<compile_context>
chip_gen: v6e
topology: v6e:2x2x1
jax: 0.10.0
libtpu: 0.0.40
codegen_flags: <defaults>
</compile_context>

<pallas_src>
import functools

import jax
import jax.numpy as jnp
from jax import lax
from jax.experimental import pallas as pl
from jax.experimental.pallas import tpu as pltpu

HID = 32      # rnn_hidden_size
ATTN = 50     # attention_size
KSIZE = 10    # conv kernel size


def _round_up(n, m):
    return (n + m - 1) // m * m


def _fused_kernel(x_ref, c1w_ref, c2w_ref,
                  wih_ref, bih_ref, whh_ref, bhh_ref,
                  aw1_ref, ab1_ref, aw2_ref, ow_ref, ob_ref,
                  out_ref,
                  xg_scr, gf_scr, gb_scr):
    # x_ref: (L, Bt, Cin) time-major f32      out_ref: (Bt, Opad) f32
    x = x_ref[...]
    Bt = x.shape[1]

    # ---- Conv1d(k=10, no bias) -> ReLU -> MaxPool1d(3,3) -------------------
    def conv_relu_pool(inp, w_ref):
        # inp: (Lin, Bt, Cc) f32 ; w_ref: (K*Cc, 32) bf16 (im2col layout)
        Lin, _, Cc = inp.shape
        Lout = Lin - KSIZE + 1
        Lp = Lout // 3
        # im2col: leading-dim (time) slices are tile-aligned; one MXU matmul.
        xcol = jnp.concatenate([inp[k:k + Lout] for k in range(KSIZE)], axis=2)
        xcol = xcol.reshape(Lout * Bt, KSIZE * Cc).astype(jnp.bfloat16)
        acc = jnp.dot(xcol, w_ref[...], preferred_element_type=jnp.float32)
        acc = jnp.maximum(acc, 0.0).reshape(Lout, Bt, 32)        # ReLU
        # MaxPool1d(3, stride=3) on registers.  Floor behavior: trailing rows
        # are dropped when Lout % 3 != 0 (matches PyTorch MaxPool1d).
        a3 = acc[:3 * Lp].reshape(Lp, 3, Bt, 32)                 # leading split
        # TODO(synk): Dropout(0.25) omitted (identity in eval mode).
        return jnp.maximum(jnp.maximum(a3[:, 0], a3[:, 1]), a3[:, 2])  # (Lp,Bt,32)

    c1 = conv_relu_pool(x, c1w_ref)          # (Lp1, Bt, 32)
    c2 = conv_relu_pool(c1, c2w_ref)         # (T,   Bt, 32)
    T = c2.shape[0]

    # ---- bidirectional single-layer GRU (batch_first) ----------------------
    # Hoisted input->hidden projection for both directions (incl. b_ih).
    xg = jnp.dot(c2.reshape(T * Bt, 32).astype(jnp.bfloat16), wih_ref[...],
                 preferred_element_type=jnp.float32) + bih_ref[...]   # (T*Bt, 6H)
    xg_scr[...] = xg.reshape(T, Bt, 6 * HID)

    whh = whh_ref[...]      # (2H, 6H) block-diagonal [fwd | bwd], bf16
    bhh = bhh_ref[...]      # (1, 6H) f32

    def gru_step(t, h):
        # h: (Bt, 2H) = [h_fwd | h_bwd]  (carried in f32)
        xf = xg_scr[t][:, 0:3 * HID]              # fwd gates use time t
        xb = xg_scr[T - 1 - t][:, 3 * HID:6 * HID]  # bwd gates use time T-1-t
        # ONE fused hidden->hidden matmul per step (block-diagonal weights).
        hh = jnp.dot(h.astype(jnp.bfloat16), whh,
                     preferred_element_type=jnp.float32) + bhh    # (Bt, 6H)
        # forward cell (PyTorch gate order r,z,n ; b_hn stays inside r*(.))
        r_f = jax.nn.sigmoid(xf[:, 0:HID] + hh[:, 0:HID])
        z_f = jax.nn.sigmoid(xf[:, HID:2 * HID] + hh[:, HID:2 * HID])
        n_f = jnp.tanh(xf[:, 2 * HID:3 * HID] + r_f * hh[:, 2 * HID:3 * HID])
        h_f = (1.0 - z_f) * n_f + z_f * h[:, 0:HID]
        # backward cell
        r_b = jax.nn.sigmoid(xb[:, 0:HID] + hh[:, 3 * HID:4 * HID])
        z_b = jax.nn.sigmoid(xb[:, HID:2 * HID] + hh[:, 4 * HID:5 * HID])
        n_b = jnp.tanh(xb[:, 2 * HID:3 * HID] + r_b * hh[:, 5 * HID:6 * HID])
        h_b = (1.0 - z_b) * n_b + z_b * h[:, HID:2 * HID]
        gf_scr[t] = h_f                     # fwd output at time t
        gb_scr[T - 1 - t] = h_b             # bwd output at time T-1-t
        return jnp.concatenate([h_f, h_b], axis=1)

    h0 = jnp.zeros((Bt, 2 * HID), jnp.float32)
    lax.fori_loop(0, T, gru_step, h0, unroll=(T <= 16))

    # ---- ReLU -> attention (softmax over time) -> ReLU -> Linear -> Softmax -
    g = jnp.concatenate([gf_scr[...], gb_scr[...]], axis=2)       # (T, Bt, 2H)
    g = jnp.maximum(g, 0.0)
    a = jnp.tanh(jnp.dot(g.reshape(T * Bt, 2 * HID).astype(jnp.bfloat16),
                         aw1_ref[...], preferred_element_type=jnp.float32)
                 + ab1_ref[...])                                  # (T*Bt, ATTN)
    a3 = a.reshape(T, Bt, ATTN)
    s = jnp.sum(a3 * aw2_ref[...], axis=2, keepdims=True)         # (T, Bt, 1)
    s = s - jnp.max(s, axis=0, keepdims=True)
    e = jnp.exp(s)
    alphas = e / jnp.sum(e, axis=0, keepdims=True)                # exact division
    ctx = jnp.maximum(jnp.sum(g * alphas, axis=0), 0.0)           # (Bt, 2H), ReLU
    logits = jnp.dot(ctx.astype(jnp.bfloat16), ow_ref[...],
                     preferred_element_type=jnp.float32) + ob_ref[...]  # (Bt, Opad)
    logits = logits - jnp.max(logits, axis=1, keepdims=True)
    el = jnp.exp(logits)
    out_ref[...] = el / jnp.sum(el, axis=1, keepdims=True)        # full-lane store


@functools.partial(jax.jit, static_argnames=("bt",))
def rnatracker_forward(x, params, *, bt=8):
    """x: (B, L, Cin) float32, same layout as the PyTorch module input."""
    B, L, Cin = x.shape
    O = params["out_w"].shape[1]
    Lout1 = L - KSIZE + 1
    Lp1 = Lout1 // 3
    Lout2 = Lp1 - KSIZE + 1
    T = Lout2 // 3
    assert Lout1 >= 3 and Lout2 >= 3 and T >= 1, "sequence too short for the model"
    assert bt % 8 == 0, "bt must be a multiple of 8 (sublane tile)"

    Bpad = _round_up(B, bt)
    Opad = _round_up(max(O, 128), 128)
    bf = jnp.bfloat16

    # Wrapper-side layout plumbing (one-time, tiny vs. the forward pass):
    #   pad batch, go time-major, cast matmul weights to bf16, pack the GRU
    #   hidden weights block-diagonally, pad the output head to 128 lanes.
    xp = jnp.zeros((Bpad, L, Cin), jnp.float32).at[:B].set(x)
    xt = jnp.transpose(xp, (1, 0, 2))                              # (L, Bpad, Cin)

    c1w = params["conv1_w"].astype(bf)
    c2w = params["conv2_w"].astype(bf)
    wih = params["gru_wih"].astype(bf)
    bih = params["gru_bih"].astype(jnp.float32)
    whh = jnp.zeros((2 * HID, 6 * HID), bf)
    whh = whh.at[0:HID, 0:3 * HID].set(params["gru_whh_f"].astype(bf))
    whh = whh.at[HID:2 * HID, 3 * HID:6 * HID].set(params["gru_whh_b"].astype(bf))
    bhh = jnp.concatenate([params["gru_bhh_f"], params["gru_bhh_b"]],
                          axis=1).astype(jnp.float32)
    aw1 = params["attn_w1"].astype(bf)
    ab1 = params["attn_b1"].astype(jnp.float32)
    aw2 = params["attn_w2"].astype(jnp.float32)
    ow = jnp.zeros((2 * HID, Opad), bf).at[:, :O].set(params["out_w"].astype(bf))
    ob = jnp.full((1, Opad), -1e30, jnp.float32).at[:, :O].set(
        params["out_b"].astype(jnp.float32))

    grid_spec = pltpu.PrefetchScalarGridSpec(
        num_scalar_prefetch=0,
        grid=(Bpad // bt,),
        in_specs=[
            pl.BlockSpec((L, bt, Cin), lambda b: (0, b, 0)),        # x (time-major)
            pl.BlockSpec((KSIZE * Cin, 32), lambda b: (0, 0)),      # conv1 w (im2col)
            pl.BlockSpec((KSIZE * 32, 32), lambda b: (0, 0)),       # conv2 w (im2col)
            pl.BlockSpec((32, 6 * HID), lambda b: (0, 0)),          # gru W_ih (fwd|bwd)
            pl.BlockSpec((1, 6 * HID), lambda b: (0, 0)),           # gru b_ih
            pl.BlockSpec((2 * HID, 6 * HID), lambda b: (0, 0)),     # gru W_hh block-diag
            pl.BlockSpec((1, 6 * HID), lambda b: (0, 0)),           # gru b_hh (fwd|bwd)
            pl.BlockSpec((2 * HID, ATTN), lambda b: (0, 0)),        # attn W1
            pl.BlockSpec((1, ATTN), lambda b: (0, 0)),              # attn b1
            pl.BlockSpec((1, ATTN), lambda b: (0, 0)),              # attn w2
            pl.BlockSpec((2 * HID, Opad), lambda b: (0, 0)),        # out W (lane-padded)
            pl.BlockSpec((1, Opad), lambda b: (0, 0)),              # out b (lane-padded)
        ],
        out_specs=pl.BlockSpec((bt, Opad), lambda b: (b, 0)),
        scratch_shapes=[
            pltpu.VMEM((T, bt, 6 * HID), jnp.float32),   # hoisted GRU input gates
            pltpu.VMEM((T, bt, HID), jnp.float32),       # fwd GRU outputs
            pltpu.VMEM((T, bt, HID), jnp.float32),       # bwd GRU outputs
        ],
    )

    out = pl.pallas_call(
        _fused_kernel,
        out_shape=jax.ShapeDtypeStruct((Bpad, Opad), jnp.float32),
        grid_spec=grid_spec,
        compiler_params=pltpu.CompilerParams(
            dimension_semantics=("parallel",)),   # batch grid: v7x 2-TC split
    )(xt, c1w, c2w, wih, bih, whh, bhh, aw1, ab1, aw2, ow, ob)

    return out[:B, :O]


def init_params(key, input_channel, output_size):
    def nrm(k, shape, scale=0.1):
        return jax.random.normal(k, shape, jnp.float32) * scale

    ks = jax.random.split(key, 13)
    return {
        # conv weights pre-packed into im2col layout: (K*Cin, Cout)
        "conv1_w": nrm(ks[0], (KSIZE * input_channel, 32), 0.3),
        "conv2_w": nrm(ks[1], (KSIZE * 32, 32), 0.1),
        # GRU input->hidden, both directions packed: cols [f_r|f_z|f_n|b_r|b_z|b_n]
        "gru_wih": nrm(ks[2], (32, 6 * HID)),
        "gru_bih": nrm(ks[3], (1, 6 * HID)),
        # GRU hidden->hidden per direction, cols [r|z|n]
        "gru_whh_f": nrm(ks[4], (HID, 3 * HID)),
        "gru_bhh_f": nrm(ks[5], (1, 3 * HID)),
        "gru_whh_b": nrm(ks[6], (HID, 3 * HID)),
        "gru_bhh_b": nrm(ks[7], (1, 3 * HID)),
        # attention
        "attn_w1": nrm(ks[8], (2 * HID, ATTN)),
        "attn_b1": nrm(ks[9], (1, ATTN)),
        "attn_w2": nrm(ks[10], (1, ATTN)),
        # output head
        "out_w": nrm(ks[11], (2 * HID, output_size)),
        "out_b": nrm(ks[12], (1, output_size)),
    }


if __name__ == "__main__":
    # L=100 -> conv1(k=10)+pool3 -> 30 -> conv2(k=10)+pool3 -> T=7
    # B=16 with bt=8 -> grid=(2,) so both v7x TensorCores are used.
    B, L, Cin, OUT = 16, 100, 4, 8
    key = jax.random.PRNGKey(0)
    xk, pk = jax.random.split(key)
    x = jax.random.normal(xk, (B, L, Cin), jnp.float32)
    params = init_params(pk, Cin, OUT)

    out = rnatracker_forward(x, params)
    out = jax.block_until_ready(out)

    assert out.shape == (B, OUT)
    assert bool(jnp.all(jnp.isfinite(out)))
    # rows of the final softmax must sum to 1
    assert bool(jnp.allclose(jnp.sum(out, axis=1), 1.0, atol=1e-4))
    print("KERNEL_OK")
</pallas_src>

<mosaic_0001>
module attributes {stable_mosaic.version = 11 : i64} {
  func.func @_fused_kernel(%arg0: i32, %arg1: memref<100x8x4xf32, #tpu.memory_space<vmem>>, %arg2: memref<40x32xbf16, #tpu.memory_space<vmem>>, %arg3: memref<320x32xbf16, #tpu.memory_space<vmem>>, %arg4: memref<32x192xbf16, #tpu.memory_space<vmem>>, %arg5: memref<1x192xf32, #tpu.memory_space<vmem>>, %arg6: memref<64x192xbf16, #tpu.memory_space<vmem>>, %arg7: memref<1x192xf32, #tpu.memory_space<vmem>>, %arg8: memref<64x50xbf16, #tpu.memory_space<vmem>>, %arg9: memref<1x50xf32, #tpu.memory_space<vmem>>, %arg10: memref<1x50xf32, #tpu.memory_space<vmem>>, %arg11: memref<64x128xbf16, #tpu.memory_space<vmem>>, %arg12: memref<1x128xf32, #tpu.memory_space<vmem>>, %arg13: memref<8x128xf32, #tpu.memory_space<vmem>>, %arg14: memref<7x8x192xf32, #tpu.memory_space<vmem>>, %arg15: memref<7x8x32xf32, #tpu.memory_space<vmem>>, %arg16: memref<7x8x32xf32, #tpu.memory_space<vmem>>) attributes {dimension_semantics = [#tpu.dimension_semantics<parallel>], iteration_bounds = array<i64: 2>, scalar_prefetch = 0 : i64, scratch_operands = 3 : i64, tpu.core_type = #tpu.core_type<tc>, window_params = [{transform_indices = @transform_0, window_bounds = array<i64: 100, 8, 4>}, {pipeline_mode = #tpu.pipeline_mode<synchronous>, transform_indices = @transform_1, window_bounds = array<i64: 40, 32>}, {pipeline_mode = #tpu.pipeline_mode<synchronous>, transform_indices = @transform_2, window_bounds = array<i64: 320, 32>}, {pipeline_mode = #tpu.pipeline_mode<synchronous>, transform_indices = @transform_3, window_bounds = array<i64: 32, 192>}, {pipeline_mode = #tpu.pipeline_mode<synchronous>, transform_indices = @transform_4, window_bounds = array<i64: 1, 192>}, {pipeline_mode = #tpu.pipeline_mode<synchronous>, transform_indices = @transform_5, window_bounds = array<i64: 64, 192>}, {pipeline_mode = #tpu.pipeline_mode<synchronous>, transform_indices = @transform_6, window_bounds = array<i64: 1, 192>}, {pipeline_mode = #tpu.pipeline_mode<synchronous>, transform_indices = @transform_7, window_bounds = array<i64: 64, 50>}, {pipeline_mode = #tpu.pipeline_mode<synchronous>, transform_indices = @transform_8, window_bounds = array<i64: 1, 50>}, {pipeline_mode = #tpu.pipeline_mode<synchronous>, transform_indices = @transform_9, window_bounds = array<i64: 1, 50>}, {pipeline_mode = #tpu.pipeline_mode<synchronous>, transform_indices = @transform_10, window_bounds = array<i64: 64, 128>}, {pipeline_mode = #tpu.pipeline_mode<synchronous>, transform_indices = @transform_11, window_bounds = array<i64: 1, 128>}, {transform_indices = @transform_12, window_bounds = array<i64: 8, 128>}]} {
    %c0 = arith.constant 0 : index
    %c0_0 = arith.constant 0 : index
    %c0_1 = arith.constant 0 : index
    %0 = vector.load %arg1[%c0, %c0_0, %c0_1] : memref<100x8x4xf32, #tpu.memory_space<vmem>>, vector<100x8x4xf32>
    %1 = vector.extract_strided_slice %0 {offsets = [0, 0, 0], sizes = [91, 8, 4], strides = [1, 1, 1]} : vector<100x8x4xf32> to vector<91x8x4xf32>
    %2 = vector.extract_strided_slice %0 {offsets = [1, 0, 0], sizes = [91, 8, 4], strides = [1, 1, 1]} : vector<100x8x4xf32> to vector<91x8x4xf32>
    %3 = vector.extract_strided_slice %0 {offsets = [2, 0, 0], sizes = [91, 8, 4], strides = [1, 1, 1]} : vector<100x8x4xf32> to vector<91x8x4xf32>
    %4 = vector.extract_strided_slice %0 {offsets = [3, 0, 0], sizes = [91, 8, 4], strides = [1, 1, 1]} : vector<100x8x4xf32> to vector<91x8x4xf32>
    %5 = vector.extract_strided_slice %0 {offsets = [4, 0, 0], sizes = [91, 8, 4], strides = [1, 1, 1]} : vector<100x8x4xf32> to vector<91x8x4xf32>
    %6 = vector.extract_strided_slice %0 {offsets = [5, 0, 0], sizes = [91, 8, 4], strides = [1, 1, 1]} : vector<100x8x4xf32> to vector<91x8x4xf32>
    %7 = vector.extract_strided_slice %0 {offsets = [6, 0, 0], sizes = [91, 8, 4], strides = [1, 1, 1]} : vector<100x8x4xf32> to vector<91x8x4xf32>
    %8 = vector.extract_strided_slice %0 {offsets = [7, 0, 0], sizes = [91, 8, 4], strides = [1, 1, 1]} : vector<100x8x4xf32> to vector<91x8x4xf32>
    %9 = vector.extract_strided_slice %0 {offsets = [8, 0, 0], sizes = [91, 8, 4], strides = [1, 1, 1]} : vector<100x8x4xf32> to vector<91x8x4xf32>
    %10 = vector.extract_strided_slice %0 {offsets = [9, 0, 0], sizes = [91, 8, 4], strides = [1, 1, 1]} : vector<100x8x4xf32> to vector<91x8x4xf32>
    %11 = tpu.concatenate %1, %2, %3, %4, %5, %6, %7, %8, %9, %10 in 2 : vector<91x8x4xf32>, vector<91x8x4xf32>, vector<91x8x4xf32>, vector<91x8x4xf32>, vector<91x8x4xf32>, vector<91x8x4xf32>, vector<91x8x4xf32>, vector<91x8x4xf32>, vector<91x8x4xf32>, vector<91x8x4xf32> -> vector<91x8x40xf32>
    %12 = vector.shape_cast %11 : vector<91x8x40xf32> to vector<728x40xf32>
    %13 = arith.truncf %12 : vector<728x40xf32> to vector<728x40xbf16>
    %c0_2 = arith.constant 0 : index
    %c0_3 = arith.constant 0 : index
    %14 = vector.load %arg2[%c0_2, %c0_3] : memref<40x32xbf16, #tpu.memory_space<vmem>>, vector<40x32xbf16>
    %cst = arith.constant dense<0.000000e+00> : vector<728x32xf32>
    %15 = tpu.matmul %13, %14, %cst {dimension_numbers = #tpu.dot_dimension_numbers<[1], [0], [0], [1], [0, 0, 1, 1], [], []>} : vector<728x40xbf16>, vector<40x32xbf16>, vector<728x32xf32> -> vector<728x32xf32>
    %cst_4 = arith.constant 0.000000e+00 : f32
    %16 = vector.broadcast %cst_4 : f32 to vector<728x32xf32>
    %17 = arith.maximumf %15, %16 : vector<728x32xf32>
    %18 = vector.shape_cast %17 : vector<728x32xf32> to vector<91x8x32xf32>
    %19 = vector.extract_strided_slice %18 {offsets = [0, 0, 0], sizes = [90, 8, 32], strides = [1, 1, 1]} : vector<91x8x32xf32> to vector<90x8x32xf32>
    %20 = vector.shape_cast %19 : vector<90x8x32xf32> to vector<30x3x8x32xf32>
    %21 = vector.extract_strided_slice %20 {offsets = [0, 0, 0, 0], sizes = [30, 1, 8, 32], strides = [1, 1, 1, 1]} : vector<30x3x8x32xf32> to vector<30x1x8x32xf32>
    %22 = vector.shape_cast %21 : vector<30x1x8x32xf32> to vector<30x8x32xf32>
    %23 = vector.extract_strided_slice %20 {offsets = [0, 1, 0, 0], sizes = [30, 1, 8, 32], strides = [1, 1, 1, 1]} : vector<30x3x8x32xf32> to vector<30x1x8x32xf32>
    %24 = vector.shape_cast %23 : vector<30x1x8x32xf32> to vector<30x8x32xf32>
    %25 = arith.maximumf %22, %24 : vector<30x8x32xf32>
    %26 = vector.extract_strided_slice %20 {offsets = [0, 2, 0, 0], sizes = [30, 1, 8, 32], strides = [1, 1, 1, 1]} : vector<30x3x8x32xf32> to vector<30x1x8x32xf32>
    %27 = vector.shape_cast %26 : vector<30x1x8x32xf32> to vector<30x8x32xf32>
    %28 = arith.maximumf %25, %27 : vector<30x8x32xf32>
    %29 = vector.extract_strided_slice %28 {offsets = [0, 0, 0], sizes = [21, 8, 32], strides = [1, 1, 1]} : vector<30x8x32xf32> to vector<21x8x32xf32>
    %30 = vector.extract_strided_slice %28 {offsets = [1, 0, 0], sizes = [21, 8, 32], strides = [1, 1, 1]} : vector<30x8x32xf32> to vector<21x8x32xf32>
    %31 = vector.extract_strided_slice %28 {offsets = [2, 0, 0], sizes = [21, 8, 32], strides = [1, 1, 1]} : vector<30x8x32xf32> to vector<21x8x32xf32>
    %32 = vector.extract_strided_slice %28 {offsets = [3, 0, 0], sizes = [21, 8, 32], strides = [1, 1, 1]} : vector<30x8x32xf32> to vector<21x8x32xf32>
    %33 = vector.extract_strided_slice %28 {offsets = [4, 0, 0], sizes = [21, 8, 32], strides = [1, 1, 1]} : vector<30x8x32xf32> to vector<21x8x32xf32>
    %34 = vector.extract_strided_slice %28 {offsets = [5, 0, 0], sizes = [21, 8, 32], strides = [1, 1, 1]} : vector<30x8x32xf32> to vector<21x8x32xf32>
    %35 = vector.extract_strided_slice %28 {offsets = [6, 0, 0], sizes = [21, 8, 32], strides = [1, 1, 1]} : vector<30x8x32xf32> to vector<21x8x32xf32>
    %36 = vector.extract_strided_slice %28 {offsets = [7, 0, 0], sizes = [21, 8, 32], strides = [1, 1, 1]} : vector<30x8x32xf32> to vector<21x8x32xf32>
    %37 = vector.extract_strided_slice %28 {offsets = [8, 0, 0], sizes = [21, 8, 32], strides = [1, 1, 1]} : vector<30x8x32xf32> to vector<21x8x32xf32>
    %38 = vector.extract_strided_slice %28 {offsets = [9, 0, 0], sizes = [21, 8, 32], strides = [1, 1, 1]} : vector<30x8x32xf32> to vector<21x8x32xf32>
    %39 = tpu.concatenate %29, %30, %31, %32, %33, %34, %35, %36, %37, %38 in 2 : vector<21x8x32xf32>, vector<21x8x32xf32>, vector<21x8x32xf32>, vector<21x8x32xf32>, vector<21x8x32xf32>, vector<21x8x32xf32>, vector<21x8x32xf32>, vector<21x8x32xf32>, vector<21x8x32xf32>, vector<21x8x32xf32> -> vector<21x8x320xf32>
    %40 = vector.shape_cast %39 : vector<21x8x320xf32> to vector<168x320xf32>
    %41 = arith.truncf %40 : vector<168x320xf32> to vector<168x320xbf16>
    %c0_5 = arith.constant 0 : index
    %c0_6 = arith.constant 0 : index
    %42 = vector.load %arg3[%c0_5, %c0_6] : memref<320x32xbf16, #tpu.memory_space<vmem>>, vector<320x32xbf16>
    %cst_7 = arith.constant dense<0.000000e+00> : vector<168x32xf32>
    %43 = tpu.matmul %41, %42, %cst_7 {dimension_numbers = #tpu.dot_dimension_numbers<[1], [0], [0], [1], [0, 0, 1, 1], [], []>} : vector<168x320xbf16>, vector<320x32xbf16>, vector<168x32xf32> -> vector<168x32xf32>
    %cst_8 = arith.constant 0.000000e+00 : f32
    %44 = vector.broadcast %cst_8 : f32 to vector<168x32xf32>
    %45 = arith.maximumf %43, %44 : vector<168x32xf32>
    %46 = vector.shape_cast %45 : vector<168x32xf32> to vector<21x8x32xf32>
    %47 = vector.shape_cast %46 : vector<21x8x32xf32> to vector<7x3x8x32xf32>
    %48 = vector.extract_strided_slice %47 {offsets = [0, 0, 0, 0], sizes = [7, 1, 8, 32], strides = [1, 1, 1, 1]} : vector<7x3x8x32xf32> to vector<7x1x8x32xf32>
    %49 = vector.shape_cast %48 : vector<7x1x8x32xf32> to vector<7x8x32xf32>
    %50 = vector.extract_strided_slice %47 {offsets = [0, 1, 0, 0], sizes = [7, 1, 8, 32], strides = [1, 1, 1, 1]} : vector<7x3x8x32xf32> to vector<7x1x8x32xf32>
    %51 = vector.shape_cast %50 : vector<7x1x8x32xf32> to vector<7x8x32xf32>
    %52 = arith.maximumf %49, %51 : vector<7x8x32xf32>
    %53 = vector.extract_strided_slice %47 {offsets = [0, 2, 0, 0], sizes = [7, 1, 8, 32], strides = [1, 1, 1, 1]} : vector<7x3x8x32xf32> to vector<7x1x8x32xf32>
    %54 = vector.shape_cast %53 : vector<7x1x8x32xf32> to vector<7x8x32xf32>
    %55 = arith.maximumf %52, %54 : vector<7x8x32xf32>
    %56 = vector.shape_cast %55 : vector<7x8x32xf32> to vector<56x32xf32>
    %57 = arith.truncf %56 : vector<56x32xf32> to vector<56x32xbf16>
    %c0_9 = arith.constant 0 : index
    %c0_10 = arith.constant 0 : index
    %58 = vector.load %arg4[%c0_9, %c0_10] : memref<32x192xbf16, #tpu.memory_space<vmem>>, vector<32x192xbf16>
    %cst_11 = arith.constant dense<0.000000e+00> : vector<56x192xf32>
    %59 = tpu.matmul %57, %58, %cst_11 {dimension_numbers = #tpu.dot_dimension_numbers<[1], [0], [0], [1], [0, 0, 1, 1], [], []>} : vector<56x32xbf16>, vector<32x192xbf16>, vector<56x192xf32> -> vector<56x192xf32>
    %c0_12 = arith.constant 0 : index
    %c0_13 = arith.constant 0 : index
    %60 = vector.load %arg5[%c0_12, %c0_13] : memref<1x192xf32, #tpu.memory_space<vmem>>, vector<1x192xf32>
    %61 = vector.broadcast %60 : vector<1x192xf32> to vector<56x192xf32>
    %62 = arith.addf %59, %61 : vector<56x192xf32>
    %63 = vector.shape_cast %62 : vector<56x192xf32> to vector<7x8x192xf32>
    %c0_14 = arith.constant 0 : index
    %c0_15 = arith.constant 0 : index
    %c0_16 = arith.constant 0 : index
    %64 = vector.load %arg14[%c0_14, %c0_15, %c0_16] : memref<7x8x192xf32, #tpu.memory_space<vmem>>, vector<7x8x192xf32>
    tpu.vector_store %arg14[%c0_14, %c0_15, %c0_16], %63 {strides = array<i32>} : memref<7x8x192xf32, #tpu.memory_space<vmem>>, vector<7x8x192xf32>,
    %c0_17 = arith.constant 0 : index
    %c0_18 = arith.constant 0 : index
    %65 = vector.load %arg6[%c0_17, %c0_18] : memref<64x192xbf16, #tpu.memory_space<vmem>>, vector<64x192xbf16>
    %c0_19 = arith.constant 0 : index
    %c0_20 = arith.constant 0 : index
    %66 = vector.load %arg7[%c0_19, %c0_20] : memref<1x192xf32, #tpu.memory_space<vmem>>, vector<1x192xf32>
    %cst_21 = arith.constant 0.000000e+00 : f32
    %67 = vector.broadcast %cst_21 : f32 to vector<8x64xf32>
    %c0_i32 = arith.constant 0 : i32
    %68 = arith.index_cast %c0_i32 : i32 to index
    %c0_22 = arith.constant 0 : index
    %c0_23 = arith.constant 0 : index
    %69 = vector.load %arg14[%68, %c0_22, %c0_23] : memref<7x8x192xf32, #tpu.memory_space<vmem>>, vector<1x8x192xf32>
    %70 = vector.shape_cast %69 : vector<1x8x192xf32> to vector<8x192xf32>
    %71 = vector.extract_strided_slice %70 {offsets = [0, 0], sizes = [8, 96], strides = [1, 1]} : vector<8x192xf32> to vector<8x96xf32>
    %c6_i32 = arith.constant 6 : i32
    %72 = arith.subi %c6_i32, %c0_i32 : i32
    %73 = arith.index_cast %72 : i32 to index
    %c0_24 = arith.constant 0 : index
    %c0_25 = arith.constant 0 : index
    %74 = vector.load %arg14[%73, %c0_24, %c0_25] : memref<7x8x192xf32, #tpu.memory_space<vmem>>, vector<1x8x192xf32>
    %75 = vector.shape_cast %74 : vector<1x8x192xf32> to vector<8x192xf32>
    %76 = vector.extract_strided_slice %75 {offsets = [0, 96], sizes = [8, 96], strides = [1, 1]} : vector<8x192xf32> to vector<8x96xf32>
    %77 = arith.truncf %67 : vector<8x64xf32> to vector<8x64xbf16>
    %cst_26 = arith.constant dense<0.000000e+00> : vector<8x192xf32>
    %78 = tpu.matmul %77, %65, %cst_26 {dimension_numbers = #tpu.dot_dimension_numbers<[1], [0], [0], [1], [0, 0, 1, 1], [], []>} : vector<8x64xbf16>, vector<64x192xbf16>, vector<8x192xf32> -> vector<8x192xf32>
    %79 = vector.broadcast %66 : vector<1x192xf32> to vector<8x192xf32>
    %80 = arith.addf %78, %79 : vector<8x192xf32>
    %81 = vector.extract_strided_slice %71 {offsets = [0, 0], sizes = [8, 32], strides = [1, 1]} : vector<8x96xf32> to vector<8x32xf32>
    %82 = vector.extract_strided_slice %80 {offsets = [0, 0], sizes = [8, 32], strides = [1, 1]} : vector<8x192xf32> to vector<8x32xf32>
    %83 = arith.addf %81, %82 : vector<8x32xf32>
    %84 = arith.negf %83 : vector<8x32xf32>
    %85 = math.exp %84 : vector<8x32xf32>
    %cst_27 = arith.constant 1.000000e+00 : f32
    %86 = vector.broadcast %cst_27 : f32 to vector<8x32xf32>
    %87 = arith.addf %86, %85 : vector<8x32xf32>
    %88 = arith.divf %86, %87 : vector<8x32xf32>
    %89 = vector.extract_strided_slice %71 {offsets = [0, 32], sizes = [8, 32], strides = [1, 1]} : vector<8x96xf32> to vector<8x32xf32>
    %90 = vector.extract_strided_slice %80 {offsets = [0, 32], sizes = [8, 32], strides = [1, 1]} : vector<8x192xf32> to vector<8x32xf32>
    %91 = arith.addf %89, %90 : vector<8x32xf32>
    %92 = arith.negf %91 : vector<8x32xf32>
    %93 = math.exp %92 : vector<8x32xf32>
    %cst_28 = arith.constant 1.000000e+00 : f32
    %94 = vector.broadcast %cst_28 : f32 to vector<8x32xf32>
    %95 = arith.addf %94, %93 : vector<8x32xf32>
    %96 = arith.divf %94, %95 : vector<8x32xf32>
    %97 = vector.extract_strided_slice %71 {offsets = [0, 64], sizes = [8, 32], strides = [1, 1]} : vector<8x96xf32> to vector<8x32xf32>
    %98 = vector.extract_strided_slice %80 {offsets = [0, 64], sizes = [8, 32], strides = [1, 1]} : vector<8x192xf32> to vector<8x32xf32>
    %99 = arith.mulf %88, %98 : vector<8x32xf32>
    %100 = arith.addf %97, %99 : vector<8x32xf32>
    %101 = math.tanh %100 : vector<8x32xf32>
    %cst_29 = arith.constant 1.000000e+00 : f32
    %102 = vector.broadcast %cst_29 : f32 to vector<8x32xf32>
    %103 = arith.subf %102, %96 : vector<8x32xf32>
    %104 = arith.mulf %103, %101 : vector<8x32xf32>
    %105 = vector.extract_strided_slice %67 {offsets = [0, 0], sizes = [8, 32], strides = [1, 1]} : vector<8x64xf32> to vector<8x32xf32>
    %106 = arith.mulf %96, %105 : vector<8x32xf32>
    %107 = arith.addf %104, %106 : vector<8x32xf32>
    %108 = vector.extract_strided_slice %76 {offsets = [0, 0], sizes = [8, 32], strides = [1, 1]} : vector<8x96xf32> to vector<8x32xf32>
    %109 = vector.extract_strided_slice %80 {offsets = [0, 96], sizes = [8, 32], strides = [1, 1]} : vector<8x192xf32> to vector<8x32xf32>
    %110 = arith.addf %108, %109 : vector<8x32xf32>
    %111 = arith.negf %110 : vector<8x32xf32>
    %112 = math.exp %111 : vector<8x32xf32>
    %cst_30 = arith.constant 1.000000e+00 : f32
    %113 = vector.broadcast %cst_30 : f32 to vector<8x32xf32>
    %114 = arith.addf %113, %112 : vector<8x32xf32>
    %115 = arith.divf %113, %114 : vector<8x32xf32>
    %116 = vector.extract_strided_slice %76 {offsets = [0, 32], sizes = [8, 32], strides = [1, 1]} : vector<8x96xf32> to vector<8x32xf32>
    %117 = vector.extract_strided_slice %80 {offsets = [0, 128], sizes = [8, 32], strides = [1, 1]} : vector<8x192xf32> to vector<8x32xf32>
    %118 = arith.addf %116, %117 : vector<8x32xf32>
    %119 = arith.negf %118 : vector<8x32xf32>
    %120 = math.exp %119 : vector<8x32xf32>
    %cst_31 = arith.constant 1.000000e+00 : f32
    %121 = vector.broadcast %cst_31 : f32 to vector<8x32xf32>
    %122 = arith.addf %121, %120 : vector<8x32xf32>
    %123 = arith.divf %121, %122 : vector<8x32xf32>
    %124 = vector.extract_strided_slice %76 {offsets = [0, 64], sizes = [8, 32], strides = [1, 1]} : vector<8x96xf32> to vector<8x32xf32>
    %125 = vector.extract_strided_slice %80 {offsets = [0, 160], sizes = [8, 32], strides = [1, 1]} : vector<8x192xf32> to vector<8x32xf32>
    %126 = arith.mulf %115, %125 : vector<8x32xf32>
    %127 = arith.addf %124, %126 : vector<8x32xf32>
    %128 = math.tanh %127 : vector<8x32xf32>
    %cst_32 = arith.constant 1.000000e+00 : f32
    %129 = vector.broadcast %cst_32 : f32 to vector<8x32xf32>
    %130 = arith.subf %129, %123 : vector<8x32xf32>
    %131 = arith.mulf %130, %128 : vector<8x32xf32>
    %132 = vector.extract_strided_slice %67 {offsets = [0, 32], sizes = [8, 32], strides = [1, 1]} : vector<8x64xf32> to vector<8x32xf32>
    %133 = arith.mulf %123, %132 : vector<8x32xf32>
    %134 = arith.addf %131, %133 : vector<8x32xf32>
    %135 = arith.index_cast %c0_i32 : i32 to index
    %c0_33 = arith.constant 0 : index
    %c0_34 = arith.constant 0 : index
    %136 = vector.load %arg15[%135, %c0_33, %c0_34] : memref<7x8x32xf32, #tpu.memory_space<vmem>>, vector<1x8x32xf32>
    %137 = vector.shape_cast %136 : vector<1x8x32xf32> to vector<8x32xf32>
    %138 = vector.shape_cast %107 : vector<8x32xf32> to vector<1x8x32xf32>
    tpu.vector_store %arg15[%135, %c0_33, %c0_34], %138 {strides = array<i32>} : memref<7x8x32xf32, #tpu.memory_space<vmem>>, vector<1x8x32xf32>,
    %c6_i32_35 = arith.constant 6 : i32
    %139 = arith.subi %c6_i32_35, %c0_i32 : i32
    %140 = arith.index_cast %139 : i32 to index
    %c0_36 = arith.constant 0 : index
    %c0_37 = arith.constant 0 : index
    %141 = vector.load %arg16[%140, %c0_36, %c0_37] : memref<7x8x32xf32, #tpu.memory_space<vmem>>, vector<1x8x32xf32>
    %142 = vector.shape_cast %141 : vector<1x8x32xf32> to vector<8x32xf32>
    %143 = vector.shape_cast %134 : vector<8x32xf32> to vector<1x8x32xf32>
    tpu.vector_store %arg16[%140, %c0_36, %c0_37], %143 {strides = array<i32>} : memref<7x8x32xf32, #tpu.memory_space<vmem>>, vector<1x8x32xf32>,
    %144 = tpu.concatenate %107, %134 in 1 : vector<8x32xf32>, vector<8x32xf32> -> vector<8x64xf32>
    %c1_i32 = arith.constant 1 : i32
    %145 = arith.index_cast %c1_i32 : i32 to index
    %c0_38 = arith.constant 0 : index
    %c0_39 = arith.constant 0 : index
    %146 = vector.load %arg14[%145, %c0_38, %c0_39] : memref<7x8x192xf32, #tpu.memory_space<vmem>>, vector<1x8x192xf32>
    %147 = vector.shape_cast %146 : vector<1x8x192xf32> to vector<8x192xf32>
    %148 = vector.extract_strided_slice %147 {offsets = [0, 0], sizes = [8, 96], strides = [1, 1]} : vector<8x192xf32> to vector<8x96xf32>
    %c6_i32_40 = arith.constant 6 : i32
    %149 = arith.subi %c6_i32_40, %c1_i32 : i32
    %150 = arith.index_cast %149 : i32 to index
    %c0_41 = arith.constant 0 : index
    %c0_42 = arith.constant 0 : index
    %151 = vector.load %arg14[%150, %c0_41, %c0_42] : memref<7x8x192xf32, #tpu.memory_space<vmem>>, vector<1x8x192xf32>
    %152 = vector.shape_cast %151 : vector<1x8x192xf32> to vector<8x192xf32>
    %153 = vector.extract_strided_slice %152 {offsets = [0, 96], sizes = [8, 96], strides = [1, 1]} : vector<8x192xf32> to vector<8x96xf32>
    %154 = arith.truncf %144 : vector<8x64xf32> to vector<8x64xbf16>
    %cst_43 = arith.constant dense<0.000000e+00> : vector<8x192xf32>
    %155 = tpu.matmul %154, %65, %cst_43 {dimension_numbers = #tpu.dot_dimension_numbers<[1], [0], [0], [1], [0, 0, 1, 1], [], []>} : vector<8x64xbf16>, vector<64x192xbf16>, vector<8x192xf32> -> vector<8x192xf32>
    %156 = vector.broadcast %66 : vector<1x192xf32> to vector<8x192xf32>
    %157 = arith.addf %155, %156 : vector<8x192xf32>
    %158 = vector.extract_strided_slice %148 {offsets = [0, 0], sizes = [8, 32], strides = [1, 1]} : vector<8x96xf32> to vector<8x32xf32>
    %159 = vector.extract_strided_slice %157 {offsets = [0, 0], sizes = [8, 32], strides = [1, 1]} : vector<8x192xf32> to vector<8x32xf32>
    %160 = arith.addf %158, %159 : vector<8x32xf32>
    %161 = arith.negf %160 : vector<8x32xf32>
    %162 = math.exp %161 : vector<8x32xf32>
    %cst_44 = arith.constant 1.000000e+00 : f32
    %163 = vector.broadcast %cst_44 : f32 to vector<8x32xf32>
    %164 = arith.addf %163, %162 : vector<8x32xf32>
    %165 = arith.divf %163, %164 : vector<8x32xf32>
    %166 = vector.extract_strided_slice %148 {offsets = [0, 32], sizes = [8, 32], strides = [1, 1]} : vector<8x96xf32> to vector<8x32xf32>
    %167 = vector.extract_strided_slice %157 {offsets = [0, 32], sizes = [8, 32], strides = [1, 1]} : vector<8x192xf32> to vector<8x32xf32>
    %168 = arith.addf %166, %167 : vector<8x32xf32>
    %169 = arith.negf %168 : vector<8x32xf32>
    %170 = math.exp %169 : vector<8x32xf32>
    %cst_45 = arith.constant 1.000000e+00 : f32
    %171 = vector.broadcast %cst_45 : f32 to vector<8x32xf32>
    %172 = arith.addf %171, %170 : vector<8x32xf32>
    %173 = arith.divf %171, %172 : vector<8x32xf32>
    %174 = vector.extract_strided_slice %148 {offsets = [0, 64], sizes = [8, 32], strides = [1, 1]} : vector<8x96xf32> to vector<8x32xf32>
    %175 = vector.extract_strided_slice %157 {offsets = [0, 64], sizes = [8, 32], strides = [1, 1]} : vector<8x192xf32> to vector<8x32xf32>
    %176 = arith.mulf %165, %175 : vector<8x32xf32>
    %177 = arith.addf %174, %176 : vector<8x32xf32>
    %178 = math.tanh %177 : vector<8x32xf32>
    %cst_46 = arith.constant 1.000000e+00 : f32
    %179 = vector.broadcast %cst_46 : f32 to vector<8x32xf32>
    %180 = arith.subf %179, %173 : vector<8x32xf32>
    %181 = arith.mulf %180, %178 : vector<8x32xf32>
    %182 = vector.extract_strided_slice %144 {offsets = [0, 0], sizes = [8, 32], strides = [1, 1]} : vector<8x64xf32> to vector<8x32xf32>
    %183 = arith.mulf %173, %182 : vector<8x32xf32>
    %184 = arith.addf %181, %183 : vector<8x32xf32>
    %185 = vector.extract_strided_slice %153 {offsets = [0, 0], sizes = [8, 32], strides = [1, 1]} : vector<8x96xf32> to vector<8x32xf32>
    %186 = vector.extract_strided_slice %157 {offsets = [0, 96], sizes = [8, 32], strides = [1, 1]} : vector<8x192xf32> to vector<8x32xf32>
    %187 = arith.addf %185, %186 : vector<8x32xf32>
    %188 = arith.negf %187 : vector<8x32xf32>
    %189 = math.exp %188 : vector<8x32xf32>
    %cst_47 = arith.constant 1.000000e+00 : f32
    %190 = vector.broadcast %cst_47 : f32 to vector<8x32xf32>
    %191 = arith.addf %190, %189 : vector<8x32xf32>
    %192 = arith.divf %190, %191 : vector<8x32xf32>
    %193 = vector.extract_strided_slice %153 {offsets = [0, 32], sizes = [8, 32], strides = [1, 1]} : vector<8x96xf32> to vector<8x32xf32>
    %194 = vector.extract_strided_slice %157 {offsets = [0, 128], sizes = [8, 32], strides = [1, 1]} : vector<8x192xf32> to vector<8x32xf32>
    %195 = arith.addf %193, %194 : vector<8x32xf32>
    %196 = arith.negf %195 : vector<8x32xf32>
    %197 = math.exp %196 : vector<8x32xf32>
    %cst_48 = arith.constant 1.000000e+00 : f32
    %198 = vector.broadcast %cst_48 : f32 to vector<8x32xf32>
    %199 = arith.addf %198, %197 : vector<8x32xf32>
    %200 = arith.divf %198, %199 : vector<8x32xf32>
    %201 = vector.extract_strided_slice %153 {offsets = [0, 64], sizes = [8, 32], strides = [1, 1]} : vector<8x96xf32> to vector<8x32xf32>
    %202 = vector.extract_strided_slice %157 {offsets = [0, 160], sizes = [8, 32], strides = [1, 1]} : vector<8x192xf32> to vector<8x32xf32>
    %203 = arith.mulf %192, %202 : vector<8x32xf32>
    %204 = arith.addf %201, %203 : vector<8x32xf32>
    %205 = math.tanh %204 : vector<8x32xf32>
    %cst_49 = arith.constant 1.000000e+00 : f32
    %206 = vector.broadcast %cst_49 : f32 to vector<8x32xf32>
    %207 = arith.subf %206, %200 : vector<8x32xf32>
    %208 = arith.mulf %207, %205 : vector<8x32xf32>
    %209 = vector.extract_strided_slice %144 {offsets = [0, 32], sizes = [8, 32], strides = [1, 1]} : vector<8x64xf32> to vector<8x32xf32>
    %210 = arith.mulf %200, %209 : vector<8x32xf32>
    %211 = arith.addf %208, %210 : vector<8x32xf32>
    %212 = arith.index_cast %c1_i32 : i32 to index
    %c0_50 = arith.constant 0 : index
    %c0_51 = arith.constant 0 : index
    %213 = vector.load %arg15[%212, %c0_50, %c0_51] : memref<7x8x32xf32, #tpu.memory_space<vmem>>, vector<1x8x32xf32>
    %214 = vector.shape_cast %213 : vector<1x8x32xf32> to vector<8x32xf32>
    %215 = vector.shape_cast %184 : vector<8x32xf32> to vector<1x8x32xf32>
    tpu.vector_store %arg15[%212, %c0_50, %c0_51], %215 {strides = array<i32>} : memref<7x8x32xf32, #tpu.memory_space<vmem>>, vector<1x8x32xf32>,
    %c6_i32_52 = arith.constant 6 : i32
    %216 = arith.subi %c6_i32_52, %c1_i32 : i32
    %217 = arith.index_cast %216 : i32 to index
    %c0_53 = arith.constant 0 : index
    %c0_54 = arith.constant 0 : index
    %218 = vector.load %arg16[%217, %c0_53, %c0_54] : memref<7x8x32xf32, #tpu.memory_space<vmem>>, vector<1x8x32xf32>
    %219 = vector.shape_cast %218 : vector<1x8x32xf32> to vector<8x32xf32>
    %220 = vector.shape_cast %211 : vector<8x32xf32> to vector<1x8x32xf32>
    tpu.vector_store %arg16[%217, %c0_53, %c0_54], %220 {strides = array<i32>} : memref<7x8x32xf32, #tpu.memory_space<vmem>>, vector<1x8x32xf32>,
    %221 = tpu.concatenate %184, %211 in 1 : vector<8x32xf32>, vector<8x32xf32> -> vector<8x64xf32>
    %c2_i32 = arith.constant 2 : i32
    %222 = arith.index_cast %c2_i32 : i32 to index
    %c0_55 = arith.constant 0 : index
    %c0_56 = arith.constant 0 : index
    %223 = vector.load %arg14[%222, %c0_55, %c0_56] : memref<7x8x192xf32, #tpu.memory_space<vmem>>, vector<1x8x192xf32>
    %224 = vector.shape_cast %223 : vector<1x8x192xf32> to vector<8x192xf32>
    %225 = vector.extract_strided_slice %224 {offsets = [0, 0], sizes = [8, 96], strides = [1, 1]} : vector<8x192xf32> to vector<8x96xf32>
    %c6_i32_57 = arith.constant 6 : i32
    %226 = arith.subi %c6_i32_57, %c2_i32 : i32
    %227 = arith.index_cast %226 : i32 to index
    %c0_58 = arith.constant 0 : index
    %c0_59 = arith.constant 0 : index
    %228 = vector.load %arg14[%227, %c0_58, %c0_59] : memref<7x8x192xf32, #tpu.memory_space<vmem>>, vector<1x8x192xf32>
    %229 = vector.shape_cast %228 : vector<1x8x192xf32> to vector<8x192xf32>
    %230 = vector.extract_strided_slice %229 {offsets = [0, 96], sizes = [8, 96], strides = [1, 1]} : vector<8x192xf32> to vector<8x96xf32>
    %231 = arith.truncf %221 : vector<8x64xf32> to vector<8x64xbf16>
    %cst_60 = arith.constant dense<0.000000e+00> : vector<8x192xf32>
    %232 = tpu.matmul %231, %65, %cst_60 {dimension_numbers = #tpu.dot_dimension_numbers<[1], [0], [0], [1], [0, 0, 1, 1], [], []>} : vector<8x64xbf16>, vector<64x192xbf16>, vector<8x192xf32> -> vector<8x192xf32>
    %233 = vector.broadcast %66 : vector<1x192xf32> to vector<8x192xf32>
    %234 = arith.addf %232, %233 : vector<8x192xf32>
    %235 = vector.extract_strided_slice %225 {offsets = [0, 0], sizes = [8, 32], strides = [1, 1]} : vector<8x96xf32> to vector<8x32xf32>
    %236 = vector.extract_strided_slice %234 {offsets = [0, 0], sizes = [8, 32], strides = [1, 1]} : vector<8x192xf32> to vector<8x32xf32>
    %237 = arith.addf %235, %236 : vector<8x32xf32>
    %238 = arith.negf %237 : vector<8x32xf32>
    %239 = math.exp %238 : vector<8x32xf32>
    %cst_61 = arith.constant 1.000000e+00 : f32
    %240 = vector.broadcast %cst_61 : f32 to vector<8x32xf32>
    %241 = arith.addf %240, %239 : vector<8x32xf32>
    %242 = arith.divf %240, %241 : vector<8x32xf32>
    %243 = vector.extract_strided_slice %225 {offsets = [0, 32], sizes = [8, 32], strides = [1, 1]} : vector<8x96xf32> to vector<8x32xf32>
    %244 = vector.extract_strided_slice %234 {offsets = [0, 32], sizes = [8, 32], strides = [1, 1]} : vector<8x192xf32> to vector<8x32xf32>
    %245 = arith.addf %243, %244 : vector<8x32xf32>
    %246 = arith.negf %245 : vector<8x32xf32>
    %247 = math.exp %246 : vector<8x32xf32>
    %cst_62 = arith.constant 1.000000e+00 : f32
    %248 = vector.broadcast %cst_62 : f32 to vector<8x32xf32>
    %249 = arith.addf %248, %247 : vector<8x32xf32>
    %250 = arith.divf %248, %249 : vector<8x32xf32>
    %251 = vector.extract_strided_slice %225 {offsets = [0, 64], sizes = [8, 32], strides = [1, 1]} : vector<8x96xf32> to vector<8x32xf32>
    %252 = vector.extract_strided_slice %234 {offsets = [0, 64], sizes = [8, 32], strides = [1, 1]} : vector<8x192xf32> to vector<8x32xf32>
    %253 = arith.mulf %242, %252 : vector<8x32xf32>
    %254 = arith.addf %251, %253 : vector<8x32xf32>
    %255 = math.tanh %254 : vector<8x32xf32>
    %cst_63 = arith.constant 1.000000e+00 : f32
    %256 = vector.broadcast %cst_63 : f32 to vector<8x32xf32>
    %257 = arith.subf %256, %250 : vector<8x32xf32>
    %258 = arith.mulf %257, %255 : vector<8x32xf32>
    %259 = vector.extract_strided_slice %221 {offsets = [0, 0], sizes = [8, 32], strides = [1, 1]} : vector<8x64xf32> to vector<8x32xf32>
    %260 = arith.mulf %250, %259 : vector<8x32xf32>
    %261 = arith.addf %258, %260 : vector<8x32xf32>
    %262 = vector.extract_strided_slice %230 {offsets = [0, 0], sizes = [8, 32], strides = [1, 1]} : vector<8x96xf32> to vector<8x32xf32>
    %263 = vector.extract_strided_slice %234 {offsets = [0, 96], sizes = [8, 32], strides = [1, 1]} : vector<8x192xf32> to vector<8x32xf32>
    %264 = arith.addf %262, %263 : vector<8x32xf32>
    %265 = arith.negf %264 : vector<8x32xf32>
    %266 = math.exp %265 : vector<8x32xf32>
    %cst_64 = arith.constant 1.000000e+00 : f32
    %267 = vector.broadcast %cst_64 : f32 to vector<8x32xf32>
    %268 = arith.addf %267, %266 : vector<8x32xf32>
    %269 = arith.divf %267, %268 : vector<8x32xf32>
    %270 = vector.extract_strided_slice %230 {offsets = [0, 32], sizes = [8, 32], strides = [1, 1]} : vector<8x96xf32> to vector<8x32xf32>
    %271 = vector.extract_strided_slice %234 {offsets = [0, 128], sizes = [8, 32], strides = [1, 1]} : vector<8x192xf32> to vector<8x32xf32>
    %272 = arith.addf %270, %271 : vector<8x32xf32>
    %273 = arith.negf %272 : vector<8x32xf32>
    %274 = math.exp %273 : vector<8x32xf32>
    %cst_65 = arith.constant 1.000000e+00 : f32
    %275 = vector.broadcast %cst_65 : f32 to vector<8x32xf32>
    %276 = arith.addf %275, %274 : vector<8x32xf32>
    %277 = arith.divf %275, %276 : vector<8x32xf32>
    %278 = vector.extract_strided_slice %230 {offsets = [0, 64], sizes = [8, 32], strides = [1, 1]} : vector<8x96xf32> to vector<8x32xf32>
    %279 = vector.extract_strided_slice %234 {offsets = [0, 160], sizes = [8, 32], strides = [1, 1]} : vector<8x192xf32> to vector<8x32xf32>
    %280 = arith.mulf %269, %279 : vector<8x32xf32>
    %281 = arith.addf %278, %280 : vector<8x32xf32>
    %282 = math.tanh %281 : vector<8x32xf32>
    %cst_66 = arith.constant 1.000000e+00 : f32
    %283 = vector.broadcast %cst_66 : f32 to vector<8x32xf32>
    %284 = arith.subf %283, %277 : vector<8x32xf32>
    %285 = arith.mulf %284, %282 : vector<8x32xf32>
    %286 = vector.extract_strided_slice %221 {offsets = [0, 32], sizes = [8, 32], strides = [1, 1]} : vector<8x64xf32> to vector<8x32xf32>
    %287 = arith.mulf %277, %286 : vector<8x32xf32>
    %288 = arith.addf %285, %287 : vector<8x32xf32>
    %289 = arith.index_cast %c2_i32 : i32 to index
    %c0_67 = arith.constant 0 : index
    %c0_68 = arith.constant 0 : index
    %290 = vector.load %arg15[%289, %c0_67, %c0_68] : memref<7x8x32xf32, #tpu.memory_space<vmem>>, vector<1x8x32xf32>
    %291 = vector.shape_cast %290 : vector<1x8x32xf32> to vector<8x32xf32>
    %292 = vector.shape_cast %261 : vector<8x32xf32> to vector<1x8x32xf32>
    tpu.vector_store %arg15[%289, %c0_67, %c0_68], %292 {strides = array<i32>} : memref<7x8x32xf32, #tpu.memory_space<vmem>>, vector<1x8x32xf32>,
    %c6_i32_69 = arith.constant 6 : i32
    %293 = arith.subi %c6_i32_69, %c2_i32 : i32
    %294 = arith.index_cast %293 : i32 to index
    %c0_70 = arith.constant 0 : index
    %c0_71 = arith.constant 0 : index
    %295 = vector.load %arg16[%294, %c0_70, %c0_71] : memref<7x8x32xf32, #tpu.memory_space<vmem>>, vector<1x8x32xf32>
    %296 = vector.shape_cast %295 : vector<1x8x32xf32> to vector<8x32xf32>
    %297 = vector.shape_cast %288 : vector<8x32xf32> to vector<1x8x32xf32>
    tpu.vector_store %arg16[%294, %c0_70, %c0_71], %297 {strides = array<i32>} : memref<7x8x32xf32, #tpu.memory_space<vmem>>, vector<1x8x32xf32>,
    %298 = tpu.concatenate %261, %288 in 1 : vector<8x32xf32>, vector<8x32xf32> -> vector<8x64xf32>
    %c3_i32 = arith.constant 3 : i32
    %299 = arith.index_cast %c3_i32 : i32 to index
    %c0_72 = arith.constant 0 : index
    %c0_73 = arith.constant 0 : index
    %300 = vector.load %arg14[%299, %c0_72, %c0_73] : memref<7x8x192xf32, #tpu.memory_space<vmem>>, vector<1x8x192xf32>
    %301 = vector.shape_cast %300 : vector<1x8x192xf32> to vector<8x192xf32>
    %302 = vector.extract_strided_slice %301 {offsets = [0, 0], sizes = [8, 96], strides = [1, 1]} : vector<8x192xf32> to vector<8x96xf32>
    %c6_i32_74 = arith.constant 6 : i32
    %303 = arith.subi %c6_i32_74, %c3_i32 : i32
    %304 = arith.index_cast %303 : i32 to index
    %c0_75 = arith.constant 0 : index
    %c0_76 = arith.constant 0 : index
    %305 = vector.load %arg14[%304, %c0_75, %c0_76] : memref<7x8x192xf32, #tpu.memory_space<vmem>>, vector<1x8x192xf32>
    %306 = vector.shape_cast %305 : vector<1x8x192xf32> to vector<8x192xf32>
    %307 = vector.extract_strided_slice %306 {offsets = [0, 96], sizes = [8, 96], strides = [1, 1]} : vector<8x192xf32> to vector<8x96xf32>
    %308 = arith.truncf %298 : vector<8x64xf32> to vector<8x64xbf16>
    %cst_77 = arith.constant dense<0.000000e+00> : vector<8x192xf32>
    %309 = tpu.matmul %308, %65, %cst_77 {dimension_numbers = #tpu.dot_dimension_numbers<[1], [0], [0], [1], [0, 0, 1, 1], [], []>} : vector<8x64xbf16>, vector<64x192xbf16>, vector<8x192xf32> -> vector<8x192xf32>
    %310 = vector.broadcast %66 : vector<1x192xf32> to vector<8x192xf32>
    %311 = arith.addf %309, %310 : vector<8x192xf32>
    %312 = vector.extract_strided_slice %302 {offsets = [0, 0], sizes = [8, 32], strides = [1, 1]} : vector<8x96xf32> to vector<8x32xf32>
    %313 = vector.extract_strided_slice %311 {offsets = [0, 0], sizes = [8, 32], strides = [1, 1]} : vector<8x192xf32> to vector<8x32xf32>
    %314 = arith.addf %312, %313 : vector<8x32xf32>
    %315 = arith.negf %314 : vector<8x32xf32>
    %316 = math.exp %315 : vector<8x32xf32>
    %cst_78 = arith.constant 1.000000e+00 : f32
    %317 = vector.broadcast %cst_78 : f32 to vector<8x32xf32>
    %318 = arith.addf %317, %316 : vector<8x32xf32>
    %319 = arith.divf %317, %318 : vector<8x32xf32>
    %320 = vector.extract_strided_slice %302 {offsets = [0, 32], sizes = [8, 32], strides = [1, 1]} : vector<8x96xf32> to vector<8x32xf32>
    %321 = vector.extract_strided_slice %311 {offsets = [0, 32], sizes = [8, 32], strides = [1, 1]} : vector<8x192xf32> to vector<8x32xf32>
    %322 = arith.addf %320, %321 : vector<8x32xf32>
    %323 = arith.negf %322 : vector<8x32xf32>
    %324 = math.exp %323 : vector<8x32xf32>
    %cst_79 = arith.constant 1.000000e+00 : f32
    %325 = vector.broadcast %cst_79 : f32 to vector<8x32xf32>
    %326 = arith.addf %325, %324 : vector<8x32xf32>
    %327 = arith.divf %325, %326 : vector<8x32xf32>
    %328 = vector.extract_strided_slice %302 {offsets = [0, 64], sizes = [8, 32], strides = [1, 1]} : vector<8x96xf32> to vector<8x32xf32>
    %329 = vector.extract_strided_slice %311 {offsets = [0, 64], sizes = [8, 32], strides = [1, 1]} : vector<8x192xf32> to vector<8x32xf32>
    %330 = arith.mulf %319, %329 : vector<8x32xf32>
    %331 = arith.addf %328, %330 : vector<8x32xf32>
    %332 = math.tanh %331 : vector<8x32xf32>
    %cst_80 = arith.constant 1.000000e+00 : f32
    %333 = vector.broadcast %cst_80 : f32 to vector<8x32xf32>
    %334 = arith.subf %333, %327 : vector<8x32xf32>
    %335 = arith.mulf %334, %332 : vector<8x32xf32>
    %336 = vector.extract_strided_slice %298 {offsets = [0, 0], sizes = [8, 32], strides = [1, 1]} : vector<8x64xf32> to vector<8x32xf32>
    %337 = arith.mulf %327, %336 : vector<8x32xf32>
    %338 = arith.addf %335, %337 : vector<8x32xf32>
    %339 = vector.extract_strided_slice %307 {offsets = [0, 0], sizes = [8, 32], strides = [1, 1]} : vector<8x96xf32> to vector<8x32xf32>
    %340 = vector.extract_strided_slice %311 {offsets = [0, 96], sizes = [8, 32], strides = [1, 1]} : vector<8x192xf32> to vector<8x32xf32>
    %341 = arith.addf %339, %340 : vector<8x32xf32>
    %342 = arith.negf %341 : vector<8x32xf32>
    %343 = math.exp %342 : vector<8x32xf32>
    %cst_81 = arith.constant 1.000000e+00 : f32
    %344 = vector.broadcast %cst_81 : f32 to vector<8x32xf32>
    %345 = arith.addf %344, %343 : vector<8x32xf32>
    %346 = arith.divf %344, %345 : vector<8x32xf32>
    %347 = vector.extract_strided_slice %307 {offsets = [0, 32], sizes = [8, 32], strides = [1, 1]} : vector<8x96xf32> to vector<8x32xf32>
    %348 = vector.extract_strided_slice %311 {offsets = [0, 128], sizes = [8, 32], strides = [1, 1]} : vector<8x192xf32> to vector<8x32xf32>
    %349 = arith.addf %347, %348 : vector<8x32xf32>
    %350 = arith.negf %349 : vector<8x32xf32>
    %351 = math.exp %350 : vector<8x32xf32>
    %cst_82 = arith.constant 1.000000e+00 : f32
    %352 = vector.broadcast %cst_82 : f32 to vector<8x32xf32>
    %353 = arith.addf %352, %351 : vector<8x32xf32>
    %354 = arith.divf %352, %353 : vector<8x32xf32>
    %355 = vector.extract_strided_slice %307 {offsets = [0, 64], sizes = [8, 32], strides = [1, 1]} : vector<8x96xf32> to vector<8x32xf32>
    %356 = vector.extract_strided_slice %311 {offsets = [0, 160], sizes = [8, 32], strides = [1, 1]} : vector<8x192xf32> to vector<8x32xf32>
    %357 = arith.mulf %346, %356 : vector<8x32xf32>
    %358 = arith.addf %355, %357 : vector<8x32xf32>
    %359 = math.tanh %358 : vector<8x32xf32>
    %cst_83 = arith.constant 1.000000e+00 : f32
    %360 = vector.broadcast %cst_83 : f32 to vector<8x32xf32>
    %361 = arith.subf %360, %354 : vector<8x32xf32>
    %362 = arith.mulf %361, %359 : vector<8x32xf32>
    %363 = vector.extract_strided_slice %298 {offsets = [0, 32], sizes = [8, 32], strides = [1, 1]} : vector<8x64xf32> to vector<8x32xf32>
    %364 = arith.mulf %354, %363 : vector<8x32xf32>
    %365 = arith.addf %362, %364 : vector<8x32xf32>
    %366 = arith.index_cast %c3_i32 : i32 to index
    %c0_84 = arith.constant 0 : index
    %c0_85 = arith.constant 0 : index
    %367 = vector.load %arg15[%366, %c0_84, %c0_85] : memref<7x8x32xf32, #tpu.memory_space<vmem>>, vector<1x8x32xf32>
    %368 = vector.shape_cast %367 : vector<1x8x32xf32> to vector<8x32xf32>
    %369 = vector.shape_cast %338 : vector<8x32xf32> to vector<1x8x32xf32>
    tpu.vector_store %arg15[%366, %c0_84, %c0_85], %369 {strides = array<i32>} : memref<7x8x32xf32, #tpu.memory_space<vmem>>, vector<1x8x32xf32>,
    %c6_i32_86 = arith.constant 6 : i32
    %370 = arith.subi %c6_i32_86, %c3_i32 : i32
    %371 = arith.index_cast %370 : i32 to index
    %c0_87 = arith.constant 0 : index
    %c0_88 = arith.constant 0 : index
    %372 = vector.load %arg16[%371, %c0_87, %c0_88] : memref<7x8x32xf32, #tpu.memory_space<vmem>>, vector<1x8x32xf32>
    %373 = vector.shape_cast %372 : vector<1x8x32xf32> to vector<8x32xf32>
    %374 = vector.shape_cast %365 : vector<8x32xf32> to vector<1x8x32xf32>
    tpu.vector_store %arg16[%371, %c0_87, %c0_88], %374 {strides = array<i32>} : memref<7x8x32xf32, #tpu.memory_space<vmem>>, vector<1x8x32xf32>,
    %375 = tpu.concatenate %338, %365 in 1 : vector<8x32xf32>, vector<8x32xf32> -> vector<8x64xf32>
    %c4_i32 = arith.constant 4 : i32
    %376 = arith.index_cast %c4_i32 : i32 to index
    %c0_89 = arith.constant 0 : index
    %c0_90 = arith.constant 0 : index
    %377 = vector.load %arg14[%376, %c0_89, %c0_90] : memref<7x8x192xf32, #tpu.memory_space<vmem>>, vector<1x8x192xf32>
    %378 = vector.shape_cast %377 : vector<1x8x192xf32> to vector<8x192xf32>
    %379 = vector.extract_strided_slice %378 {offsets = [0, 0], sizes = [8, 96], strides = [1, 1]} : vector<8x192xf32> to vector<8x96xf32>
    %c6_i32_91 = arith.constant 6 : i32
    %380 = arith.subi %c6_i32_91, %c4_i32 : i32
    %381 = arith.index_cast %380 : i32 to index
    %c0_92 = arith.constant 0 : index
    %c0_93 = arith.constant 0 : index
    %382 = vector.load %arg14[%381, %c0_92, %c0_93] : memref<7x8x192xf32, #tpu.memory_space<vmem>>, vector<1x8x192xf32>
    %383 = vector.shape_cast %382 : vector<1x8x192xf32> to vector<8x192xf32>
    %384 = vector.extract_strided_slice %383 {offsets = [0, 96], sizes = [8, 96], strides = [1, 1]} : vector<8x192xf32> to vector<8x96xf32>
    %385 = arith.truncf %375 : vector<8x64xf32> to vector<8x64xbf16>
    %cst_94 = arith.constant dense<0.000000e+00> : vector<8x192xf32>
    %386 = tpu.matmul %385, %65, %cst_94 {dimension_numbers = #tpu.dot_dimension_numbers<[1], [0], [0], [1], [0, 0, 1, 1], [], []>} : vector<8x64xbf16>, vector<64x192xbf16>, vector<8x192xf32> -> vector<8x192xf32>
    %387 = vector.broadcast %66 : vector<1x192xf32> to vector<8x192xf32>
    %388 = arith.addf %386, %387 : vector<8x192xf32>
    %389 = vector.extract_strided_slice %379 {offsets = [0, 0], sizes = [8, 32], strides = [1, 1]} : vector<8x96xf32> to vector<8x32xf32>
    %390 = vector.extract_strided_slice %388 {offsets = [0, 0], sizes = [8, 32], strides = [1, 1]} : vector<8x192xf32> to vector<8x32xf32>
    %391 = arith.addf %389, %390 : vector<8x32xf32>
    %392 = arith.negf %391 : vector<8x32xf32>
    %393 = math.exp %392 : vector<8x32xf32>
    %cst_95 = arith.constant 1.000000e+00 : f32
    %394 = vector.broadcast %cst_95 : f32 to vector<8x32xf32>
    %395 = arith.addf %394, %393 : vector<8x32xf32>
    %396 = arith.divf %394, %395 : vector<8x32xf32>
    %397 = vector.extract_strided_slice %379 {offsets = [0, 32], sizes = [8, 32], strides = [1, 1]} : vector<8x96xf32> to vector<8x32xf32>
    %398 = vector.extract_strided_slice %388 {offsets = [0, 32], sizes = [8, 32], strides = [1, 1]} : vector<8x192xf32> to vector<8x32xf32>
    %399 = arith.addf %397, %398 : vector<8x32xf32>
    %400 = arith.negf %399 : vector<8x32xf32>
    %401 = math.exp %400 : vector<8x32xf32>
    %cst_96 = arith.constant 1.000000e+00 : f32
    %402 = vector.broadcast %cst_96 : f32 to vector<8x32xf32>
    %403 = arith.addf %402, %401 : vector<8x32xf32>
    %404 = arith.divf %402, %403 : vector<8x32xf32>
    %405 = vector.extract_strided_slice %379 {offsets = [0, 64], sizes = [8, 32], strides = [1, 1]} : vector<8x96xf32> to vector<8x32xf32>
    %406 = vector.extract_strided_slice %388 {offsets = [0, 64], sizes = [8, 32], strides = [1, 1]} : vector<8x192xf32> to vector<8x32xf32>
    %407 = arith.mulf %396, %406 : vector<8x32xf32>
    %408 = arith.addf %405, %407 : vector<8x32xf32>
    %409 = math.tanh %408 : vector<8x32xf32>
    %cst_97 = arith.constant 1.000000e+00 : f32
    %410 = vector.broadcast %cst_97 : f32 to vector<8x32xf32>
    %411 = arith.subf %410, %404 : vector<8x32xf32>
    %412 = arith.mulf %411, %409 : vector<8x32xf32>
    %413 = vector.extract_strided_slice %375 {offsets = [0, 0], sizes = [8, 32], strides = [1, 1]} : vector<8x64xf32> to vector<8x32xf32>
    %414 = arith.mulf %404, %413 : vector<8x32xf32>
    %415 = arith.addf %412, %414 : vector<8x32xf32>
    %416 = vector.extract_strided_slice %384 {offsets = [0, 0], sizes = [8, 32], strides = [1, 1]} : vector<8x96xf32> to vector<8x32xf32>
    %417 = vector.extract_strided_slice %388 {offsets = [0, 96], sizes = [8, 32], strides = [1, 1]} : vector<8x192xf32> to vector<8x32xf32>
    %418 = arith.addf %416, %417 : vector<8x32xf32>
    %419 = arith.negf %418 : vector<8x32xf32>
    %420 = math.exp %419 : vector<8x32xf32>
    %cst_98 = arith.constant 1.000000e+00 : f32
    %421 = vector.broadcast %cst_98 : f32 to vector<8x32xf32>
    %422 = arith.addf %421, %420 : vector<8x32xf32>
    %423 = arith.divf %421, %422 : vector<8x32xf32>
    %424 = vector.extract_strided_slice %384 {offsets = [0, 32], sizes = [8, 32], strides = [1, 1]} : vector<8x96xf32> to vector<8x32xf32>
    %425 = vector.extract_strided_slice %388 {offsets = [0, 128], sizes = [8, 32], strides = [1, 1]} : vector<8x192xf32> to vector<8x32xf32>
    %426 = arith.addf %424, %425 : vector<8x32xf32>
    %427 = arith.negf %426 : vector<8x32xf32>
    %428 = math.exp %427 : vector<8x32xf32>
    %cst_99 = arith.constant 1.000000e+00 : f32
    %429 = vector.broadcast %cst_99 : f32 to vector<8x32xf32>
    %430 = arith.addf %429, %428 : vector<8x32xf32>
    %431 = arith.divf %429, %430 : vector<8x32xf32>
    %432 = vector.extract_strided_slice %384 {offsets = [0, 64], sizes = [8, 32], strides = [1, 1]} : vector<8x96xf32> to vector<8x32xf32>
    %433 = vector.extract_strided_slice %388 {offsets = [0, 160], sizes = [8, 32], strides = [1, 1]} : vector<8x192xf32> to vector<8x32xf32>
    %434 = arith.mulf %423, %433 : vector<8x32xf32>
    %435 = arith.addf %432, %434 : vector<8x32xf32>
    %436 = math.tanh %435 : vector<8x32xf32>
    %cst_100 = arith.constant 1.000000e+00 : f32
    %437 = vector.broadcast %cst_100 : f32 to vector<8x32xf32>
    %438 = arith.subf %437, %431 : vector<8x32xf32>
    %439 = arith.mulf %438, %436 : vector<8x32xf32>
    %440 = vector.extract_strided_slice %375 {offsets = [0, 32], sizes = [8, 32], strides = [1, 1]} : vector<8x64xf32> to vector<8x32xf32>
    %441 = arith.mulf %431, %440 : vector<8x32xf32>
    %442 = arith.addf %439, %441 : vector<8x32xf32>
    %443 = arith.index_cast %c4_i32 : i32 to index
    %c0_101 = arith.constant 0 : index
    %c0_102 = arith.constant 0 : index
    %444 = vector.load %arg15[%443, %c0_101, %c0_102] : memref<7x8x32xf32, #tpu.memory_space<vmem>>, vector<1x8x32xf32>
    %445 = vector.shape_cast %444 : vector<1x8x32xf32> to vector<8x32xf32>
    %446 = vector.shape_cast %415 : vector<8x32xf32> to vector<1x8x32xf32>
    tpu.vector_store %arg15[%443, %c0_101, %c0_102], %446 {strides = array<i32>} : memref<7x8x32xf32, #tpu.memory_space<vmem>>, vector<1x8x32xf32>,
    %c6_i32_103 = arith.constant 6 : i32
    %447 = arith.subi %c6_i32_103, %c4_i32 : i32
    %448 = arith.index_cast %447 : i32 to index
    %c0_104 = arith.constant 0 : index
    %c0_105 = arith.constant 0 : index
    %449 = vector.load %arg16[%448, %c0_104, %c0_105] : memref<7x8x32xf32, #tpu.memory_space<vmem>>, vector<1x8x32xf32>
    %450 = vector.shape_cast %449 : vector<1x8x32xf32> to vector<8x32xf32>
    %451 = vector.shape_cast %442 : vector<8x32xf32> to vector<1x8x32xf32>
    tpu.vector_store %arg16[%448, %c0_104, %c0_105], %451 {strides = array<i32>} : memref<7x8x32xf32, #tpu.memory_space<vmem>>, vector<1x8x32xf32>,
    %452 = tpu.concatenate %415, %442 in 1 : vector<8x32xf32>, vector<8x32xf32> -> vector<8x64xf32>
    %c5_i32 = arith.constant 5 : i32
    %453 = arith.index_cast %c5_i32 : i32 to index
    %c0_106 = arith.constant 0 : index
    %c0_107 = arith.constant 0 : index
    %454 = vector.load %arg14[%453, %c0_106, %c0_107] : memref<7x8x192xf32, #tpu.memory_space<vmem>>, vector<1x8x192xf32>
    %455 = vector.shape_cast %454 : vector<1x8x192xf32> to vector<8x192xf32>
    %456 = vector.extract_strided_slice %455 {offsets = [0, 0], sizes = [8, 96], strides = [1, 1]} : vector<8x192xf32> to vector<8x96xf32>
    %c6_i32_108 = arith.constant 6 : i32
    %457 = arith.subi %c6_i32_108, %c5_i32 : i32
    %458 = arith.index_cast %457 : i32 to index
    %c0_109 = arith.constant 0 : index
    %c0_110 = arith.constant 0 : index
    %459 = vector.load %arg14[%458, %c0_109, %c0_110] : memref<7x8x192xf32, #tpu.memory_space<vmem>>, vector<1x8x192xf32>
    %460 = vector.shape_cast %459 : vector<1x8x192xf32> to vector<8x192xf32>
    %461 = vector.extract_strided_slice %460 {offsets = [0, 96], sizes = [8, 96], strides = [1, 1]} : vector<8x192xf32> to vector<8x96xf32>
    %462 = arith.truncf %452 : vector<8x64xf32> to vector<8x64xbf16>
    %cst_111 = arith.constant dense<0.000000e+00> : vector<8x192xf32>
    %463 = tpu.matmul %462, %65, %cst_111 {dimension_numbers = #tpu.dot_dimension_numbers<[1], [0], [0], [1], [0, 0, 1, 1], [], []>} : vector<8x64xbf16>, vector<64x192xbf16>, vector<8x192xf32> -> vector<8x192xf32>
    %464 = vector.broadcast %66 : vector<1x192xf32> to vector<8x192xf32>
    %465 = arith.addf %463, %464 : vector<8x192xf32>
    %466 = vector.extract_strided_slice %456 {offsets = [0, 0], sizes = [8, 32], strides = [1, 1]} : vector<8x96xf32> to vector<8x32xf32>
    %467 = vector.extract_strided_slice %465 {offsets = [0, 0], sizes = [8, 32], strides = [1, 1]} : vector<8x192xf32> to vector<8x32xf32>
    %468 = arith.addf %466, %467 : vector<8x32xf32>
    %469 = arith.negf %468 : vector<8x32xf32>
    %470 = math.exp %469 : vector<8x32xf32>
    %cst_112 = arith.constant 1.000000e+00 : f32
    %471 = vector.broadcast %cst_112 : f32 to vector<8x32xf32>
    %472 = arith.addf %471, %470 : vector<8x32xf32>
    %473 = arith.divf %471, %472 : vector<8x32xf32>
    %474 = vector.extract_strided_slice %456 {offsets = [0, 32], sizes = [8, 32], strides = [1, 1]} : vector<8x96xf32> to vector<8x32xf32>
    %475 = vector.extract_strided_slice %465 {offsets = [0, 32], sizes = [8, 32], strides = [1, 1]} : vector<8x192xf32> to vector<8x32xf32>
    %476 = arith.addf %474, %475 : vector<8x32xf32>
    %477 = arith.negf %476 : vector<8x32xf32>
    %478 = math.exp %477 : vector<8x32xf32>
    %cst_113 = arith.constant 1.000000e+00 : f32
    %479 = vector.broadcast %cst_113 : f32 to vector<8x32xf32>
    %480 = arith.addf %479, %478 : vector<8x32xf32>
    %481 = arith.divf %479, %480 : vector<8x32xf32>
    %482 = vector.extract_strided_slice %456 {offsets = [0, 64], sizes = [8, 32], strides = [1, 1]} : vector<8x96xf32> to vector<8x32xf32>
    %483 = vector.extract_strided_slice %465 {offsets = [0, 64], sizes = [8, 32], strides = [1, 1]} : vector<8x192xf32> to vector<8x32xf32>
    %484 = arith.mulf %473, %483 : vector<8x32xf32>
    %485 = arith.addf %482, %484 : vector<8x32xf32>
    %486 = math.tanh %485 : vector<8x32xf32>
    %cst_114 = arith.constant 1.000000e+00 : f32
    %487 = vector.broadcast %cst_114 : f32 to vector<8x32xf32>
    %488 = arith.subf %487, %481 : vector<8x32xf32>
    %489 = arith.mulf %488, %486 : vector<8x32xf32>
    %490 = vector.extract_strided_slice %452 {offsets = [0, 0], sizes = [8, 32], strides = [1, 1]} : vector<8x64xf32> to vector<8x32xf32>
    %491 = arith.mulf %481, %490 : vector<8x32xf32>
    %492 = arith.addf %489, %491 : vector<8x32xf32>
    %493 = vector.extract_strided_slice %461 {offsets = [0, 0], sizes = [8, 32], strides = [1, 1]} : vector<8x96xf32> to vector<8x32xf32>
    %494 = vector.extract_strided_slice %465 {offsets = [0, 96], sizes = [8, 32], strides = [1, 1]} : vector<8x192xf32> to vector<8x32xf32>
    %495 = arith.addf %493, %494 : vector<8x32xf32>
    %496 = arith.negf %495 : vector<8x32xf32>
    %497 = math.exp %496 : vector<8x32xf32>
    %cst_115 = arith.constant 1.000000e+00 : f32
    %498 = vector.broadcast %cst_115 : f32 to vector<8x32xf32>
    %499 = arith.addf %498, %497 : vector<8x32xf32>
    %500 = arith.divf %498, %499 : vector<8x32xf32>
    %501 = vector.extract_strided_slice %461 {offsets = [0, 32], sizes = [8, 32], strides = [1, 1]} : vector<8x96xf32> to vector<8x32xf32>
    %502 = vector.extract_strided_slice %465 {offsets = [0, 128], sizes = [8, 32], strides = [1, 1]} : vector<8x192xf32> to vector<8x32xf32>
    %503 = arith.addf %501, %502 : vector<8x32xf32>
    %504 = arith.negf %503 : vector<8x32xf32>
    %505 = math.exp %504 : vector<8x32xf32>
    %cst_116 = arith.constant 1.000000e+00 : f32
    %506 = vector.broadcast %cst_116 : f32 to vector<8x32xf32>
    %507 = arith.addf %506, %505 : vector<8x32xf32>
    %508 = arith.divf %506, %507 : vector<8x32xf32>
    %509 = vector.extract_strided_slice %461 {offsets = [0, 64], sizes = [8, 32], strides = [1, 1]} : vector<8x96xf32> to vector<8x32xf32>
    %510 = vector.extract_strided_slice %465 {offsets = [0, 160], sizes = [8, 32], strides = [1, 1]} : vector<8x192xf32> to vector<8x32xf32>
    %511 = arith.mulf %500, %510 : vector<8x32xf32>
    %512 = arith.addf %509, %511 : vector<8x32xf32>
    %513 = math.tanh %512 : vector<8x32xf32>
    %cst_117 = arith.constant 1.000000e+00 : f32
    %514 = vector.broadcast %cst_117 : f32 to vector<8x32xf32>
    %515 = arith.subf %514, %508 : vector<8x32xf32>
    %516 = arith.mulf %515, %513 : vector<8x32xf32>
    %517 = vector.extract_strided_slice %452 {offsets = [0, 32], sizes = [8, 32], strides = [1, 1]} : vector<8x64xf32> to vector<8x32xf32>
    %518 = arith.mulf %508, %517 : vector<8x32xf32>
    %519 = arith.addf %516, %518 : vector<8x32xf32>
    %520 = arith.index_cast %c5_i32 : i32 to index
    %c0_118 = arith.constant 0 : index
    %c0_119 = arith.constant 0 : index
    %521 = vector.load %arg15[%520, %c0_118, %c0_119] : memref<7x8x32xf32, #tpu.memory_space<vmem>>, vector<1x8x32xf32>
    %522 = vector.shape_cast %521 : vector<1x8x32xf32> to vector<8x32xf32>
    %523 = vector.shape_cast %492 : vector<8x32xf32> to vector<1x8x32xf32>
    tpu.vector_store %arg15[%520, %c0_118, %c0_119], %523 {strides = array<i32>} : memref<7x8x32xf32, #tpu.memory_space<vmem>>, vector<1x8x32xf32>,
    %c6_i32_120 = arith.constant 6 : i32
    %524 = arith.subi %c6_i32_120, %c5_i32 : i32
    %525 = arith.index_cast %524 : i32 to index
    %c0_121 = arith.constant 0 : index
    %c0_122 = arith.constant 0 : index
    %526 = vector.load %arg16[%525, %c0_121, %c0_122] : memref<7x8x32xf32, #tpu.memory_space<vmem>>, vector<1x8x32xf32>
    %527 = vector.shape_cast %526 : vector<1x8x32xf32> to vector<8x32xf32>
    %528 = vector.shape_cast %519 : vector<8x32xf32> to vector<1x8x32xf32>
    tpu.vector_store %arg16[%525, %c0_121, %c0_122], %528 {strides = array<i32>} : memref<7x8x32xf32, #tpu.memory_space<vmem>>, vector<1x8x32xf32>,
    %529 = tpu.concatenate %492, %519 in 1 : vector<8x32xf32>, vector<8x32xf32> -> vector<8x64xf32>
    %c6_i32_123 = arith.constant 6 : i32
    %530 = arith.index_cast %c6_i32_123 : i32 to index
    %c0_124 = arith.constant 0 : index
    %c0_125 = arith.constant 0 : index
    %531 = vector.load %arg14[%530, %c0_124, %c0_125] : memref<7x8x192xf32, #tpu.memory_space<vmem>>, vector<1x8x192xf32>
    %532 = vector.shape_cast %531 : vector<1x8x192xf32> to vector<8x192xf32>
    %533 = vector.extract_strided_slice %532 {offsets = [0, 0], sizes = [8, 96], strides = [1, 1]} : vector<8x192xf32> to vector<8x96xf32>
    %c6_i32_126 = arith.constant 6 : i32
    %534 = arith.subi %c6_i32_126, %c6_i32_123 : i32
    %535 = arith.index_cast %534 : i32 to index
    %c0_127 = arith.constant 0 : index
    %c0_128 = arith.constant 0 : index
    %536 = vector.load %arg14[%535, %c0_127, %c0_128] : memref<7x8x192xf32, #tpu.memory_space<vmem>>, vector<1x8x192xf32>
    %537 = vector.shape_cast %536 : vector<1x8x192xf32> to vector<8x192xf32>
    %538 = vector.extract_strided_slice %537 {offsets = [0, 96], sizes = [8, 96], strides = [1, 1]} : vector<8x192xf32> to vector<8x96xf32>
    %539 = arith.truncf %529 : vector<8x64xf32> to vector<8x64xbf16>
    %cst_129 = arith.constant dense<0.000000e+00> : vector<8x192xf32>
    %540 = tpu.matmul %539, %65, %cst_129 {dimension_numbers = #tpu.dot_dimension_numbers<[1], [0], [0], [1], [0, 0, 1, 1], [], []>} : vector<8x64xbf16>, vector<64x192xbf16>, vector<8x192xf32> -> vector<8x192xf32>
    %541 = vector.broadcast %66 : vector<1x192xf32> to vector<8x192xf32>
    %542 = arith.addf %540, %541 : vector<8x192xf32>
    %543 = vector.extract_strided_slice %533 {offsets = [0, 0], sizes = [8, 32], strides = [1, 1]} : vector<8x96xf32> to vector<8x32xf32>
    %544 = vector.extract_strided_slice %542 {offsets = [0, 0], sizes = [8, 32], strides = [1, 1]} : vector<8x192xf32> to vector<8x32xf32>
    %545 = arith.addf %543, %544 : vector<8x32xf32>
    %546 = arith.negf %545 : vector<8x32xf32>
    %547 = math.exp %546 : vector<8x32xf32>
    %cst_130 = arith.constant 1.000000e+00 : f32
    %548 = vector.broadcast %cst_130 : f32 to vector<8x32xf32>
    %549 = arith.addf %548, %547 : vector<8x32xf32>
    %550 = arith.divf %548, %549 : vector<8x32xf32>
    %551 = vector.extract_strided_slice %533 {offsets = [0, 32], sizes = [8, 32], strides = [1, 1]} : vector<8x96xf32> to vector<8x32xf32>
    %552 = vector.extract_strided_slice %542 {offsets = [0, 32], sizes = [8, 32], strides = [1, 1]} : vector<8x192xf32> to vector<8x32xf32>
    %553 = arith.addf %551, %552 : vector<8x32xf32>
    %554 = arith.negf %553 : vector<8x32xf32>
    %555 = math.exp %554 : vector<8x32xf32>
    %cst_131 = arith.constant 1.000000e+00 : f32
    %556 = vector.broadcast %cst_131 : f32 to vector<8x32xf32>
    %557 = arith.addf %556, %555 : vector<8x32xf32>
    %558 = arith.divf %556, %557 : vector<8x32xf32>
    %559 = vector.extract_strided_slice %533 {offsets = [0, 64], sizes = [8, 32], strides = [1, 1]} : vector<8x96xf32> to vector<8x32xf32>
    %560 = vector.extract_strided_slice %542 {offsets = [0, 64], sizes = [8, 32], strides = [1, 1]} : vector<8x192xf32> to vector<8x32xf32>
    %561 = arith.mulf %550, %560 : vector<8x32xf32>
    %562 = arith.addf %559, %561 : vector<8x32xf32>
    %563 = math.tanh %562 : vector<8x32xf32>
    %cst_132 = arith.constant 1.000000e+00 : f32
    %564 = vector.broadcast %cst_132 : f32 to vector<8x32xf32>
    %565 = arith.subf %564, %558 : vector<8x32xf32>
    %566 = arith.mulf %565, %563 : vector<8x32xf32>
    %567 = vector.extract_strided_slice %529 {offsets = [0, 0], sizes = [8, 32], strides = [1, 1]} : vector<8x64xf32> to vector<8x32xf32>
    %568 = arith.mulf %558, %567 : vector<8x32xf32>
    %569 = arith.addf %566, %568 : vector<8x32xf32>
    %570 = vector.extract_strided_slice %538 {offsets = [0, 0], sizes = [8, 32], strides = [1, 1]} : vector<8x96xf32> to vector<8x32xf32>
    %571 = vector.extract_strided_slice %542 {offsets = [0, 96], sizes = [8, 32], strides = [1, 1]} : vector<8x192xf32> to vector<8x32xf32>
    %572 = arith.addf %570, %571 : vector<8x32xf32>
    %573 = arith.negf %572 : vector<8x32xf32>
    %574 = math.exp %573 : vector<8x32xf32>
    %cst_133 = arith.constant 1.000000e+00 : f32
    %575 = vector.broadcast %cst_133 : f32 to vector<8x32xf32>
    %576 = arith.addf %575, %574 : vector<8x32xf32>
    %577 = arith.divf %575, %576 : vector<8x32xf32>
    %578 = vector.extract_strided_slice %538 {offsets = [0, 32], sizes = [8, 32], strides = [1, 1]} : vector<8x96xf32> to vector<8x32xf32>
    %579 = vector.extract_strided_slice %542 {offsets = [0, 128], sizes = [8, 32], strides = [1, 1]} : vector<8x192xf32> to vector<8x32xf32>
    %580 = arith.addf %578, %579 : vector<8x32xf32>
    %581 = arith.negf %580 : vector<8x32xf32>
    %582 = math.exp %581 : vector<8x32xf32>
    %cst_134 = arith.constant 1.000000e+00 : f32
    %583 = vector.broadcast %cst_134 : f32 to vector<8x32xf32>
    %584 = arith.addf %583, %582 : vector<8x32xf32>
    %585 = arith.divf %583, %584 : vector<8x32xf32>
    %586 = vector.extract_strided_slice %538 {offsets = [0, 64], sizes = [8, 32], strides = [1, 1]} : vector<8x96xf32> to vector<8x32xf32>
    %587 = vector.extract_strided_slice %542 {offsets = [0, 160], sizes = [8, 32], strides = [1, 1]} : vector<8x192xf32> to vector<8x32xf32>
    %588 = arith.mulf %577, %587 : vector<8x32xf32>
    %589 = arith.addf %586, %588 : vector<8x32xf32>
    %590 = math.tanh %589 : vector<8x32xf32>
    %cst_135 = arith.constant 1.000000e+00 : f32
    %591 = vector.broadcast %cst_135 : f32 to vector<8x32xf32>
    %592 = arith.subf %591, %585 : vector<8x32xf32>
    %593 = arith.mulf %592, %590 : vector<8x32xf32>
    %594 = vector.extract_strided_slice %529 {offsets = [0, 32], sizes = [8, 32], strides = [1, 1]} : vector<8x64xf32> to vector<8x32xf32>
    %595 = arith.mulf %585, %594 : vector<8x32xf32>
    %596 = arith.addf %593, %595 : vector<8x32xf32>
    %597 = arith.index_cast %c6_i32_123 : i32 to index
    %c0_136 = arith.constant 0 : index
    %c0_137 = arith.constant 0 : index
    %598 = vector.load %arg15[%597, %c0_136, %c0_137] : memref<7x8x32xf32, #tpu.memory_space<vmem>>, vector<1x8x32xf32>
    %599 = vector.shape_cast %598 : vector<1x8x32xf32> to vector<8x32xf32>
    %600 = vector.shape_cast %569 : vector<8x32xf32> to vector<1x8x32xf32>
    tpu.vector_store %arg15[%597, %c0_136, %c0_137], %600 {strides = array<i32>} : memref<7x8x32xf32, #tpu.memory_space<vmem>>, vector<1x8x32xf32>,
    %c6_i32_138 = arith.constant 6 : i32
    %601 = arith.subi %c6_i32_138, %c6_i32_123 : i32
    %602 = arith.index_cast %601 : i32 to index
    %c0_139 = arith.constant 0 : index
    %c0_140 = arith.constant 0 : index
    %603 = vector.load %arg16[%602, %c0_139, %c0_140] : memref<7x8x32xf32, #tpu.memory_space<vmem>>, vector<1x8x32xf32>
    %604 = vector.shape_cast %603 : vector<1x8x32xf32> to vector<8x32xf32>
    %605 = vector.shape_cast %596 : vector<8x32xf32> to vector<1x8x32xf32>
    tpu.vector_store %arg16[%602, %c0_139, %c0_140], %605 {strides = array<i32>} : memref<7x8x32xf32, #tpu.memory_space<vmem>>, vector<1x8x32xf32>,
    %606 = tpu.concatenate %569, %596 in 1 : vector<8x32xf32>, vector<8x32xf32> -> vector<8x64xf32>
    %c7_i32 = arith.constant 7 : i32
    %c0_141 = arith.constant 0 : index
    %c0_142 = arith.constant 0 : index
    %c0_143 = arith.constant 0 : index
    %607 = vector.load %arg15[%c0_141, %c0_142, %c0_143] : memref<7x8x32xf32, #tpu.memory_space<vmem>>, vector<7x8x32xf32>
    %c0_144 = arith.constant 0 : index
    %c0_145 = arith.constant 0 : index
    %c0_146 = arith.constant 0 : index
    %608 = vector.load %arg16[%c0_144, %c0_145, %c0_146] : memref<7x8x32xf32, #tpu.memory_space<vmem>>, vector<7x8x32xf32>
    %609 = tpu.concatenate %607, %608 in 2 : vector<7x8x32xf32>, vector<7x8x32xf32> -> vector<7x8x64xf32>
    %cst_147 = arith.constant 0.000000e+00 : f32
    %610 = vector.broadcast %cst_147 : f32 to vector<7x8x64xf32>
    %611 = arith.maximumf %609, %610 : vector<7x8x64xf32>
    %612 = vector.shape_cast %611 : vector<7x8x64xf32> to vector<56x64xf32>
    %613 = arith.truncf %612 : vector<56x64xf32> to vector<56x64xbf16>
    %c0_148 = arith.constant 0 : index
    %c0_149 = arith.constant 0 : index
    %614 = vector.load %arg8[%c0_148, %c0_149] : memref<64x50xbf16, #tpu.memory_space<vmem>>, vector<64x50xbf16>
    %cst_150 = arith.constant dense<0.000000e+00> : vector<56x50xf32>
    %615 = tpu.matmul %613, %614, %cst_150 {dimension_numbers = #tpu.dot_dimension_numbers<[1], [0], [0], [1], [0, 0, 1, 1], [], []>} : vector<56x64xbf16>, vector<64x50xbf16>, vector<56x50xf32> -> vector<56x50xf32>
    %c0_151 = arith.constant 0 : index
    %c0_152 = arith.constant 0 : index
    %616 = vector.load %arg9[%c0_151, %c0_152] : memref<1x50xf32, #tpu.memory_space<vmem>>, vector<1x50xf32>
    %617 = vector.broadcast %616 : vector<1x50xf32> to vector<56x50xf32>
    %618 = arith.addf %615, %617 : vector<56x50xf32>
    %619 = math.tanh %618 : vector<56x50xf32>
    %620 = vector.shape_cast %619 : vector<56x50xf32> to vector<7x8x50xf32>
    %c0_153 = arith.constant 0 : index
    %c0_154 = arith.constant 0 : index
    %621 = vector.load %arg10[%c0_153, %c0_154] : memref<1x50xf32, #tpu.memory_space<vmem>>, vector<1x50xf32>
    %622 = vector.shape_cast %621 : vector<1x50xf32> to vector<1x1x50xf32>
    %623 = vector.broadcast %622 : vector<1x1x50xf32> to vector<7x8x50xf32>
    %624 = arith.mulf %620, %623 : vector<7x8x50xf32>
    %cst_155 = arith.constant dense<0.000000e+00> : vector<7x8xf32>
    %625 = vector.multi_reduction <add>, %624, %cst_155 [2] : vector<7x8x50xf32> to vector<7x8xf32>
    %626 = vector.shape_cast %625 : vector<7x8xf32> to vector<7x8x1xf32>
    %cst_156 = arith.constant dense<0xFF800000> : vector<8x1xf32>
    %627 = vector.multi_reduction <maximumf>, %626, %cst_156 [0] : vector<7x8x1xf32> to vector<8x1xf32>
    %628 = vector.shape_cast %627 : vector<8x1xf32> to vector<1x8x1xf32>
    %629 = vector.broadcast %628 : vector<1x8x1xf32> to vector<7x8x1xf32>
    %630 = arith.subf %626, %629 : vector<7x8x1xf32>
    %631 = math.exp %630 : vector<7x8x1xf32>
    %cst_157 = arith.constant dense<0.000000e+00> : vector<8x1xf32>
    %632 = vector.multi_reduction <add>, %631, %cst_157 [0] : vector<7x8x1xf32> to vector<8x1xf32>
    %633 = vector.shape_cast %632 : vector<8x1xf32> to vector<1x8x1xf32>
    %634 = vector.broadcast %633 : vector<1x8x1xf32> to vector<7x8x1xf32>
    %635 = arith.divf %631, %634 : vector<7x8x1xf32>
    %636 = vector.broadcast %635 : vector<7x8x1xf32> to vector<7x8x64xf32>
    %637 = arith.mulf %611, %636 : vector<7x8x64xf32>
    %cst_158 = arith.constant dense<0.000000e+00> : vector<8x64xf32>
    %638 = vector.multi_reduction <add>, %637, %cst_158 [0] : vector<7x8x64xf32> to vector<8x64xf32>
    %cst_159 = arith.constant 0.000000e+00 : f32
    %639 = vector.broadcast %cst_159 : f32 to vector<8x64xf32>
    %640 = arith.maximumf %638, %639 : vector<8x64xf32>
    %641 = arith.truncf %640 : vector<8x64xf32> to vector<8x64xbf16>
    %c0_160 = arith.constant 0 : index
    %c0_161 = arith.constant 0 : index
    %642 = vector.load %arg11[%c0_160, %c0_161] : memref<64x128xbf16, #tpu.memory_space<vmem>>, vector<64x128xbf16>
    %cst_162 = arith.constant dense<0.000000e+00> : vector<8x128xf32>
    %643 = tpu.matmul %641, %642, %cst_162 {dimension_numbers = #tpu.dot_dimension_numbers<[1], [0], [0], [1], [0, 0, 1, 1], [], []>} : vector<8x64xbf16>, vector<64x128xbf16>, vector<8x128xf32> -> vector<8x128xf32>
    %c0_163 = arith.constant 0 : index
    %c0_164 = arith.constant 0 : index
    %644 = vector.load %arg12[%c0_163, %c0_164] : memref<1x128xf32, #tpu.memory_space<vmem>>, vector<1x128xf32>
    %645 = vector.broadcast %644 : vector<1x128xf32> to vector<8x128xf32>
    %646 = arith.addf %643, %645 : vector<8x128xf32>
    %cst_165 = arith.constant dense<0xFF800000> : vector<8xf32>
    %647 = vector.multi_reduction <maximumf>, %646, %cst_165 [1] : vector<8x128xf32> to vector<8xf32>
    %648 = vector.shape_cast %647 : vector<8xf32> to vector<8x1xf32>
    %649 = vector.broadcast %648 : vector<8x1xf32> to vector<8x128xf32>
    %650 = arith.subf %646, %649 : vector<8x128xf32>
    %651 = math.exp %650 : vector<8x128xf32>
    %cst_166 = arith.constant dense<0.000000e+00> : vector<8xf32>
    %652 = vector.multi_reduction <add>, %651, %cst_166 [1] : vector<8x128xf32> to vector<8xf32>
    %653 = vector.shape_cast %652 : vector<8xf32> to vector<8x1xf32>
    %654 = vector.broadcast %653 : vector<8x1xf32> to vector<8x128xf32>
    %655 = arith.divf %651, %654 : vector<8x128xf32>
    %c0_167 = arith.constant 0 : index
    %c0_168 = arith.constant 0 : index
    %656 = vector.load %arg13[%c0_167, %c0_168] : memref<8x128xf32, #tpu.memory_space<vmem>>, vector<8x128xf32>
    tpu.vector_store %arg13[%c0_167, %c0_168], %655 {strides = array<i32>} : memref<8x128xf32, #tpu.memory_space<vmem>>, vector<8x128xf32>,
    return
  }
  func.func @transform_0(%arg0: i32) -> (i32, i32, i32) {
    %c0_i32 = arith.constant 0 : i32
    %c0_i32_0 = arith.constant 0 : i32
    %c0_i32_1 = arith.constant 0 : i32
    return %c0_i32, %arg0, %c0_i32_0 : i32, i32, i32
  }
  func.func @transform_1(%arg0: i32) -> (i32, i32) {
    %c0_i32 = arith.constant 0 : i32
    %c0_i32_0 = arith.constant 0 : i32
    %c0_i32_1 = arith.constant 0 : i32
    return %c0_i32, %c0_i32_0 : i32, i32
  }
  func.func @transform_2(%arg0: i32) -> (i32, i32) {
    %c0_i32 = arith.constant 0 : i32
    %c0_i32_0 = arith.constant 0 : i32
    %c0_i32_1 = arith.constant 0 : i32
    return %c0_i32, %c0_i32_0 : i32, i32
  }
  func.func @transform_3(%arg0: i32) -> (i32, i32) {
    %c0_i32 = arith.constant 0 : i32
    %c0_i32_0 = arith.constant 0 : i32
    %c0_i32_1 = arith.constant 0 : i32
    return %c0_i32, %c0_i32_0 : i32, i32
  }
  func.func @transform_4(%arg0: i32) -> (i32, i32) {
    %c0_i32 = arith.constant 0 : i32
    %c0_i32_0 = arith.constant 0 : i32
    %c0_i32_1 = arith.constant 0 : i32
    return %c0_i32, %c0_i32_0 : i32, i32
  }
  func.func @transform_5(%arg0: i32) -> (i32, i32) {
    %c0_i32 = arith.constant 0 : i32
    %c0_i32_0 = arith.constant 0 : i32
    %c0_i32_1 = arith.constant 0 : i32
    return %c0_i32, %c0_i32_0 : i32, i32
  }
  func.func @transform_6(%arg0: i32) -> (i32, i32) {
    %c0_i32 = arith.constant 0 : i32
    %c0_i32_0 = arith.constant 0 : i32
    %c0_i32_1 = arith.constant 0 : i32
    return %c0_i32, %c0_i32_0 : i32, i32
  }
  func.func @transform_7(%arg0: i32) -> (i32, i32) {
    %c0_i32 = arith.constant 0 : i32
    %c0_i32_0 = arith.constant 0 : i32
    %c0_i32_1 = arith.constant 0 : i32
    return %c0_i32, %c0_i32_0 : i32, i32
  }
  func.func @transform_8(%arg0: i32) -> (i32, i32) {
    %c0_i32 = arith.constant 0 : i32
    %c0_i32_0 = arith.constant 0 : i32
    %c0_i32_1 = arith.constant 0 : i32
    return %c0_i32, %c0_i32_0 : i32, i32
  }
  func.func @transform_9(%arg0: i32) -> (i32, i32) {
    %c0_i32 = arith.constant 0 : i32
    %c0_i32_0 = arith.constant 0 : i32
    %c0_i32_1 = arith.constant 0 : i32
    return %c0_i32, %c0_i32_0 : i32, i32
  }
  func.func @transform_10(%arg0: i32) -> (i32, i32) {
    %c0_i32 = arith.constant 0 : i32
    %c0_i32_0 = arith.constant 0 : i32
    %c0_i32_1 = arith.constant 0 : i32
    return %c0_i32, %c0_i32_0 : i32, i32
  }
  func.func @transform_11(%arg0: i32) -> (i32, i32) {
    %c0_i32 = arith.constant 0 : i32
    %c0_i32_0 = arith.constant 0 : i32
    %c0_i32_1 = arith.constant 0 : i32
    return %c0_i32, %c0_i32_0 : i32, i32
  }
  func.func @transform_12(%arg0: i32) -> (i32, i32) {
    %c0_i32 = arith.constant 0 : i32
    %c0_i32_0 = arith.constant 0 : i32
    return %arg0, %c0_i32 : i32, i32
  }
}

</mosaic_0001>

<llo_original>
// kernel: rnatracker_forward.1
$region0: #{rnatracker_forward.1}
  #allocation0 [shape = 'u32[]', space=smem, size = 0x4, offset = 0x4, fixed_abs, tag = 'smem constant byte address 0x4 - core index']
  #allocation1 [shape = 'u32[144,128]{1,0:T(1,128)}', space=vmem, size = 0x12000, scoped, tag = 'internal scratch']
  #allocation2 [shape = 'f32[7,8,192]{2,1,0:T(8,128)}', space=vmem, size = 0xe000, scoped, tag = 'scratch operand']
  #allocation3 [shape = 'f32[7,8,32]{2,1,0:T(8,128)}', space=vmem, size = 0x7000, scoped, tag = 'scratch operand']
  #allocation4 [shape = 'f32[7,8,32]{2,1,0:T(8,128)}', space=vmem, size = 0x7000, scoped, tag = 'scratch operand']
  %s0 = inlined_call_operand.vmem [shape: f32[100,16,4], index: 0, kind: input, shape index: {}]
  %s1 = inlined_call_operand.vmem [shape: bf16[40,32], index: 1, kind: input, shape index: {}]
  %s2 = inlined_call_operand.vmem [shape: bf16[320,32], index: 2, kind: input, shape index: {}]
  %s3 = inlined_call_operand.vmem [shape: bf16[32,192], index: 3, kind: input, shape index: {}]
  %s4 = inlined_call_operand.vmem [shape: f32[1,192], index: 4, kind: input, shape index: {}]
  %s5 = inlined_call_operand.vmem [shape: bf16[64,192], index: 5, kind: input, shape index: {}]
  %s6 = inlined_call_operand.vmem [shape: f32[1,192], index: 6, kind: input, shape index: {}]
  %s7 = inlined_call_operand.vmem [shape: bf16[64,50], index: 7, kind: input, shape index: {}]
  %s8 = inlined_call_operand.vmem [shape: f32[1,50], index: 8, kind: input, shape index: {}]
  %s9 = inlined_call_operand.vmem [shape: f32[1,50], index: 9, kind: input, shape index: {}]
  %s10 = inlined_call_operand.vmem [shape: bf16[64,128], index: 10, kind: input, shape index: {}]
  %s11 = inlined_call_operand.vmem [shape: f32[1,128], index: 11, kind: input, shape index: {}]
  %s12 = inlined_call_operand.vmem [shape: f32[16,128], index: 12, kind: output, shape index: {}]
  %s13 = sld [smem:[#allocation0]]
  $region119: #{rnatracker_forward.1} parent=0
    _
  %s15 = ssub.s32 1, %s13
  %s16 = scalar_select 0, %s15, %s13
  $region1: #{rnatracker_forward.1} parent=0
    #allocation5 [shape = 'u8[819200]{0}', space=vmem, size = 0xc8000, scoped, tag = 'input window, operand 0']
    loop: start=0, step=1, limit=4
    $region2: #{rnatracker_forward.1} parent=1 // loop_pre_header
      _
    $region3: #{rnatracker_forward.1} parent=1 // loop_header
      %s18 = sphi 0, %s22
      %p19 = scmp.ge.s32.totalorder %s18, 4
      %s28 = sphi 0, %s30
      %s31 = sphi 0, %s28
      %s32 = sphi 0, %s31
      %s48 = sphi 0, %s32
      %s52 = sphi 0, %s52
      %s54 = sphi 0, %s52
      %s55 = sphi 0, %s54
      %s69 = sphi 0, %s55
      %s73 = sphi 0, %s73
      %s75 = sphi 0, %s73
      %s76 = sphi 0, %s75
      %s90 = sphi 0, %s76
      %s94 = sphi 0, %s94
      %s96 = sphi 0, %s94
      %s97 = sphi 0, %s96
      %s111 = sphi 0, %s97
      %s115 = sphi 0, %s115
      %s117 = sphi 0, %s115
      %s118 = sphi 0, %s117
      %s132 = sphi 0, %s118
      %s136 = sphi 0, %s136
      %s138 = sphi 0, %s136
      %s139 = sphi 0, %s138
      %s153 = sphi 0, %s139
      %s157 = sphi 0, %s157
      %s159 = sphi 0, %s157
      %s160 = sphi 0, %s159
      %s174 = sphi 0, %s160
      %s178 = sphi 0, %s178
      %s180 = sphi 0, %s178
      %s181 = sphi 0, %s180
      %s195 = sphi 0, %s181
      %s199 = sphi 0, %s199
      %s201 = sphi 0, %s199
      %s202 = sphi 0, %s201
      %s216 = sphi 0, %s202
      %s220 = sphi 0, %s220
      %s222 = sphi 0, %s220
      %s223 = sphi 0, %s222
      %s237 = sphi 0, %s223
      %s241 = sphi 0, %s241
      %s243 = sphi 0, %s241
      %s244 = sphi 0, %s243
      %s258 = sphi 0, %s244
      %s262 = sphi 0, %s262
      %s264 = sphi 0, %s262
      %s265 = sphi 0, %s264
      %s279 = sphi 0, %s265
      %s285 = sphi 0, %s287
      %s288 = sphi 0, %s285
      %s289 = sphi 0, %s288
      %s305 = sphi 0, %s289
    $region4: #{rnatracker_forward.1} parent=1 // loop_header_branch
      %21 = sbr.rel (%p19) target = $region8
    $region5: #{rnatracker_forward.1} parent=1 // loop_body
      %s23 = ssub.s32 %s18, 1
      %s24 = ssub.s32 %s18, 2
      %s25 = sadd.s32 %s18, 1
      %s26 = ssub.s32 %s18, %s25
      %p27 = scmp.eq.s32.totalorder %s26, 0
      %s29 = sadd.s32 %s28, 1
      %s30 = scalar_select %p27, %s28, %s29
      %p33 = pneg %p27
      %p34 = scmp.eq.s32.totalorder %s18, 1
      %p35 = por %p33, %p34
      %p36 = scmp.ne.s32.totalorder %s28, %s31
      %p37 = scmp.eq.s32.totalorder %s18, 0
      %p38 = por %p36, %p37
      %p39 = scmp.ne.s32.totalorder %s28, %s31
      %p40 = scmp.eq.s32.totalorder %s23, 1
      %p41 = por %p39, %p40
      %p42 = scmp.ne.s32.totalorder %s31, %s32
      %p43 = scmp.eq.s32.totalorder %s23, 0
      %p44 = por %p42, %p43
      %p45 = scmp.ne.s32.totalorder %s31, %s32
      %p46 = scmp.eq.s32.totalorder %s24, 1
      %p47 = por %p45, %p46
      %p49 = scmp.ne.s32.totalorder %s32, %s48
      %p50 = scmp.eq.s32.totalorder %s24, 0
      %p51 = por %p49, %p50
      %s53 = sadd.s32 %s52, 1
      %p56 = scmp.eq.s32.totalorder %s18, 1
      %p57 = scmp.ne.s32.totalorder %s52, %s54
      %p58 = scmp.eq.s32.totalorder %s18, 0
      %p59 = por %p57, %p58
      %p60 = scmp.ne.s32.totalorder %s52, %s54
      %p61 = scmp.eq.s32.totalorder %s23, 1
      %p62 = por %p60, %p61
      %p63 = scmp.ne.s32.totalorder %s54, %s55
      %p64 = scmp.eq.s32.totalorder %s23, 0
      %p65 = por %p63, %p64
      %p66 = scmp.ne.s32.totalorder %s54, %s55
      %p67 = scmp.eq.s32.totalorder %s24, 1
      %p68 = por %p66, %p67
      %p70 = scmp.ne.s32.totalorder %s55, %s69
      %p71 = scmp.eq.s32.totalorder %s24, 0
      %p72 = por %p70, %p71
      %s74 = sadd.s32 %s73, 1
      %p77 = scmp.eq.s32.totalorder %s18, 1
      %p78 = scmp.ne.s32.totalorder %s73, %s75
      %p79 = scmp.eq.s32.totalorder %s18, 0
      %p80 = por %p78, %p79
      %p81 = scmp.ne.s32.totalorder %s73, %s75
      %p82 = scmp.eq.s32.totalorder %s23, 1
      %p83 = por %p81, %p82
      %p84 = scmp.ne.s32.totalorder %s75, %s76
      %p85 = scmp.eq.s32.totalorder %s23, 0
      %p86 = por %p84, %p85
      %p87 = scmp.ne.s32.totalorder %s75, %s76
      %p88 = scmp.eq.s32.totalorder %s24, 1
      %p89 = por %p87, %p88
      %p91 = scmp.ne.s32.totalorder %s76, %s90
      %p92 = scmp.eq.s32.totalorder %s24, 0
      %p93 = por %p91, %p92
      %s95 = sadd.s32 %s94, 1
      %p98 = scmp.eq.s32.totalorder %s18, 1
      %p99 = scmp.ne.s32.totalorder %s94, %s96
      %p100 = scmp.eq.s32.totalorder %s18, 0
      %p101 = por %p99, %p100
      %p102 = scmp.ne.s32.totalorder %s94, %s96
      %p103 = scmp.eq.s32.totalorder %s23, 1
      %p104 = por %p102, %p103
      %p105 = scmp.ne.s32.totalorder %s96, %s97
      %p106 = scmp.eq.s32.totalorder %s23, 0
      %p107 = por %p105, %p106
      %p108 = scmp.ne.s32.totalorder %s96, %s97
      %p109 = scmp.eq.s32.totalorder %s24, 1
      %p110 = por %p108, %p109
      %p112 = scmp.ne.s32.totalorder %s97, %s111
      %p113 = scmp.eq.s32.totalorder %s24, 0
      %p114 = por %p112, %p113
      %s116 = sadd.s32 %s115, 1
      %p119 = scmp.eq.s32.totalorder %s18, 1
      %p120 = scmp.ne.s32.totalorder %s115, %s117
      %p121 = scmp.eq.s32.totalorder %s18, 0
      %p122 = por %p120, %p121
      %p123 = scmp.ne.s32.totalorder %s115, %s117
      %p124 = scmp.eq.s32.totalorder %s23, 1
      %p125 = por %p123, %p124
      %p126 = scmp.ne.s32.totalorder %s117, %s118
      %p127 = scmp.eq.s32.totalorder %s23, 0
      %p128 = por %p126, %p127
      %p129 = scmp.ne.s32.totalorder %s117, %s118
      %p130 = scmp.eq.s32.totalorder %s24, 1
      %p131 = por %p129, %p130
      %p133 = scmp.ne.s32.totalorder %s118, %s132
      %p134 = scmp.eq.s32.totalorder %s24, 0
      %p135 = por %p133, %p134
      %s137 = sadd.s32 %s136, 1
      %p140 = scmp.eq.s32.totalorder %s18, 1
      %p141 = scmp.ne.s32.totalorder %s136, %s138
      %p142 = scmp.eq.s32.totalorder %s18, 0
      %p143 = por %p141, %p142
      %p144 = scmp.ne.s32.totalorder %s136, %s138
      %p145 = scmp.eq.s32.totalorder %s23, 1
      %p146 = por %p144, %p145
      %p147 = scmp.ne.s32.totalorder %s138, %s139
      %p148 = scmp.eq.s32.totalorder %s23, 0
      %p149 = por %p147, %p148
      %p150 = scmp.ne.s32.totalorder %s138, %s139
      %p151 = scmp.eq.s32.totalorder %s24, 1
      %p152 = por %p150, %p151
      %p154 = scmp.ne.s32.totalorder %s139, %s153
      %p155 = scmp.eq.s32.totalorder %s24, 0
      %p156 = por %p154, %p155
      %s158 = sadd.s32 %s157, 1
      %p161 = scmp.eq.s32.totalorder %s18, 1
      %p162 = scmp.ne.s32.totalorder %s157, %s159
      %p163 = scmp.eq.s32.totalorder %s18, 0
      %p164 = por %p162, %p163
      %p165 = scmp.ne.s32.totalorder %s157, %s159
      %p166 = scmp.eq.s32.totalorder %s23, 1
      %p167 = por %p165, %p166
      %p168 = scmp.ne.s32.totalorder %s159, %s160
      %p169 = scmp.eq.s32.totalorder %s23, 0
      %p170 = por %p168, %p169
      %p171 = scmp.ne.s32.totalorder %s159, %s160
      %p172 = scmp.eq.s32.totalorder %s24, 1
      %p173 = por %p171, %p172
      %p175 = scmp.ne.s32.totalorder %s160, %s174
      %p176 = scmp.eq.s32.totalorder %s24, 0
      %p177 = por %p175, %p176
      %s179 = sadd.s32 %s178, 1
      %p182 = scmp.eq.s32.totalorder %s18, 1
      %p183 = scmp.ne.s32.totalorder %s178, %s180
      %p184 = scmp.eq.s32.totalorder %s18, 0
      %p185 = por %p183, %p184
      %p186 = scmp.ne.s32.totalorder %s178, %s180
      %p187 = scmp.eq.s32.totalorder %s23, 1
      %p188 = por %p186, %p187
      %p189 = scmp.ne.s32.totalorder %s180, %s181
      %p190 = scmp.eq.s32.totalorder %s23, 0
      %p191 = por %p189, %p190
      %p192 = scmp.ne.s32.totalorder %s180, %s181
      %p193 = scmp.eq.s32.totalorder %s24, 1
      %p194 = por %p192, %p193
      %p196 = scmp.ne.s32.totalorder %s181, %s195
      %p197 = scmp.eq.s32.totalorder %s24, 0
      %p198 = por %p196, %p197
      %s200 = sadd.s32 %s199, 1
      %p203 = scmp.eq.s32.totalorder %s18, 1
      %p204 = scmp.ne.s32.totalorder %s199, %s201
      %p205 = scmp.eq.s32.totalorder %s18, 0
      %p206 = por %p204, %p205
      %p207 = scmp.ne.s32.totalorder %s199, %s201
      %p208 = scmp.eq.s32.totalorder %s23, 1
      %p209 = por %p207, %p208
      %p210 = scmp.ne.s32.totalorder %s201, %s202
      %p211 = scmp.eq.s32.totalorder %s23, 0
      %p212 = por %p210, %p211
      %p213 = scmp.ne.s32.totalorder %s201, %s202
      %p214 = scmp.eq.s32.totalorder %s24, 1
      %p215 = por %p213, %p214
      %p217 = scmp.ne.s32.totalorder %s202, %s216
      %p218 = scmp.eq.s32.totalorder %s24, 0
      %p219 = por %p217, %p218
      %s221 = sadd.s32 %s220, 1
      %p224 = scmp.eq.s32.totalorder %s18, 1
      %p225 = scmp.ne.s32.totalorder %s220, %s222
      %p226 = scmp.eq.s32.totalorder %s18, 0
      %p227 = por %p225, %p226
      %p228 = scmp.ne.s32.totalorder %s220, %s222
      %p229 = scmp.eq.s32.totalorder %s23, 1
      %p230 = por %p228, %p229
      %p231 = scmp.ne.s32.totalorder %s222, %s223
      %p232 = scmp.eq.s32.totalorder %s23, 0
      %p233 = por %p231, %p232
      %p234 = scmp.ne.s32.totalorder %s222, %s223
      %p235 = scmp.eq.s32.totalorder %s24, 1
      %p236 = por %p234, %p235
      %p238 = scmp.ne.s32.totalorder %s223, %s237
      %p239 = scmp.eq.s32.totalorder %s24, 0
      %p240 = por %p238, %p239
      %s242 = sadd.s32 %s241, 1
      %p245 = scmp.eq.s32.totalorder %s18, 1
      %p246 = scmp.ne.s32.totalorder %s241, %s243
      %p247 = scmp.eq.s32.totalorder %s18, 0
      %p248 = por %p246, %p247
      %p249 = scmp.ne.s32.totalorder %s241, %s243
      %p250 = scmp.eq.s32.totalorder %s23, 1
      %p251 = por %p249, %p250
      %p252 = scmp.ne.s32.totalorder %s243, %s244
      %p253 = scmp.eq.s32.totalorder %s23, 0
      %p254 = por %p252, %p253
      %p255 = scmp.ne.s32.totalorder %s243, %s244
      %p256 = scmp.eq.s32.totalorder %s24, 1
      %p257 = por %p255, %p256
      %p259 = scmp.ne.s32.totalorder %s244, %s258
      %p260 = scmp.eq.s32.totalorder %s24, 0
      %p261 = por %p259, %p260
      %s263 = sadd.s32 %s262, 1
      %p266 = scmp.eq.s32.totalorder %s18, 1
      %p267 = scmp.ne.s32.totalorder %s262, %s264
      %p268 = scmp.eq.s32.totalorder %s18, 0
      %p269 = por %p267, %p268
      %p270 = scmp.ne.s32.totalorder %s262, %s264
      %p271 = scmp.eq.s32.totalorder %s23, 1
      %p272 = por %p270, %p271
      %p273 = scmp.ne.s32.totalorder %s264, %s265
      %p274 = scmp.eq.s32.totalorder %s23, 0
      %p275 = por %p273, %p274
      %p276 = scmp.ne.s32.totalorder %s264, %s265
      %p277 = scmp.eq.s32.totalorder %s24, 1
      %p278 = por %p276, %p277
      %p280 = scmp.ne.s32.totalorder %s265, %s279
      %p281 = scmp.eq.s32.totalorder %s24, 0
      %p282 = por %p280, %p281
      %s283 = ssub.s32 %s18, %s25
      %p284 = scmp.eq.s32.totalorder %s283, 0
      %s286 = sadd.s32 %s285, 1
      %s287 = scalar_select %p284, %s285, %s286
      %p290 = pneg %p284
      %p291 = scmp.eq.s32.totalorder %s18, 1
      %p292 = por %p290, %p291
      %p293 = scmp.ne.s32.totalorder %s285, %s288
      %p294 = scmp.eq.s32.totalorder %s18, 0
      %p295 = por %p293, %p294
      %p296 = scmp.ne.s32.totalorder %s285, %s288
      %p297 = scmp.eq.s32.totalorder %s23, 1
      %p298 = por %p296, %p297
      %p299 = scmp.ne.s32.totalorder %s288, %s289
      %p300 = scmp.eq.s32.totalorder %s23, 0
      %p301 = por %p299, %p300
      %p302 = scmp.ne.s32.totalorder %s288, %s289
      %p303 = scmp.eq.s32.totalorder %s24, 1
      %p304 = por %p302, %p303
      %p306 = scmp.ne.s32.totalorder %s289, %s305
      %p307 = scmp.eq.s32.totalorder %s24, 0
      %p308 = por %p306, %p307
      %p309 = scmp.le.s32.totalorder 1, %s18
      %p310 = scmp.lt.s32.totalorder %s18, 3
      %p311 = pnand %p309, %p310
      %p312 = pneg %p311
      // Predicated region
      $region9: #{rnatracker_forward.1} parent=5 // pred_check
        _
      $region10: #{rnatracker_forward.1} parent=5 // pred_check_branch
        %314 = sbr.rel (%p311) target = $region12
      $region11: #{rnatracker_forward.1} parent=5 // pred_region
        %s315 = ssub.s32 %s18, 1
        // Predicated region
        $region13: #{rnatracker_forward.1} parent=11 // pred_check
          %p316 = pneg %p65
        $region14: #{rnatracker_forward.1} parent=11 // pred_check_branch
          %318 = sbr.rel (%p316) target = $region16
        $region15: #{rnatracker_forward.1} parent=11 // pred_region
          _
        $region16: #{rnatracker_forward.1} parent=11 // pred_fallthru
          _
        // Predicated region
        $region17: #{rnatracker_forward.1} parent=11 // pred_check
          %p319 = pneg %p86
        $region18: #{rnatracker_forward.1} parent=11 // pred_check_branch
          %321 = sbr.rel (%p319) target = $region20
        $region19: #{rnatracker_forward.1} parent=11 // pred_region
          _
        $region20: #{rnatracker_forward.1} parent=11 // pred_fallthru
          _
        // Predicated region
        $region21: #{rnatracker_forward.1} parent=11 // pred_check
          %p322 = pneg %p107
        $region22: #{rnatracker_forward.1} parent=11 // pred_check_branch
          %324 = sbr.rel (%p322) target = $region24
        $region23: #{rnatracker_forward.1} parent=11 // pred_region
          _
        $region24: #{rnatracker_forward.1} parent=11 // pred_fallthru
          _
        // Predicated region
        $region25: #{rnatracker_forward.1} parent=11 // pred_check
          %p325 = pneg %p128
        $region26: #{rnatracker_forward.1} parent=11 // pred_check_branch
          %327 = sbr.rel (%p325) target = $region28
        $region27: #{rnatracker_forward.1} parent=11 // pred_region
          _
        $region28: #{rnatracker_forward.1} parent=11 // pred_fallthru
          _
        // Predicated region
        $region29: #{rnatracker_forward.1} parent=11 // pred_check
          %p328 = pneg %p149
        $region30: #{rnatracker_forward.1} parent=11 // pred_check_branch
          %330 = sbr.rel (%p328) target = $region32
        $region31: #{rnatracker_forward.1} parent=11 // pred_region
          _
        $region32: #{rnatracker_forward.1} parent=11 // pred_fallthru
          _
        // Predicated region
        $region33: #{rnatracker_forward.1} parent=11 // pred_check
          %p331 = pneg %p170
        $region34: #{rnatracker_forward.1} parent=11 // pred_check_branch
          %333 = sbr.rel (%p331) target = $region36
        $region35: #{rnatracker_forward.1} parent=11 // pred_region
          _
        $region36: #{rnatracker_forward.1} parent=11 // pred_fallthru
          _
        // Predicated region
        $region37: #{rnatracker_forward.1} parent=11 // pred_check
          %p334 = pneg %p191
        $region38: #{rnatracker_forward.1} parent=11 // pred_check_branch
          %336 = sbr.rel (%p334) target = $region40
        $region39: #{rnatracker_forward.1} parent=11 // pred_region
          _
        $region40: #{rnatracker_forward.1} parent=11 // pred_fallthru
          _
        // Predicated region
        $region41: #{rnatracker_forward.1} parent=11 // pred_check
          %p337 = pneg %p212
        $region42: #{rnatracker_forward.1} parent=11 // pred_check_branch
          %339 = sbr.rel (%p337) target = $region44
        $region43: #{rnatracker_forward.1} parent=11 // pred_region
          _
        $region44: #{rnatracker_forward.1} parent=11 // pred_fallthru
          _
        // Predicated region
        $region45: #{rnatracker_forward.1} parent=11 // pred_check
          %p340 = pneg %p233
        $region46: #{rnatracker_forward.1} parent=11 // pred_check_branch
          %342 = sbr.rel (%p340) target = $region48
        $region47: #{rnatracker_forward.1} parent=11 // pred_region
          _
        $region48: #{rnatracker_forward.1} parent=11 // pred_fallthru
          _
        // Predicated region
        $region49: #{rnatracker_forward.1} parent=11 // pred_check
          %p343 = pneg %p254
        $region50: #{rnatracker_forward.1} parent=11 // pred_check_branch
          %345 = sbr.rel (%p343) target = $region52
        $region51: #{rnatracker_forward.1} parent=11 // pred_region
          _
        $region52: #{rnatracker_forward.1} parent=11 // pred_fallthru
          _
        // Predicated region
        $region53: #{rnatracker_forward.1} parent=11 // pred_check
          %p346 = pneg %p275
        $region54: #{rnatracker_forward.1} parent=11 // pred_check_branch
          %348 = sbr.rel (%p346) target = $region56
        $region55: #{rnatracker_forward.1} parent=11 // pred_region
          _
        $region56: #{rnatracker_forward.1} parent=11 // pred_fallthru
          _
      $region12: #{rnatracker_forward.1} parent=5 // pred_fallthru
        _
      %p349 = scmp.lt.s32.totalorder %s18, 2
      // Predicated region
      $region57: #{rnatracker_forward.1} parent=5 // pred_check
        %p350 = pneg %p349
      $region58: #{rnatracker_forward.1} parent=5 // pred_check_branch
        %352 = sbr.rel (%p350) target = $region60
      $region59: #{rnatracker_forward.1} parent=5 // pred_region
        // Predicated region
        $region61: #{rnatracker_forward.1} parent=59 // pred_check
          %p353 = pneg %p38
        $region62: #{rnatracker_forward.1} parent=59 // pred_check_branch
          %355 = sbr.rel (%p353) target = $region64
        $region63: #{rnatracker_forward.1} parent=59 // pred_region
          %s356 = sand.u32 %s28, 1
          %s357 = sand.u32 %s28, 1
          %s358 = smul.addr %s357, 800
          %s359 = scalar_lea.vmem [#allocation5], %s358
          %s360 = smul.addr %s18, 8
          %s361 = scalar_lea.vmem %s0, %s360
          // Predicated region
          $region65: #{rnatracker_forward.1} parent=63 // pred_check
            _
          $region66: #{rnatracker_forward.1} parent=63 // pred_check_branch
            %363 = sbr.rel (0) target = $region68
          $region67: #{rnatracker_forward.1} parent=63 // pred_region
            // Predicated region
            $region69: #{rnatracker_forward.1} parent=67 // pred_check
              _
            $region70: #{rnatracker_forward.1} parent=67 // pred_check_branch
              %365 = sbr.rel (0) target = $region72
            $region71: #{rnatracker_forward.1} parent=67 // pred_region
              // Predicated region
              $region84: #{rnatracker_forward.1} parent=71 // pred_check
                _
              $region85: #{rnatracker_forward.1} parent=71 // pred_check_branch
                %579 = sbr.rel (0) target = $region87
              $region86: #{rnatracker_forward.1} parent=71 // pred_region
                loop: start=0, step=1, limit=1
                $region88: #{rnatracker_forward.1} parent=86 // loop_pre_header
                  _
                $region89: #{rnatracker_forward.1} parent=86 // loop_header
                  %s581 = sphi 0, %s585
                  %p582 = scmp.ge.s32.totalorder %s581, 1
                  %s586 = sphi %s361, %s361
                  %s587 = sphi %s359, %s359
                $region90: #{rnatracker_forward.1} parent=86 // loop_header_branch
                  %584 = sbr.rel (%p582) target = $region94
                $region91: #{rnatracker_forward.1} parent=86 // loop_body
                  %v588 = vld [vmem:[%s586] sm:$0xff]
                  %589 = vst [vmem:[%s587] sm:$0xff] %v588
                  %v590 = vld [vmem:[%s586 + $0x10] sm:$0xff]
                  %591 = vst [vmem:[%s587 + $0x8] sm:$0xff] %v590
                  %v592 = vld [vmem:[%s586 + $0x20] sm:$0xff]
                  %593 = vst [vmem:[%s587 + $0x10] sm:$0xff] %v592
                  %v594 = vld [vmem:[%s586 + $0x30] sm:$0xff]
                  %595 = vst [vmem:[%s587 + $0x18] sm:$0xff] %v594
                  %v596 = vld [vmem:[%s586 + $0x40] sm:$0xff]
                  %597 = vst [vmem:[%s587 + $0x20] sm:$0xff] %v596
                  %v598 = vld [vmem:[%s586 + $0x50] sm:$0xff]
                  %599 = vst [vmem:[%s587 + $0x28] sm:$0xff] %v598
                  %v600 = vld [vmem:[%s586 + $0x60] sm:$0xff]
                  %601 = vst [vmem:[%s587 + $0x30] sm:$0xff] %v600
                  %v602 = vld [vmem:[%s586 + $0x70] sm:$0xff]
                  %603 = vst [vmem:[%s587 + $0x38] sm:$0xff] %v602
                  %v604 = vld [vmem:[%s586 + $0x80] sm:$0xff]
                  %605 = vst [vmem:[%s587 + $0x40] sm:$0xff] %v604
                  %v606 = vld [vmem:[%s586 + $0x90] sm:$0xff]
                  %607 = vst [vmem:[%s587 + $0x48] sm:$0xff] %v606
                  %v608 = vld [vmem:[%s586 + $0xa0] sm:$0xff]
                  %609 = vst [vmem:[%s587 + $0x50] sm:$0xff] %v608
                  %v610 = vld [vmem:[%s586 + $0xb0] sm:$0xff]
                  %611 = vst [vmem:[%s587 + $0x58] sm:$0xff] %v610
                  %v612 = vld [vmem:[%s586 + $0xc0] sm:$0xff]
                  %613 = vst [vmem:[%s587 + $0x60] sm:$0xff] %v612
                  %v614 = vld [vmem:[%s586 + $0xd0] sm:$0xff]
                  %615 = vst [vmem:[%s587 + $0x68] sm:$0xff] %v614
                  %v616 = vld [vmem:[%s586 + $0xe0] sm:$0xff]
                  %617 = vst [vmem:[%s587 + $0x70] sm:$0xff] %v616
                  %v618 = vld [vmem:[%s586 + $0xf0] sm:$0xff]
                  %619 = vst [vmem:[%s587 + $0x78] sm:$0xff] %v618
                  %v620 = vld [vmem:[%s586 + $0x100] sm:$0xff]
                  %621 = vst [vmem:[%s587 + $0x80] sm:$0xff] %v620
                  %v622 = vld [vmem:[%s586 + $0x110] sm:$0xff]
                  %623 = vst [vmem:[%s587 + $0x88] sm:$0xff] %v622
                  %v624 = vld [vmem:[%s586 + $0x120] sm:$0xff]
                  %625 = vst [vmem:[%s587 + $0x90] sm:$0xff] %v624
                  %v626 = vld [vmem:[%s586 + $0x130] sm:$0xff]
                  %627 = vst [vmem:[%s587 + $0x98] sm:$0xff] %v626
                  %v628 = vld [vmem:[%s586 + $0x140] sm:$0xff]
                  %629 = vst [vmem:[%s587 + $0xa0] sm:$0xff] %v628
                  %v630 = vld [vmem:[%s586 + $0x150] sm:$0xff]
                  %631 = vst [vmem:[%s587 + $0xa8] sm:$0xff] %v630
                  %v632 = vld [vmem:[%s586 + $0x160] sm:$0xff]
                  %633 = vst [vmem:[%s587 + $0xb0] sm:$0xff] %v632
                  %v634 = vld [vmem:[%s586 + $0x170] sm:$0xff]
                  %635 = vst [vmem:[%s587 + $0xb8] sm:$0xff] %v634
                  %v636 = vld [vmem:[%s586 + $0x180] sm:$0xff]
                  %637 = vst [vmem:[%s587 + $0xc0] sm:$0xff] %v636
                  %v638 = vld [vmem:[%s586 + $0x190] sm:$0xff]
                  %639 = vst [vmem:[%s587 + $0xc8] sm:$0xff] %v638
                  %v640 = vld [vmem:[%s586 + $0x1a0] sm:$0xff]
                  %641 = vst [vmem:[%s587 + $0xd0] sm:$0xff] %v640
                  %v642 = vld [vmem:[%s586 + $0x1b0] sm:$0xff]
                  %643 = vst [vmem:[%s587 + $0xd8] sm:$0xff] %v642
                  %v644 = vld [vmem:[%s586 + $0x1c0] sm:$0xff]
                  %645 = vst [vmem:[%s587 + $0xe0] sm:$0xff] %v644
                  %v646 = vld [vmem:[%s586 + $0x1d0] sm:$0xff]
                  %647 = vst [vmem:[%s587 + $0xe8] sm:$0xff] %v646
                  %v648 = vld [vmem:[%s586 + $0x1e0] sm:$0xff]
                  %649 = vst [vmem:[%s587 + $0xf0] sm:$0xff] %v648
                  %v650 = vld [vmem:[%s586 + $0x1f0] sm:$0xff]
                  %651 = vst [vmem:[%s587 + $0xf8] sm:$0xff] %v650
                  %v652 = vld [vmem:[%s586 + $0x200] sm:$0xff]
                  %653 = vst [vmem:[%s587 + $0x100] sm:$0xff] %v652
                  %v654 = vld [vmem:[%s586 + $0x210] sm:$0xff]
                  %655 = vst [vmem:[%s587 + $0x108] sm:$0xff] %v654
                  %v656 = vld [vmem:[%s586 + $0x220] sm:$0xff]
                  %657 = vst [vmem:[%s587 + $0x110] sm:$0xff] %v656
                  %v658 = vld [vmem:[%s586 + $0x230] sm:$0xff]
                  %659 = vst [vmem:[%s587 + $0x118] sm:$0xff] %v658
                  %v660 = vld [vmem:[%s586 + $0x240] sm:$0xff]
                  %661 = vst [vmem:[%s587 + $0x120] sm:$0xff] %v660
                  %v662 = vld [vmem:[%s586 + $0x250] sm:$0xff]
                  %663 = vst [vmem:[%s587 + $0x128] sm:$0xff] %v662
                  %v664 = vld [vmem:[%s586 + $0x260] sm:$0xff]
                  %665 = vst [vmem:[%s587 + $0x130] sm:$0xff] %v664
                  %v666 = vld [vmem:[%s586 + $0x270] sm:$0xff]
                  %667 = vst [vmem:[%s587 + $0x138] sm:$0xff] %v666
                  %v668 = vld [vmem:[%s586 + $0x280] sm:$0xff]
                  %669 = vst [vmem:[%s587 + $0x140] sm:$0xff] %v668
                  %v670 = vld [vmem:[%s586 + $0x290] sm:$0xff]
                  %671 = vst [vmem:[%s587 + $0x148] sm:$0xff] %v670
                  %v672 = vld [vmem:[%s586 + $0x2a0] sm:$0xff]
                  %673 = vst [vmem:[%s587 + $0x150] sm:$0xff] %v672
                  %v674 = vld [vmem:[%s586 + $0x2b0] sm:$0xff]
                  %675 = vst [vmem:[%s587 + $0x158] sm:$0xff] %v674
                  %v676 = vld [vmem:[%s586 + $0x2c0] sm:$0xff]
                  %677 = vst [vmem:[%s587 + $0x160] sm:$0xff] %v676
                  %v678 = vld [vmem:[%s586 + $0x2d0] sm:$0xff]
                  %679 = vst [vmem:[%s587 + $0x168] sm:$0xff] %v678
                  %v680 = vld [vmem:[%s586 + $0x2e0] sm:$0xff]
                  %681 = vst [vmem:[%s587 + $0x170] sm:$0xff] %v680
                  %v682 = vld [vmem:[%s586 + $0x2f0] sm:$0xff]
                  %683 = vst [vmem:[%s587 + $0x178] sm:$0xff] %v682
                  %v684 = vld [vmem:[%s586 + $0x300] sm:$0xff]
                  %685 = vst [vmem:[%s587 + $0x180] sm:$0xff] %v684
                  %v686 = vld [vmem:[%s586 + $0x310] sm:$0xff]
                  %687 = vst [vmem:[%s587 + $0x188] sm:$0xff] %v686
                  %v688 = vld [vmem:[%s586 + $0x320] sm:$0xff]
                  %689 = vst [vmem:[%s587 + $0x190] sm:$0xff] %v688
                  %v690 = vld [vmem:[%s586 + $0x330] sm:$0xff]
                  %691 = vst [vmem:[%s587 + $0x198] sm:$0xff] %v690
                  %v692 = vld [vmem:[%s586 + $0x340] sm:$0xff]
                  %693 = vst [vmem:[%s587 + $0x1a0] sm:$0xff] %v692
                  %v694 = vld [vmem:[%s586 + $0x350] sm:$0xff]
                  %695 = vst [vmem:[%s587 + $0x1a8] sm:$0xff] %v694
                  %v696 = vld [vmem:[%s586 + $0x360] sm:$0xff]
                  %697 = vst [vmem:[%s587 + $0x1b0] sm:$0xff] %v696
                  %v698 = vld [vmem:[%s586 + $0x370] sm:$0xff]
                  %699 = vst [vmem:[%s587 + $0x1b8] sm:$0xff] %v698
                  %v700 = vld [vmem:[%s586 + $0x380] sm:$0xff]
                  %701 = vst [vmem:[%s587 + $0x1c0] sm:$0xff] %v700
                  %v702 = vld [vmem:[%s586 + $0x390] sm:$0xff]
                  %703 = vst [vmem:[%s587 + $0x1c8] sm:$0xff] %v702
                  %v704 = vld [vmem:[%s586 + $0x3a0] sm:$0xff]
                  %705 = vst [vmem:[%s587 + $0x1d0] sm:$0xff] %v704
                  %v706 = vld [vmem:[%s586 + $0x3b0] sm:$0xff]
                  %707 = vst [vmem:[%s587 + $0x1d8] sm:$0xff] %v706
                  %v708 = vld [vmem:[%s586 + $0x3c0] sm:$0xff]
                  %709 = vst [vmem:[%s587 + $0x1e0] sm:$0xff] %v708
                  %v710 = vld [vmem:[%s586 + $0x3d0] sm:$0xff]
                  %711 = vst [vmem:[%s587 + $0x1e8] sm:$0xff] %v710
                  %v712 = vld [vmem:[%s586 + $0x3e0] sm:$0xff]
                  %713 = vst [vmem:[%s587 + $0x1f0] sm:$0xff] %v712
                  %v714 = vld [vmem:[%s586 + $0x3f0] sm:$0xff]
                  %715 = vst [vmem:[%s587 + $0x1f8] sm:$0xff] %v714
                  %v716 = vld [vmem:[%s586 + $0x400] sm:$0xff]
                  %717 = vst [vmem:[%s587 + $0x200] sm:$0xff] %v716
                  %v718 = vld [vmem:[%s586 + $0x410] sm:$0xff]
                  %719 = vst [vmem:[%s587 + $0x208] sm:$0xff] %v718
                  %v720 = vld [vmem:[%s586 + $0x420] sm:$0xff]
                  %721 = vst [vmem:[%s587 + $0x210] sm:$0xff] %v720
                  %v722 = vld [vmem:[%s586 + $0x430] sm:$0xff]
                  %723 = vst [vmem:[%s587 + $0x218] sm:$0xff] %v722
                  %v724 = vld [vmem:[%s586 + $0x440] sm:$0xff]
                  %725 = vst [vmem:[%s587 + $0x220] sm:$0xff] %v724
                  %v726 = vld [vmem:[%s586 + $0x450] sm:$0xff]
                  %727 = vst [vmem:[%s587 + $0x228] sm:$0xff] %v726
                  %v728 = vld [vmem:[%s586 + $0x460] sm:$0xff]
                  %729 = vst [vmem:[%s587 + $0x230] sm:$0xff] %v728
                  %v730 = vld [vmem:[%s586 + $0x470] sm:$0xff]
                  %731 = vst [vmem:[%s587 + $0x238] sm:$0xff] %v730
                  %v732 = vld [vmem:[%s586 + $0x480] sm:$0xff]
                  %733 = vst [vmem:[%s587 + $0x240] sm:$0xff] %v732
                  %v734 = vld [vmem:[%s586 + $0x490] sm:$0xff]
                  %735 = vst [vmem:[%s587 + $0x248] sm:$0xff] %v734
                  %v736 = vld [vmem:[%s586 + $0x4a0] sm:$0xff]
                  %737 = vst [vmem:[%s587 + $0x250] sm:$0xff] %v736
                  %v738 = vld [vmem:[%s586 + $0x4b0] sm:$0xff]
                  %739 = vst [vmem:[%s587 + $0x258] sm:$0xff] %v738
                  %v740 = vld [vmem:[%s586 + $0x4c0] sm:$0xff]
                  %741 = vst [vmem:[%s587 + $0x260] sm:$0xff] %v740
                  %v742 = vld [vmem:[%s586 + $0x4d0] sm:$0xff]
                  %743 = vst [vmem:[%s587 + $0x268] sm:$0xff] %v742
                  %v744 = vld [vmem:[%s586 + $0x4e0] sm:$0xff]
                  %745 = vst [vmem:[%s587 + $0x270] sm:$0xff] %v744
                  %v746 = vld [vmem:[%s586 + $0x4f0] sm:$0xff]
                  %747 = vst [vmem:[%s587 + $0x278] sm:$0xff] %v746
                  %v748 = vld [vmem:[%s586 + $0x500] sm:$0xff]
                  %749 = vst [vmem:[%s587 + $0x280] sm:$0xff] %v748
                  %v750 = vld [vmem:[%s586 + $0x510] sm:$0xff]
                  %751 = vst [vmem:[%s587 + $0x288] sm:$0xff] %v750
                  %v752 = vld [vmem:[%s586 + $0x520] sm:$0xff]
                  %753 = vst [vmem:[%s587 + $0x290] sm:$0xff] %v752
                  %v754 = vld [vmem:[%s586 + $0x530] sm:$0xff]
                  %755 = vst [vmem:[%s587 + $0x298] sm:$0xff] %v754
                  %v756 = vld [vmem:[%s586 + $0x540] sm:$0xff]
                  %757 = vst [vmem:[%s587 + $0x2a0] sm:$0xff] %v756
                  %v758 = vld [vmem:[%s586 + $0x550] sm:$0xff]
                  %759 = vst [vmem:[%s587 + $0x2a8] sm:$0xff] %v758
                  %v760 = vld [vmem:[%s586 + $0x560] sm:$0xff]
                  %761 = vst [vmem:[%s587 + $0x2b0] sm:$0xff] %v760
                  %v762 = vld [vmem:[%s586 + $0x570] sm:$0xff]
                  %763 = vst [vmem:[%s587 + $0x2b8] sm:$0xff] %v762
                  %v764 = vld [vmem:[%s586 + $0x580] sm:$0xff]
                  %765 = vst [vmem:[%s587 + $0x2c0] sm:$0xff] %v764
                  %v766 = vld [vmem:[%s586 + $0x590] sm:$0xff]
                  %767 = vst [vmem:[%s587 + $0x2c8] sm:$0xff] %v766
                  %v768 = vld [vmem:[%s586 + $0x5a0] sm:$0xff]
                  %769 = vst [vmem:[%s587 + $0x2d0] sm:$0xff] %v768
                  %v770 = vld [vmem:[%s586 + $0x5b0] sm:$0xff]
                  %771 = vst [vmem:[%s587 + $0x2d8] sm:$0xff] %v770
                  %v772 = vld [vmem:[%s586 + $0x5c0] sm:$0xff]
                  %773 = vst [vmem:[%s587 + $0x2e0] sm:$0xff] %v772
                  %v774 = vld [vmem:[%s586 + $0x5d0] sm:$0xff]
                  %775 = vst [vmem:[%s587 + $0x2e8] sm:$0xff] %v774
                  %v776 = vld [vmem:[%s586 + $0x5e0] sm:$0xff]
                  %777 = vst [vmem:[%s587 + $0x2f0] sm:$0xff] %v776
                  %v778 = vld [vmem:[%s586 + $0x5f0] sm:$0xff]
                  %779 = vst [vmem:[%s587 + $0x2f8] sm:$0xff] %v778
                  %v780 = vld [vmem:[%s586 + $0x600] sm:$0xff]
                  %781 = vst [vmem:[%s587 + $0x300] sm:$0xff] %v780
                  %v782 = vld [vmem:[%s586 + $0x610] sm:$0xff]
                  %783 = vst [vmem:[%s587 + $0x308] sm:$0xff] %v782
                  %v784 = vld [vmem:[%s586 + $0x620] sm:$0xff]
                  %785 = vst [vmem:[%s587 + $0x310] sm:$0xff] %v784
                  %v786 = vld [vmem:[%s586 + $0x630] sm:$0xff]
                  %787 = vst [vmem:[%s587 + $0x318] sm:$0xff] %v786
                $region92: #{rnatracker_forward.1} parent=86 // loop_footer
                  %s585 = sadd.s32 1, %s581
                $region93: #{rnatracker_forward.1} parent=86 // loop_footer_branch
                  %580 = sbr.rel target = $region89
                $region94: #{rnatracker_forward.1} parent=86 // loop_exit
                  _
              $region87: #{rnatracker_forward.1} parent=71 // pred_fallthru
                _
              // Predicated region
              $region95: #{rnatracker_forward.1} parent=71 // pred_check
                _
              $region96: #{rnatracker_forward.1} parent=71 // pred_check_branch
                %789 = sbr.rel target = $region98
              $region97: #{rnatracker_forward.1} parent=71 // pred_region
                _
              $region98: #{rnatracker_forward.1} parent=71 // pred_fallthru
                _
            $region72: #{rnatracker_forward.1} parent=67 // pred_fallthru
              _
            // Predicated region
            $region73: #{rnatracker_forward.1} parent=67 // pred_check
              _
            $region74: #{rnatracker_forward.1} parent=67 // pred_check_branch
              %367 = sbr.rel target = $region76
            $region75: #{rnatracker_forward.1} parent=67 // pred_region
              %s369 = ssub.s32 256, 1
              loop: start=0, step=1, limit=1
              $region77: #{rnatracker_forward.1} parent=75 // loop_pre_header
                _
              $region78: #{rnatracker_forward.1} parent=75 // loop_header
                %s371 = sphi 0, %s375
                %p372 = scmp.ge.s32.totalorder %s371, 1
                %s376 = sphi %s361, %s361
                %s377 = sphi %s359, %s359
              $region79: #{rnatracker_forward.1} parent=75 // loop_header_branch
                %374 = sbr.rel (%p372) target = $region83
              $region80: #{rnatracker_forward.1} parent=75 // loop_body
                %v378 = vld [vmem:[%s376] sm:%s369]
                %379 = vst [vmem:[%s377] sm:%s369] %v378
                %v380 = vld [vmem:[%s376 + $0x10] sm:%s369]
                %381 = vst [vmem:[%s377 + $0x8] sm:%s369] %v380
                %v382 = vld [vmem:[%s376 + $0x20] sm:%s369]
                %383 = vst [vmem:[%s377 + $0x10] sm:%s369] %v382
                %v384 = vld [vmem:[%s376 + $0x30] sm:%s369]
                %385 = vst [vmem:[%s377 + $0x18] sm:%s369] %v384
                %v386 = vld [vmem:[%s376 + $0x40] sm:%s369]
                %387 = vst [vmem:[%s377 + $0x20] sm:%s369] %v386
                %v388 = vld [vmem:[%s376 + $0x50] sm:%s369]
                %389 = vst [vmem:[%s377 + $0x28] sm:%s369] %v388
                %v390 = vld [vmem:[%s376 + $0x60] sm:%s369]
                %391 = vst [vmem:[%s377 + $0x30] sm:%s369] %v390
                %v392 = vld [vmem:[%s376 + $0x70] sm:%s369]
                %393 = vst [vmem:[%s377 + $0x38] sm:%s369] %v392
                %v394 = vld [vmem:[%s376 + $0x80] sm:%s369]
                %395 = vst [vmem:[%s377 + $0x40] sm:%s369] %v394
                %v396 = vld [vmem:[%s376 + $0x90] sm:%s369]
                %397 = vst [vmem:[%s377 + $0x48] sm:%s369] %v396
                %v398 = vld [vmem:[%s376 + $0xa0] sm:%s369]
                %399 = vst [vmem:[%s377 + $0x50] sm:%s369] %v398
                %v400 = vld [vmem:[%s376 + $0xb0] sm:%s369]
                %401 = vst [vmem:[%s377 + $0x58] sm:%s369] %v400
                %v402 = vld [vmem:[%s376 + $0xc0] sm:%s369]
                %403 = vst [vmem:[%s377 + $0x60] sm:%s369] %v402
                %v404 = vld [vmem:[%s376 + $0xd0] sm:%s369]
                %405 = vst [vmem:[%s377 + $0x68] sm:%s369] %v404
                %v406 = vld [vmem:[%s376 + $0xe0] sm:%s369]
                %407 = vst [vmem:[%s377 + $0x70] sm:%s369] %v406
                %v408 = vld [vmem:[%s376 + $0xf0] sm:%s369]
                %409 = vst [vmem:[%s377 + $0x78] sm:%s369] %v408
                %v410 = vld [vmem:[%s376 + $0x100] sm:%s369]
                %411 = vst [vmem:[%s377 + $0x80] sm:%s369] %v410
                %v412 = vld [vmem:[%s376 + $0x110] sm:%s369]
                %413 = vst [vmem:[%s377 + $0x88] sm:%s369] %v412
                %v414 = vld [vmem:[%s376 + $0x120] sm:%s369]
                %415 = vst [vmem:[%s377 + $0x90] sm:%s369] %v414
                %v416 = vld [vmem:[%s376 + $0x130] sm:%s369]
                %417 = vst [vmem:[%s377 + $0x98] sm:%s369] %v416
                %v418 = vld [vmem:[%s376 + $0x140] sm:%s369]
                %419 = vst [vmem:[%s377 + $0xa0] sm:%s369] %v418
                %v420 = vld [vmem:[%s376 + $0x150] sm:%s369]
                %421 = vst [vmem:[%s377 + $0xa8] sm:%s369] %v420
                %v422 = vld [vmem:[%s376 + $0x160] sm:%s369]
                %423 = vst [vmem:[%s377 + $0xb0] sm:%s369] %v422
                %v424 = vld [vmem:[%s376 + $0x170] sm:%s369]
                %425 = vst [vmem:[%s377 + $0xb8] sm:%s369] %v424
                %v426 = vld [vmem:[%s376 + $0x180] sm:%s369]
                %427 = vst [vmem:[%s377 + $0xc0] sm:%s369] %v426
                %v428 = vld [vmem:[%s376 + $0x190] sm:%s369]
                %429 = vst [vmem:[%s377 + $0xc8] sm:%s369] %v428
                %v430 = vld [vmem:[%s376 + $0x1a0] sm:%s369]
                %431 = vst [vmem:[%s377 + $0xd0] sm:%s369] %v430
                %v432 = vld [vmem:[%s376 + $0x1b0] sm:%s369]
                %433 = vst [vmem:[%s377 + $0xd8] sm:%s369] %v432
                %v434 = vld [vmem:[%s376 + $0x1c0] sm:%s369]
                %435 = vst [vmem:[%s377 + $0xe0] sm:%s369] %v434
                %v436 = vld [vmem:[%s376 + $0x1d0] sm:%s369]
                %437 = vst [vmem:[%s377 + $0xe8] sm:%s369] %v436
                %v438 = vld [vmem:[%s376 + $0x1e0] sm:%s369]
                %439 = vst [vmem:[%s377 + $0xf0] sm:%s369] %v438
                %v440 = vld [vmem:[%s376 + $0x1f0] sm:%s369]
                %441 = vst [vmem:[%s377 + $0xf8] sm:%s369] %v440
                %v442 = vld [vmem:[%s376 + $0x200] sm:%s369]
                %443 = vst [vmem:[%s377 + $0x100] sm:%s369] %v442
                %v444 = vld [vmem:[%s376 + $0x210] sm:%s369]
                %445 = vst [vmem:[%s377 + $0x108] sm:%s369] %v444
                %v446 = vld [vmem:[%s376 + $0x220] sm:%s369]
                %447 = vst [vmem:[%s377 + $0x110] sm:%s369] %v446
                %v448 = vld [vmem:[%s376 + $0x230] sm:%s369]
                %449 = vst [vmem:[%s377 + $0x118] sm:%s369] %v448
                %v450 = vld [vmem:[%s376 + $0x240] sm:%s369]
                %451 = vst [vmem:[%s377 + $0x120] sm:%s369] %v450
                %v452 = vld [vmem:[%s376 + $0x250] sm:%s369]
                %453 = vst [vmem:[%s377 + $0x128] sm:%s369] %v452
                %v454 = vld [vmem:[%s376 + $0x260] sm:%s369]
                %455 = vst [vmem:[%s377 + $0x130] sm:%s369] %v454
                %v456 = vld [vmem:[%s376 + $0x270] sm:%s369]
                %457 = vst [vmem:[%s377 + $0x138] sm:%s369] %v456
                %v458 = vld [vmem:[%s376 + $0x280] sm:%s369]
                %459 = vst [vmem:[%s377 + $0x140] sm:%s369] %v458
                %v460 = vld [vmem:[%s376 + $0x290] sm:%s369]
                %461 = vst [vmem:[%s377 + $0x148] sm:%s369] %v460
                %v462 = vld [vmem:[%s376 + $0x2a0] sm:%s369]
                %463 = vst [vmem:[%s377 + $0x150] sm:%s369] %v462
                %v464 = vld [vmem:[%s376 + $0x2b0] sm:%s369]
                %465 = vst [vmem:[%s377 + $0x158] sm:%s369] %v464
                %v466 = vld [vmem:[%s376 + $0x2c0] sm:%s369]
                %467 = vst [vmem:[%s377 + $0x160] sm:%s369] %v466
                %v468 = vld [vmem:[%s376 + $0x2d0] sm:%s369]
                %469 = vst [vmem:[%s377 + $0x168] sm:%s369] %v468
                %v470 = vld [vmem:[%s376 + $0x2e0] sm:%s369]
                %471 = vst [vmem:[%s377 + $0x170] sm:%s369] %v470
                %v472 = vld [vmem:[%s376 + $0x2f0] sm:%s369]
                %473 = vst [vmem:[%s377 + $0x178] sm:%s369] %v472
                %v474 = vld [vmem:[%s376 + $0x300] sm:%s369]
                %475 = vst [vmem:[%s377 + $0x180] sm:%s369] %v474
                %v476 = vld [vmem:[%s376 + $0x310] sm:%s369]
                %477 = vst [vmem:[%s377 + $0x188] sm:%s369] %v476
                %v478 = vld [vmem:[%s376 + $0x320] sm:%s369]
                %479 = vst [vmem:[%s377 + $0x190] sm:%s369] %v478
                %v480 = vld [vmem:[%s376 + $0x330] sm:%s369]
                %481 = vst [vmem:[%s377 + $0x198] sm:%s369] %v480
                %v482 = vld [vmem:[%s376 + $0x340] sm:%s369]
                %483 = vst [vmem:[%s377 + $0x1a0] sm:%s369] %v482
                %v484 = vld [vmem:[%s376 + $0x350] sm:%s369]
                %485 = vst [vmem:[%s377 + $0x1a8] sm:%s369] %v484
                %v486 = vld [vmem:[%s376 + $0x360] sm:%s369]
                %487 = vst [vmem:[%s377 + $0x1b0] sm:%s369] %v486
                %v488 = vld [vmem:[%s376 + $0x370] sm:%s369]
                %489 = vst [vmem:[%s377 + $0x1b8] sm:%s369] %v488
                %v490 = vld [vmem:[%s376 + $0x380] sm:%s369]
                %491 = vst [vmem:[%s377 + $0x1c0] sm:%s369] %v490
                %v492 = vld [vmem:[%s376 + $0x390] sm:%s369]
                %493 = vst [vmem:[%s377 + $0x1c8] sm:%s369] %v492
                %v494 = vld [vmem:[%s376 + $0x3a0] sm:%s369]
                %495 = vst [vmem:[%s377 + $0x1d0] sm:%s369] %v494
                %v496 = vld [vmem:[%s376 + $0x3b0] sm:%s369]
                %497 = vst [vmem:[%s377 + $0x1d8] sm:%s369] %v496
                %v498 = vld [vmem:[%s376 + $0x3c0] sm:%s369]
                %499 = vst [vmem:[%s377 + $0x1e0] sm:%s369] %v498
                %v500 = vld [vmem:[%s376 + $0x3d0] sm:%s369]
                %501 = vst [vmem:[%s377 + $0x1e8] sm:%s369] %v500
                %v502 = vld [vmem:[%s376 + $0x3e0] sm:%s369]
                %503 = vst [vmem:[%s377 + $0x1f0] sm:%s369] %v502
                %v504 = vld [vmem:[%s376 + $0x3f0] sm:%s369]
                %505 = vst [vmem:[%s377 + $0x1f8] sm:%s369] %v504
                %v506 = vld [vmem:[%s376 + $0x400] sm:%s369]
                %507 = vst [vmem:[%s377 + $0x200] sm:%s369] %v506
                %v508 = vld [vmem:[%s376 + $0x410] sm:%s369]
                %509 = vst [vmem:[%s377 + $0x208] sm:%s369] %v508
                %v510 = vld [vmem:[%s376 + $0x420] sm:%s369]
                %511 = vst [vmem:[%s377 + $0x210] sm:%s369] %v510
                %v512 = vld [vmem:[%s376 + $0x430] sm:%s369]
                %513 = vst [vmem:[%s377 + $0x218] sm:%s369] %v512
                %v514 = vld [vmem:[%s376 + $0x440] sm:%s369]
                %515 = vst [vmem:[%s377 + $0x220] sm:%s369] %v514
                %v516 = vld [vmem:[%s376 + $0x450] sm:%s369]
                %517 = vst [vmem:[%s377 + $0x228] sm:%s369] %v516
                %v518 = vld [vmem:[%s376 + $0x460] sm:%s369]
                %519 = vst [vmem:[%s377 + $0x230] sm:%s369] %v518
                %v520 = vld [vmem:[%s376 + $0x470] sm:%s369]
                %521 = vst [vmem:[%s377 + $0x238] sm:%s369] %v520
                %v522 = vld [vmem:[%s376 + $0x480] sm:%s369]
                %523 = vst [vmem:[%s377 + $0x240] sm:%s369] %v522
                %v524 = vld [vmem:[%s376 + $0x490] sm:%s369]
                %525 = vst [vmem:[%s377 + $0x248] sm:%s369] %v524
                %v526 = vld [vmem:[%s376 + $0x4a0] sm:%s369]
                %527 = vst [vmem:[%s377 + $0x250] sm:%s369] %v526
                %v528 = vld [vmem:[%s376 + $0x4b0] sm:%s369]
                %529 = vst [vmem:[%s377 + $0x258] sm:%s369] %v528
                %v530 = vld [vmem:[%s376 + $0x4c0] sm:%s369]
                %531 = vst [vmem:[%s377 + $0x260] sm:%s369] %v530
                %v532 = vld [vmem:[%s376 + $0x4d0] sm:%s369]
                %533 = vst [vmem:[%s377 + $0x268] sm:%s369] %v532
                %v534 = vld [vmem:[%s376 + $0x4e0] sm:%s369]
                %535 = vst [vmem:[%s377 + $0x270] sm:%s369] %v534
                %v536 = vld [vmem:[%s376 + $0x4f0] sm:%s369]
                %537 = vst [vmem:[%s377 + $0x278] sm:%s369] %v536
                %v538 = vld [vmem:[%s376 + $0x500] sm:%s369]
                %539 = vst [vmem:[%s377 + $0x280] sm:%s369] %v538
                %v540 = vld [vmem:[%s376 + $0x510] sm:%s369]
                %541 = vst [vmem:[%s377 + $0x288] sm:%s369] %v540
                %v542 = vld [vmem:[%s376 + $0x520] sm:%s369]
                %543 = vst [vmem:[%s377 + $0x290] sm:%s369] %v542
                %v544 = vld [vmem:[%s376 + $0x530] sm:%s369]
                %545 = vst [vmem:[%s377 + $0x298] sm:%s369] %v544
                %v546 = vld [vmem:[%s376 + $0x540] sm:%s369]
                %547 = vst [vmem:[%s377 + $0x2a0] sm:%s369] %v546
                %v548 = vld [vmem:[%s376 + $0x550] sm:%s369]
                %549 = vst [vmem:[%s377 + $0x2a8] sm:%s369] %v548
                %v550 = vld [vmem:[%s376 + $0x560] sm:%s369]
                %551 = vst [vmem:[%s377 + $0x2b0] sm:%s369] %v550
                %v552 = vld [vmem:[%s376 + $0x570] sm:%s369]
                %553 = vst [vmem:[%s377 + $0x2b8] sm:%s369] %v552
                %v554 = vld [vmem:[%s376 + $0x580] sm:%s369]
                %555 = vst [vmem:[%s377 + $0x2c0] sm:%s369] %v554
                %v556 = vld [vmem:[%s376 + $0x590] sm:%s369]
                %557 = vst [vmem:[%s377 + $0x2c8] sm:%s369] %v556
                %v558 = vld [vmem:[%s376 + $0x5a0] sm:%s369]
                %559 = vst [vmem:[%s377 + $0x2d0] sm:%s369] %v558
                %v560 = vld [vmem:[%s376 + $0x5b0] sm:%s369]
                %561 = vst [vmem:[%s377 + $0x2d8] sm:%s369] %v560
                %v562 = vld [vmem:[%s376 + $0x5c0] sm:%s369]
                %563 = vst [vmem:[%s377 + $0x2e0] sm:%s369] %v562
                %v564 = vld [vmem:[%s376 + $0x5d0] sm:%s369]
                %565 = vst [vmem:[%s377 + $0x2e8] sm:%s369] %v564
                %v566 = vld [vmem:[%s376 + $0x5e0] sm:%s369]
                %567 = vst [vmem:[%s377 + $0x2f0] sm:%s369] %v566
                %v568 = vld [vmem:[%s376 + $0x5f0] sm:%s369]
                %569 = vst [vmem:[%s377 + $0x2f8] sm:%s369] %v568
                %v570 = vld [vmem:[%s376 + $0x600] sm:%s369]
                %571 = vst [vmem:[%s377 + $0x300] sm:%s369] %v570
                %v572 = vld [vmem:[%s376 + $0x610] sm:%s369]
                %573 = vst [vmem:[%s377 + $0x308] sm:%s369] %v572
                %v574 = vld [vmem:[%s376 + $0x620] sm:%s369]
                %575 = vst [vmem:[%s377 + $0x310] sm:%s369] %v574
                %v576 = vld [vmem:[%s376 + $0x630] sm:%s369]
                %577 = vst [vmem:[%s377 + $0x318] sm:%s369] %v576
              $region81: #{rnatracker_forward.1} parent=75 // loop_footer
                %s375 = sadd.s32 1, %s371
              $region82: #{rnatracker_forward.1} parent=75 // loop_footer_branch
                %370 = sbr.rel target = $region78
              $region83: #{rnatracker_forward.1} parent=75 // loop_exit
                _
            $region76: #{rnatracker_forward.1} parent=67 // pred_fallthru
              _
          $region68: #{rnatracker_forward.1} parent=63 // pred_fallthru
            _
          %790 = vnop
        $region64: #{rnatracker_forward.1} parent=59 // pred_fallthru
          _
      $region60: #{rnatracker_forward.1} parent=5 // pred_fallthru
        _
      %p791 = scmp.le.s32.totalorder 1, %s18
      %p792 = scmp.lt.s32.totalorder %s18, 3
      %p793 = pnand %p791, %p792
      %p794 = pneg %p793
      // Predicated region
      $region99: #{rnatracker_forward.1} parent=5 // pred_check
        _
      $region100: #{rnatracker_forward.1} parent=5 // pred_check_branch
        %796 = sbr.rel (%p793) target = $region102
      $region101: #{rnatracker_forward.1} parent=5 // pred_region
        %s797 = ssub.s32 %s18, 1
        %s798 = sand.u32 %s31, 1
        %s799 = sand.u32 %s31, 1
        %s800 = smul.addr %s799, 800
        %s801 = scalar_lea.vmem [#allocation5], %s800
        // Predicated region
        $region103: #{rnatracker_forward.1} parent=101 // pred_check
          %p802 = pneg %p44
        $region104: #{rnatracker_forward.1} parent=101 // pred_check_branch
          %804 = sbr.rel (%p802) target = $region106
        $region105: #{rnatracker_forward.1} parent=101 // pred_region
          _
        $region106: #{rnatracker_forward.1} parent=101 // pred_fallthru
          _
        %s805 = sand.u32 %s31, 1
        %s806 = sand.u32 %s31, 1
        %s807 = smul.addr %s806, 800
        %s808 = scalar_lea.vmem [#allocation5], %s807
        %p809 = pneg %p44
        %p810 = pneg %p41
        %p811 = pneg %p65
        %p812 = pneg %p62
        %p813 = pneg %p86
        %p814 = pneg %p83
        %p815 = pneg %p107
        %p816 = pneg %p104
        %p817 = pneg %p128
        %p818 = pneg %p125
        %p819 = pneg %p149
        %p820 = pneg %p146
        %p821 = pneg %p170
        %p822 = pneg %p167
        %p823 = pneg %p191
        %p824 = pneg %p188
        %p825 = pneg %p212
        %p826 = pneg %p209
        %p827 = pneg %p233
        %p828 = pneg %p230
        %p829 = pneg %p254
        %p830 = pneg %p251
        %p831 = pneg %p275
        %p832 = pneg %p272
        %p833 = pneg %p301
        %p834 = pneg %p298
        %p835 = scmp.lt.s32.totalorder %s23, 1
        %s836 = scalar_select %p835, %s23, 1
        %s837 = smul.addr %s836, 8
        %s838 = scalar_lea.vmem %s12, %s837
        %p839 = scmp.lt.s32.totalorder %s23, 1
        %s840 = scalar_select %p839, %s23, 1
        %s841 = smul.addr %s840, 8
        %s842 = scalar_lea.vmem %s12, %s841
        %v844 = vld [vmem:[%s801] sm:$0xff]
        %v845 = vld [vmem:[%s801 + $0x8] sm:$0xff]
        %v846 = vld [vmem:[%s801 + $0x10] sm:$0xff]
        %v847 = vld [vmem:[%s801 + $0x18] sm:$0xff]
        %v848 = vld [vmem:[%s801 + $0x20] sm:$0xff]
        %v849 = vld [vmem:[%s801 + $0x28] sm:$0xff]
        %v850 = vld [vmem:[%s801 + $0x30] sm:$0xff]
        %v851 = vld [vmem:[%s801 + $0x38] sm:$0xff]
        %v852 = vld [vmem:[%s801 + $0x40] sm:$0xff]
        %v853 = vld [vmem:[%s801 + $0x48] sm:$0xff]
        %v854 = vld [vmem:[%s801 + $0x50] sm:$0xff]
        %v855 = vld [vmem:[%s801 + $0x58] sm:$0xff]
        %v856 = vld [vmem:[%s801 + $0x60] sm:$0xff]
        %v857 = vld [vmem:[%s801 + $0x68] sm:$0xff]
        %v858 = vld [vmem:[%s801 + $0x70] sm:$0xff]
        %v859 = vld [vmem:[%s801 + $0x78] sm:$0xff]
        %v860 = vld [vmem:[%s801 + $0x80] sm:$0xff]
        %v861 = vld [vmem:[%s801 + $0x88] sm:$0xff]
        %v862 = vld [vmem:[%s801 + $0x90] sm:$0xff]
        %v863 = vld [vmem:[%s801 + $0x98] sm:$0xff]
        %v864 = vld [vmem:[%s801 + $0xa0] sm:$0xff]
        %v865 = vld [vmem:[%s801 + $0xa8] sm:$0xff]
        %v866 = vld [vmem:[%s801 + $0xb0] sm:$0xff]
        %v867 = vld [vmem:[%s801 + $0xb8] sm:$0xff]
        %v868 = vld [vmem:[%s801 + $0xc0] sm:$0xff]
        %v869 = vld [vmem:[%s801 + $0xc8] sm:$0xff]
        %v870 = vld [vmem:[%s801 + $0xd0] sm:$0xff]
        %v871 = vld [vmem:[%s801 + $0xd8] sm:$0xff]
        %v872 = vld [vmem:[%s801 + $0xe0] sm:$0xff]
        %v873 = vld [vmem:[%s801 + $0xe8] sm:$0xff]
        %v874 = vld [vmem:[%s801 + $0xf0] sm:$0xff]
        %v875 = vld [vmem:[%s801 + $0xf8] sm:$0xff]
        %v876 = vld [vmem:[%s801 + $0x100] sm:$0xff]
        %v877 = vld [vmem:[%s801 + $0x108] sm:$0xff]
        %v878 = vld [vmem:[%s801 + $0x110] sm:$0xff]
        %v879 = vld [vmem:[%s801 + $0x118] sm:$0xff]
        %v880 = vld [vmem:[%s801 + $0x120] sm:$0xff]
        %v881 = vld [vmem:[%s801 + $0x128] sm:$0xff]
        %v882 = vld [vmem:[%s801 + $0x130] sm:$0xff]
        %v883 = vld [vmem:[%s801 + $0x138] sm:$0xff]
        %v884 = vld [vmem:[%s801 + $0x140] sm:$0xff]
        %v885 = vld [vmem:[%s801 + $0x148] sm:$0xff]
        %v886 = vld [vmem:[%s801 + $0x150] sm:$0xff]
        %v887 = vld [vmem:[%s801 + $0x158] sm:$0xff]
        %v888 = vld [vmem:[%s801 + $0x160] sm:$0xff]
        %v889 = vld [vmem:[%s801 + $0x168] sm:$0xff]
        %v890 = vld [vmem:[%s801 + $0x170] sm:$0xff]
        %v891 = vld [vmem:[%s801 + $0x178] sm:$0xff]
        %v892 = vld [vmem:[%s801 + $0x180] sm:$0xff]
        %v893 = vld [vmem:[%s801 + $0x188] sm:$0xff]
        %v894 = vld [vmem:[%s801 + $0x190] sm:$0xff]
        %v895 = vld [vmem:[%s801 + $0x198] sm:$0xff]
        %v896 = vld [vmem:[%s801 + $0x1a0] sm:$0xff]
        %v897 = vld [vmem:[%s801 + $0x1a8] sm:$0xff]
        %v898 = vld [vmem:[%s801 + $0x1b0] sm:$0xff]
        %v899 = vld [vmem:[%s801 + $0x1b8] sm:$0xff]
        %v900 = vld [vmem:[%s801 + $0x1c0] sm:$0xff]
        %v901 = vld [vmem:[%s801 + $0x1c8] sm:$0xff]
        %v902 = vld [vmem:[%s801 + $0x1d0] sm:$0xff]
        %v903 = vld [vmem:[%s801 + $0x1d8] sm:$0xff]
        %v904 = vld [vmem:[%s801 + $0x1e0] sm:$0xff]
        %v905 = vld [vmem:[%s801 + $0x1e8] sm:$0xff]
        %v906 = vld [vmem:[%s801 + $0x1f0] sm:$0xff]
        %v907 = vld [vmem:[%s801 + $0x1f8] sm:$0xff]
        %v908 = vld [vmem:[%s801 + $0x200] sm:$0xff]
        %v909 = vld [vmem:[%s801 + $0x208] sm:$0xff]
        %v910 = vld [vmem:[%s801 + $0x210] sm:$0xff]
        %v911 = vld [vmem:[%s801 + $0x218] sm:$0xff]
        %v912 = vld [vmem:[%s801 + $0x220] sm:$0xff]
        %v913 = vld [vmem:[%s801 + $0x228] sm:$0xff]
        %v914 = vld [vmem:[%s801 + $0x230] sm:$0xff]
        %v915 = vld [vmem:[%s801 + $0x238] sm:$0xff]
        %v916 = vld [vmem:[%s801 + $0x240] sm:$0xff]
        %v917 = vld [vmem:[%s801 + $0x248] sm:$0xff]
        %v918 = vld [vmem:[%s801 + $0x250] sm:$0xff]
        %v919 = vld [vmem:[%s801 + $0x258] sm:$0xff]
        %v920 = vld [vmem:[%s801 + $0x260] sm:$0xff]
        %v921 = vld [vmem:[%s801 + $0x268] sm:$0xff]
        %v922 = vld [vmem:[%s801 + $0x270] sm:$0xff]
        %v923 = vld [vmem:[%s801 + $0x278] sm:$0xff]
        %v924 = vld [vmem:[%s801 + $0x280] sm:$0xff]
        %v925 = vld [vmem:[%s801 + $0x288] sm:$0xff]
        %v926 = vld [vmem:[%s801 + $0x290] sm:$0xff]
        %v927 = vld [vmem:[%s801 + $0x298] sm:$0xff]
        %v928 = vld [vmem:[%s801 + $0x2a0] sm:$0xff]
        %v929 = vld [vmem:[%s801 + $0x2a8] sm:$0xff]
        %v930 = vld [vmem:[%s801 + $0x2b0] sm:$0xff]
        %v931 = vld [vmem:[%s801 + $0x2b8] sm:$0xff]
        %v932 = vld [vmem:[%s801 + $0x2c0] sm:$0xff]
        %v933 = vld [vmem:[%s801 + $0x2c8] sm:$0xff]
        %v934 = vld [vmem:[%s801 + $0x2d0] sm:$0xff]
        %v935 = vld [vmem:[%s801 + $0x2d8] sm:$0xff]
        %v936 = vld [vmem:[%s801 + $0x2e0] sm:$0xff]
        %v937 = vld [vmem:[%s801 + $0x2e8] sm:$0xff]
        %v938 = vld [vmem:[%s801 + $0x2f0] sm:$0xff]
        %v939 = vld [vmem:[%s801 + $0x2f8] sm:$0xff]
        %v940 = vld [vmem:[%s801 + $0x300] sm:$0xff]
        %v941 = vld [vmem:[%s801 + $0x308] sm:$0xff]
        %v942 = vld [vmem:[%s801 + $0x310] sm:$0xff]
        %v943 = vld [vmem:[%s801 + $0x318] sm:$0xff]
        %1035 = vrot.lane.b32.xlu0 %v845, 4
        %v1036 = vpop.permute.xlu0 %1035
        %1037 = vrot.lane.b32.xlu0 %v846, 4
        %v1038 = vpop.permute.xlu0 %1037
        %1039 = vrot.lane.b32.xlu0 %v847, 4
        %v1040 = vpop.permute.xlu0 %1039
        %1041 = vrot.lane.b32.xlu0 %v848, 4
        %v1042 = vpop.permute.xlu0 %1041
        %1043 = vrot.lane.b32.xlu0 %v849, 4
        %v1044 = vpop.permute.xlu0 %1043
        %1045 = vrot.lane.b32.xlu0 %v850, 4
        %v1046 = vpop.permute.xlu0 %1045
        %1047 = vrot.lane.b32.xlu0 %v851, 4
        %v1048 = vpop.permute.xlu0 %1047
        %1049 = vrot.lane.b32.xlu0 %v852, 4
        %v1050 = vpop.permute.xlu0 %1049
        %1051 = vrot.lane.b32.xlu0 %v853, 4
        %v1052 = vpop.permute.xlu0 %1051
        %1053 = vrot.lane.b32.xlu0 %v854, 4
        %v1054 = vpop.permute.xlu0 %1053
        %1055 = vrot.lane.b32.xlu0 %v855, 4
        %v1056 = vpop.permute.xlu0 %1055
        %1057 = vrot.lane.b32.xlu0 %v856, 4
        %v1058 = vpop.permute.xlu0 %1057
        %1059 = vrot.lane.b32.xlu0 %v857, 4
        %v1060 = vpop.permute.xlu0 %1059
        %1061 = vrot.lane.b32.xlu0 %v858, 4
        %v1062 = vpop.permute.xlu0 %1061
        %1063 = vrot.lane.b32.xlu0 %v859, 4
        %v1064 = vpop.permute.xlu0 %1063
        %1065 = vrot.lane.b32.xlu0 %v860, 4
        %v1066 = vpop.permute.xlu0 %1065
        %1067 = vrot.lane.b32.xlu0 %v861, 4
        %v1068 = vpop.permute.xlu0 %1067
        %1069 = vrot.lane.b32.xlu0 %v862, 4
        %v1070 = vpop.permute.xlu0 %1069
        %1071 = vrot.lane.b32.xlu0 %v863, 4
        %v1072 = vpop.permute.xlu0 %1071
        %1073 = vrot.lane.b32.xlu0 %v864, 4
        %v1074 = vpop.permute.xlu0 %1073
        %1075 = vrot.lane.b32.xlu0 %v865, 4
        %v1076 = vpop.permute.xlu0 %1075
        %1077 = vrot.lane.b32.xlu0 %v866, 4
        %v1078 = vpop.permute.xlu0 %1077
        %1079 = vrot.lane.b32.xlu0 %v867, 4
        %v1080 = vpop.permute.xlu0 %1079
        %1081 = vrot.lane.b32.xlu0 %v868, 4
        %v1082 = vpop.permute.xlu0 %1081
        %1083 = vrot.lane.b32.xlu0 %v869, 4
        %v1084 = vpop.permute.xlu0 %1083
        %1085 = vrot.lane.b32.xlu0 %v870, 4
        %v1086 = vpop.permute.xlu0 %1085
        %1087 = vrot.lane.b32.xlu0 %v871, 4
        %v1088 = vpop.permute.xlu0 %1087
        %1089 = vrot.lane.b32.xlu0 %v872, 4
        %v1090 = vpop.permute.xlu0 %1089
        %1091 = vrot.lane.b32.xlu0 %v873, 4
        %v1092 = vpop.permute.xlu0 %1091
        %1093 = vrot.lane.b32.xlu0 %v874, 4
        %v1094 = vpop.permute.xlu0 %1093
        %1095 = vrot.lane.b32.xlu0 %v875, 4
        %v1096 = vpop.permute.xlu0 %1095
        %1097 = vrot.lane.b32.xlu0 %v876, 4
        %v1098 = vpop.permute.xlu0 %1097
        %1099 = vrot.lane.b32.xlu0 %v877, 4
        %v1100 = vpop.permute.xlu0 %1099
        %1101 = vrot.lane.b32.xlu0 %v878, 4
        %v1102 = vpop.permute.xlu0 %1101
        %1103 = vrot.lane.b32.xlu0 %v879, 4
        %v1104 = vpop.permute.xlu0 %1103
        %1105 = vrot.lane.b32.xlu0 %v880, 4
        %v1106 = vpop.permute.xlu0 %1105
        %1107 = vrot.lane.b32.xlu0 %v881, 4
        %v1108 = vpop.permute.xlu0 %1107
        %1109 = vrot.lane.b32.xlu0 %v882, 4
        %v1110 = vpop.permute.xlu0 %1109
        %1111 = vrot.lane.b32.xlu0 %v883, 4
        %v1112 = vpop.permute.xlu0 %1111
        %1113 = vrot.lane.b32.xlu0 %v884, 4
        %v1114 = vpop.permute.xlu0 %1113
        %1115 = vrot.lane.b32.xlu0 %v885, 4
        %v1116 = vpop.permute.xlu0 %1115
        %1117 = vrot.lane.b32.xlu0 %v886, 4
        %v1118 = vpop.permute.xlu0 %1117
        %1119 = vrot.lane.b32.xlu0 %v887, 4
        %v1120 = vpop.permute.xlu0 %1119
        %1121 = vrot.lane.b32.xlu0 %v888, 4
        %v1122 = vpop.permute.xlu0 %1121
        %1123 = vrot.lane.b32.xlu0 %v889, 4
        %v1124 = vpop.permute.xlu0 %1123
        %1125 = vrot.lane.b32.xlu0 %v890, 4
        %v1126 = vpop.permute.xlu0 %1125
        %1127 = vrot.lane.b32.xlu0 %v891, 4
        %v1128 = vpop.permute.xlu0 %1127
        %1129 = vrot.lane.b32.xlu0 %v892, 4
        %v1130 = vpop.permute.xlu0 %1129
        %1131 = vrot.lane.b32.xlu0 %v893, 4
        %v1132 = vpop.permute.xlu0 %1131
        %1133 = vrot.lane.b32.xlu0 %v894, 4
        %v1134 = vpop.permute.xlu0 %1133
        %1135 = vrot.lane.b32.xlu0 %v895, 4
        %v1136 = vpop.permute.xlu0 %1135
        %1137 = vrot.lane.b32.xlu0 %v896, 4
        %v1138 = vpop.permute.xlu0 %1137
        %1139 = vrot.lane.b32.xlu0 %v897, 4
        %v1140 = vpop.permute.xlu0 %1139
        %1141 = vrot.lane.b32.xlu0 %v898, 4
        %v1142 = vpop.permute.xlu0 %1141
        %1143 = vrot.lane.b32.xlu0 %v899, 4
        %v1144 = vpop.permute.xlu0 %1143
        %1145 = vrot.lane.b32.xlu0 %v900, 4
        %v1146 = vpop.permute.xlu0 %1145
        %1147 = vrot.lane.b32.xlu0 %v901, 4
        %v1148 = vpop.permute.xlu0 %1147
        %1149 = vrot.lane.b32.xlu0 %v902, 4
        %v1150 = vpop.permute.xlu0 %1149
        %1151 = vrot.lane.b32.xlu0 %v903, 4
        %v1152 = vpop.permute.xlu0 %1151
        %1153 = vrot.lane.b32.xlu0 %v904, 4
        %v1154 = vpop.permute.xlu0 %1153
        %1155 = vrot.lane.b32.xlu0 %v905, 4
        %v1156 = vpop.permute.xlu0 %1155
        %1157 = vrot.lane.b32.xlu0 %v906, 4
        %v1158 = vpop.permute.xlu0 %1157
        %1159 = vrot.lane.b32.xlu0 %v907, 4
        %v1160 = vpop.permute.xlu0 %1159
        %1161 = vrot.lane.b32.xlu0 %v908, 4
        %v1162 = vpop.permute.xlu0 %1161
        %1163 = vrot.lane.b32.xlu0 %v909, 4
        %v1164 = vpop.permute.xlu0 %1163
        %1165 = vrot.lane.b32.xlu0 %v910, 4
        %v1166 = vpop.permute.xlu0 %1165
        %1167 = vrot.lane.b32.xlu0 %v911, 4
        %v1168 = vpop.permute.xlu0 %1167
        %1169 = vrot.lane.b32.xlu0 %v912, 4
        %v1170 = vpop.permute.xlu0 %1169
        %1171 = vrot.lane.b32.xlu0 %v913, 4
        %v1172 = vpop.permute.xlu0 %1171
        %1173 = vrot.lane.b32.xlu0 %v914, 4
        %v1174 = vpop.permute.xlu0 %1173
        %1175 = vrot.lane.b32.xlu0 %v915, 4
        %v1176 = vpop.permute.xlu0 %1175
        %1177 = vrot.lane.b32.xlu0 %v916, 4
        %v1178 = vpop.permute.xlu0 %1177
        %1179 = vrot.lane.b32.xlu0 %v917, 4
        %v1180 = vpop.permute.xlu0 %1179
        %1181 = vrot.lane.b32.xlu0 %v918, 4
        %v1182 = vpop.permute.xlu0 %1181
        %1183 = vrot.lane.b32.xlu0 %v919, 4
        %v1184 = vpop.permute.xlu0 %1183
        %1185 = vrot.lane.b32.xlu0 %v920, 4
        %v1186 = vpop.permute.xlu0 %1185
        %1187 = vrot.lane.b32.xlu0 %v921, 4
        %v1188 = vpop.permute.xlu0 %1187
        %1189 = vrot.lane.b32.xlu0 %v922, 4
        %v1190 = vpop.permute.xlu0 %1189
        %1191 = vrot.lane.b32.xlu0 %v923, 4
        %v1192 = vpop.permute.xlu0 %1191
        %1193 = vrot.lane.b32.xlu0 %v924, 4
        %v1194 = vpop.permute.xlu0 %1193
        %1195 = vrot.lane.b32.xlu0 %v925, 4
        %v1196 = vpop.permute.xlu0 %1195
        %1197 = vrot.lane.b32.xlu0 %v926, 4
        %v1198 = vpop.permute.xlu0 %1197
        %1199 = vrot.lane.b32.xlu0 %v927, 4
        %v1200 = vpop.permute.xlu0 %1199
        %1201 = vrot.lane.b32.xlu0 %v928, 4
        %v1202 = vpop.permute.xlu0 %1201
        %1203 = vrot.lane.b32.xlu0 %v929, 4
        %v1204 = vpop.permute.xlu0 %1203
        %1205 = vrot.lane.b32.xlu0 %v930, 4
        %v1206 = vpop.permute.xlu0 %1205
        %1207 = vrot.lane.b32.xlu0 %v931, 4
        %v1208 = vpop.permute.xlu0 %1207
        %1209 = vrot.lane.b32.xlu0 %v932, 4
        %v1210 = vpop.permute.xlu0 %1209
        %1211 = vrot.lane.b32.xlu0 %v933, 4
        %v1212 = vpop.permute.xlu0 %1211
        %1213 = vrot.lane.b32.xlu0 %v934, 4
        %v1214 = vpop.permute.xlu0 %1213
        %1215 = vrot.lane.b32.xlu0 %v935, 4
        %v1216 = vpop.permute.xlu0 %1215
        %1309 = vrot.lane.b32.xlu0 %v846, 8
        %v1310 = vpop.permute.xlu0 %1309
        %1311 = vrot.lane.b32.xlu0 %v847, 8
        %v1312 = vpop.permute.xlu0 %1311
        %1313 = vrot.lane.b32.xlu0 %v848, 8
        %v1314 = vpop.permute.xlu0 %1313
        %1315 = vrot.lane.b32.xlu0 %v849, 8
        %v1316 = vpop.permute.xlu0 %1315
        %1317 = vrot.lane.b32.xlu0 %v850, 8
        %v1318 = vpop.permute.xlu0 %1317
        %1319 = vrot.lane.b32.xlu0 %v851, 8
        %v1320 = vpop.permute.xlu0 %1319
        %1321 = vrot.lane.b32.xlu0 %v852, 8
        %v1322 = vpop.permute.xlu0 %1321
        %1323 = vrot.lane.b32.xlu0 %v853, 8
        %v1324 = vpop.permute.xlu0 %1323
        %1325 = vrot.lane.b32.xlu0 %v854, 8
        %v1326 = vpop.permute.xlu0 %1325
        %1327 = vrot.lane.b32.xlu0 %v855, 8
        %v1328 = vpop.permute.xlu0 %1327
        %1329 = vrot.lane.b32.xlu0 %v856, 8
        %v1330 = vpop.permute.xlu0 %1329
        %1331 = vrot.lane.b32.xlu0 %v857, 8
        %v1332 = vpop.permute.xlu0 %1331
        %1333 = vrot.lane.b32.xlu0 %v858, 8
        %v1334 = vpop.permute.xlu0 %1333
        %1335 = vrot.lane.b32.xlu0 %v859, 8
        %v1336 = vpop.permute.xlu0 %1335
        %1337 = vrot.lane.b32.xlu0 %v860, 8
        %v1338 = vpop.permute.xlu0 %1337
        %1339 = vrot.lane.b32.xlu0 %v861, 8
        %v1340 = vpop.permute.xlu0 %1339
        %1341 = vrot.lane.b32.xlu0 %v862, 8
        %v1342 = vpop.permute.xlu0 %1341
        %1343 = vrot.lane.b32.xlu0 %v863, 8
        %v1344 = vpop.permute.xlu0 %1343
        %1345 = vrot.lane.b32.xlu0 %v864, 8
        %v1346 = vpop.permute.xlu0 %1345
        %1347 = vrot.lane.b32.xlu0 %v865, 8
        %v1348 = vpop.permute.xlu0 %1347
        %1349 = vrot.lane.b32.xlu0 %v866, 8
        %v1350 = vpop.permute.xlu0 %1349
        %1351 = vrot.lane.b32.xlu0 %v867, 8
        %v1352 = vpop.permute.xlu0 %1351
        %1353 = vrot.lane.b32.xlu0 %v868, 8
        %v1354 = vpop.permute.xlu0 %1353
        %1355 = vrot.lane.b32.xlu0 %v869, 8
        %v1356 = vpop.permute.xlu0 %1355
        %1357 = vrot.lane.b32.xlu0 %v870, 8
        %v1358 = vpop.permute.xlu0 %1357
        %1359 = vrot.lane.b32.xlu0 %v871, 8
        %v1360 = vpop.permute.xlu0 %1359
        %1361 = vrot.lane.b32.xlu0 %v872, 8
        %v1362 = vpop.permute.xlu0 %1361
        %1363 = vrot.lane.b32.xlu0 %v873, 8
        %v1364 = vpop.permute.xlu0 %1363
        %1365 = vrot.lane.b32.xlu0 %v874, 8
        %v1366 = vpop.permute.xlu0 %1365
        %1367 = vrot.lane.b32.xlu0 %v875, 8
        %v1368 = vpop.permute.xlu0 %1367
        %1369 = vrot.lane.b32.xlu0 %v876, 8
        %v1370 = vpop.permute.xlu0 %1369
        %1371 = vrot.lane.b32.xlu0 %v877, 8
        %v1372 = vpop.permute.xlu0 %1371
        %1373 = vrot.lane.b32.xlu0 %v878, 8
        %v1374 = vpop.permute.xlu0 %1373
        %1375 = vrot.lane.b32.xlu0 %v879, 8
        %v1376 = vpop.permute.xlu0 %1375
        %1377 = vrot.lane.b32.xlu0 %v880, 8
        %v1378 = vpop.permute.xlu0 %1377
        %1379 = vrot.lane.b32.xlu0 %v881, 8
        %v1380 = vpop.permute.xlu0 %1379
        %1381 = vrot.lane.b32.xlu0 %v882, 8
        %v1382 = vpop.permute.xlu0 %1381
        %1383 = vrot.lane.b32.xlu0 %v883, 8
        %v1384 = vpop.permute.xlu0 %1383
        %1385 = vrot.lane.b32.xlu0 %v884, 8
        %v1386 = vpop.permute.xlu0 %1385
        %1387 = vrot.lane.b32.xlu0 %v885, 8
        %v1388 = vpop.permute.xlu0 %1387
        %1389 = vrot.lane.b32.xlu0 %v886, 8
        %v1390 = vpop.permute.xlu0 %1389
        %1391 = vrot.lane.b32.xlu0 %v887, 8
        %v1392 = vpop.permute.xlu0 %1391
        %1393 = vrot.lane.b32.xlu0 %v888, 8
        %v1394 = vpop.permute.xlu0 %1393
        %1395 = vrot.lane.b32.xlu0 %v889, 8
        %v1396 = vpop.permute.xlu0 %1395
        %1397 = vrot.lane.b32.xlu0 %v890, 8
        %v1398 = vpop.permute.xlu0 %1397
        %1399 = vrot.lane.b32.xlu0 %v891, 8
        %v1400 = vpop.permute.xlu0 %1399
        %1401 = vrot.lane.b32.xlu0 %v892, 8
        %v1402 = vpop.permute.xlu0 %1401
        %1403 = vrot.lane.b32.xlu0 %v893, 8
        %v1404 = vpop.permute.xlu0 %1403
        %1405 = vrot.lane.b32.xlu0 %v894, 8
        %v1406 = vpop.permute.xlu0 %1405
        %1407 = vrot.lane.b32.xlu0 %v895, 8
        %v1408 = vpop.permute.xlu0 %1407
        %1409 = vrot.lane.b32.xlu0 %v896, 8
        %v1410 = vpop.permute.xlu0 %1409
        %1411 = vrot.lane.b32.xlu0 %v897, 8
        %v1412 = vpop.permute.xlu0 %1411
        %1413 = vrot.lane.b32.xlu0 %v898, 8
        %v1414 = vpop.permute.xlu0 %1413
        %1415 = vrot.lane.b32.xlu0 %v899, 8
        %v1416 = vpop.permute.xlu0 %1415
        %1417 = vrot.lane.b32.xlu0 %v900, 8
        %v1418 = vpop.permute.xlu0 %1417
        %1419 = vrot.lane.b32.xlu0 %v901, 8
        %v1420 = vpop.permute.xlu0 %1419
        %1421 = vrot.lane.b32.xlu0 %v902, 8
        %v1422 = vpop.permute.xlu0 %1421
        %1423 = vrot.lane.b32.xlu0 %v903, 8
        %v1424 = vpop.permute.xlu0 %1423
        %1425 = vrot.lane.b32.xlu0 %v904, 8
        %v1426 = vpop.permute.xlu0 %1425
        %1427 = vrot.lane.b32.xlu0 %v905, 8
        %v1428 = vpop.permute.xlu0 %1427
        %1429 = vrot.lane.b32.xlu0 %v906, 8
        %v1430 = vpop.permute.xlu0 %1429
        %1431 = vrot.lane.b32.xlu0 %v907, 8
        %v1432 = vpop.permute.xlu0 %1431
        %1433 = vrot.lane.b32.xlu0 %v908, 8
        %v1434 = vpop.permute.xlu0 %1433
        %1435 = vrot.lane.b32.xlu0 %v909, 8
        %v1436 = vpop.permute.xlu0 %1435
        %1437 = vrot.lane.b32.xlu0 %v910, 8
        %v1438 = vpop.permute.xlu0 %1437
        %1439 = vrot.lane.b32.xlu0 %v911, 8
        %v1440 = vpop.permute.xlu0 %1439
        %1441 = vrot.lane.b32.xlu0 %v912, 8
        %v1442 = vpop.permute.xlu0 %1441
        %1443 = vrot.lane.b32.xlu0 %v913, 8
        %v1444 = vpop.permute.xlu0 %1443
        %1445 = vrot.lane.b32.xlu0 %v914, 8
        %v1446 = vpop.permute.xlu0 %1445
        %1447 = vrot.lane.b32.xlu0 %v915, 8
        %v1448 = vpop.permute.xlu0 %1447
        %1449 = vrot.lane.b32.xlu0 %v916, 8
        %v1450 = vpop.permute.xlu0 %1449
        %1451 = vrot.lane.b32.xlu0 %v917, 8
        %v1452 = vpop.permute.xlu0 %1451
        %1453 = vrot.lane.b32.xlu0 %v918, 8
        %v1454 = vpop.permute.xlu0 %1453
        %1455 = vrot.lane.b32.xlu0 %v919, 8
        %v1456 = vpop.permute.xlu0 %1455
        %1457 = vrot.lane.b32.xlu0 %v920, 8
        %v1458 = vpop.permute.xlu0 %1457
        %1459 = vrot.lane.b32.xlu0 %v921, 8
        %v1460 = vpop.permute.xlu0 %1459
        %1461 = vrot.lane.b32.xlu0 %v922, 8
        %v1462 = vpop.permute.xlu0 %1461
        %1463 = vrot.lane.b32.xlu0 %v923, 8
        %v1464 = vpop.permute.xlu0 %1463
        %1465 = vrot.lane.b32.xlu0 %v924, 8
        %v1466 = vpop.permute.xlu0 %1465
        %1467 = vrot.lane.b32.xlu0 %v925, 8
        %v1468 = vpop.permute.xlu0 %1467
        %1469 = vrot.lane.b32.xlu0 %v926, 8
        %v1470 = vpop.permute.xlu0 %1469
        %1471 = vrot.lane.b32.xlu0 %v927, 8
        %v1472 = vpop.permute.xlu0 %1471
        %1473 = vrot.lane.b32.xlu0 %v928, 8
        %v1474 = vpop.permute.xlu0 %1473
        %1475 = vrot.lane.b32.xlu0 %v929, 8
        %v1476 = vpop.permute.xlu0 %1475
        %1477 = vrot.lane.b32.xlu0 %v930, 8
        %v1478 = vpop.permute.xlu0 %1477
        %1479 = vrot.lane.b32.xlu0 %v931, 8
        %v1480 = vpop.permute.xlu0 %1479
        %1481 = vrot.lane.b32.xlu0 %v932, 8
        %v1482 = vpop.permute.xlu0 %1481
        %1483 = vrot.lane.b32.xlu0 %v933, 8
        %v1484 = vpop.permute.xlu0 %1483
        %1485 = vrot.lane.b32.xlu0 %v934, 8
        %v1486 = vpop.permute.xlu0 %1485
        %1487 = vrot.lane.b32.xlu0 %v935, 8
        %v1488 = vpop.permute.xlu0 %1487
        %1489 = vrot.lane.b32.xlu0 %v936, 8
        %v1490 = vpop.permute.xlu0 %1489
        %1583 = vrot.lane.b32.xlu0 %v847, 12
        %v1584 = vpop.permute.xlu0 %1583
        %1585 = vrot.lane.b32.xlu0 %v848, 12
        %v1586 = vpop.permute.xlu0 %1585
        %1587 = vrot.lane.b32.xlu0 %v849, 12
        %v1588 = vpop.permute.xlu0 %1587
        %1589 = vrot.lane.b32.xlu0 %v850, 12
        %v1590 = vpop.permute.xlu0 %1589
        %1591 = vrot.lane.b32.xlu0 %v851, 12
        %v1592 = vpop.permute.xlu0 %1591
        %1593 = vrot.lane.b32.xlu0 %v852, 12
        %v1594 = vpop.permute.xlu0 %1593
        %1595 = vrot.lane.b32.xlu0 %v853, 12
        %v1596 = vpop.permute.xlu0 %1595
        %1597 = vrot.lane.b32.xlu0 %v854, 12
        %v1598 = vpop.permute.xlu0 %1597
        %1599 = vrot.lane.b32.xlu0 %v855, 12
        %v1600 = vpop.permute.xlu0 %1599
        %1601 = vrot.lane.b32.xlu0 %v856, 12
        %v1602 = vpop.permute.xlu0 %1601
        %1603 = vrot.lane.b32.xlu0 %v857, 12
        %v1604 = vpop.permute.xlu0 %1603
        %1605 = vrot.lane.b32.xlu0 %v858, 12
        %v1606 = vpop.permute.xlu0 %1605
        %1607 = vrot.lane.b32.xlu0 %v859, 12
        %v1608 = vpop.permute.xlu0 %1607
        %1609 = vrot.lane.b32.xlu0 %v860, 12
        %v1610 = vpop.permute.xlu0 %1609
        %1611 = vrot.lane.b32.xlu0 %v861, 12
        %v1612 = vpop.permute.xlu0 %1611
        %1613 = vrot.lane.b32.xlu0 %v862, 12
        %v1614 = vpop.permute.xlu0 %1613
        %1615 = vrot.lane.b32.xlu0 %v863, 12
        %v1616 = vpop.permute.xlu0 %1615
        %1617 = vrot.lane.b32.xlu0 %v864, 12
        %v1618 = vpop.permute.xlu0 %1617
        %1619 = vrot.lane.b32.xlu0 %v865, 12
        %v1620 = vpop.permute.xlu0 %1619
        %1621 = vrot.lane.b32.xlu0 %v866, 12
        %v1622 = vpop.permute.xlu0 %1621
        %1623 = vrot.lane.b32.xlu0 %v867, 12
        %v1624 = vpop.permute.xlu0 %1623
        %1625 = vrot.lane.b32.xlu0 %v868, 12
        %v1626 = vpop.permute.xlu0 %1625
        %1627 = vrot.lane.b32.xlu0 %v869, 12
        %v1628 = vpop.permute.xlu0 %1627
        %1629 = vrot.lane.b32.xlu0 %v870, 12
        %v1630 = vpop.permute.xlu0 %1629
        %1631 = vrot.lane.b32.xlu0 %v871, 12
        %v1632 = vpop.permute.xlu0 %1631
        %1633 = vrot.lane.b32.xlu0 %v872, 12
        %v1634 = vpop.permute.xlu0 %1633
        %1635 = vrot.lane.b32.xlu0 %v873, 12
        %v1636 = vpop.permute.xlu0 %1635
        %1637 = vrot.lane.b32.xlu0 %v874, 12
        %v1638 = vpop.permute.xlu0 %1637
        %1639 = vrot.lane.b32.xlu0 %v875, 12
        %v1640 = vpop.permute.xlu0 %1639
        %1641 = vrot.lane.b32.xlu0 %v876, 12
        %v1642 = vpop.permute.xlu0 %1641
        %1643 = vrot.lane.b32.xlu0 %v877, 12
        %v1644 = vpop.permute.xlu0 %1643
        %1645 = vrot.lane.b32.xlu0 %v878, 12
        %v1646 = vpop.permute.xlu0 %1645
        %1647 = vrot.lane.b32.xlu0 %v879, 12
        %v1648 = vpop.permute.xlu0 %1647
        %1649 = vrot.lane.b32.xlu0 %v880, 12
        %v1650 = vpop.permute.xlu0 %1649
        %1651 = vrot.lane.b32.xlu0 %v881, 12
        %v1652 = vpop.permute.xlu0 %1651
        %1653 = vrot.lane.b32.xlu0 %v882, 12
        %v1654 = vpop.permute.xlu0 %1653
        %1655 = vrot.lane.b32.xlu0 %v883, 12
        %v1656 = vpop.permute.xlu0 %1655
        %1657 = vrot.lane.b32.xlu0 %v884, 12
        %v1658 = vpop.permute.xlu0 %1657
        %1659 = vrot.lane.b32.xlu0 %v885, 12
        %v1660 = vpop.permute.xlu0 %1659
        %1661 = vrot.lane.b32.xlu0 %v886, 12
        %v1662 = vpop.permute.xlu0 %1661
        %1663 = vrot.lane.b32.xlu0 %v887, 12
        %v1664 = vpop.permute.xlu0 %1663
        %1665 = vrot.lane.b32.xlu0 %v888, 12
        %v1666 = vpop.permute.xlu0 %1665
        %1667 = vrot.lane.b32.xlu0 %v889, 12
        %v1668 = vpop.permute.xlu0 %1667
        %1669 = vrot.lane.b32.xlu0 %v890, 12
        %v1670 = vpop.permute.xlu0 %1669
        %1671 = vrot.lane.b32.xlu0 %v891, 12
        %v1672 = vpop.permute.xlu0 %1671
        %1673 = vrot.lane.b32.xlu0 %v892, 12
        %v1674 = vpop.permute.xlu0 %1673
        %1675 = vrot.lane.b32.xlu0 %v893, 12
        %v1676 = vpop.permute.xlu0 %1675
        %1677 = vrot.lane.b32.xlu0 %v894, 12
        %v1678 = vpop.permute.xlu0 %1677
        %1679 = vrot.lane.b32.xlu0 %v895, 12
        %v1680 = vpop.permute.xlu0 %1679
        %1681 = vrot.lane.b32.xlu0 %v896, 12
        %v1682 = vpop.permute.xlu0 %1681
        %1683 = vrot.lane.b32.xlu0 %v897, 12
        %v1684 = vpop.permute.xlu0 %1683
        %1685 = vrot.lane.b32.xlu0 %v898, 12
        %v1686 = vpop.permute.xlu0 %1685
        %1687 = vrot.lane.b32.xlu0 %v899, 12
        %v1688 = vpop.permute.xlu0 %1687
        %1689 = vrot.lane.b32.xlu0 %v900, 12
        %v1690 = vpop.permute.xlu0 %1689
        %1691 = vrot.lane.b32.xlu0 %v901, 12
        %v1692 = vpop.permute.xlu0 %1691
        %1693 = vrot.lane.b32.xlu0 %v902, 12
        %v1694 = vpop.permute.xlu0 %1693
        %1695 = vrot.lane.b32.xlu0 %v903, 12
        %v1696 = vpop.permute.xlu0 %1695
        %1697 = vrot.lane.b32.xlu0 %v904, 12
        %v1698 = vpop.permute.xlu0 %1697
        %1699 = vrot.lane.b32.xlu0 %v905, 12
        %v1700 = vpop.permute.xlu0 %1699
        %1701 = vrot.lane.b32.xlu0 %v906, 12
        %v1702 = vpop.permute.xlu0 %1701
        %1703 = vrot.lane.b32.xlu0 %v907, 12
        %v1704 = vpop.permute.xlu0 %1703
        %1705 = vrot.lane.b32.xlu0 %v908, 12
        %v1706 = vpop.permute.xlu0 %1705
        %1707 = vrot.lane.b32.xlu0 %v909, 12
        %v1708 = vpop.permute.xlu0 %1707
        %1709 = vrot.lane.b32.xlu0 %v910, 12
        %v1710 = vpop.permute.xlu0 %1709
        %1711 = vrot.lane.b32.xlu0 %v911, 12
        %v1712 = vpop.permute.xlu0 %1711
        %1713 = vrot.lane.b32.xlu0 %v912, 12
        %v1714 = vpop.permute.xlu0 %1713
        %1715 = vrot.lane.b32.xlu0 %v913, 12
        %v1716 = vpop.permute.xlu0 %1715
        %1717 = vrot.lane.b32.xlu0 %v914, 12
        %v1718 = vpop.permute.xlu0 %1717
        %1719 = vrot.lane.b32.xlu0 %v915, 12
        %v1720 = vpop.permute.xlu0 %1719
        %1721 = vrot.lane.b32.xlu0 %v916, 12
        %v1722 = vpop.permute.xlu0 %1721
        %1723 = vrot.lane.b32.xlu0 %v917, 12
        %v1724 = vpop.permute.xlu0 %1723
        %1725 = vrot.lane.b32.xlu0 %v918, 12
        %v1726 = vpop.permute.xlu0 %1725
        %1727 = vrot.lane.b32.xlu0 %v919, 12
        %v1728 = vpop.permute.xlu0 %1727
        %1729 = vrot.lane.b32.xlu0 %v920, 12
        %v1730 = vpop.permute.xlu0 %1729
        %1731 = vrot.lane.b32.xlu0 %v921, 12
        %v1732 = vpop.permute.xlu0 %1731
        %1733 = vrot.lane.b32.xlu0 %v922, 12
        %v1734 = vpop.permute.xlu0 %1733
        %1735 = vrot.lane.b32.xlu0 %v923, 12
        %v1736 = vpop.permute.xlu0 %1735
        %1737 = vrot.lane.b32.xlu0 %v924, 12
        %v1738 = vpop.permute.xlu0 %1737
        %1739 = vrot.lane.b32.xlu0 %v925, 12
        %v1740 = vpop.permute.xlu0 %1739
        %1741 = vrot.lane.b32.xlu0 %v926, 12
        %v1742 = vpop.permute.xlu0 %1741
        %1743 = vrot.lane.b32.xlu0 %v927, 12
        %v1744 = vpop.permute.xlu0 %1743
        %1745 = vrot.lane.b32.xlu0 %v928, 12
        %v1746 = vpop.permute.xlu0 %1745
        %1747 = vrot.lane.b32.xlu0 %v929, 12
        %v1748 = vpop.permute.xlu0 %1747
        %1749 = vrot.lane.b32.xlu0 %v930, 12
        %v1750 = vpop.permute.xlu0 %1749
        %1751 = vrot.lane.b32.xlu0 %v931, 12
        %v1752 = vpop.permute.xlu0 %1751
        %1753 = vrot.lane.b32.xlu0 %v932, 12
        %v1754 = vpop.permute.xlu0 %1753
        %1755 = vrot.lane.b32.xlu0 %v933, 12
        %v1756 = vpop.permute.xlu0 %1755
        %1757 = vrot.lane.b32.xlu0 %v934, 12
        %v1758 = vpop.permute.xlu0 %1757
        %1759 = vrot.lane.b32.xlu0 %v935, 12
        %v1760 = vpop.permute.xlu0 %1759
        %1761 = vrot.lane.b32.xlu0 %v936, 12
        %v1762 = vpop.permute.xlu0 %1761
        %1763 = vrot.lane.b32.xlu0 %v937, 12
        %v1764 = vpop.permute.xlu0 %1763
        %1857 = vrot.lane.b32.xlu0 %v848, 16
        %v1858 = vpop.permute.xlu0 %1857
        %1859 = vrot.lane.b32.xlu0 %v849, 16
        %v1860 = vpop.permute.xlu0 %1859
        %1861 = vrot.lane.b32.xlu0 %v850, 16
        %v1862 = vpop.permute.xlu0 %1861
        %1863 = vrot.lane.b32.xlu0 %v851, 16
        %v1864 = vpop.permute.xlu0 %1863
        %1865 = vrot.lane.b32.xlu0 %v852, 16
        %v1866 = vpop.permute.xlu0 %1865
        %1867 = vrot.lane.b32.xlu0 %v853, 16
        %v1868 = vpop.permute.xlu0 %1867
        %1869 = vrot.lane.b32.xlu0 %v854, 16
        %v1870 = vpop.permute.xlu0 %1869
        %1871 = vrot.lane.b32.xlu0 %v855, 16
        %v1872 = vpop.permute.xlu0 %1871
        %1873 = vrot.lane.b32.xlu0 %v856, 16
        %v1874 = vpop.permute.xlu0 %1873
        %1875 = vrot.lane.b32.xlu0 %v857, 16
        %v1876 = vpop.permute.xlu0 %1875
        %1877 = vrot.lane.b32.xlu0 %v858, 16
        %v1878 = vpop.permute.xlu0 %1877
        %1879 = vrot.lane.b32.xlu0 %v859, 16
        %v1880 = vpop.permute.xlu0 %1879
        %1881 = vrot.lane.b32.xlu0 %v860, 16
        %v1882 = vpop.permute.xlu0 %1881
        %1883 = vrot.lane.b32.xlu0 %v861, 16
        %v1884 = vpop.permute.xlu0 %1883
        %1885 = vrot.lane.b32.xlu0 %v862, 16
        %v1886 = vpop.permute.xlu0 %1885
        %1887 = vrot.lane.b32.xlu0 %v863, 16
        %v1888 = vpop.permute.xlu0 %1887
        %1889 = vrot.lane.b32.xlu0 %v864, 16
        %v1890 = vpop.permute.xlu0 %1889
        %1891 = vrot.lane.b32.xlu0 %v865, 16
        %v1892 = vpop.permute.xlu0 %1891
        %1893 = vrot.lane.b32.xlu0 %v866, 16
        %v1894 = vpop.permute.xlu0 %1893
        %1895 = vrot.lane.b32.xlu0 %v867, 16
        %v1896 = vpop.permute.xlu0 %1895
        %1897 = vrot.lane.b32.xlu0 %v868, 16
        %v1898 = vpop.permute.xlu0 %1897
        %1899 = vrot.lane.b32.xlu0 %v869, 16
        %v1900 = vpop.permute.xlu0 %1899
        %1901 = vrot.lane.b32.xlu0 %v870, 16
        %v1902 = vpop.permute.xlu0 %1901
        %1903 = vrot.lane.b32.xlu0 %v871, 16
        %v1904 = vpop.permute.xlu0 %1903
        %1905 = vrot.lane.b32.xlu0 %v872, 16
        %v1906 = vpop.permute.xlu0 %1905
        %1907 = vrot.lane.b32.xlu0 %v873, 16
        %v1908 = vpop.permute.xlu0 %1907
        %1909 = vrot.lane.b32.xlu0 %v874, 16
        %v1910 = vpop.permute.xlu0 %1909
        %1911 = vrot.lane.b32.xlu0 %v875, 16
        %v1912 = vpop.permute.xlu0 %1911
        %1913 = vrot.lane.b32.xlu0 %v876, 16
        %v1914 = vpop.permute.xlu0 %1913
        %1915 = vrot.lane.b32.xlu0 %v877, 16
        %v1916 = vpop.permute.xlu0 %1915
        %1917 = vrot.lane.b32.xlu0 %v878, 16
        %v1918 = vpop.permute.xlu0 %1917
        %1919 = vrot.lane.b32.xlu0 %v879, 16
        %v1920 = vpop.permute.xlu0 %1919
        %1921 = vrot.lane.b32.xlu0 %v880, 16
        %v1922 = vpop.permute.xlu0 %1921
        %1923 = vrot.lane.b32.xlu0 %v881, 16
        %v1924 = vpop.permute.xlu0 %1923
        %1925 = vrot.lane.b32.xlu0 %v882, 16
        %v1926 = vpop.permute.xlu0 %1925
        %1927 = vrot.lane.b32.xlu0 %v883, 16
        %v1928 = vpop.permute.xlu0 %1927
        %1929 = vrot.lane.b32.xlu0 %v884, 16
        %v1930 = vpop.permute.xlu0 %1929
        %1931 = vrot.lane.b32.xlu0 %v885, 16
        %v1932 = vpop.permute.xlu0 %1931
        %1933 = vrot.lane.b32.xlu0 %v886, 16
        %v1934 = vpop.permute.xlu0 %1933
        %1935 = vrot.lane.b32.xlu0 %v887, 16
        %v1936 = vpop.permute.xlu0 %1935
        %1937 = vrot.lane.b32.xlu0 %v888, 16
        %v1938 = vpop.permute.xlu0 %1937
        %1939 = vrot.lane.b32.xlu0 %v889, 16
        %v1940 = vpop.permute.xlu0 %1939
        %1941 = vrot.lane.b32.xlu0 %v890, 16
        %v1942 = vpop.permute.xlu0 %1941
        %1943 = vrot.lane.b32.xlu0 %v891, 16
        %v1944 = vpop.permute.xlu0 %1943
        %1945 = vrot.lane.b32.xlu0 %v892, 16
        %v1946 = vpop.permute.xlu0 %1945
        %1947 = vrot.lane.b32.xlu0 %v893, 16
        %v1948 = vpop.permute.xlu0 %1947
        %1949 = vrot.lane.b32.xlu0 %v894, 16
        %v1950 = vpop.permute.xlu0 %1949
        %1951 = vrot.lane.b32.xlu0 %v895, 16
        %v1952 = vpop.permute.xlu0 %1951
        %1953 = vrot.lane.b32.xlu0 %v896, 16
        %v1954 = vpop.permute.xlu0 %1953
        %1955 = vrot.lane.b32.xlu0 %v897, 16
        %v1956 = vpop.permute.xlu0 %1955
        %1957 = vrot.lane.b32.xlu0 %v898, 16
        %v1958 = vpop.permute.xlu0 %1957
        %1959 = vrot.lane.b32.xlu0 %v899, 16
        %v1960 = vpop.permute.xlu0 %1959
        %1961 = vrot.lane.b32.xlu0 %v900, 16
        %v1962 = vpop.permute.xlu0 %1961
        %1963 = vrot.lane.b32.xlu0 %v901, 16
        %v1964 = vpop.permute.xlu0 %1963
        %1965 = vrot.lane.b32.xlu0 %v902, 16
        %v1966 = vpop.permute.xlu0 %1965
        %1967 = vrot.lane.b32.xlu0 %v903, 16
        %v1968 = vpop.permute.xlu0 %1967
        %1969 = vrot.lane.b32.xlu0 %v904, 16
        %v1970 = vpop.permute.xlu0 %1969
        %1971 = vrot.lane.b32.xlu0 %v905, 16
        %v1972 = vpop.permute.xlu0 %1971
        %1973 = vrot.lane.b32.xlu0 %v906, 16
        %v1974 = vpop.permute.xlu0 %1973
        %1975 = vrot.lane.b32.xlu0 %v907, 16
        %v1976 = vpop.permute.xlu0 %1975
        %1977 = vrot.lane.b32.xlu0 %v908, 16
        %v1978 = vpop.permute.xlu0 %1977
        %1979 = vrot.lane.b32.xlu0 %v909, 16
        %v1980 = vpop.permute.xlu0 %1979
        %1981 = vrot.lane.b32.xlu0 %v910, 16
        %v1982 = vpop.permute.xlu0 %1981
        %1983 = vrot.lane.b32.xlu0 %v911, 16
        %v1984 = vpop.permute.xlu0 %1983
        %1985 = vrot.lane.b32.xlu0 %v912, 16
        %v1986 = vpop.permute.xlu0 %1985
        %1987 = vrot.lane.b32.xlu0 %v913, 16
        %v1988 = vpop.permute.xlu0 %1987
        %1989 = vrot.lane.b32.xlu0 %v914, 16
        %v1990 = vpop.permute.xlu0 %1989
        %1991 = vrot.lane.b32.xlu0 %v915, 16
        %v1992 = vpop.permute.xlu0 %1991
        %1993 = vrot.lane.b32.xlu0 %v916, 16
        %v1994 = vpop.permute.xlu0 %1993
        %1995 = vrot.lane.b32.xlu0 %v917, 16
        %v1996 = vpop.permute.xlu0 %1995
        %1997 = vrot.lane.b32.xlu0 %v918, 16
        %v1998 = vpop.permute.xlu0 %1997
        %1999 = vrot.lane.b32.xlu0 %v919, 16
        %v2000 = vpop.permute.xlu0 %1999
        %2001 = vrot.lane.b32.xlu0 %v920, 16
        %v2002 = vpop.permute.xlu0 %2001
        %2003 = vrot.lane.b32.xlu0 %v921, 16
        %v2004 = vpop.permute.xlu0 %2003
        %2005 = vrot.lane.b32.xlu0 %v922, 16
        %v2006 = vpop.permute.xlu0 %2005
        %2007 = vrot.lane.b32.xlu0 %v923, 16
        %v2008 = vpop.permute.xlu0 %2007
        %2009 = vrot.lane.b32.xlu0 %v924, 16
        %v2010 = vpop.permute.xlu0 %2009
        %2011 = vrot.lane.b32.xlu0 %v925, 16
        %v2012 = vpop.permute.xlu0 %2011
        %2013 = vrot.lane.b32.xlu0 %v926, 16
        %v2014 = vpop.permute.xlu0 %2013
        %2015 = vrot.lane.b32.xlu0 %v927, 16
        %v2016 = vpop.permute.xlu0 %2015
        %2017 = vrot.lane.b32.xlu0 %v928, 16
        %v2018 = vpop.permute.xlu0 %2017
        %2019 = vrot.lane.b32.xlu0 %v929, 16
        %v2020 = vpop.permute.xlu0 %2019
        %2021 = vrot.lane.b32.xlu0 %v930, 16
        %v2022 = vpop.permute.xlu0 %2021
        %2023 = vrot.lane.b32.xlu0 %v931, 16
        %v2024 = vpop.permute.xlu0 %2023
        %2025 = vrot.lane.b32.xlu0 %v932, 16
        %v2026 = vpop.permute.xlu0 %2025
        %2027 = vrot.lane.b32.xlu0 %v933, 16
        %v2028 = vpop.permute.xlu0 %2027
        %2029 = vrot.lane.b32.xlu0 %v934, 16
        %v2030 = vpop.permute.xlu0 %2029
        %2031 = vrot.lane.b32.xlu0 %v935, 16
        %v2032 = vpop.permute.xlu0 %2031
        %2033 = vrot.lane.b32.xlu0 %v936, 16
        %v2034 = vpop.permute.xlu0 %2033
        %2035 = vrot.lane.b32.xlu0 %v937, 16
        %v2036 = vpop.permute.xlu0 %2035
        %2037 = vrot.lane.b32.xlu0 %v938, 16
        %v2038 = vpop.permute.xlu0 %2037
        %2131 = vrot.lane.b32.xlu0 %v849, 20
        %v2132 = vpop.permute.xlu0 %2131
        %2133 = vrot.lane.b32.xlu0 %v850, 20
        %v2134 = vpop.permute.xlu0 %2133
        %2135 = vrot.lane.b32.xlu0 %v851, 20
        %v2136 = vpop.permute.xlu0 %2135
        %2137 = vrot.lane.b32.xlu0 %v852, 20
        %v2138 = vpop.permute.xlu0 %2137
        %2139 = vrot.lane.b32.xlu0 %v853, 20
        %v2140 = vpop.permute.xlu0 %2139
        %2141 = vrot.lane.b32.xlu0 %v854, 20
        %v2142 = vpop.permute.xlu0 %2141
        %2143 = vrot.lane.b32.xlu0 %v855, 20
        %v2144 = vpop.permute.xlu0 %2143
        %2145 = vrot.lane.b32.xlu0 %v856, 20
        %v2146 = vpop.permute.xlu0 %2145
        %2147 = vrot.lane.b32.xlu0 %v857, 20
        %v2148 = vpop.permute.xlu0 %2147
        %2149 = vrot.lane.b32.xlu0 %v858, 20
        %v2150 = vpop.permute.xlu0 %2149
        %2151 = vrot.lane.b32.xlu0 %v859, 20
        %v2152 = vpop.permute.xlu0 %2151
        %2153 = vrot.lane.b32.xlu0 %v860, 20
        %v2154 = vpop.permute.xlu0 %2153
        %2155 = vrot.lane.b32.xlu0 %v861, 20
        %v2156 = vpop.permute.xlu0 %2155
        %2157 = vrot.lane.b32.xlu0 %v862, 20
        %v2158 = vpop.permute.xlu0 %2157
        %2159 = vrot.lane.b32.xlu0 %v863, 20
        %v2160 = vpop.permute.xlu0 %2159
        %2161 = vrot.lane.b32.xlu0 %v864, 20
        %v2162 = vpop.permute.xlu0 %2161
        %2163 = vrot.lane.b32.xlu0 %v865, 20
        %v2164 = vpop.permute.xlu0 %2163
        %2165 = vrot.lane.b32.xlu0 %v866, 20
        %v2166 = vpop.permute.xlu0 %2165
        %2167 = vrot.lane.b32.xlu0 %v867, 20
        %v2168 = vpop.permute.xlu0 %2167
        %2169 = vrot.lane.b32.xlu0 %v868, 20
        %v2170 = vpop.permute.xlu0 %2169
        %2171 = vrot.lane.b32.xlu0 %v869, 20
        %v2172 = vpop.permute.xlu0 %2171
        %2173 = vrot.lane.b32.xlu0 %v870, 20
        %v2174 = vpop.permute.xlu0 %2173
        %2175 = vrot.lane.b32.xlu0 %v871, 20
        %v2176 = vpop.permute.xlu0 %2175
        %2177 = vrot.lane.b32.xlu0 %v872, 20
        %v2178 = vpop.permute.xlu0 %2177
        %2179 = vrot.lane.b32.xlu0 %v873, 20
        %v2180 = vpop.permute.xlu0 %2179
        %2181 = vrot.lane.b32.xlu0 %v874, 20
        %v2182 = vpop.permute.xlu0 %2181
        %2183 = vrot.lane.b32.xlu0 %v875, 20
        %v2184 = vpop.permute.xlu0 %2183
        %2185 = vrot.lane.b32.xlu0 %v876, 20
        %v2186 = vpop.permute.xlu0 %2185
        %2187 = vrot.lane.b32.xlu0 %v877, 20
        %v2188 = vpop.permute.xlu0 %2187
        %2189 = vrot.lane.b32.xlu0 %v878, 20
        %v2190 = vpop.permute.xlu0 %2189
        %2191 = vrot.lane.b32.xlu0 %v879, 20
        %v2192 = vpop.permute.xlu0 %2191
        %2193 = vrot.lane.b32.xlu0 %v880, 20
        %v2194 = vpop.permute.xlu0 %2193
        %2195 = vrot.lane.b32.xlu0 %v881, 20
        %v2196 = vpop.permute.xlu0 %2195
        %2197 = vrot.lane.b32.xlu0 %v882, 20
        %v2198 = vpop.permute.xlu0 %2197
        %2199 = vrot.lane.b32.xlu0 %v883, 20
        %v2200 = vpop.permute.xlu0 %2199
        %2201 = vrot.lane.b32.xlu0 %v884, 20
        %v2202 = vpop.permute.xlu0 %2201
        %2203 = vrot.lane.b32.xlu0 %v885, 20
        %v2204 = vpop.permute.xlu0 %2203
        %2205 = vrot.lane.b32.xlu0 %v886, 20
        %v2206 = vpop.permute.xlu0 %2205
        %2207 = vrot.lane.b32.xlu0 %v887, 20
        %v2208 = vpop.permute.xlu0 %2207
        %2209 = vrot.lane.b32.xlu0 %v888, 20
        %v2210 = vpop.permute.xlu0 %2209
        %2211 = vrot.lane.b32.xlu0 %v889, 20
        %v2212 = vpop.permute.xlu0 %2211
        %2213 = vrot.lane.b32.xlu0 %v890, 20
        %v2214 = vpop.permute.xlu0 %2213
        %2215 = vrot.lane.b32.xlu0 %v891, 20
        %v2216 = vpop.permute.xlu0 %2215
        %2217 = vrot.lane.b32.xlu0 %v892, 20
        %v2218 = vpop.permute.xlu0 %2217
        %2219 = vrot.lane.b32.xlu0 %v893, 20
        %v2220 = vpop.permute.xlu0 %2219
        %2221 = vrot.lane.b32.xlu0 %v894, 20
        %v2222 = vpop.permute.xlu0 %2221
        %2223 = vrot.lane.b32.xlu0 %v895, 20
        %v2224 = vpop.permute.xlu0 %2223
        %2225 = vrot.lane.b32.xlu0 %v896, 20
        %v2226 = vpop.permute.xlu0 %2225
        %2227 = vrot.lane.b32.xlu0 %v897, 20
        %v2228 = vpop.permute.xlu0 %2227
        %2229 = vrot.lane.b32.xlu0 %v898, 20
        %v2230 = vpop.permute.xlu0 %2229
        %2231 = vrot.lane.b32.xlu0 %v899, 20
        %v2232 = vpop.permute.xlu0 %2231
        %2233 = vrot.lane.b32.xlu0 %v900, 20
        %v2234 = vpop.permute.xlu0 %2233
        %2235 = vrot.lane.b32.xlu0 %v901, 20
        %v2236 = vpop.permute.xlu0 %2235
        %2237 = vrot.lane.b32.xlu0 %v902, 20
        %v2238 = vpop.permute.xlu0 %2237
        %2239 = vrot.lane.b32.xlu0 %v903, 20
        %v2240 = vpop.permute.xlu0 %2239
        %2241 = vrot.lane.b32.xlu0 %v904, 20
        %v2242 = vpop.permute.xlu0 %2241
        %2243 = vrot.lane.b32.xlu0 %v905, 20
        %v2244 = vpop.permute.xlu0 %2243
        %2245 = vrot.lane.b32.xlu0 %v906, 20
        %v2246 = vpop.permute.xlu0 %2245
        %2247 = vrot.lane.b32.xlu0 %v907, 20
        %v2248 = vpop.permute.xlu0 %2247
        %2249 = vrot.lane.b32.xlu0 %v908, 20
        %v2250 = vpop.permute.xlu0 %2249
        %2251 = vrot.lane.b32.xlu0 %v909, 20
        %v2252 = vpop.permute.xlu0 %2251
        %2253 = vrot.lane.b32.xlu0 %v910, 20
        %v2254 = vpop.permute.xlu0 %2253
        %2255 = vrot.lane.b32.xlu0 %v911, 20
        %v2256 = vpop.permute.xlu0 %2255
        %2257 = vrot.lane.b32.xlu0 %v912, 20
        %v2258 = vpop.permute.xlu0 %2257
        %2259 = vrot.lane.b32.xlu0 %v913, 20
        %v2260 = vpop.permute.xlu0 %2259
        %2261 = vrot.lane.b32.xlu0 %v914, 20
        %v2262 = vpop.permute.xlu0 %2261
        %2263 = vrot.lane.b32.xlu0 %v915, 20
        %v2264 = vpop.permute.xlu0 %2263
        %2265 = vrot.lane.b32.xlu0 %v916, 20
        %v2266 = vpop.permute.xlu0 %2265
        %2267 = vrot.lane.b32.xlu0 %v917, 20
        %v2268 = vpop.permute.xlu0 %2267
        %2269 = vrot.lane.b32.xlu0 %v918, 20
        %v2270 = vpop.permute.xlu0 %2269
        %2271 = vrot.lane.b32.xlu0 %v919, 20
        %v2272 = vpop.permute.xlu0 %2271
        %2273 = vrot.lane.b32.xlu0 %v920, 20
        %v2274 = vpop.permute.xlu0 %2273
        %2275 = vrot.lane.b32.xlu0 %v921, 20
        %v2276 = vpop.permute.xlu0 %2275
        %2277 = vrot.lane.b32.xlu0 %v922, 20
        %v2278 = vpop.permute.xlu0 %2277
        %2279 = vrot.lane.b32.xlu0 %v923, 20
        %v2280 = vpop.permute.xlu0 %2279
        %2281 = vrot.lane.b32.xlu0 %v924, 20
        %v2282 = vpop.permute.xlu0 %2281
        %2283 = vrot.lane.b32.xlu0 %v925, 20
        %v2284 = vpop.permute.xlu0 %2283
        %2285 = vrot.lane.b32.xlu0 %v926, 20
        %v2286 = vpop.permute.xlu0 %2285
        %2287 = vrot.lane.b32.xlu0 %v927, 20
        %v2288 = vpop.permute.xlu0 %2287
        %2289 = vrot.lane.b32.xlu0 %v928, 20
        %v2290 = vpop.permute.xlu0 %2289
        %2291 = vrot.lane.b32.xlu0 %v929, 20
        %v2292 = vpop.permute.xlu0 %2291
        %2293 = vrot.lane.b32.xlu0 %v930, 20
        %v2294 = vpop.permute.xlu0 %2293
        %2295 = vrot.lane.b32.xlu0 %v931, 20
        %v2296 = vpop.permute.xlu0 %2295
        %2297 = vrot.lane.b32.xlu0 %v932, 20
        %v2298 = vpop.permute.xlu0 %2297
        %2299 = vrot.lane.b32.xlu0 %v933, 20
        %v2300 = vpop.permute.xlu0 %2299
        %2301 = vrot.lane.b32.xlu0 %v934, 20
        %v2302 = vpop.permute.xlu0 %2301
        %2303 = vrot.lane.b32.xlu0 %v935, 20
        %v2304 = vpop.permute.xlu0 %2303
        %2305 = vrot.lane.b32.xlu0 %v936, 20
        %v2306 = vpop.permute.xlu0 %2305
        %2307 = vrot.lane.b32.xlu0 %v937, 20
        %v2308 = vpop.permute.xlu0 %2307
        %2309 = vrot.lane.b32.xlu0 %v938, 20
        %v2310 = vpop.permute.xlu0 %2309
        %2311 = vrot.lane.b32.xlu0 %v939, 20
        %v2312 = vpop.permute.xlu0 %2311
        %2405 = vrot.lane.b32.xlu0 %v850, 24
        %v2406 = vpop.permute.xlu0 %2405
        %2407 = vrot.lane.b32.xlu0 %v851, 24
        %v2408 = vpop.permute.xlu0 %2407
        %2409 = vrot.lane.b32.xlu0 %v852, 24
        %v2410 = vpop.permute.xlu0 %2409
        %2411 = vrot.lane.b32.xlu0 %v853, 24
        %v2412 = vpop.permute.xlu0 %2411
        %2413 = vrot.lane.b32.xlu0 %v854, 24
        %v2414 = vpop.permute.xlu0 %2413
        %2415 = vrot.lane.b32.xlu0 %v855, 24
        %v2416 = vpop.permute.xlu0 %2415
        %2417 = vrot.lane.b32.xlu0 %v856, 24
        %v2418 = vpop.permute.xlu0 %2417
        %2419 = vrot.lane.b32.xlu0 %v857, 24
        %v2420 = vpop.permute.xlu0 %2419
        %2421 = vrot.lane.b32.xlu0 %v858, 24
        %v2422 = vpop.permute.xlu0 %2421
        %2423 = vrot.lane.b32.xlu0 %v859, 24
        %v2424 = vpop.permute.xlu0 %2423
        %2425 = vrot.lane.b32.xlu0 %v860, 24
        %v2426 = vpop.permute.xlu0 %2425
        %2427 = vrot.lane.b32.xlu0 %v861, 24
        %v2428 = vpop.permute.xlu0 %2427
        %2429 = vrot.lane.b32.xlu0 %v862, 24
        %v2430 = vpop.permute.xlu0 %2429
        %2431 = vrot.lane.b32.xlu0 %v863, 24
        %v2432 = vpop.permute.xlu0 %2431
        %2433 = vrot.lane.b32.xlu0 %v864, 24
        %v2434 = vpop.permute.xlu0 %2433
        %2435 = vrot.lane.b32.xlu0 %v865, 24
        %v2436 = vpop.permute.xlu0 %2435
        %2437 = vrot.lane.b32.xlu0 %v866, 24
        %v2438 = vpop.permute.xlu0 %2437
        %2439 = vrot.lane.b32.xlu0 %v867, 24
        %v2440 = vpop.permute.xlu0 %2439
        %2441 = vrot.lane.b32.xlu0 %v868, 24
        %v2442 = vpop.permute.xlu0 %2441
        %2443 = vrot.lane.b32.xlu0 %v869, 24
        %v2444 = vpop.permute.xlu0 %2443
        %2445 = vrot.lane.b32.xlu0 %v870, 24
        %v2446 = vpop.permute.xlu0 %2445
        %2447 = vrot.lane.b32.xlu0 %v871, 24
        %v2448 = vpop.permute.xlu0 %2447
        %2449 = vrot.lane.b32.xlu0 %v872, 24
        %v2450 = vpop.permute.xlu0 %2449
        %2451 = vrot.lane.b32.xlu0 %v873, 24
        %v2452 = vpop.permute.xlu0 %2451
        %2453 = vrot.lane.b32.xlu0 %v874, 24
        %v2454 = vpop.permute.xlu0 %2453
        %2455 = vrot.lane.b32.xlu0 %v875, 24
        %v2456 = vpop.permute.xlu0 %2455
        %2457 = vrot.lane.b32.xlu0 %v876, 24
        %v2458 = vpop.permute.xlu0 %2457
        %2459 = vrot.lane.b32.xlu0 %v877, 24
        %v2460 = vpop.permute.xlu0 %2459
        %2461 = vrot.lane.b32.xlu0 %v878, 24
        %v2462 = vpop.permute.xlu0 %2461
        %2463 = vrot.lane.b32.xlu0 %v879, 24
        %v2464 = vpop.permute.xlu0 %2463
        %2465 = vrot.lane.b32.xlu0 %v880, 24
        %v2466 = vpop.permute.xlu0 %2465
        %2467 = vrot.lane.b32.xlu0 %v881, 24
        %v2468 = vpop.permute.xlu0 %2467
        %2469 = vrot.lane.b32.xlu0 %v882, 24
        %v2470 = vpop.permute.xlu0 %2469
        %2471 = vrot.lane.b32.xlu0 %v883, 24
        %v2472 = vpop.permute.xlu0 %2471
        %2473 = vrot.lane.b32.xlu0 %v884, 24
        %v2474 = vpop.permute.xlu0 %2473
        %2475 = vrot.lane.b32.xlu0 %v885, 24
        %v2476 = vpop.permute.xlu0 %2475
        %2477 = vrot.lane.b32.xlu0 %v886, 24
        %v2478 = vpop.permute.xlu0 %2477
        %2479 = vrot.lane.b32.xlu0 %v887, 24
        %v2480 = vpop.permute.xlu0 %2479
        %2481 = vrot.lane.b32.xlu0 %v888, 24
        %v2482 = vpop.permute.xlu0 %2481
        %2483 = vrot.lane.b32.xlu0 %v889, 24
        %v2484 = vpop.permute.xlu0 %2483
        %2485 = vrot.lane.b32.xlu0 %v890, 24
        %v2486 = vpop.permute.xlu0 %2485
        %2487 = vrot.lane.b32.xlu0 %v891, 24
        %v2488 = vpop.permute.xlu0 %2487
        %2489 = vrot.lane.b32.xlu0 %v892, 24
        %v2490 = vpop.permute.xlu0 %2489
        %2491 = vrot.lane.b32.xlu0 %v893, 24
        %v2492 = vpop.permute.xlu0 %2491
        %2493 = vrot.lane.b32.xlu0 %v894, 24
        %v2494 = vpop.permute.xlu0 %2493
        %2495 = vrot.lane.b32.xlu0 %v895, 24
        %v2496 = vpop.permute.xlu0 %2495
        %2497 = vrot.lane.b32.xlu0 %v896, 24
        %v2498 = vpop.permute.xlu0 %2497
        %2499 = vrot.lane.b32.xlu0 %v897, 24
        %v2500 = vpop.permute.xlu0 %2499
        %2501 = vrot.lane.b32.xlu0 %v898, 24
        %v2502 = vpop.permute.xlu0 %2501
        %2503 = vrot.lane.b32.xlu0 %v899, 24
        %v2504 = vpop.permute.xlu0 %2503
        %2505 = vrot.lane.b32.xlu0 %v900, 24
        %v2506 = vpop.permute.xlu0 %2505
        %2507 = vrot.lane.b32.xlu0 %v901, 24
        %v2508 = vpop.permute.xlu0 %2507
        %2509 = vrot.lane.b32.xlu0 %v902, 24
        %v2510 = vpop.permute.xlu0 %2509
        %2511 = vrot.lane.b32.xlu0 %v903, 24
        %v2512 = vpop.permute.xlu0 %2511
        %2513 = vrot.lane.b32.xlu0 %v904, 24
        %v2514 = vpop.permute.xlu0 %2513
        %2515 = vrot.lane.b32.xlu0 %v905, 24
        %v2516 = vpop.permute.xlu0 %2515
        %2517 = vrot.lane.b32.xlu0 %v906, 24
        %v2518 = vpop.permute.xlu0 %2517
        %2519 = vrot.lane.b32.xlu0 %v907, 24
        %v2520 = vpop.permute.xlu0 %2519
        %2521 = vrot.lane.b32.xlu0 %v908, 24
        %v2522 = vpop.permute.xlu0 %2521
        %2523 = vrot.lane.b32.xlu0 %v909, 24
        %v2524 = vpop.permute.xlu0 %2523
        %2525 = vrot.lane.b32.xlu0 %v910, 24
        %v2526 = vpop.permute.xlu0 %2525
        %2527 = vrot.lane.b32.xlu0 %v911, 24
        %v2528 = vpop.permute.xlu0 %2527
        %2529 = vrot.lane.b32.xlu0 %v912, 24
        %v2530 = vpop.permute.xlu0 %2529
        %2531 = vrot.lane.b32.xlu0 %v913, 24
        %v2532 = vpop.permute.xlu0 %2531
        %2533 = vrot.lane.b32.xlu0 %v914, 24
        %v2534 = vpop.permute.xlu0 %2533
        %2535 = vrot.lane.b32.xlu0 %v915, 24
        %v2536 = vpop.permute.xlu0 %2535
        %2537 = vrot.lane.b32.xlu0 %v916, 24
        %v2538 = vpop.permute.xlu0 %2537
        %2539 = vrot.lane.b32.xlu0 %v917, 24
        %v2540 = vpop.permute.xlu0 %2539
        %2541 = vrot.lane.b32.xlu0 %v918, 24
        %v2542 = vpop.permute.xlu0 %2541
        %2543 = vrot.lane.b32.xlu0 %v919, 24
        %v2544 = vpop.permute.xlu0 %2543
        %2545 = vrot.lane.b32.xlu0 %v920, 24
        %v2546 = vpop.permute.xlu0 %2545
        %2547 = vrot.lane.b32.xlu0 %v921, 24
        %v2548 = vpop.permute.xlu0 %2547
        %2549 = vrot.lane.b32.xlu0 %v922, 24
        %v2550 = vpop.permute.xlu0 %2549
        %2551 = vrot.lane.b32.xlu0 %v923, 24
        %v2552 = vpop.permute.xlu0 %2551
        %2553 = vrot.lane.b32.xlu0 %v924, 24
        %v2554 = vpop.permute.xlu0 %2553
        %2555 = vrot.lane.b32.xlu0 %v925, 24
        %v2556 = vpop.permute.xlu0 %2555
        %2557 = vrot.lane.b32.xlu0 %v926, 24
        %v2558 = vpop.permute.xlu0 %2557
        %2559 = vrot.lane.b32.xlu0 %v927, 24
        %v2560 = vpop.permute.xlu0 %2559
        %2561 = vrot.lane.b32.xlu0 %v928, 24
        %v2562 = vpop.permute.xlu0 %2561
        %2563 = vrot.lane.b32.xlu0 %v929, 24
        %v2564 = vpop.permute.xlu0 %2563
        %2565 = vrot.lane.b32.xlu0 %v930, 24
        %v2566 = vpop.permute.xlu0 %2565
        %2567 = vrot.lane.b32.xlu0 %v931, 24
        %v2568 = vpop.permute.xlu0 %2567
        %2569 = vrot.lane.b32.xlu0 %v932, 24
        %v2570 = vpop.permute.xlu0 %2569
        %2571 = vrot.lane.b32.xlu0 %v933, 24
        %v2572 = vpop.permute.xlu0 %2571
        %2573 = vrot.lane.b32.xlu0 %v934, 24
        %v2574 = vpop.permute.xlu0 %2573
        %2575 = vrot.lane.b32.xlu0 %v935, 24
        %v2576 = vpop.permute.xlu0 %2575
        %2577 = vrot.lane.b32.xlu0 %v936, 24
        %v2578 = vpop.permute.xlu0 %2577
        %2579 = vrot.lane.b32.xlu0 %v937, 24
        %v2580 = vpop.permute.xlu0 %2579
        %2581 = vrot.lane.b32.xlu0 %v938, 24
        %v2582 = vpop.permute.xlu0 %2581
        %2583 = vrot.lane.b32.xlu0 %v939, 24
        %v2584 = vpop.permute.xlu0 %2583
        %2585 = vrot.lane.b32.xlu0 %v940, 24
        %v2586 = vpop.permute.xlu0 %2585
        %2679 = vrot.lane.b32.xlu0 %v851, 28
        %v2680 = vpop.permute.xlu0 %2679
        %2681 = vrot.lane.b32.xlu0 %v852, 28
        %v2682 = vpop.permute.xlu0 %2681
        %2683 = vrot.lane.b32.xlu0 %v853, 28
        %v2684 = vpop.permute.xlu0 %2683
        %2685 = vrot.lane.b32.xlu0 %v854, 28
        %v2686 = vpop.permute.xlu0 %2685
        %2687 = vrot.lane.b32.xlu0 %v855, 28
        %v2688 = vpop.permute.xlu0 %2687
        %2689 = vrot.lane.b32.xlu0 %v856, 28
        %v2690 = vpop.permute.xlu0 %2689
        %2691 = vrot.lane.b32.xlu0 %v857, 28
        %v2692 = vpop.permute.xlu0 %2691
        %2693 = vrot.lane.b32.xlu0 %v858, 28
        %v2694 = vpop.permute.xlu0 %2693
        %2695 = vrot.lane.b32.xlu0 %v859, 28
        %v2696 = vpop.permute.xlu0 %2695
        %2697 = vrot.lane.b32.xlu0 %v860, 28
        %v2698 = vpop.permute.xlu0 %2697
        %2699 = vrot.lane.b32.xlu0 %v861, 28
        %v2700 = vpop.permute.xlu0 %2699
        %2701 = vrot.lane.b32.xlu0 %v862, 28
        %v2702 = vpop.permute.xlu0 %2701
        %2703 = vrot.lane.b32.xlu0 %v863, 28
        %v2704 = vpop.permute.xlu0 %2703
        %2705 = vrot.lane.b32.xlu0 %v864, 28
        %v2706 = vpop.permute.xlu0 %2705
        %2707 = vrot.lane.b32.xlu0 %v865, 28
        %v2708 = vpop.permute.xlu0 %2707
        %2709 = vrot.lane.b32.xlu0 %v866, 28
        %v2710 = vpop.permute.xlu0 %2709
        %2711 = vrot.lane.b32.xlu0 %v867, 28
        %v2712 = vpop.permute.xlu0 %2711
        %2713 = vrot.lane.b32.xlu0 %v868, 28
        %v2714 = vpop.permute.xlu0 %2713
        %2715 = vrot.lane.b32.xlu0 %v869, 28
        %v2716 = vpop.permute.xlu0 %2715
        %2717 = vrot.lane.b32.xlu0 %v870, 28
        %v2718 = vpop.permute.xlu0 %2717
        %2719 = vrot.lane.b32.xlu0 %v871, 28
        %v2720 = vpop.permute.xlu0 %2719
        %2721 = vrot.lane.b32.xlu0 %v872, 28
        %v2722 = vpop.permute.xlu0 %2721
        %2723 = vrot.lane.b32.xlu0 %v873, 28
        %v2724 = vpop.permute.xlu0 %2723
        %2725 = vrot.lane.b32.xlu0 %v874, 28
        %v2726 = vpop.permute.xlu0 %2725
        %2727 = vrot.lane.b32.xlu0 %v875, 28
        %v2728 = vpop.permute.xlu0 %2727
        %2729 = vrot.lane.b32.xlu0 %v876, 28
        %v2730 = vpop.permute.xlu0 %2729
        %2731 = vrot.lane.b32.xlu0 %v877, 28
        %v2732 = vpop.permute.xlu0 %2731
        %2733 = vrot.lane.b32.xlu0 %v878, 28
        %v2734 = vpop.permute.xlu0 %2733
        %2735 = vrot.lane.b32.xlu0 %v879, 28
        %v2736 = vpop.permute.xlu0 %2735
        %2737 = vrot.lane.b32.xlu0 %v880, 28
        %v2738 = vpop.permute.xlu0 %2737
        %2739 = vrot.lane.b32.xlu0 %v881, 28
        %v2740 = vpop.permute.xlu0 %2739
        %2741 = vrot.lane.b32.xlu0 %v882, 28
        %v2742 = vpop.permute.xlu0 %2741
        %2743 = vrot.lane.b32.xlu0 %v883, 28
        %v2744 = vpop.permute.xlu0 %2743
        %2745 = vrot.lane.b32.xlu0 %v884, 28
        %v2746 = vpop.permute.xlu0 %2745
        %2747 = vrot.lane.b32.xlu0 %v885, 28
        %v2748 = vpop.permute.xlu0 %2747
        %2749 = vrot.lane.b32.xlu0 %v886, 28
        %v2750 = vpop.permute.xlu0 %2749
        %2751 = vrot.lane.b32.xlu0 %v887, 28
        %v2752 = vpop.permute.xlu0 %2751
        %2753 = vrot.lane.b32.xlu0 %v888, 28
        %v2754 = vpop.permute.xlu0 %2753
        %2755 = vrot.lane.b32.xlu0 %v889, 28
        %v2756 = vpop.permute.xlu0 %2755
        %2757 = vrot.lane.b32.xlu0 %v890, 28
        %v2758 = vpop.permute.xlu0 %2757
        %2759 = vrot.lane.b32.xlu0 %v891, 28
        %v2760 = vpop.permute.xlu0 %2759
        %2761 = vrot.lane.b32.xlu0 %v892, 28
        %v2762 = vpop.permute.xlu0 %2761
        %2763 = vrot.lane.b32.xlu0 %v893, 28
        %v2764 = vpop.permute.xlu0 %2763
        %2765 = vrot.lane.b32.xlu0 %v894, 28
        %v2766 = vpop.permute.xlu0 %2765
        %2767 = vrot.lane.b32.xlu0 %v895, 28
        %v2768 = vpop.permute.xlu0 %2767
        %2769 = vrot.lane.b32.xlu0 %v896, 28
        %v2770 = vpop.permute.xlu0 %2769
        %2771 = vrot.lane.b32.xlu0 %v897, 28
        %v2772 = vpop.permute.xlu0 %2771
        %2773 = vrot.lane.b32.xlu0 %v898, 28
        %v2774 = vpop.permute.xlu0 %2773
        %2775 = vrot.lane.b32.xlu0 %v899, 28
        %v2776 = vpop.permute.xlu0 %2775
        %2777 = vrot.lane.b32.xlu0 %v900, 28
        %v2778 = vpop.permute.xlu0 %2777
        %2779 = vrot.lane.b32.xlu0 %v901, 28
        %v2780 = vpop.permute.xlu0 %2779
        %2781 = vrot.lane.b32.xlu0 %v902, 28
        %v2782 = vpop.permute.xlu0 %2781
        %2783 = vrot.lane.b32.xlu0 %v903, 28
        %v2784 = vpop.permute.xlu0 %2783
        %2785 = vrot.lane.b32.xlu0 %v904, 28
        %v2786 = vpop.permute.xlu0 %2785
        %2787 = vrot.lane.b32.xlu0 %v905, 28
        %v2788 = vpop.permute.xlu0 %2787
        %2789 = vrot.lane.b32.xlu0 %v906, 28
        %v2790 = vpop.permute.xlu0 %2789
        %2791 = vrot.lane.b32.xlu0 %v907, 28
        %v2792 = vpop.permute.xlu0 %2791
        %2793 = vrot.lane.b32.xlu0 %v908, 28
        %v2794 = vpop.permute.xlu0 %2793
        %2795 = vrot.lane.b32.xlu0 %v909, 28
        %v2796 = vpop.permute.xlu0 %2795
        %2797 = vrot.lane.b32.xlu0 %v910, 28
        %v2798 = vpop.permute.xlu0 %2797
        %2799 = vrot.lane.b32.xlu0 %v911, 28
        %v2800 = vpop.permute.xlu0 %2799
        %2801 = vrot.lane.b32.xlu0 %v912, 28
        %v2802 = vpop.permute.xlu0 %2801
        %2803 = vrot.lane.b32.xlu0 %v913, 28
        %v2804 = vpop.permute.xlu0 %2803
        %2805 = vrot.lane.b32.xlu0 %v914, 28
        %v2806 = vpop.permute.xlu0 %2805
        %2807 = vrot.lane.b32.xlu0 %v915, 28
        %v2808 = vpop.permute.xlu0 %2807
        %2809 = vrot.lane.b32.xlu0 %v916, 28
        %v2810 = vpop.permute.xlu0 %2809
        %2811 = vrot.lane.b32.xlu0 %v917, 28
        %v2812 = vpop.permute.xlu0 %2811
        %2813 = vrot.lane.b32.xlu0 %v918, 28
        %v2814 = vpop.permute.xlu0 %2813
        %2815 = vrot.lane.b32.xlu0 %v919, 28
        %v2816 = vpop.permute.xlu0 %2815
        %2817 = vrot.lane.b32.xlu0 %v920, 28
        %v2818 = vpop.permute.xlu0 %2817
        %2819 = vrot.lane.b32.xlu0 %v921, 28
        %v2820 = vpop.permute.xlu0 %2819
        %2821 = vrot.lane.b32.xlu0 %v922, 28
        %v2822 = vpop.permute.xlu0 %2821
        %2823 = vrot.lane.b32.xlu0 %v923, 28
        %v2824 = vpop.permute.xlu0 %2823
        %2825 = vrot.lane.b32.xlu0 %v924, 28
        %v2826 = vpop.permute.xlu0 %2825
        %2827 = vrot.lane.b32.xlu0 %v925, 28
        %v2828 = vpop.permute.xlu0 %2827
        %2829 = vrot.lane.b32.xlu0 %v926, 28
        %v2830 = vpop.permute.xlu0 %2829
        %2831 = vrot.lane.b32.xlu0 %v927, 28
        %v2832 = vpop.permute.xlu0 %2831
        %2833 = vrot.lane.b32.xlu0 %v928, 28
        %v2834 = vpop.permute.xlu0 %2833
        %2835 = vrot.lane.b32.xlu0 %v929, 28
        %v2836 = vpop.permute.xlu0 %2835
        %2837 = vrot.lane.b32.xlu0 %v930, 28
        %v2838 = vpop.permute.xlu0 %2837
        %2839 = vrot.lane.b32.xlu0 %v931, 28
        %v2840 = vpop.permute.xlu0 %2839
        %2841 = vrot.lane.b32.xlu0 %v932, 28
        %v2842 = vpop.permute.xlu0 %2841
        %2843 = vrot.lane.b32.xlu0 %v933, 28
        %v2844 = vpop.permute.xlu0 %2843
        %2845 = vrot.lane.b32.xlu0 %v934, 28
        %v2846 = vpop.permute.xlu0 %2845
        %2847 = vrot.lane.b32.xlu0 %v935, 28
        %v2848 = vpop.permute.xlu0 %2847
        %2849 = vrot.lane.b32.xlu0 %v936, 28
        %v2850 = vpop.permute.xlu0 %2849
        %2851 = vrot.lane.b32.xlu0 %v937, 28
        %v2852 = vpop.permute.xlu0 %2851
        %2853 = vrot.lane.b32.xlu0 %v938, 28
        %v2854 = vpop.permute.xlu0 %2853
        %2855 = vrot.lane.b32.xlu0 %v939, 28
        %v2856 = vpop.permute.xlu0 %2855
        %2857 = vrot.lane.b32.xlu0 %v940, 28
        %v2858 = vpop.permute.xlu0 %2857
        %2859 = vrot.lane.b32.xlu0 %v941, 28
        %v2860 = vpop.permute.xlu0 %2859
        %2953 = vrot.lane.b32.xlu0 %v852, 32
        %v2954 = vpop.permute.xlu0 %2953
        %2955 = vrot.lane.b32.xlu0 %v853, 32
        %v2956 = vpop.permute.xlu0 %2955
        %2957 = vrot.lane.b32.xlu0 %v854, 32
        %v2958 = vpop.permute.xlu0 %2957
        %2959 = vrot.lane.b32.xlu0 %v855, 32
        %v2960 = vpop.permute.xlu0 %2959
        %2961 = vrot.lane.b32.xlu0 %v856, 32
        %v2962 = vpop.permute.xlu0 %2961
        %2963 = vrot.lane.b32.xlu0 %v857, 32
        %v2964 = vpop.permute.xlu0 %2963
        %2965 = vrot.lane.b32.xlu0 %v858, 32
        %v2966 = vpop.permute.xlu0 %2965
        %2967 = vrot.lane.b32.xlu0 %v859, 32
        %v2968 = vpop.permute.xlu0 %2967
        %2969 = vrot.lane.b32.xlu0 %v860, 32
        %v2970 = vpop.permute.xlu0 %2969
        %2971 = vrot.lane.b32.xlu0 %v861, 32
        %v2972 = vpop.permute.xlu0 %2971
        %2973 = vrot.lane.b32.xlu0 %v862, 32
        %v2974 = vpop.permute.xlu0 %2973
        %2975 = vrot.lane.b32.xlu0 %v863, 32
        %v2976 = vpop.permute.xlu0 %2975
        %2977 = vrot.lane.b32.xlu0 %v864, 32
        %v2978 = vpop.permute.xlu0 %2977
        %2979 = vrot.lane.b32.xlu0 %v865, 32
        %v2980 = vpop.permute.xlu0 %2979
        %2981 = vrot.lane.b32.xlu0 %v866, 32
        %v2982 = vpop.permute.xlu0 %2981
        %2983 = vrot.lane.b32.xlu0 %v867, 32
        %v2984 = vpop.permute.xlu0 %2983
        %2985 = vrot.lane.b32.xlu0 %v868, 32
        %v2986 = vpop.permute.xlu0 %2985
        %2987 = vrot.lane.b32.xlu0 %v869, 32
        %v2988 = vpop.permute.xlu0 %2987
        %2989 = vrot.lane.b32.xlu0 %v870, 32
        %v2990 = vpop.permute.xlu0 %2989
        %2991 = vrot.lane.b32.xlu0 %v871, 32
        %v2992 = vpop.permute.xlu0 %2991
        %2993 = vrot.lane.b32.xlu0 %v872, 32
        %v2994 = vpop.permute.xlu0 %2993
        %2995 = vrot.lane.b32.xlu0 %v873, 32
        %v2996 = vpop.permute.xlu0 %2995
        %2997 = vrot.lane.b32.xlu0 %v874, 32
        %v2998 = vpop.permute.xlu0 %2997
        %2999 = vrot.lane.b32.xlu0 %v875, 32
        %v3000 = vpop.permute.xlu0 %2999
        %3001 = vrot.lane.b32.xlu0 %v876, 32
        %v3002 = vpop.permute.xlu0 %3001
        %3003 = vrot.lane.b32.xlu0 %v877, 32
        %v3004 = vpop.permute.xlu0 %3003
        %3005 = vrot.lane.b32.xlu0 %v878, 32
        %v3006 = vpop.permute.xlu0 %3005
        %3007 = vrot.lane.b32.xlu0 %v879, 32
        %v3008 = vpop.permute.xlu0 %3007
        %3009 = vrot.lane.b32.xlu0 %v880, 32
        %v3010 = vpop.permute.xlu0 %3009
        %3011 = vrot.lane.b32.xlu0 %v881, 32
        %v3012 = vpop.permute.xlu0 %3011
        %3013 = vrot.lane.b32.xlu0 %v882, 32
        %v3014 = vpop.permute.xlu0 %3013
        %3015 = vrot.lane.b32.xlu0 %v883, 32
        %v3016 = vpop.permute.xlu0 %3015
        %3017 = vrot.lane.b32.xlu0 %v884, 32
        %v3018 = vpop.permute.xlu0 %3017
        %3019 = vrot.lane.b32.xlu0 %v885, 32
        %v3020 = vpop.permute.xlu0 %3019
        %3021 = vrot.lane.b32.xlu0 %v886, 32
        %v3022 = vpop.permute.xlu0 %3021
        %3023 = vrot.lane.b32.xlu0 %v887, 32
        %v3024 = vpop.permute.xlu0 %3023
        %3025 = vrot.lane.b32.xlu0 %v888, 32
        %v3026 = vpop.permute.xlu0 %3025
        %3027 = vrot.lane.b32.xlu0 %v889, 32
        %v3028 = vpop.permute.xlu0 %3027
        %3029 = vrot.lane.b32.xlu0 %v890, 32
        %v3030 = vpop.permute.xlu0 %3029
        %3031 = vrot.lane.b32.xlu0 %v891, 32
        %v3032 = vpop.permute.xlu0 %3031
        %3033 = vrot.lane.b32.xlu0 %v892, 32
        %v3034 = vpop.permute.xlu0 %3033
        %3035 = vrot.lane.b32.xlu0 %v893, 32
        %v3036 = vpop.permute.xlu0 %3035
        %3037 = vrot.lane.b32.xlu0 %v894, 32
        %v3038 = vpop.permute.xlu0 %3037
        %3039 = vrot.lane.b32.xlu0 %v895, 32
        %v3040 = vpop.permute.xlu0 %3039
        %3041 = vrot.lane.b32.xlu0 %v896, 32
        %v3042 = vpop.permute.xlu0 %3041
        %3043 = vrot.lane.b32.xlu0 %v897, 32
        %v3044 = vpop.permute.xlu0 %3043
        %3045 = vrot.lane.b32.xlu0 %v898, 32
        %v3046 = vpop.permute.xlu0 %3045
        %3047 = vrot.lane.b32.xlu0 %v899, 32
        %v3048 = vpop.permute.xlu0 %3047
        %3049 = vrot.lane.b32.xlu0 %v900, 32
        %v3050 = vpop.permute.xlu0 %3049
        %3051 = vrot.lane.b32.xlu0 %v901, 32
        %v3052 = vpop.permute.xlu0 %3051
        %3053 = vrot.lane.b32.xlu0 %v902, 32
        %v3054 = vpop.permute.xlu0 %3053
        %3055 = vrot.lane.b32.xlu0 %v903, 32
        %v3056 = vpop.permute.xlu0 %3055
        %3057 = vrot.lane.b32.xlu0 %v904, 32
        %v3058 = vpop.permute.xlu0 %3057
        %3059 = vrot.lane.b32.xlu0 %v905, 32
        %v3060 = vpop.permute.xlu0 %3059
        %3061 = vrot.lane.b32.xlu0 %v906, 32
        %v3062 = vpop.permute.xlu0 %3061
        %3063 = vrot.lane.b32.xlu0 %v907, 32
        %v3064 = vpop.permute.xlu0 %3063
        %3065 = vrot.lane.b32.xlu0 %v908, 32
        %v3066 = vpop.permute.xlu0 %3065
        %3067 = vrot.lane.b32.xlu0 %v909, 32
        %v3068 = vpop.permute.xlu0 %3067
        %3069 = vrot.lane.b32.xlu0 %v910, 32
        %v3070 = vpop.permute.xlu0 %3069
        %3071 = vrot.lane.b32.xlu0 %v911, 32
        %v3072 = vpop.permute.xlu0 %3071
        %3073 = vrot.lane.b32.xlu0 %v912, 32
        %v3074 = vpop.permute.xlu0 %3073
        %3075 = vrot.lane.b32.xlu0 %v913, 32
        %v3076 = vpop.permute.xlu0 %3075
        %3077 = vrot.lane.b32.xlu0 %v914, 32
        %v3078 = vpop.permute.xlu0 %3077
        %3079 = vrot.lane.b32.xlu0 %v915, 32
        %v3080 = vpop.permute.xlu0 %3079
        %3081 = vrot.lane.b32.xlu0 %v916, 32
        %v3082 = vpop.permute.xlu0 %3081
        %3083 = vrot.lane.b32.xlu0 %v917, 32
        %v3084 = vpop.permute.xlu0 %3083
        %3085 = vrot.lane.b32.xlu0 %v918, 32
        %v3086 = vpop.permute.xlu0 %3085
        %3087 = vrot.lane.b32.xlu0 %v919, 32
        %v3088 = vpop.permute.xlu0 %3087
        %3089 = vrot.lane.b32.xlu0 %v920, 32
        %v3090 = vpop.permute.xlu0 %3089
        %3091 = vrot.lane.b32.xlu0 %v921, 32
        %v3092 = vpop.permute.xlu0 %3091
        %3093 = vrot.lane.b32.xlu0 %v922, 32
        %v3094 = vpop.permute.xlu0 %3093
        %3095 = vrot.lane.b32.xlu0 %v923, 32
        %v3096 = vpop.permute.xlu0 %3095
        %3097 = vrot.lane.b32.xlu0 %v924, 32
        %v3098 = vpop.permute.xlu0 %3097
        %3099 = vrot.lane.b32.xlu0 %v925, 32
        %v3100 = vpop.permute.xlu0 %3099
        %3101 = vrot.lane.b32.xlu0 %v926, 32
        %v3102 = vpop.permute.xlu0 %3101
        %3103 = vrot.lane.b32.xlu0 %v927, 32
        %v3104 = vpop.permute.xlu0 %3103
        %3105 = vrot.lane.b32.xlu0 %v928, 32
        %v3106 = vpop.permute.xlu0 %3105
        %3107 = vrot.lane.b32.xlu0 %v929, 32
        %v3108 = vpop.permute.xlu0 %3107
        %3109 = vrot.lane.b32.xlu0 %v930, 32
        %v3110 = vpop.permute.xlu0 %3109
        %3111 = vrot.lane.b32.xlu0 %v931, 32
        %v3112 = vpop.permute.xlu0 %3111
        %3113 = vrot.lane.b32.xlu0 %v932, 32
        %v3114 = vpop.permute.xlu0 %3113
        %3115 = vrot.lane.b32.xlu0 %v933, 32
        %v3116 = vpop.permute.xlu0 %3115
        %3117 = vrot.lane.b32.xlu0 %v934, 32
        %v3118 = vpop.permute.xlu0 %3117
        %3119 = vrot.lane.b32.xlu0 %v935, 32
        %v3120 = vpop.permute.xlu0 %3119
        %3121 = vrot.lane.b32.xlu0 %v936, 32
        %v3122 = vpop.permute.xlu0 %3121
        %3123 = vrot.lane.b32.xlu0 %v937, 32
        %v3124 = vpop.permute.xlu0 %3123
        %3125 = vrot.lane.b32.xlu0 %v938, 32
        %v3126 = vpop.permute.xlu0 %3125
        %3127 = vrot.lane.b32.xlu0 %v939, 32
        %v3128 = vpop.permute.xlu0 %3127
        %3129 = vrot.lane.b32.xlu0 %v940, 32
        %v3130 = vpop.permute.xlu0 %3129
        %3131 = vrot.lane.b32.xlu0 %v941, 32
        %v3132 = vpop.permute.xlu0 %3131
        %3133 = vrot.lane.b32.xlu0 %v942, 32
        %v3134 = vpop.permute.xlu0 %3133
        %3227 = vrot.lane.b32.xlu0 %v853, 36
        %v3228 = vpop.permute.xlu0 %3227
        %3229 = vrot.lane.b32.xlu0 %v854, 36
        %v3230 = vpop.permute.xlu0 %3229
        %3231 = vrot.lane.b32.xlu0 %v855, 36
        %v3232 = vpop.permute.xlu0 %3231
        %3233 = vrot.lane.b32.xlu0 %v856, 36
        %v3234 = vpop.permute.xlu0 %3233
        %3235 = vrot.lane.b32.xlu0 %v857, 36
        %v3236 = vpop.permute.xlu0 %3235
        %3237 = vrot.lane.b32.xlu0 %v858, 36
        %v3238 = vpop.permute.xlu0 %3237
        %3239 = vrot.lane.b32.xlu0 %v859, 36
        %v3240 = vpop.permute.xlu0 %3239
        %3241 = vrot.lane.b32.xlu0 %v860, 36
        %v3242 = vpop.permute.xlu0 %3241
        %3243 = vrot.lane.b32.xlu0 %v861, 36
        %v3244 = vpop.permute.xlu0 %3243
        %3245 = vrot.lane.b32.xlu0 %v862, 36
        %v3246 = vpop.permute.xlu0 %3245
        %3247 = vrot.lane.b32.xlu0 %v863, 36
        %v3248 = vpop.permute.xlu0 %3247
        %3249 = vrot.lane.b32.xlu0 %v864, 36
        %v3250 = vpop.permute.xlu0 %3249
        %3251 = vrot.lane.b32.xlu0 %v865, 36
        %v3252 = vpop.permute.xlu0 %3251
        %3253 = vrot.lane.b32.xlu0 %v866, 36
        %v3254 = vpop.permute.xlu0 %3253
        %3255 = vrot.lane.b32.xlu0 %v867, 36
        %v3256 = vpop.permute.xlu0 %3255
        %3257 = vrot.lane.b32.xlu0 %v868, 36
        %v3258 = vpop.permute.xlu0 %3257
        %3259 = vrot.lane.b32.xlu0 %v869, 36
        %v3260 = vpop.permute.xlu0 %3259
        %3261 = vrot.lane.b32.xlu0 %v870, 36
        %v3262 = vpop.permute.xlu0 %3261
        %3263 = vrot.lane.b32.xlu0 %v871, 36
        %v3264 = vpop.permute.xlu0 %3263
        %3265 = vrot.lane.b32.xlu0 %v872, 36
        %v3266 = vpop.permute.xlu0 %3265
        %3267 = vrot.lane.b32.xlu0 %v873, 36
        %v3268 = vpop.permute.xlu0 %3267
        %3269 = vrot.lane.b32.xlu0 %v874, 36
        %v3270 = vpop.permute.xlu0 %3269
        %3271 = vrot.lane.b32.xlu0 %v875, 36
        %v3272 = vpop.permute.xlu0 %3271
        %3273 = vrot.lane.b32.xlu0 %v876, 36
        %v3274 = vpop.permute.xlu0 %3273
        %3275 = vrot.lane.b32.xlu0 %v877, 36
        %v3276 = vpop.permute.xlu0 %3275
        %3277 = vrot.lane.b32.xlu0 %v878, 36
        %v3278 = vpop.permute.xlu0 %3277
        %3279 = vrot.lane.b32.xlu0 %v879, 36
        %v3280 = vpop.permute.xlu0 %3279
        %3281 = vrot.lane.b32.xlu0 %v880, 36
        %v3282 = vpop.permute.xlu0 %3281
        %3283 = vrot.lane.b32.xlu0 %v881, 36
        %v3284 = vpop.permute.xlu0 %3283
        %3285 = vrot.lane.b32.xlu0 %v882, 36
        %v3286 = vpop.permute.xlu0 %3285
        %3287 = vrot.lane.b32.xlu0 %v883, 36
        %v3288 = vpop.permute.xlu0 %3287
        %3289 = vrot.lane.b32.xlu0 %v884, 36
        %v3290 = vpop.permute.xlu0 %3289
        %3291 = vrot.lane.b32.xlu0 %v885, 36
        %v3292 = vpop.permute.xlu0 %3291
        %3293 = vrot.lane.b32.xlu0 %v886, 36
        %v3294 = vpop.permute.xlu0 %3293
        %3295 = vrot.lane.b32.xlu0 %v887, 36
        %v3296 = vpop.permute.xlu0 %3295
        %3297 = vrot.lane.b32.xlu0 %v888, 36
        %v3298 = vpop.permute.xlu0 %3297
        %3299 = vrot.lane.b32.xlu0 %v889, 36
        %v3300 = vpop.permute.xlu0 %3299
        %3301 = vrot.lane.b32.xlu0 %v890, 36
        %v3302 = vpop.permute.xlu0 %3301
        %3303 = vrot.lane.b32.xlu0 %v891, 36
        %v3304 = vpop.permute.xlu0 %3303
        %3305 = vrot.lane.b32.xlu0 %v892, 36
        %v3306 = vpop.permute.xlu0 %3305
        %3307 = vrot.lane.b32.xlu0 %v893, 36
        %v3308 = vpop.permute.xlu0 %3307
        %3309 = vrot.lane.b32.xlu0 %v894, 36
        %v3310 = vpop.permute.xlu0 %3309
        %3311 = vrot.lane.b32.xlu0 %v895, 36
        %v3312 = vpop.permute.xlu0 %3311
        %3313 = vrot.lane.b32.xlu0 %v896, 36
        %v3314 = vpop.permute.xlu0 %3313
        %3315 = vrot.lane.b32.xlu0 %v897, 36
        %v3316 = vpop.permute.xlu0 %3315
        %3317 = vrot.lane.b32.xlu0 %v898, 36
        %v3318 = vpop.permute.xlu0 %3317
        %3319 = vrot.lane.b32.xlu0 %v899, 36
        %v3320 = vpop.permute.xlu0 %3319
        %3321 = vrot.lane.b32.xlu0 %v900, 36
        %v3322 = vpop.permute.xlu0 %3321
        %3323 = vrot.lane.b32.xlu0 %v901, 36
        %v3324 = vpop.permute.xlu0 %3323
        %3325 = vrot.lane.b32.xlu0 %v902, 36
        %v3326 = vpop.permute.xlu0 %3325
        %3327 = vrot.lane.b32.xlu0 %v903, 36
        %v3328 = vpop.permute.xlu0 %3327
        %3329 = vrot.lane.b32.xlu0 %v904, 36
        %v3330 = vpop.permute.xlu0 %3329
        %3331 = vrot.lane.b32.xlu0 %v905, 36
        %v3332 = vpop.permute.xlu0 %3331
        %3333 = vrot.lane.b32.xlu0 %v906, 36
        %v3334 = vpop.permute.xlu0 %3333
        %3335 = vrot.lane.b32.xlu0 %v907, 36
        %v3336 = vpop.permute.xlu0 %3335
        %3337 = vrot.lane.b32.xlu0 %v908, 36
        %v3338 = vpop.permute.xlu0 %3337
        %3339 = vrot.lane.b32.xlu0 %v909, 36
        %v3340 = vpop.permute.xlu0 %3339
        %3341 = vrot.lane.b32.xlu0 %v910, 36
        %v3342 = vpop.permute.xlu0 %3341
        %3343 = vrot.lane.b32.xlu0 %v911, 36
        %v3344 = vpop.permute.xlu0 %3343
        %3345 = vrot.lane.b32.xlu0 %v912, 36
        %v3346 = vpop.permute.xlu0 %3345
        %3347 = vrot.lane.b32.xlu0 %v913, 36
        %v3348 = vpop.permute.xlu0 %3347
        %3349 = vrot.lane.b32.xlu0 %v914, 36
        %v3350 = vpop.permute.xlu0 %3349
        %3351 = vrot.lane.b32.xlu0 %v915, 36
        %v3352 = vpop.permute.xlu0 %3351
        %3353 = vrot.lane.b32.xlu0 %v916, 36
        %v3354 = vpop.permute.xlu0 %3353
        %3355 = vrot.lane.b32.xlu0 %v917, 36
        %v3356 = vpop.permute.xlu0 %3355
        %3357 = vrot.lane.b32.xlu0 %v918, 36
        %v3358 = vpop.permute.xlu0 %3357
        %3359 = vrot.lane.b32.xlu0 %v919, 36
        %v3360 = vpop.permute.xlu0 %3359
        %3361 = vrot.lane.b32.xlu0 %v920, 36
        %v3362 = vpop.permute.xlu0 %3361
        %3363 = vrot.lane.b32.xlu0 %v921, 36
        %v3364 = vpop.permute.xlu0 %3363
        %3365 = vrot.lane.b32.xlu0 %v922, 36
        %v3366 = vpop.permute.xlu0 %3365
        %3367 = vrot.lane.b32.xlu0 %v923, 36
        %v3368 = vpop.permute.xlu0 %3367
        %3369 = vrot.lane.b32.xlu0 %v924, 36
        %v3370 = vpop.permute.xlu0 %3369
        %3371 = vrot.lane.b32.xlu0 %v925, 36
        %v3372 = vpop.permute.xlu0 %3371
        %3373 = vrot.lane.b32.xlu0 %v926, 36
        %v3374 = vpop.permute.xlu0 %3373
        %3375 = vrot.lane.b32.xlu0 %v927, 36
        %v3376 = vpop.permute.xlu0 %3375
        %3377 = vrot.lane.b32.xlu0 %v928, 36
        %v3378 = vpop.permute.xlu0 %3377
        %3379 = vrot.lane.b32.xlu0 %v929, 36
        %v3380 = vpop.permute.xlu0 %3379
        %3381 = vrot.lane.b32.xlu0 %v930, 36
        %v3382 = vpop.permute.xlu0 %3381
        %3383 = vrot.lane.b32.xlu0 %v931, 36
        %v3384 = vpop.permute.xlu0 %3383
        %3385 = vrot.lane.b32.xlu0 %v932, 36
        %v3386 = vpop.permute.xlu0 %3385
        %3387 = vrot.lane.b32.xlu0 %v933, 36
        %v3388 = vpop.permute.xlu0 %3387
        %3389 = vrot.lane.b32.xlu0 %v934, 36
        %v3390 = vpop.permute.xlu0 %3389
        %3391 = vrot.lane.b32.xlu0 %v935, 36
        %v3392 = vpop.permute.xlu0 %3391
        %3393 = vrot.lane.b32.xlu0 %v936, 36
        %v3394 = vpop.permute.xlu0 %3393
        %3395 = vrot.lane.b32.xlu0 %v937, 36
        %v3396 = vpop.permute.xlu0 %3395
        %3397 = vrot.lane.b32.xlu0 %v938, 36
        %v3398 = vpop.permute.xlu0 %3397
        %3399 = vrot.lane.b32.xlu0 %v939, 36
        %v3400 = vpop.permute.xlu0 %3399
        %3401 = vrot.lane.b32.xlu0 %v940, 36
        %v3402 = vpop.permute.xlu0 %3401
        %3403 = vrot.lane.b32.xlu0 %v941, 36
        %v3404 = vpop.permute.xlu0 %3403
        %3405 = vrot.lane.b32.xlu0 %v942, 36
        %v3406 = vpop.permute.xlu0 %3405
        %3407 = vrot.lane.b32.xlu0 %v943, 36
        %v3408 = vpop.permute.xlu0 %3407
        %vm3500 = vcmask 31744
        %v3501 = vsel %vm3500, %v844, %v1036
        %v3502 = vsel %vm3500, %v845, %v1038
        %v3503 = vsel %vm3500, %v846, %v1040
        %v3504 = vsel %vm3500, %v847, %v1042
        %v3505 = vsel %vm3500, %v848, %v1044
        %v3506 = vsel %vm3500, %v849, %v1046
        %v3507 = vsel %vm3500, %v850, %v1048
        %v3508 = vsel %vm3500, %v851, %v1050
        %v3509 = vsel %vm3500, %v852, %v1052
        %v3510 = vsel %vm3500, %v853, %v1054
        %v3511 = vsel %vm3500, %v854, %v1056
        %v3512 = vsel %vm3500, %v855, %v1058
        %v3513 = vsel %vm3500, %v856, %v1060
        %v3514 = vsel %vm3500, %v857, %v1062
        %v3515 = vsel %vm3500, %v858, %v1064
        %v3516 = vsel %vm3500, %v859, %v1066
        %v3517 = vsel %vm3500, %v860, %v1068
        %v3518 = vsel %vm3500, %v861, %v1070
        %v3519 = vsel %vm3500, %v862, %v1072
        %v3520 = vsel %vm3500, %v863, %v1074
        %v3521 = vsel %vm3500, %v864, %v1076
        %v3522 = vsel %vm3500, %v865, %v1078
        %v3523 = vsel %vm3500, %v866, %v1080
        %v3524 = vsel %vm3500, %v867, %v1082
        %v3525 = vsel %vm3500, %v868, %v1084
        %v3526 = vsel %vm3500, %v869, %v1086
        %v3527 = vsel %vm3500, %v870, %v1088
        %v3528 = vsel %vm3500, %v871, %v1090
        %v3529 = vsel %vm3500, %v872, %v1092
        %v3530 = vsel %vm3500, %v873, %v1094
        %v3531 = vsel %vm3500, %v874, %v1096
        %v3532 = vsel %vm3500, %v875, %v1098
        %v3533 = vsel %vm3500, %v876, %v1100
        %v3534 = vsel %vm3500, %v877, %v1102
        %v3535 = vsel %vm3500, %v878, %v1104
        %v3536 = vsel %vm3500, %v879, %v1106
        %v3537 = vsel %vm3500, %v880, %v1108
        %v3538 = vsel %vm3500, %v881, %v1110
        %v3539 = vsel %vm3500, %v882, %v1112
        %v3540 = vsel %vm3500, %v883, %v1114
        %v3541 = vsel %vm3500, %v884, %v1116
        %v3542 = vsel %vm3500, %v885, %v1118
        %v3543 = vsel %vm3500, %v886, %v1120
        %v3544 = vsel %vm3500, %v887, %v1122
        %v3545 = vsel %vm3500, %v888, %v1124
        %v3546 = vsel %vm3500, %v889, %v1126
        %v3547 = vsel %vm3500, %v890, %v1128
        %v3548 = vsel %vm3500, %v891, %v1130
        %v3549 = vsel %vm3500, %v892, %v1132
        %v3550 = vsel %vm3500, %v893, %v1134
        %v3551 = vsel %vm3500, %v894, %v1136
        %v3552 = vsel %vm3500, %v895, %v1138
        %v3553 = vsel %vm3500, %v896, %v1140
        %v3554 = vsel %vm3500, %v897, %v1142
        %v3555 = vsel %vm3500, %v898, %v1144
        %v3556 = vsel %vm3500, %v899, %v1146
        %v3557 = vsel %vm3500, %v900, %v1148
        %v3558 = vsel %vm3500, %v901, %v1150
        %v3559 = vsel %vm3500, %v902, %v1152
        %v3560 = vsel %vm3500, %v903, %v1154
        %v3561 = vsel %vm3500, %v904, %v1156
        %v3562 = vsel %vm3500, %v905, %v1158
        %v3563 = vsel %vm3500, %v906, %v1160
        %v3564 = vsel %vm3500, %v907, %v1162
        %v3565 = vsel %vm3500, %v908, %v1164
        %v3566 = vsel %vm3500, %v909, %v1166
        %v3567 = vsel %vm3500, %v910, %v1168
        %v3568 = vsel %vm3500, %v911, %v1170
        %v3569 = vsel %vm3500, %v912, %v1172
        %v3570 = vsel %vm3500, %v913, %v1174
        %v3571 = vsel %vm3500, %v914, %v1176
        %v3572 = vsel %vm3500, %v915, %v1178
        %v3573 = vsel %vm3500, %v916, %v1180
        %v3574 = vsel %vm3500, %v917, %v1182
        %v3575 = vsel %vm3500, %v918, %v1184
        %v3576 = vsel %vm3500, %v919, %v1186
        %v3577 = vsel %vm3500, %v920, %v1188
        %v3578 = vsel %vm3500, %v921, %v1190
        %v3579 = vsel %vm3500, %v922, %v1192
        %v3580 = vsel %vm3500, %v923, %v1194
        %v3581 = vsel %vm3500, %v924, %v1196
        %v3582 = vsel %vm3500, %v925, %v1198
        %v3583 = vsel %vm3500, %v926, %v1200
        %v3584 = vsel %vm3500, %v927, %v1202
        %v3585 = vsel %vm3500, %v928, %v1204
        %v3586 = vsel %vm3500, %v929, %v1206
        %v3587 = vsel %vm3500, %v930, %v1208
        %v3588 = vsel %vm3500, %v931, %v1210
        %v3589 = vsel %vm3500, %v932, %v1212
        %v3590 = vsel %vm3500, %v933, %v1214
        %v3591 = vsel %vm3500, %v934, %v1216
        %vm3592 = vcmask 64512
        %v3593 = vsel %vm3592, %v3501, %v1310
        %v3594 = vsel %vm3592, %v3502, %v1312
        %v3595 = vsel %vm3592, %v3503, %v1314
        %v3596 = vsel %vm3592, %v3504, %v1316
        %v3597 = vsel %vm3592, %v3505, %v1318
        %v3598 = vsel %vm3592, %v3506, %v1320
        %v3599 = vsel %vm3592, %v3507, %v1322
        %v3600 = vsel %vm3592, %v3508, %v1324
        %v3601 = vsel %vm3592, %v3509, %v1326
        %v3602 = vsel %vm3592, %v3510, %v1328
        %v3603 = vsel %vm3592, %v3511, %v1330
        %v3604 = vsel %vm3592, %v3512, %v1332
        %v3605 = vsel %vm3592, %v3513, %v1334
        %v3606 = vsel %vm3592, %v3514, %v1336
        %v3607 = vsel %vm3592, %v3515, %v1338
        %v3608 = vsel %vm3592, %v3516, %v1340
        %v3609 = vsel %vm3592, %v3517, %v1342
        %v3610 = vsel %vm3592, %v3518, %v1344
        %v3611 = vsel %vm3592, %v3519, %v1346
        %v3612 = vsel %vm3592, %v3520, %v1348
        %v3613 = vsel %vm3592, %v3521, %v1350
        %v3614 = vsel %vm3592, %v3522, %v1352
        %v3615 = vsel %vm3592, %v3523, %v1354
        %v3616 = vsel %vm3592, %v3524, %v1356
        %v3617 = vsel %vm3592, %v3525, %v1358
        %v3618 = vsel %vm3592, %v3526, %v1360
        %v3619 = vsel %vm3592, %v3527, %v1362
        %v3620 = vsel %vm3592, %v3528, %v1364
        %v3621 = vsel %vm3592, %v3529, %v1366
        %v3622 = vsel %vm3592, %v3530, %v1368
        %v3623 = vsel %vm3592, %v3531, %v1370
        %v3624 = vsel %vm3592, %v3532, %v1372
        %v3625 = vsel %vm3592, %v3533, %v1374
        %v3626 = vsel %vm3592, %v3534, %v1376
        %v3627 = vsel %vm3592, %v3535, %v1378
        %v3628 = vsel %vm3592, %v3536, %v1380
        %v3629 = vsel %vm3592, %v3537, %v1382
        %v3630 = vsel %vm3592, %v3538, %v1384
        %v3631 = vsel %vm3592, %v3539, %v1386
        %v3632 = vsel %vm3592, %v3540, %v1388
        %v3633 = vsel %vm3592, %v3541, %v1390
        %v3634 = vsel %vm3592, %v3542, %v1392
        %v3635 = vsel %vm3592, %v3543, %v1394
        %v3636 = vsel %vm3592, %v3544, %v1396
        %v3637 = vsel %vm3592, %v3545, %v1398
        %v3638 = vsel %vm3592, %v3546, %v1400
        %v3639 = vsel %vm3592, %v3547, %v1402
        %v3640 = vsel %vm3592, %v3548, %v1404
        %v3641 = vsel %vm3592, %v3549, %v1406
        %v3642 = vsel %vm3592, %v3550, %v1408
        %v3643 = vsel %vm3592, %v3551, %v1410
        %v3644 = vsel %vm3592, %v3552, %v1412
        %v3645 = vsel %vm3592, %v3553, %v1414
        %v3646 = vsel %vm3592, %v3554, %v1416
        %v3647 = vsel %vm3592, %v3555, %v1418
        %v3648 = vsel %vm3592, %v3556, %v1420
        %v3649 = vsel %vm3592, %v3557, %v1422
        %v3650 = vsel %vm3592, %v3558, %v1424
        %v3651 = vsel %vm3592, %v3559, %v1426
        %v3652 = vsel %vm3592, %v3560, %v1428
        %v3653 = vsel %vm3592, %v3561, %v1430
        %v3654 = vsel %vm3592, %v3562, %v1432
        %v3655 = vsel %vm3592, %v3563, %v1434
        %v3656 = vsel %vm3592, %v3564, %v1436
        %v3657 = vsel %vm3592, %v3565, %v1438
        %v3658 = vsel %vm3592, %v3566, %v1440
        %v3659 = vsel %vm3592, %v3567, %v1442
        %v3660 = vsel %vm3592, %v3568, %v1444
        %v3661 = vsel %vm3592, %v3569, %v1446
        %v3662 = vsel %vm3592, %v3570, %v1448
        %v3663 = vsel %vm3592, %v3571, %v1450
        %v3664 = vsel %vm3592, %v3572, %v1452
        %v3665 = vsel %vm3592, %v3573, %v1454
        %v3666 = vsel %vm3592, %v3574, %v1456
        %v3667 = vsel %vm3592, %v3575, %v1458
        %v3668 = vsel %vm3592, %v3576, %v1460
        %v3669 = vsel %vm3592, %v3577, %v1462
        %v3670 = vsel %vm3592, %v3578, %v1464
        %v3671 = vsel %vm3592, %v3579, %v1466
        %v3672 = vsel %vm3592, %v3580, %v1468
        %v3673 = vsel %vm3592, %v3581, %v1470
        %v3674 = vsel %vm3592, %v3582, %v1472
        %v3675 = vsel %vm3592, %v3583, %v1474
        %v3676 = vsel %vm3592, %v3584, %v1476
        %v3677 = vsel %vm3592, %v3585, %v1478
        %v3678 = vsel %vm3592, %v3586, %v1480
        %v3679 = vsel %vm3592, %v3587, %v1482
        %v3680 = vsel %vm3592, %v3588, %v1484
        %v3681 = vsel %vm3592, %v3589, %v1486
        %v3682 = vsel %vm3592, %v3590, %v1488
        %v3683 = vsel %vm3592, %v3591, %v1490
        %vm3684 = vcmask 97280
        %v3685 = vsel %vm3684, %v3593, %v1584
        %v3686 = vsel %vm3684, %v3594, %v1586
        %v3687 = vsel %vm3684, %v3595, %v1588
        %v3688 = vsel %vm3684, %v3596, %v1590
        %v3689 = vsel %vm3684, %v3597, %v1592
        %v3690 = vsel %vm3684, %v3598, %v1594
        %v3691 = vsel %vm3684, %v3599, %v1596
        %v3692 = vsel %vm3684, %v3600, %v1598
        %v3693 = vsel %vm3684, %v3601, %v1600
        %v3694 = vsel %vm3684, %v3602, %v1602
        %v3695 = vsel %vm3684, %v3603, %v1604
        %v3696 = vsel %vm3684, %v3604, %v1606
        %v3697 = vsel %vm3684, %v3605, %v1608
        %v3698 = vsel %vm3684, %v3606, %v1610
        %v3699 = vsel %vm3684, %v3607, %v1612
        %v3700 = vsel %vm3684, %v3608, %v1614
        %v3701 = vsel %vm3684, %v3609, %v1616
        %v3702 = vsel %vm3684, %v3610, %v1618
        %v3703 = vsel %vm3684, %v3611, %v1620
        %v3704 = vsel %vm3684, %v3612, %v1622
        %v3705 = vsel %vm3684, %v3613, %v1624
        %v3706 = vsel %vm3684, %v3614, %v1626
        %v3707 = vsel %vm3684, %v3615, %v1628
        %v3708 = vsel %vm3684, %v3616, %v1630
        %v3709 = vsel %vm3684, %v3617, %v1632
        %v3710 = vsel %vm3684, %v3618, %v1634
        %v3711 = vsel %vm3684, %v3619, %v1636
        %v3712 = vsel %vm3684, %v3620, %v1638
        %v3713 = vsel %vm3684, %v3621, %v1640
        %v3714 = vsel %vm3684, %v3622, %v1642
        %v3715 = vsel %vm3684, %v3623, %v1644
        %v3716 = vsel %vm3684, %v3624, %v1646
        %v3717 = vsel %vm3684, %v3625, %v1648
        %v3718 = vsel %vm3684, %v3626, %v1650
        %v3719 = vsel %vm3684, %v3627, %v1652
        %v3720 = vsel %vm3684, %v3628, %v1654
        %v3721 = vsel %vm3684, %v3629, %v1656
        %v3722 = vsel %vm3684, %v3630, %v1658
        %v3723 = vsel %vm3684, %v3631, %v1660
        %v3724 = vsel %vm3684, %v3632, %v1662
        %v3725 = vsel %vm3684, %v3633, %v1664
        %v3726 = vsel %vm3684, %v3634, %v1666
        %v3727 = vsel %vm3684, %v3635, %v1668
        %v3728 = vsel %vm3684, %v3636, %v1670
        %v3729 = vsel %vm3684, %v3637, %v1672
        %v3730 = vsel %vm3684, %v3638, %v1674
        %v3731 = vsel %vm3684, %v3639, %v1676
        %v3732 = vsel %vm3684, %v3640, %v1678
        %v3733 = vsel %vm3684, %v3641, %v1680
        %v3734 = vsel %vm3684, %v3642, %v1682
        %v3735 = vsel %vm3684, %v3643, %v1684
        %v3736 = vsel %vm3684, %v3644, %v1686
        %v3737 = vsel %vm3684, %v3645, %v1688
        %v3738 = vsel %vm3684, %v3646, %v1690
        %v3739 = vsel %vm3684, %v3647, %v1692
        %v3740 = vsel %vm3684, %v3648, %v1694
        %v3741 = vsel %vm3684, %v3649, %v1696
        %v3742 = vsel %vm3684, %v3650, %v1698
        %v3743 = vsel %vm3684, %v3651, %v1700
        %v3744 = vsel %vm3684, %v3652, %v1702
        %v3745 = vsel %vm3684, %v3653, %v1704
        %v3746 = vsel %vm3684, %v3654, %v1706
        %v3747 = vsel %vm3684, %v3655, %v1708
        %v3748 = vsel %vm3684, %v3656, %v1710
        %v3749 = vsel %vm3684, %v3657, %v1712
        %v3750 = vsel %vm3684, %v3658, %v1714
        %v3751 = vsel %vm3684, %v3659, %v1716
        %v3752 = vsel %vm3684, %v3660, %v1718
        %v3753 = vsel %vm3684, %v3661, %v1720
        %v3754 = vsel %vm3684, %v3662, %v1722
        %v3755 = vsel %vm3684, %v3663, %v1724
        %v3756 = vsel %vm3684, %v3664, %v1726
        %v3757 = vsel %vm3684, %v3665, %v1728
        %v3758 = vsel %vm3684, %v3666, %v1730
        %v3759 = vsel %vm3684, %v3667, %v1732
        %v3760 = vsel %vm3684, %v3668, %v1734
        %v3761 = vsel %vm3684, %v3669, %v1736
        %v3762 = vsel %vm3684, %v3670, %v1738
        %v3763 = vsel %vm3684, %v3671, %v1740
        %v3764 = vsel %vm3684, %v3672, %v1742
        %v3765 = vsel %vm3684, %v3673, %v1744
        %v3766 = vsel %vm3684, %v3674, %v1746
        %v3767 = vsel %vm3684, %v3675, %v1748
        %v3768 = vsel %vm3684, %v3676, %v1750
        %v3769 = vsel %vm3684, %v3677, %v1752
        %v3770 = vsel %vm3684, %v3678, %v1754
        %v3771 = vsel %vm3684, %v3679, %v1756
        %v3772 = vsel %vm3684, %v3680, %v1758
        %v3773 = vsel %vm3684, %v3681, %v1760
        %v3774 = vsel %vm3684, %v3682, %v1762
        %v3775 = vsel %vm3684, %v3683, %v1764
        %vm3776 = vcmask 130048
        %v3777 = vsel %vm3776, %v3685, %v1858
        %v3778 = vsel %vm3776, %v3686, %v1860
        %v3779 = vsel %vm3776, %v3687, %v1862
        %v3780 = vsel %vm3776, %v3688, %v1864
        %v3781 = vsel %vm3776, %v3689, %v1866
        %v3782 = vsel %vm3776, %v3690, %v1868
        %v3783 = vsel %vm3776, %v3691, %v1870
        %v3784 = vsel %vm3776, %v3692, %v1872
        %v3785 = vsel %vm3776, %v3693, %v1874
        %v3786 = vsel %vm3776, %v3694, %v1876
        %v3787 = vsel %vm3776, %v3695, %v1878
        %v3788 = vsel %vm3776, %v3696, %v1880
        %v3789 = vsel %vm3776, %v3697, %v1882
        %v3790 = vsel %vm3776, %v3698, %v1884
        %v3791 = vsel %vm3776, %v3699, %v1886
        %v3792 = vsel %vm3776, %v3700, %v1888
        %v3793 = vsel %vm3776, %v3701, %v1890
        %v3794 = vsel %vm3776, %v3702, %v1892
        %v3795 = vsel %vm3776, %v3703, %v1894
        %v3796 = vsel %vm3776, %v3704, %v1896
        %v3797 = vsel %vm3776, %v3705, %v1898
        %v3798 = vsel %vm3776, %v3706, %v1900
        %v3799 = vsel %vm3776, %v3707, %v1902
        %v3800 = vsel %vm3776, %v3708, %v1904
        %v3801 = vsel %vm3776, %v3709, %v1906
        %v3802 = vsel %vm3776, %v3710, %v1908
        %v3803 = vsel %vm3776, %v3711, %v1910
        %v3804 = vsel %vm3776, %v3712, %v1912
        %v3805 = vsel %vm3776, %v3713, %v1914
        %v3806 = vsel %vm3776, %v3714, %v1916
        %v3807 = vsel %vm3776, %v3715, %v1918
        %v3808 = vsel %vm3776, %v3716, %v1920
        %v3809 = vsel %vm3776, %v3717, %v1922
        %v3810 = vsel %vm3776, %v3718, %v1924
        %v3811 = vsel %vm3776, %v3719, %v1926
        %v3812 = vsel %vm3776, %v3720, %v1928
        %v3813 = vsel %vm3776, %v3721, %v1930
        %v3814 = vsel %vm3776, %v3722, %v1932
        %v3815 = vsel %vm3776, %v3723, %v1934
        %v3816 = vsel %vm3776, %v3724, %v1936
        %v3817 = vsel %vm3776, %v3725, %v1938
        %v3818 = vsel %vm3776, %v3726, %v1940
        %v3819 = vsel %vm3776, %v3727, %v1942
        %v3820 = vsel %vm3776, %v3728, %v1944
        %v3821 = vsel %vm3776, %v3729, %v1946
        %v3822 = vsel %vm3776, %v3730, %v1948
        %v3823 = vsel %vm3776, %v3731, %v1950
        %v3824 = vsel %vm3776, %v3732, %v1952
        %v3825 = vsel %vm3776, %v3733, %v1954
        %v3826 = vsel %vm3776, %v3734, %v1956
        %v3827 = vsel %vm3776, %v3735, %v1958
        %v3828 = vsel %vm3776, %v3736, %v1960
        %v3829 = vsel %vm3776, %v3737, %v1962
        %v3830 = vsel %vm3776, %v3738, %v1964
        %v3831 = vsel %vm3776, %v3739, %v1966
        %v3832 = vsel %vm3776, %v3740, %v1968
        %v3833 = vsel %vm3776, %v3741, %v1970
        %v3834 = vsel %vm3776, %v3742, %v1972
        %v3835 = vsel %vm3776, %v3743, %v1974
        %v3836 = vsel %vm3776, %v3744, %v1976
        %v3837 = vsel %vm3776, %v3745, %v1978
        %v3838 = vsel %vm3776, %v3746, %v1980
        %v3839 = vsel %vm3776, %v3747, %v1982
        %v3840 = vsel %vm3776, %v3748, %v1984
        %v3841 = vsel %vm3776, %v3749, %v1986
        %v3842 = vsel %vm3776, %v3750, %v1988
        %v3843 = vsel %vm3776, %v3751, %v1990
        %v3844 = vsel %vm3776, %v3752, %v1992
        %v3845 = vsel %vm3776, %v3753, %v1994
        %v3846 = vsel %vm3776, %v3754, %v1996
        %v3847 = vsel %vm3776, %v3755, %v1998
        %v3848 = vsel %vm3776, %v3756, %v2000
        %v3849 = vsel %vm3776, %v3757, %v2002
        %v3850 = vsel %vm3776, %v3758, %v2004
        %v3851 = vsel %vm3776, %v3759, %v2006
        %v3852 = vsel %vm3776, %v3760, %v2008
        %v3853 = vsel %vm3776, %v3761, %v2010
        %v3854 = vsel %vm3776, %v3762, %v2012
        %v3855 = vsel %vm3776, %v3763, %v2014
        %v3856 = vsel %vm3776, %v3764, %v2016
        %v3857 = vsel %vm3776, %v3765, %v2018
        %v3858 = vsel %vm3776, %v3766, %v2020
        %v3859 = vsel %vm3776, %v3767, %v2022
        %v3860 = vsel %vm3776, %v3768, %v2024
        %v3861 = vsel %vm3776, %v3769, %v2026
        %v3862 = vsel %vm3776, %v3770, %v2028
        %v3863 = vsel %vm3776, %v3771, %v2030
        %v3864 = vsel %vm3776, %v3772, %v2032
        %v3865 = vsel %vm3776, %v3773, %v2034
        %v3866 = vsel %vm3776, %v3774, %v2036
        %v3867 = vsel %vm3776, %v3775, %v2038
        %vm3868 = vcmask 162816
        %v3869 = vsel %vm3868, %v3777, %v2132
        %v3870 = vsel %vm3868, %v3778, %v2134
        %v3871 = vsel %vm3868, %v3779, %v2136
        %v3872 = vsel %vm3868, %v3780, %v2138
        %v3873 = vsel %vm3868, %v3781, %v2140
        %v3874 = vsel %vm3868, %v3782, %v2142
        %v3875 = vsel %vm3868, %v3783, %v2144
        %v3876 = vsel %vm3868, %v3784, %v2146
        %v3877 = vsel %vm3868, %v3785, %v2148
        %v3878 = vsel %vm3868, %v3786, %v2150
        %v3879 = vsel %vm3868, %v3787, %v2152
        %v3880 = vsel %vm3868, %v3788, %v2154
        %v3881 = vsel %vm3868, %v3789, %v2156
        %v3882 = vsel %vm3868, %v3790, %v2158
        %v3883 = vsel %vm3868, %v3791, %v2160
        %v3884 = vsel %vm3868, %v3792, %v2162
        %v3885 = vsel %vm3868, %v3793, %v2164
        %v3886 = vsel %vm3868, %v3794, %v2166
        %v3887 = vsel %vm3868, %v3795, %v2168
        %v3888 = vsel %vm3868, %v3796, %v2170
        %v3889 = vsel %vm3868, %v3797, %v2172
        %v3890 = vsel %vm3868, %v3798, %v2174
        %v3891 = vsel %vm3868, %v3799, %v2176
        %v3892 = vsel %vm3868, %v3800, %v2178
        %v3893 = vsel %vm3868, %v3801, %v2180
        %v3894 = vsel %vm3868, %v3802, %v2182
        %v3895 = vsel %vm3868, %v3803, %v2184
        %v3896 = vsel %vm3868, %v3804, %v2186
        %v3897 = vsel %vm3868, %v3805, %v2188
        %v3898 = vsel %vm3868, %v3806, %v2190
        %v3899 = vsel %vm3868, %v3807, %v2192
        %v3900 = vsel %vm3868, %v3808, %v2194
        %v3901 = vsel %vm3868, %v3809, %v2196
        %v3902 = vsel %vm3868, %v3810, %v2198
        %v3903 = vsel %vm3868, %v3811, %v2200
        %v3904 = vsel %vm3868, %v3812, %v2202
        %v3905 = vsel %vm3868, %v3813, %v2204
        %v3906 = vsel %vm3868, %v3814, %v2206
        %v3907 = vsel %vm3868, %v3815, %v2208
        %v3908 = vsel %vm3868, %v3816, %v2210
        %v3909 = vsel %vm3868, %v3817, %v2212
        %v3910 = vsel %vm3868, %v3818, %v2214
        %v3911 = vsel %vm3868, %v3819, %v2216
        %v3912 = vsel %vm3868, %v3820, %v2218
        %v3913 = vsel %vm3868, %v3821, %v2220
        %v3914 = vsel %vm3868, %v3822, %v2222
        %v3915 = vsel %vm3868, %v3823, %v2224
        %v3916 = vsel %vm3868, %v3824, %v2226
        %v3917 = vsel %vm3868, %v3825, %v2228
        %v3918 = vsel %vm3868, %v3826, %v2230
        %v3919 = vsel %vm3868, %v3827, %v2232
        %v3920 = vsel %vm3868, %v3828, %v2234
        %v3921 = vsel %vm3868, %v3829, %v2236
        %v3922 = vsel %vm3868, %v3830, %v2238
        %v3923 = vsel %vm3868, %v3831, %v2240
        %v3924 = vsel %vm3868, %v3832, %v2242
        %v3925 = vsel %vm3868, %v3833, %v2244
        %v3926 = vsel %vm3868, %v3834, %v2246
        %v3927 = vsel %vm3868, %v3835, %v2248
        %v3928 = vsel %vm3868, %v3836, %v2250
        %v3929 = vsel %vm3868, %v3837, %v2252
        %v3930 = vsel %vm3868, %v3838, %v2254
        %v3931 = vsel %vm3868, %v3839, %v2256
        %v3932 = vsel %vm3868, %v3840, %v2258
        %v3933 = vsel %vm3868, %v3841, %v2260
        %v3934 = vsel %vm3868, %v3842, %v2262
        %v3935 = vsel %vm3868, %v3843, %v2264
        %v3936 = vsel %vm3868, %v3844, %v2266
        %v3937 = vsel %vm3868, %v3845, %v2268
        %v3938 = vsel %vm3868, %v3846, %v2270
        %v3939 = vsel %vm3868, %v3847, %v2272
        %v3940 = vsel %vm3868, %v3848, %v2274
        %v3941 = vsel %vm3868, %v3849, %v2276
        %v3942 = vsel %vm3868, %v3850, %v2278
        %v3943 = vsel %vm3868, %v3851, %v2280
        %v3944 = vsel %vm3868, %v3852, %v2282
        %v3945 = vsel %vm3868, %v3853, %v2284
        %v3946 = vsel %vm3868, %v3854, %v2286
        %v3947 = vsel %vm3868, %v3855, %v2288
        %v3948 = vsel %vm3868, %v3856, %v2290
        %v3949 = vsel %vm3868, %v3857, %v2292
        %v3950 = vsel %vm3868, %v3858, %v2294
        %v3951 = vsel %vm3868, %v3859, %v2296
        %v3952 = vsel %vm3868, %v3860, %v2298
        %v3953 = vsel %vm3868, %v3861, %v2300
        %v3954 = vsel %vm3868, %v3862, %v2302
        %v3955 = vsel %vm3868, %v3863, %v2304
        %v3956 = vsel %vm3868, %v3864, %v2306
        %v3957 = vsel %vm3868, %v3865, %v2308
        %v3958 = vsel %vm3868, %v3866, %v2310
        %v3959 = vsel %vm3868, %v3867, %v2312
        %vm3960 = vcmask 195584
        %v3961 = vsel %vm3960, %v3869, %v2406
        %v3962 = vsel %vm3960, %v3870, %v2408
        %v3963 = vsel %vm3960, %v3871, %v2410
        %v3964 = vsel %vm3960, %v3872, %v2412
        %v3965 = vsel %vm3960, %v3873, %v2414
        %v3966 = vsel %vm3960, %v3874, %v2416
        %v3967 = vsel %vm3960, %v3875, %v2418
        %v3968 = vsel %vm3960, %v3876, %v2420
        %v3969 = vsel %vm3960, %v3877, %v2422
        %v3970 = vsel %vm3960, %v3878, %v2424
        %v3971 = vsel %vm3960, %v3879, %v2426
        %v3972 = vsel %vm3960, %v3880, %v2428
        %v3973 = vsel %vm3960, %v3881, %v2430
        %v3974 = vsel %vm3960, %v3882, %v2432
        %v3975 = vsel %vm3960, %v3883, %v2434
        %v3976 = vsel %vm3960, %v3884, %v2436
        %v3977 = vsel %vm3960, %v3885, %v2438
        %v3978 = vsel %vm3960, %v3886, %v2440
        %v3979 = vsel %vm3960, %v3887, %v2442
        %v3980 = vsel %vm3960, %v3888, %v2444
        %v3981 = vsel %vm3960, %v3889, %v2446
        %v3982 = vsel %vm3960, %v3890, %v2448
        %v3983 = vsel %vm3960, %v3891, %v2450
        %v3984 = vsel %vm3960, %v3892, %v2452
        %v3985 = vsel %vm3960, %v3893, %v2454
        %v3986 = vsel %vm3960, %v3894, %v2456
        %v3987 = vsel %vm3960, %v3895, %v2458
        %v3988 = vsel %vm3960, %v3896, %v2460
        %v3989 = vsel %vm3960, %v3897, %v2462
        %v3990 = vsel %vm3960, %v3898, %v2464
        %v3991 = vsel %vm3960, %v3899, %v2466
        %v3992 = vsel %vm3960, %v3900, %v2468
        %v3993 = vsel %vm3960, %v3901, %v2470
        %v3994 = vsel %vm3960, %v3902, %v2472
        %v3995 = vsel %vm3960, %v3903, %v2474
        %v3996 = vsel %vm3960, %v3904, %v2476
        %v3997 = vsel %vm3960, %v3905, %v2478
        %v3998 = vsel %vm3960, %v3906, %v2480
        %v3999 = vsel %vm3960, %v3907, %v2482
        %v4000 = vsel %vm3960, %v3908, %v2484
        %v4001 = vsel %vm3960, %v3909, %v2486
        %v4002 = vsel %vm3960, %v3910, %v2488
        %v4003 = vsel %vm3960, %v3911, %v2490
        %v4004 = vsel %vm3960, %v3912, %v2492
        %v4005 = vsel %vm3960, %v3913, %v2494
        %v4006 = vsel %vm3960, %v3914, %v2496
        %v4007 = vsel %vm3960, %v3915, %v2498
        %v4008 = vsel %vm3960, %v3916, %v2500
        %v4009 = vsel %vm3960, %v3917, %v2502
        %v4010 = vsel %vm3960, %v3918, %v2504
        %v4011 = vsel %vm3960, %v3919, %v2506
        %v4012 = vsel %vm3960, %v3920, %v2508
        %v4013 = vsel %vm3960, %v3921, %v2510
        %v4014 = vsel %vm3960, %v3922, %v2512
        %v4015 = vsel %vm3960, %v3923, %v2514
        %v4016 = vsel %vm3960, %v3924, %v2516
        %v4017 = vsel %vm3960, %v3925, %v2518
        %v4018 = vsel %vm3960, %v3926, %v2520
        %v4019 = vsel %vm3960, %v3927, %v2522
        %v4020 = vsel %vm3960, %v3928, %v2524
        %v4021 = vsel %vm3960, %v3929, %v2526
        %v4022 = vsel %vm3960, %v3930, %v2528
        %v4023 = vsel %vm3960, %v3931, %v2530
        %v4024 = vsel %vm3960, %v3932, %v2532
        %v4025 = vsel %vm3960, %v3933, %v2534
        %v4026 = vsel %vm3960, %v3934, %v2536
        %v4027 = vsel %vm3960, %v3935, %v2538
        %v4028 = vsel %vm3960, %v3936, %v2540
        %v4029 = vsel %vm3960, %v3937, %v2542
        %v4030 = vsel %vm3960, %v3938, %v2544
        %v4031 = vsel %vm3960, %v3939, %v2546
        %v4032 = vsel %vm3960, %v3940, %v2548
        %v4033 = vsel %vm3960, %v3941, %v2550
        %v4034 = vsel %vm3960, %v3942, %v2552
        %v4035 = vsel %vm3960, %v3943, %v2554
        %v4036 = vsel %vm3960, %v3944, %v2556
        %v4037 = vsel %vm3960, %v3945, %v2558
        %v4038 = vsel %vm3960, %v3946, %v2560
        %v4039 = vsel %vm3960, %v3947, %v2562
        %v4040 = vsel %vm3960, %v3948, %v2564
        %v4041 = vsel %vm3960, %v3949, %v2566
        %v4042 = vsel %vm3960, %v3950, %v2568
        %v4043 = vsel %vm3960, %v3951, %v2570
        %v4044 = vsel %vm3960, %v3952, %v2572
        %v4045 = vsel %vm3960, %v3953, %v2574
        %v4046 = vsel %vm3960, %v3954, %v2576
        %v4047 = vsel %vm3960, %v3955, %v2578
        %v4048 = vsel %vm3960, %v3956, %v2580
        %v4049 = vsel %vm3960, %v3957, %v2582
        %v4050 = vsel %vm3960, %v3958, %v2584
        %v4051 = vsel %vm3960, %v3959, %v2586
        %vm4052 = vcmask 228352
        %v4053 = vsel %vm4052, %v3961, %v2680
        %v4054 = vsel %vm4052, %v3962, %v2682
        %v4055 = vsel %vm4052, %v3963, %v2684
        %v4056 = vsel %vm4052, %v3964, %v2686
        %v4057 = vsel %vm4052, %v3965, %v2688
        %v4058 = vsel %vm4052, %v3966, %v2690
        %v4059 = vsel %vm4052, %v3967, %v2692
        %v4060 = vsel %vm4052, %v3968, %v2694
        %v4061 = vsel %vm4052, %v3969, %v2696
        %v4062 = vsel %vm4052, %v3970, %v2698
        %v4063 = vsel %vm4052, %v3971, %v2700
        %v4064 = vsel %vm4052, %v3972, %v2702
        %v4065 = vsel %vm4052, %v3973, %v2704
        %v4066 = vsel %vm4052, %v3974, %v2706
        %v4067 = vsel %vm4052, %v3975, %v2708
        %v4068 = vsel %vm4052, %v3976, %v2710
        %v4069 = vsel %vm4052, %v3977, %v2712
        %v4070 = vsel %vm4052, %v3978, %v2714
        %v4071 = vsel %vm4052, %v3979, %v2716
        %v4072 = vsel %vm4052, %v3980, %v2718
        %v4073 = vsel %vm4052, %v3981, %v2720
        %v4074 = vsel %vm4052, %v3982, %v2722
        %v4075 = vsel %vm4052, %v3983, %v2724
        %v4076 = vsel %vm4052, %v3984, %v2726
        %v4077 = vsel %vm4052, %v3985, %v2728
        %v4078 = vsel %vm4052, %v3986, %v2730
        %v4079 = vsel %vm4052, %v3987, %v2732
        %v4080 = vsel %vm4052, %v3988, %v2734
        %v4081 = vsel %vm4052, %v3989, %v2736
        %v4082 = vsel %vm4052, %v3990, %v2738
        %v4083 = vsel %vm4052, %v3991, %v2740
        %v4084 = vsel %vm4052, %v3992, %v2742
        %v4085 = vsel %vm4052, %v3993, %v2744
        %v4086 = vsel %vm4052, %v3994, %v2746
        %v4087 = vsel %vm4052, %v3995, %v2748
        %v4088 = vsel %vm4052, %v3996, %v2750
        %v4089 = vsel %vm4052, %v3997, %v2752
        %v4090 = vsel %vm4052, %v3998, %v2754
        %v4091 = vsel %vm4052, %v3999, %v2756
        %v4092 = vsel %vm4052, %v4000, %v2758
        %v4093 = vsel %vm4052, %v4001, %v2760
        %v4094 = vsel %vm4052, %v4002, %v2762
        %v4095 = vsel %vm4052, %v4003, %v2764
        %v4096 = vsel %vm4052, %v4004, %v2766
        %v4097 = vsel %vm4052, %v4005, %v2768
        %v4098 = vsel %vm4052, %v4006, %v2770
        %v4099 = vsel %vm4052, %v4007, %v2772
        %v4100 = vsel %vm4052, %v4008, %v2774
        %v4101 = vsel %vm4052, %v4009, %v2776
        %v4102 = vsel %vm4052, %v4010, %v2778
        %v4103 = vsel %vm4052, %v4011, %v2780
        %v4104 = vsel %vm4052, %v4012, %v2782
        %v4105 = vsel %vm4052, %v4013, %v2784
        %v4106 = vsel %vm4052, %v4014, %v2786
        %v4107 = vsel %vm4052, %v4015, %v2788
        %v4108 = vsel %vm4052, %v4016, %v2790
        %v4109 = vsel %vm4052, %v4017, %v2792
        %v4110 = vsel %vm4052, %v4018, %v2794
        %v4111 = vsel %vm4052, %v4019, %v2796
        %v4112 = vsel %vm4052, %v4020, %v2798
        %v4113 = vsel %vm4052, %v4021, %v2800
        %v4114 = vsel %vm4052, %v4022, %v2802
        %v4115 = vsel %vm4052, %v4023, %v2804
        %v4116 = vsel %vm4052, %v4024, %v2806
        %v4117 = vsel %vm4052, %v4025, %v2808
        %v4118 = vsel %vm4052, %v4026, %v2810
        %v4119 = vsel %vm4052, %v4027, %v2812
        %v4120 = vsel %vm4052, %v4028, %v2814
        %v4121 = vsel %vm4052, %v4029, %v2816
        %v4122 = vsel %vm4052, %v4030, %v2818
        %v4123 = vsel %vm4052, %v4031, %v2820
        %v4124 = vsel %vm4052, %v4032, %v2822
        %v4125 = vsel %vm4052, %v4033, %v2824
        %v4126 = vsel %vm4052, %v4034, %v2826
        %v4127 = vsel %vm4052, %v4035, %v2828
        %v4128 = vsel %vm4052, %v4036, %v2830
        %v4129 = vsel %vm4052, %v4037, %v2832
        %v4130 = vsel %vm4052, %v4038, %v2834
        %v4131 = vsel %vm4052, %v4039, %v2836
        %v4132 = vsel %vm4052, %v4040, %v2838
        %v4133 = vsel %vm4052, %v4041, %v2840
        %v4134 = vsel %vm4052, %v4042, %v2842
        %v4135 = vsel %vm4052, %v4043, %v2844
        %v4136 = vsel %vm4052, %v4044, %v2846
        %v4137 = vsel %vm4052, %v4045, %v2848
        %v4138 = vsel %vm4052, %v4046, %v2850
        %v4139 = vsel %vm4052, %v4047, %v2852
        %v4140 = vsel %vm4052, %v4048, %v2854
        %v4141 = vsel %vm4052, %v4049, %v2856
        %v4142 = vsel %vm4052, %v4050, %v2858
        %v4143 = vsel %vm4052, %v4051, %v2860
        %vm4144 = vcmask 261120
        %v4145 = vsel %vm4144, %v4053, %v2954
        %v4146 = vsel %vm4144, %v4054, %v2956
        %v4147 = vsel %vm4144, %v4055, %v2958
        %v4148 = vsel %vm4144, %v4056, %v2960
        %v4149 = vsel %vm4144, %v4057, %v2962
        %v4150 = vsel %vm4144, %v4058, %v2964
        %v4151 = vsel %vm4144, %v4059, %v2966
        %v4152 = vsel %vm4144, %v4060, %v2968
        %v4153 = vsel %vm4144, %v4061, %v2970
        %v4154 = vsel %vm4144, %v4062, %v2972
        %v4155 = vsel %vm4144, %v4063, %v2974
        %v4156 = vsel %vm4144, %v4064, %v2976
        %v4157 = vsel %vm4144, %v4065, %v2978
        %v4158 = vsel %vm4144, %v4066, %v2980
        %v4159 = vsel %vm4144, %v4067, %v2982
        %v4160 = vsel %vm4144, %v4068, %v2984
        %v4161 = vsel %vm4144, %v4069, %v2986
        %v4162 = vsel %vm4144, %v4070, %v2988
        %v4163 = vsel %vm4144, %v4071, %v2990
        %v4164 = vsel %vm4144, %v4072, %v2992
        %v4165 = vsel %vm4144, %v4073, %v2994
        %v4166 = vsel %vm4144, %v4074, %v2996
        %v4167 = vsel %vm4144, %v4075, %v2998
        %v4168 = vsel %vm4144, %v4076, %v3000
        %v4169 = vsel %vm4144, %v4077, %v3002
        %v4170 = vsel %vm4144, %v4078, %v3004
        %v4171 = vsel %vm4144, %v4079, %v3006
        %v4172 = vsel %vm4144, %v4080, %v3008
        %v4173 = vsel %vm4144, %v4081, %v3010
        %v4174 = vsel %vm4144, %v4082, %v3012
        %v4175 = vsel %vm4144, %v4083, %v3014
        %v4176 = vsel %vm4144, %v4084, %v3016
        %v4177 = vsel %vm4144, %v4085, %v3018
        %v4178 = vsel %vm4144, %v4086, %v3020
        %v4179 = vsel %vm4144, %v4087, %v3022
        %v4180 = vsel %vm4144, %v4088, %v3024
        %v4181 = vsel %vm4144, %v4089, %v3026
        %v4182 = vsel %vm4144, %v4090, %v3028
        %v4183 = vsel %vm4144, %v4091, %v3030
        %v4184 = vsel %vm4144, %v4092, %v3032
        %v4185 = vsel %vm4144, %v4093, %v3034
        %v4186 = vsel %vm4144, %v4094, %v3036
        %v4187 = vsel %vm4144, %v4095, %v3038
        %v4188 = vsel %vm4144, %v4096, %v3040
        %v4189 = vsel %vm4144, %v4097, %v3042
        %v4190 = vsel %vm4144, %v4098, %v3044
        %v4191 = vsel %vm4144, %v4099, %v3046
        %v4192 = vsel %vm4144, %v4100, %v3048
        %v4193 = vsel %vm4144, %v4101, %v3050
        %v4194 = vsel %vm4144, %v4102, %v3052
        %v4195 = vsel %vm4144, %v4103, %v3054
        %v4196 = vsel %vm4144, %v4104, %v3056
        %v4197 = vsel %vm4144, %v4105, %v3058
        %v4198 = vsel %vm4144, %v4106, %v3060
        %v4199 = vsel %vm4144, %v4107, %v3062
        %v4200 = vsel %vm4144, %v4108, %v3064
        %v4201 = vsel %vm4144, %v4109, %v3066
        %v4202 = vsel %vm4144, %v4110, %v3068
        %v4203 = vsel %vm4144, %v4111, %v3070
        %v4204 = vsel %vm4144, %v4112, %v3072
        %v4205 = vsel %vm4144, %v4113, %v3074
        %v4206 = vsel %vm4144, %v4114, %v3076
        %v4207 = vsel %vm4144, %v4115, %v3078
        %v4208 = vsel %vm4144, %v4116, %v3080
        %v4209 = vsel %vm4144, %v4117, %v3082
        %v4210 = vsel %vm4144, %v4118, %v3084
        %v4211 = vsel %vm4144, %v4119, %v3086
        %v4212 = vsel %vm4144, %v4120, %v3088
        %v4213 = vsel %vm4144, %v4121, %v3090
        %v4214 = vsel %vm4144, %v4122, %v3092
        %v4215 = vsel %vm4144, %v4123, %v3094
        %v4216 = vsel %vm4144, %v4124, %v3096
        %v4217 = vsel %vm4144, %v4125, %v3098
        %v4218 = vsel %vm4144, %v4126, %v3100
        %v4219 = vsel %vm4144, %v4127, %v3102
        %v4220 = vsel %vm4144, %v4128, %v3104
        %v4221 = vsel %vm4144, %v4129, %v3106
        %v4222 = vsel %vm4144, %v4130, %v3108
        %v4223 = vsel %vm4144, %v4131, %v3110
        %v4224 = vsel %vm4144, %v4132, %v3112
        %v4225 = vsel %vm4144, %v4133, %v3114
        %v4226 = vsel %vm4144, %v4134, %v3116
        %v4227 = vsel %vm4144, %v4135, %v3118
        %v4228 = vsel %vm4144, %v4136, %v3120
        %v4229 = vsel %vm4144, %v4137, %v3122
        %v4230 = vsel %vm4144, %v4138, %v3124
        %v4231 = vsel %vm4144, %v4139, %v3126
        %v4232 = vsel %vm4144, %v4140, %v3128
        %v4233 = vsel %vm4144, %v4141, %v3130
        %v4234 = vsel %vm4144, %v4142, %v3132
        %v4235 = vsel %vm4144, %v4143, %v3134
        %vm4236 = vcmask 293888
        %v4237 = vsel %vm4236, %v4145, %v3228
        %v4238 = vsel %vm4236, %v4146, %v3230
        %v4239 = vsel %vm4236, %v4147, %v3232
        %v4240 = vsel %vm4236, %v4148, %v3234
        %v4241 = vsel %vm4236, %v4149, %v3236
        %v4242 = vsel %vm4236, %v4150, %v3238
        %v4243 = vsel %vm4236, %v4151, %v3240
        %v4244 = vsel %vm4236, %v4152, %v3242
        %v4245 = vsel %vm4236, %v4153, %v3244
        %v4246 = vsel %vm4236, %v4154, %v3246
        %v4247 = vsel %vm4236, %v4155, %v3248
        %v4248 = vsel %vm4236, %v4156, %v3250
        %v4249 = vsel %vm4236, %v4157, %v3252
        %v4250 = vsel %vm4236, %v4158, %v3254
        %v4251 = vsel %vm4236, %v4159, %v3256
        %v4252 = vsel %vm4236, %v4160, %v3258
        %v4253 = vsel %vm4236, %v4161, %v3260
        %v4254 = vsel %vm4236, %v4162, %v3262
        %v4255 = vsel %vm4236, %v4163, %v3264
        %v4256 = vsel %vm4236, %v4164, %v3266
        %v4257 = vsel %vm4236, %v4165, %v3268
        %v4258 = vsel %vm4236, %v4166, %v3270
        %v4259 = vsel %vm4236, %v4167, %v3272
        %v4260 = vsel %vm4236, %v4168, %v3274
        %v4261 = vsel %vm4236, %v4169, %v3276
        %v4262 = vsel %vm4236, %v4170, %v3278
        %v4263 = vsel %vm4236, %v4171, %v3280
        %v4264 = vsel %vm4236, %v4172, %v3282
        %v4265 = vsel %vm4236, %v4173, %v3284
        %v4266 = vsel %vm4236, %v4174, %v3286
        %v4267 = vsel %vm4236, %v4175, %v3288
        %v4268 = vsel %vm4236, %v4176, %v3290
        %v4269 = vsel %vm4236, %v4177, %v3292
        %v4270 = vsel %vm4236, %v4178, %v3294
        %v4271 = vsel %vm4236, %v4179, %v3296
        %v4272 = vsel %vm4236, %v4180, %v3298
        %v4273 = vsel %vm4236, %v4181, %v3300
        %v4274 = vsel %vm4236, %v4182, %v3302
        %v4275 = vsel %vm4236, %v4183, %v3304
        %v4276 = vsel %vm4236, %v4184, %v3306
        %v4277 = vsel %vm4236, %v4185, %v3308
        %v4278 = vsel %vm4236, %v4186, %v3310
        %v4279 = vsel %vm4236, %v4187, %v3312
        %v4280 = vsel %vm4236, %v4188, %v3314
        %v4281 = vsel %vm4236, %v4189, %v3316
        %v4282 = vsel %vm4236, %v4190, %v3318
        %v4283 = vsel %vm4236, %v4191, %v3320
        %v4284 = vsel %vm4236, %v4192, %v3322
        %v4285 = vsel %vm4236, %v4193, %v3324
        %v4286 = vsel %vm4236, %v4194, %v3326
        %v4287 = vsel %vm4236, %v4195, %v3328
        %v4288 = vsel %vm4236, %v4196, %v3330
        %v4289 = vsel %vm4236, %v4197, %v3332
        %v4290 = vsel %vm4236, %v4198, %v3334
        %v4291 = vsel %vm4236, %v4199, %v3336
        %v4292 = vsel %vm4236, %v4200, %v3338
        %v4293 = vsel %vm4236, %v4201, %v3340
        %v4294 = vsel %vm4236, %v4202, %v3342
        %v4295 = vsel %vm4236, %v4203, %v3344
        %v4296 = vsel %vm4236, %v4204, %v3346
        %v4297 = vsel %vm4236, %v4205, %v3348
        %v4298 = vsel %vm4236, %v4206, %v3350
        %v4299 = vsel %vm4236, %v4207, %v3352
        %v4300 = vsel %vm4236, %v4208, %v3354
        %v4301 = vsel %vm4236, %v4209, %v3356
        %v4302 = vsel %vm4236, %v4210, %v3358
        %v4303 = vsel %vm4236, %v4211, %v3360
        %v4304 = vsel %vm4236, %v4212, %v3362
        %v4305 = vsel %vm4236, %v4213, %v3364
        %v4306 = vsel %vm4236, %v4214, %v3366
        %v4307 = vsel %vm4236, %v4215, %v3368
        %v4308 = vsel %vm4236, %v4216, %v3370
        %v4309 = vsel %vm4236, %v4217, %v3372
        %v4310 = vsel %vm4236, %v4218, %v3374
        %v4311 = vsel %vm4236, %v4219, %v3376
        %v4312 = vsel %vm4236, %v4220, %v3378
        %v4313 = vsel %vm4236, %v4221, %v3380
        %v4314 = vsel %vm4236, %v4222, %v3382
        %v4315 = vsel %vm4236, %v4223, %v3384
        %v4316 = vsel %vm4236, %v4224, %v3386
        %v4317 = vsel %vm4236, %v4225, %v3388
        %v4318 = vsel %vm4236, %v4226, %v3390
        %v4319 = vsel %vm4236, %v4227, %v3392
        %v4320 = vsel %vm4236, %v4228, %v3394
        %v4321 = vsel %vm4236, %v4229, %v3396
        %v4322 = vsel %vm4236, %v4230, %v3398
        %v4323 = vsel %vm4236, %v4231, %v3400
        %v4324 = vsel %vm4236, %v4232, %v3402
        %v4325 = vsel %vm4236, %v4233, %v3404
        %v4326 = vsel %vm4236, %v4234, %v3406
        %v4327 = vsel %vm4236, %v4235, %v3408
        %v4328 = vpack.c.bf16 %v4238, %v4237
        %v4329 = vpack.c.bf16 %v4240, %v4239
        %v4330 = vpack.c.bf16 %v4242, %v4241
        %v4331 = vpack.c.bf16 %v4244, %v4243
        %v4332 = vpack.c.bf16 %v4246, %v4245
        %v4333 = vpack.c.bf16 %v4248, %v4247
        %v4334 = vpack.c.bf16 %v4250, %v4249
        %v4335 = vpack.c.bf16 %v4252, %v4251
        %v4336 = vpack.c.bf16 %v4254, %v4253
        %v4337 = vpack.c.bf16 %v4256, %v4255
        %v4338 = vpack.c.bf16 %v4258, %v4257
        %v4339 = vpack.c.bf16 %v4260, %v4259
        %v4340 = vpack.c.bf16 %v4262, %v4261
        %v4341 = vpack.c.bf16 %v4264, %v4263
        %v4342 = vpack.c.bf16 %v4266, %v4265
        %v4343 = vpack.c.bf16 %v4268, %v4267
        %v4344 = vpack.c.bf16 %v4270, %v4269
        %v4345 = vpack.c.bf16 %v4272, %v4271
        %v4346 = vpack.c.bf16 %v4274, %v4273
        %v4347 = vpack.c.bf16 %v4276, %v4275
        %v4348 = vpack.c.bf16 %v4278, %v4277
        %v4349 = vpack.c.bf16 %v4280, %v4279
        %v4350 = vpack.c.bf16 %v4282, %v4281
        %v4351 = vpack.c.bf16 %v4284, %v4283
        %v4352 = vpack.c.bf16 %v4286, %v4285
        %v4353 = vpack.c.bf16 %v4288, %v4287
        %v4354 = vpack.c.bf16 %v4290, %v4289
        %v4355 = vpack.c.bf16 %v4292, %v4291
        %v4356 = vpack.c.bf16 %v4294, %v4293
        %v4357 = vpack.c.bf16 %v4296, %v4295
        %v4358 = vpack.c.bf16 %v4298, %v4297
        %v4359 = vpack.c.bf16 %v4300, %v4299
        %v4360 = vpack.c.bf16 %v4302, %v4301
        %v4361 = vpack.c.bf16 %v4304, %v4303
        %v4362 = vpack.c.bf16 %v4306, %v4305
        %v4363 = vpack.c.bf16 %v4308, %v4307
        %v4364 = vpack.c.bf16 %v4310, %v4309
        %v4365 = vpack.c.bf16 %v4312, %v4311
        %v4366 = vpack.c.bf16 %v4314, %v4313
        %v4367 = vpack.c.bf16 %v4316, %v4315
        %v4368 = vpack.c.bf16 %v4318, %v4317
        %v4369 = vpack.c.bf16 %v4320, %v4319
        %v4370 = vpack.c.bf16 %v4322, %v4321
        %v4371 = vpack.c.bf16 %v4324, %v4323
        %v4372 = vpack.c.bf16 %v4326, %v4325
        %v4373 = vpack.c.bf16 %v4327, %v4327
        %v4374 = vld [vmem:[%s1] sm:$0xf]
        %v4375 = vld [vmem:[%s1 + $0x4] sm:$0xf]
        %v4376 = vld [vmem:[%s1 + $0x8] sm:$0xf]
        %v4377 = vld [vmem:[%s1 + $0xc] sm:$0xf]
        %v4378 = vld [vmem:[%s1 + $0x10] sm:$0xf]
        %v4384 = vunpack.c.l.b16 %v4374
        %v4385 = vunpack.c.l.b16 %v4375
        %v4386 = vunpack.c.l.b16 %v4376
        %v4387 = vunpack.c.l.b16 %v4377
        %v4388 = vunpack.c.l.b16 %v4378
        %v4389 = vpack.c.b16 %v4385, %v4384
        %v4390 = vpack.c.b16 %v4387, %v4386
        %v4391 = vpack.c.b16 %v4388, %v4388
        %vm4394 = vcmask 326656
        %v4396 = vsel %vm4394, %v4328, 0
        %v4399 = vsel %vm4394, %v4329, 0
        %v4402 = vsel %vm4394, %v4330, 0
        %v4405 = vsel %vm4394, %v4331, 0
        %v4408 = vsel %vm4394, %v4332, 0
        %v4411 = vsel %vm4394, %v4333, 0
        %v4414 = vsel %vm4394, %v4334, 0
        %v4417 = vsel %vm4394, %v4335, 0
        %v4420 = vsel %vm4394, %v4336, 0
        %v4423 = vsel %vm4394, %v4337, 0
        %v4426 = vsel %vm4394, %v4338, 0
        %v4429 = vsel %vm4394, %v4339, 0
        %v4432 = vsel %vm4394, %v4340, 0
        %v4435 = vsel %vm4394, %v4341, 0
        %v4438 = vsel %vm4394, %v4342, 0
        %v4441 = vsel %vm4394, %v4343, 0
        %v4444 = vsel %vm4394, %v4344, 0
        %v4447 = vsel %vm4394, %v4345, 0
        %v4450 = vsel %vm4394, %v4346, 0
        %v4453 = vsel %vm4394, %v4347, 0
        %v4456 = vsel %vm4394, %v4348, 0
        %v4459 = vsel %vm4394, %v4349, 0
        %v4462 = vsel %vm4394, %v4350, 0
        %v4465 = vsel %vm4394, %v4351, 0
        %v4468 = vsel %vm4394, %v4352, 0
        %v4471 = vsel %vm4394, %v4353, 0
        %v4474 = vsel %vm4394, %v4354, 0
        %v4477 = vsel %vm4394, %v4355, 0
        %v4480 = vsel %vm4394, %v4356, 0
        %v4483 = vsel %vm4394, %v4357, 0
        %v4486 = vsel %vm4394, %v4358, 0
        %v4489 = vsel %vm4394, %v4359, 0
        %v4492 = vsel %vm4394, %v4360, 0
        %v4495 = vsel %vm4394, %v4361, 0
        %v4498 = vsel %vm4394, %v4362, 0
        %v4501 = vsel %vm4394, %v4363, 0
        %v4504 = vsel %vm4394, %v4364, 0
        %v4507 = vsel %vm4394, %v4365, 0
        %v4510 = vsel %vm4394, %v4366, 0
        %v4513 = vsel %vm4394, %v4367, 0
        %v4516 = vsel %vm4394, %v4368, 0
        %v4519 = vsel %vm4394, %v4369, 0
        %v4522 = vsel %vm4394, %v4370, 0
        %v4525 = vsel %vm4394, %v4371, 0
        %v4528 = vsel %vm4394, %v4372, 0
        %v4531 = vsel %vm4394, %v4373, 0
        %vm4533 = vcmask 1043456
        %v4535 = vsel %vm4533, %v4391, 0
        %4537 = vmatprep.subr.bf16.mxu0 0
        %4538 = vmatpush1.bf16.msra.mxu0 0
        %4539 = vmatprep.subr.bf16.mxu0 0
        %4540 = vmatpush1.bf16.msra.mxu0 0
        %4541 = vmatprep.subr.bf16.mxu0 0
        %4542 = vmatpush1.bf16.msra.mxu0 0
        %4543 = vmatprep.subr.bf16.mxu0 0
        %4544 = vmatpush1.bf16.msra.mxu0 0
        %4545 = vmatprep.subr.bf16.mxu0 0
        %4546 = vmatpush1.bf16.msra.mxu0 0
        %4547 = vmatprep.subr.bf16.mxu0 0
        %4548 = vmatpush1.bf16.msra.mxu0 %v4535
        %4549 = vmatprep.subr.bf16.mxu0 0
        %4550 = vmatpush1.bf16.msra.mxu0 %v4390
        %4551 = vmatprep.subr.bf16.mxu0 0
        %4552 = vmatpush1.bf16.msra.mxu0 %v4389
        %4553 = vmatprep.subr.bf16.mxu0 0
        %4554 = vmatpush2.bf16.msra.mxu0 0
        %4555 = vmatprep.subr.bf16.mxu0 0
        %4556 = vmatpush2.bf16.msra.mxu0 0
        %4557 = vmatprep.subr.bf16.mxu0 0
        %4558 = vmatpush2.bf16.msra.mxu0 0
        %4559 = vmatprep.subr.bf16.mxu0 0
        %4560 = vmatpush2.bf16.msra.mxu0 0
        %4561 = vmatprep.subr.bf16.mxu0 0
        %4562 = vmatpush2.bf16.msra.mxu0 0
        %4563 = vmatprep.subr.bf16.mxu0 0
        %4564 = vmatpush2.bf16.msra.mxu0 0
        %4565 = vmatprep.subr.bf16.mxu0 0
        %4566 = vmatpush2.bf16.msra.mxu0 0
        %4567 = vmatprep.subr.bf16.mxu0 0
        %4568 = vmatpush2.bf16.msra.mxu0 0
        %4569 = vmatprep.mubr.bf16.mxu0 0
        %4570 = vmatmul.mubr.bf16.gmra.mxu0 %v4396
        %v4571 = vpop.f32.mrf.mxu0
        %v4572 = vadd.f32 0.0, %v4571
        %v4573 = vpop.f32.mrf.mxu0
        %v4574 = vpop.f32.mrf.mxu0
        %v4575 = vadd.f32 0.0, %v4574
        %v4576 = vpop.f32.mrf.mxu0
        %4577 = vmatprep.mubr.bf16.mxu0 0
        %4578 = vmatmul.mubr.bf16.gmra.mxu0 %v4399
        %v4579 = vpop.f32.mrf.mxu0
        %v4580 = vadd.f32 0.0, %v4579
        %v4581 = vpop.f32.mrf.mxu0
        %v4582 = vpop.f32.mrf.mxu0
        %v4583 = vadd.f32 0.0, %v4582
        %v4584 = vpop.f32.mrf.mxu0
        %4585 = vmatprep.mubr.bf16.mxu0 0
        %4586 = vmatmul.mubr.bf16.gmra.mxu0 %v4402
        %v4587 = vpop.f32.mrf.mxu0
        %v4588 = vadd.f32 0.0, %v4587
        %v4589 = vpop.f32.mrf.mxu0
        %v4590 = vpop.f32.mrf.mxu0
        %v4591 = vadd.f32 0.0, %v4590
        %v4592 = vpop.f32.mrf.mxu0
        %4593 = vmatprep.mubr.bf16.mxu0 0
        %4594 = vmatmul.mubr.bf16.gmra.mxu0 %v4405
        %v4595 = vpop.f32.mrf.mxu0
        %v4596 = vadd.f32 0.0, %v4595
        %v4597 = vpop.f32.mrf.mxu0
        %v4598 = vpop.f32.mrf.mxu0
        %v4599 = vadd.f32 0.0, %v4598
        %v4600 = vpop.f32.mrf.mxu0
        %4601 = vmatprep.mubr.bf16.mxu0 0
        %4602 = vmatmul.mubr.bf16.gmra.mxu0 %v4408
        %v4603 = vpop.f32.mrf.mxu0
        %v4604 = vadd.f32 0.0, %v4603
        %v4605 = vpop.f32.mrf.mxu0
        %v4606 = vpop.f32.mrf.mxu0
        %v4607 = vadd.f32 0.0, %v4606
        %v4608 = vpop.f32.mrf.mxu0
        %4609 = vmatprep.mubr.bf16.mxu0 0
        %4610 = vmatmul.mubr.bf16.gmra.mxu0 %v4411
        %v4611 = vpop.f32.mrf.mxu0
        %v4612 = vadd.f32 0.0, %v4611
        %v4613 = vpop.f32.mrf.mxu0
        %v4614 = vpop.f32.mrf.mxu0
        %v4615 = vadd.f32 0.0, %v4614
        %v4616 = vpop.f32.mrf.mxu0
        %4617 = vmatprep.mubr.bf16.mxu0 0
        %4618 = vmatmul.mubr.bf16.gmra.mxu0 %v4414
        %v4619 = vpop.f32.mrf.mxu0
        %v4620 = vadd.f32 0.0, %v4619
        %v4621 = vpop.f32.mrf.mxu0
        %v4622 = vpop.f32.mrf.mxu0
        %v4623 = vadd.f32 0.0, %v4622
        %v4624 = vpop.f32.mrf.mxu0
        %4625 = vmatprep.mubr.bf16.mxu0 0
        %4626 = vmatmul.mubr.bf16.gmra.mxu0 %v4417
        %v4627 = vpop.f32.mrf.mxu0
        %v4628 = vadd.f32 0.0, %v4627
        %v4629 = vpop.f32.mrf.mxu0
        %v4630 = vpop.f32.mrf.mxu0
        %v4631 = vadd.f32 0.0, %v4630
        %v4632 = vpop.f32.mrf.mxu0
        %4633 = vmatprep.mubr.bf16.mxu0 0
        %4634 = vmatmul.mubr.bf16.gmra.mxu0 %v4420
        %v4635 = vpop.f32.mrf.mxu0
        %v4636 = vadd.f32 0.0, %v4635
        %v4637 = vpop.f32.mrf.mxu0
        %v4638 = vpop.f32.mrf.mxu0
        %v4639 = vadd.f32 0.0, %v4638
        %v4640 = vpop.f32.mrf.mxu0
        %4641 = vmatprep.mubr.bf16.mxu0 0
        %4642 = vmatmul.mubr.bf16.gmra.mxu0 %v4423
        %v4643 = vpop.f32.mrf.mxu0
        %v4644 = vadd.f32 0.0, %v4643
        %v4645 = vpop.f32.mrf.mxu0
        %v4646 = vpop.f32.mrf.mxu0
        %v4647 = vadd.f32 0.0, %v4646
        %v4648 = vpop.f32.mrf.mxu0
        %4649 = vmatprep.mubr.bf16.mxu0 0
        %4650 = vmatmul.mubr.bf16.gmra.mxu0 %v4426
        %v4651 = vpop.f32.mrf.mxu0
        %v4652 = vadd.f32 0.0, %v4651
        %v4653 = vpop.f32.mrf.mxu0
        %v4654 = vpop.f32.mrf.mxu0
        %v4655 = vadd.f32 0.0, %v4654
        %v4656 = vpop.f32.mrf.mxu0
        %4657 = vmatprep.mubr.bf16.mxu0 0
        %4658 = vmatmul.mubr.bf16.gmra.mxu0 %v4429
        %v4659 = vpop.f32.mrf.mxu0
        %v4660 = vadd.f32 0.0, %v4659
        %v4661 = vpop.f32.mrf.mxu0
        %v4662 = vpop.f32.mrf.mxu0
        %v4663 = vadd.f32 0.0, %v4662
        %v4664 = vpop.f32.mrf.mxu0
        %4665 = vmatprep.mubr.bf16.mxu0 0
        %4666 = vmatmul.mubr.bf16.gmra.mxu0 %v4432
        %v4667 = vpop.f32.mrf.mxu0
        %v4668 = vadd.f32 0.0, %v4667
        %v4669 = vpop.f32.mrf.mxu0
        %v4670 = vpop.f32.mrf.mxu0
        %v4671 = vadd.f32 0.0, %v4670
        %v4672 = vpop.f32.mrf.mxu0
        %4673 = vmatprep.mubr.bf16.mxu0 0
        %4674 = vmatmul.mubr.bf16.gmra.mxu0 %v4435
        %v4675 = vpop.f32.mrf.mxu0
        %v4676 = vadd.f32 0.0, %v4675
        %v4677 = vpop.f32.mrf.mxu0
        %v4678 = vpop.f32.mrf.mxu0
        %v4679 = vadd.f32 0.0, %v4678
        %v4680 = vpop.f32.mrf.mxu0
        %4681 = vmatprep.mubr.bf16.mxu0 0
        %4682 = vmatmul.mubr.bf16.gmra.mxu0 %v4438
        %v4683 = vpop.f32.mrf.mxu0
        %v4684 = vadd.f32 0.0, %v4683
        %v4685 = vpop.f32.mrf.mxu0
        %v4686 = vpop.f32.mrf.mxu0
        %v4687 = vadd.f32 0.0, %v4686
        %v4688 = vpop.f32.mrf.mxu0
        %4689 = vmatprep.mubr.bf16.mxu0 0
        %4690 = vmatmul.mubr.bf16.gmra.mxu0 %v4441
        %v4691 = vpop.f32.mrf.mxu0
        %v4692 = vadd.f32 0.0, %v4691
        %v4693 = vpop.f32.mrf.mxu0
        %v4694 = vpop.f32.mrf.mxu0
        %v4695 = vadd.f32 0.0, %v4694
        %v4696 = vpop.f32.mrf.mxu0
        %4697 = vmatprep.mubr.bf16.mxu0 0
        %4698 = vmatmul.mubr.bf16.gmra.mxu0 %v4444
        %v4699 = vpop.f32.mrf.mxu0
        %v4700 = vadd.f32 0.0, %v4699
        %v4701 = vpop.f32.mrf.mxu0
        %v4702 = vpop.f32.mrf.mxu0
        %v4703 = vadd.f32 0.0, %v4702
        %v4704 = vpop.f32.mrf.mxu0
        %4705 = vmatprep.mubr.bf16.mxu0 0
        %4706 = vmatmul.mubr.bf16.gmra.mxu0 %v4447
        %v4707 = vpop.f32.mrf.mxu0
        %v4708 = vadd.f32 0.0, %v4707
        %v4709 = vpop.f32.mrf.mxu0
        %v4710 = vpop.f32.mrf.mxu0
        %v4711 = vadd.f32 0.0, %v4710
        %v4712 = vpop.f32.mrf.mxu0
        %4713 = vmatprep.mubr.bf16.mxu0 0
        %4714 = vmatmul.mubr.bf16.gmra.mxu0 %v4450
        %v4715 = vpop.f32.mrf.mxu0
        %v4716 = vadd.f32 0.0, %v4715
        %v4717 = vpop.f32.mrf.mxu0
        %v4718 = vpop.f32.mrf.mxu0
        %v4719 = vadd.f32 0.0, %v4718
        %v4720 = vpop.f32.mrf.mxu0
        %4721 = vmatprep.mubr.bf16.mxu0 0
        %4722 = vmatmul.mubr.bf16.gmra.mxu0 %v4453
        %v4723 = vpop.f32.mrf.mxu0
        %v4724 = vadd.f32 0.0, %v4723
        %v4725 = vpop.f32.mrf.mxu0
        %v4726 = vpop.f32.mrf.mxu0
        %v4727 = vadd.f32 0.0, %v4726
        %v4728 = vpop.f32.mrf.mxu0
        %4729 = vmatprep.mubr.bf16.mxu0 0
        %4730 = vmatmul.mubr.bf16.gmra.mxu0 %v4456
        %v4731 = vpop.f32.mrf.mxu0
        %v4732 = vadd.f32 0.0, %v4731
        %v4733 = vpop.f32.mrf.mxu0
        %v4734 = vpop.f32.mrf.mxu0
        %v4735 = vadd.f32 0.0, %v4734
        %v4736 = vpop.f32.mrf.mxu0
        %4737 = vmatprep.mubr.bf16.mxu0 0
        %4738 = vmatmul.mubr.bf16.gmra.mxu0 %v4459
        %v4739 = vpop.f32.mrf.mxu0
        %v4740 = vadd.f32 0.0, %v4739
        %v4741 = vpop.f32.mrf.mxu0
        %v4742 = vpop.f32.mrf.mxu0
        %v4743 = vadd.f32 0.0, %v4742
        %v4744 = vpop.f32.mrf.mxu0
        %4745 = vmatprep.mubr.bf16.mxu0 0
        %4746 = vmatmul.mubr.bf16.gmra.mxu0 %v4462
        %v4747 = vpop.f32.mrf.mxu0
        %v4748 = vadd.f32 0.0, %v4747
        %v4749 = vpop.f32.mrf.mxu0
        %v4750 = vpop.f32.mrf.mxu0
        %v4751 = vadd.f32 0.0, %v4750
        %v4752 = vpop.f32.mrf.mxu0
        %4753 = vmatprep.mubr.bf16.mxu0 0
        %4754 = vmatmul.mubr.bf16.gmra.mxu0 %v4465
        %v4755 = vpop.f32.mrf.mxu0
        %v4756 = vadd.f32 0.0, %v4755
        %v4757 = vpop.f32.mrf.mxu0
        %v4758 = vpop.f32.mrf.mxu0
        %v4759 = vadd.f32 0.0, %v4758
        %v4760 = vpop.f32.mrf.mxu0
        %4761 = vmatprep.mubr.bf16.mxu0 0
        %4762 = vmatmul.mubr.bf16.gmra.mxu0 %v4468
        %v4763 = vpop.f32.mrf.mxu0
        %v4764 = vadd.f32 0.0, %v4763
        %v4765 = vpop.f32.mrf.mxu0
        %v4766 = vpop.f32.mrf.mxu0
        %v4767 = vadd.f32 0.0, %v4766
        %v4768 = vpop.f32.mrf.mxu0
        %4769 = vmatprep.mubr.bf16.mxu0 0
        %4770 = vmatmul.mubr.bf16.gmra.mxu0 %v4471
        %v4771 = vpop.f32.mrf.mxu0
        %v4772 = vadd.f32 0.0, %v4771
        %v4773 = vpop.f32.mrf.mxu0
        %v4774 = vpop.f32.mrf.mxu0
        %v4775 = vadd.f32 0.0, %v4774
        %v4776 = vpop.f32.mrf.mxu0
        %4777 = vmatprep.mubr.bf16.mxu0 0
        %4778 = vmatmul.mubr.bf16.gmra.mxu0 %v4474
        %v4779 = vpop.f32.mrf.mxu0
        %v4780 = vadd.f32 0.0, %v4779
        %v4781 = vpop.f32.mrf.mxu0
        %v4782 = vpop.f32.mrf.mxu0
        %v4783 = vadd.f32 0.0, %v4782
        %v4784 = vpop.f32.mrf.mxu0
        %4785 = vmatprep.mubr.bf16.mxu0 0
        %4786 = vmatmul.mubr.bf16.gmra.mxu0 %v4477
        %v4787 = vpop.f32.mrf.mxu0
        %v4788 = vadd.f32 0.0, %v4787
        %v4789 = vpop.f32.mrf.mxu0
        %v4790 = vpop.f32.mrf.mxu0
        %v4791 = vadd.f32 0.0, %v4790
        %v4792 = vpop.f32.mrf.mxu0
        %4793 = vmatprep.mubr.bf16.mxu0 0
        %4794 = vmatmul.mubr.bf16.gmra.mxu0 %v4480
        %v4795 = vpop.f32.mrf.mxu0
        %v4796 = vadd.f32 0.0, %v4795
        %v4797 = vpop.f32.mrf.mxu0
        %v4798 = vpop.f32.mrf.mxu0
        %v4799 = vadd.f32 0.0, %v4798
        %v4800 = vpop.f32.mrf.mxu0
        %4801 = vmatprep.mubr.bf16.mxu0 0
        %4802 = vmatmul.mubr.bf16.gmra.mxu0 %v4483
        %v4803 = vpop.f32.mrf.mxu0
        %v4804 = vadd.f32 0.0, %v4803
        %v4805 = vpop.f32.mrf.mxu0
        %v4806 = vpop.f32.mrf.mxu0
        %v4807 = vadd.f32 0.0, %v4806
        %v4808 = vpop.f32.mrf.mxu0
        %4809 = vmatprep.mubr.bf16.mxu0 0
        %4810 = vmatmul.mubr.bf16.gmra.mxu0 %v4486
        %v4811 = vpop.f32.mrf.mxu0
        %v4812 = vadd.f32 0.0, %v4811
        %v4813 = vpop.f32.mrf.mxu0
        %v4814 = vpop.f32.mrf.mxu0
        %v4815 = vadd.f32 0.0, %v4814
        %v4816 = vpop.f32.mrf.mxu0
        %4817 = vmatprep.mubr.bf16.mxu0 0
        %4818 = vmatmul.mubr.bf16.gmra.mxu0 %v4489
        %v4819 = vpop.f32.mrf.mxu0
        %v4820 = vadd.f32 0.0, %v4819
        %v4821 = vpop.f32.mrf.mxu0
        %v4822 = vpop.f32.mrf.mxu0
        %v4823 = vadd.f32 0.0, %v4822
        %v4824 = vpop.f32.mrf.mxu0
        %4825 = vmatprep.mubr.bf16.mxu0 0
        %4826 = vmatmul.mubr.bf16.gmra.mxu0 %v4492
        %v4827 = vpop.f32.mrf.mxu0
        %v4828 = vadd.f32 0.0, %v4827
        %v4829 = vpop.f32.mrf.mxu0
        %v4830 = vpop.f32.mrf.mxu0
        %v4831 = vadd.f32 0.0, %v4830
        %v4832 = vpop.f32.mrf.mxu0
        %4833 = vmatprep.mubr.bf16.mxu0 0
        %4834 = vmatmul.mubr.bf16.gmra.mxu0 %v4495
        %v4835 = vpop.f32.mrf.mxu0
        %v4836 = vadd.f32 0.0, %v4835
        %v4837 = vpop.f32.mrf.mxu0
        %v4838 = vpop.f32.mrf.mxu0
        %v4839 = vadd.f32 0.0, %v4838
        %v4840 = vpop.f32.mrf.mxu0
        %4841 = vmatprep.mubr.bf16.mxu0 0
        %4842 = vmatmul.mubr.bf16.gmra.mxu0 %v4498
        %v4843 = vpop.f32.mrf.mxu0
        %v4844 = vadd.f32 0.0, %v4843
        %v4845 = vpop.f32.mrf.mxu0
        %v4846 = vpop.f32.mrf.mxu0
        %v4847 = vadd.f32 0.0, %v4846
        %v4848 = vpop.f32.mrf.mxu0
        %4849 = vmatprep.mubr.bf16.mxu0 0
        %4850 = vmatmul.mubr.bf16.gmra.mxu0 %v4501
        %v4851 = vpop.f32.mrf.mxu0
        %v4852 = vadd.f32 0.0, %v4851
        %v4853 = vpop.f32.mrf.mxu0
        %v4854 = vpop.f32.mrf.mxu0
        %v4855 = vadd.f32 0.0, %v4854
        %v4856 = vpop.f32.mrf.mxu0
        %4857 = vmatprep.mubr.bf16.mxu0 0
        %4858 = vmatmul.mubr.bf16.gmra.mxu0 %v4504
        %v4859 = vpop.f32.mrf.mxu0
        %v4860 = vadd.f32 0.0, %v4859
        %v4861 = vpop.f32.mrf.mxu0
        %v4862 = vpop.f32.mrf.mxu0
        %v4863 = vadd.f32 0.0, %v4862
        %v4864 = vpop.f32.mrf.mxu0
        %4865 = vmatprep.mubr.bf16.mxu0 0
        %4866 = vmatmul.mubr.bf16.gmra.mxu0 %v4507
        %v4867 = vpop.f32.mrf.mxu0
        %v4868 = vadd.f32 0.0, %v4867
        %v4869 = vpop.f32.mrf.mxu0
        %v4870 = vpop.f32.mrf.mxu0
        %v4871 = vadd.f32 0.0, %v4870
        %v4872 = vpop.f32.mrf.mxu0
        %4873 = vmatprep.mubr.bf16.mxu0 0
        %4874 = vmatmul.mubr.bf16.gmra.mxu0 %v4510
        %v4875 = vpop.f32.mrf.mxu0
        %v4876 = vadd.f32 0.0, %v4875
        %v4877 = vpop.f32.mrf.mxu0
        %v4878 = vpop.f32.mrf.mxu0
        %v4879 = vadd.f32 0.0, %v4878
        %v4880 = vpop.f32.mrf.mxu0
        %4881 = vmatprep.mubr.bf16.mxu0 0
        %4882 = vmatmul.mubr.bf16.gmra.mxu0 %v4513
        %v4883 = vpop.f32.mrf.mxu0
        %v4884 = vadd.f32 0.0, %v4883
        %v4885 = vpop.f32.mrf.mxu0
        %v4886 = vpop.f32.mrf.mxu0
        %v4887 = vadd.f32 0.0, %v4886
        %v4888 = vpop.f32.mrf.mxu0
        %4889 = vmatprep.mubr.bf16.mxu0 0
        %4890 = vmatmul.mubr.bf16.gmra.mxu0 %v4516
        %v4891 = vpop.f32.mrf.mxu0
        %v4892 = vadd.f32 0.0, %v4891
        %v4893 = vpop.f32.mrf.mxu0
        %v4894 = vpop.f32.mrf.mxu0
        %v4895 = vadd.f32 0.0, %v4894
        %v4896 = vpop.f32.mrf.mxu0
        %4897 = vmatprep.mubr.bf16.mxu0 0
        %4898 = vmatmul.mubr.bf16.gmra.mxu0 %v4519
        %v4899 = vpop.f32.mrf.mxu0
        %v4900 = vadd.f32 0.0, %v4899
        %v4901 = vpop.f32.mrf.mxu0
        %v4902 = vpop.f32.mrf.mxu0
        %v4903 = vadd.f32 0.0, %v4902
        %v4904 = vpop.f32.mrf.mxu0
        %4905 = vmatprep.mubr.bf16.mxu0 0
        %4906 = vmatmul.mubr.bf16.gmra.mxu0 %v4522
        %v4907 = vpop.f32.mrf.mxu0
        %v4908 = vadd.f32 0.0, %v4907
        %v4909 = vpop.f32.mrf.mxu0
        %v4910 = vpop.f32.mrf.mxu0
        %v4911 = vadd.f32 0.0, %v4910
        %v4912 = vpop.f32.mrf.mxu0
        %4913 = vmatprep.mubr.bf16.mxu0 0
        %4914 = vmatmul.mubr.bf16.gmra.mxu0 %v4525
        %v4915 = vpop.f32.mrf.mxu0
        %v4916 = vadd.f32 0.0, %v4915
        %v4917 = vpop.f32.mrf.mxu0
        %v4918 = vpop.f32.mrf.mxu0
        %v4919 = vadd.f32 0.0, %v4918
        %v4920 = vpop.f32.mrf.mxu0
        %4921 = vmatprep.mubr.bf16.mxu0 0
        %4922 = vmatmul.mubr.bf16.gmra.mxu0 %v4528
        %v4923 = vpop.f32.mrf.mxu0
        %v4924 = vadd.f32 0.0, %v4923
        %v4925 = vpop.f32.mrf.mxu0
        %v4926 = vpop.f32.mrf.mxu0
        %v4927 = vadd.f32 0.0, %v4926
        %v4928 = vpop.f32.mrf.mxu0
        %4929 = vmatprep.mubr.bf16.mxu0 0
        %4930 = vmatmul.mubr.bf16.gmra.mxu0 %v4531
        %v4931 = vpop.f32.mrf.mxu0
        %v4932 = vpop.f32.mrf.mxu0
        %v4933 = vpop.f32.mrf.mxu0
        %v4934 = vpop.f32.mrf.mxu0
        %4935 = vdwg.mxu0
        %v4936 = vmax.f32 %v4572, 0.0
        %v4937 = vmax.f32 %v4575, 0.0
        %v4938 = vmax.f32 %v4580, 0.0
        %v4939 = vmax.f32 %v4583, 0.0
        %v4940 = vmax.f32 %v4588, 0.0
        %v4941 = vmax.f32 %v4591, 0.0
        %v4942 = vmax.f32 %v4596, 0.0
        %v4943 = vmax.f32 %v4599, 0.0
        %v4944 = vmax.f32 %v4604, 0.0
        %v4945 = vmax.f32 %v4607, 0.0
        %v4946 = vmax.f32 %v4612, 0.0
        %v4947 = vmax.f32 %v4615, 0.0
        %v4948 = vmax.f32 %v4620, 0.0
        %v4949 = vmax.f32 %v4623, 0.0
        %v4950 = vmax.f32 %v4628, 0.0
        %v4951 = vmax.f32 %v4631, 0.0
        %v4952 = vmax.f32 %v4636, 0.0
        %v4953 = vmax.f32 %v4639, 0.0
        %v4954 = vmax.f32 %v4644, 0.0
        %v4955 = vmax.f32 %v4647, 0.0
        %v4956 = vmax.f32 %v4652, 0.0
        %v4957 = vmax.f32 %v4655, 0.0
        %v4958 = vmax.f32 %v4660, 0.0
        %v4959 = vmax.f32 %v4663, 0.0
        %v4960 = vmax.f32 %v4668, 0.0
        %v4961 = vmax.f32 %v4671, 0.0
        %v4962 = vmax.f32 %v4676, 0.0
        %v4963 = vmax.f32 %v4679, 0.0
        %v4964 = vmax.f32 %v4684, 0.0
        %v4965 = vmax.f32 %v4687, 0.0
        %v4966 = vmax.f32 %v4692, 0.0
        %v4967 = vmax.f32 %v4695, 0.0
        %v4968 = vmax.f32 %v4700, 0.0
        %v4969 = vmax.f32 %v4703, 0.0
        %v4970 = vmax.f32 %v4708, 0.0
        %v4971 = vmax.f32 %v4711, 0.0
        %v4972 = vmax.f32 %v4716, 0.0
        %v4973 = vmax.f32 %v4719, 0.0
        %v4974 = vmax.f32 %v4724, 0.0
        %v4975 = vmax.f32 %v4727, 0.0
        %v4976 = vmax.f32 %v4732, 0.0
        %v4977 = vmax.f32 %v4735, 0.0
        %v4978 = vmax.f32 %v4740, 0.0
        %v4979 = vmax.f32 %v4743, 0.0
        %v4980 = vmax.f32 %v4748, 0.0
        %v4981 = vmax.f32 %v4751, 0.0
        %v4982 = vmax.f32 %v4756, 0.0
        %v4983 = vmax.f32 %v4759, 0.0
        %v4984 = vmax.f32 %v4764, 0.0
        %v4985 = vmax.f32 %v4767, 0.0
        %v4986 = vmax.f32 %v4772, 0.0
        %v4987 = vmax.f32 %v4775, 0.0
        %v4988 = vmax.f32 %v4780, 0.0
        %v4989 = vmax.f32 %v4783, 0.0
        %v4990 = vmax.f32 %v4788, 0.0
        %v4991 = vmax.f32 %v4791, 0.0
        %v4992 = vmax.f32 %v4796, 0.0
        %v4993 = vmax.f32 %v4799, 0.0
        %v4994 = vmax.f32 %v4804, 0.0
        %v4995 = vmax.f32 %v4807, 0.0
        %v4996 = vmax.f32 %v4812, 0.0
        %v4997 = vmax.f32 %v4815, 0.0
        %v4998 = vmax.f32 %v4820, 0.0
        %v4999 = vmax.f32 %v4823, 0.0
        %v5000 = vmax.f32 %v4828, 0.0
        %v5001 = vmax.f32 %v4831, 0.0
        %v5002 = vmax.f32 %v4836, 0.0
        %v5003 = vmax.f32 %v4839, 0.0
        %v5004 = vmax.f32 %v4844, 0.0
        %v5005 = vmax.f32 %v4847, 0.0
        %v5006 = vmax.f32 %v4852, 0.0
        %v5007 = vmax.f32 %v4855, 0.0
        %v5008 = vmax.f32 %v4860, 0.0
        %v5009 = vmax.f32 %v4863, 0.0
        %v5010 = vmax.f32 %v4868, 0.0
        %v5011 = vmax.f32 %v4871, 0.0
        %v5012 = vmax.f32 %v4876, 0.0
        %v5013 = vmax.f32 %v4879, 0.0
        %v5014 = vmax.f32 %v4884, 0.0
        %v5015 = vmax.f32 %v4887, 0.0
        %v5016 = vmax.f32 %v4892, 0.0
        %v5017 = vmax.f32 %v4895, 0.0
        %v5018 = vmax.f32 %v4900, 0.0
        %v5019 = vmax.f32 %v4903, 0.0
        %v5020 = vmax.f32 %v4908, 0.0
        %v5021 = vmax.f32 %v4911, 0.0
        %v5022 = vmax.f32 %v4916, 0.0
        %v5023 = vmax.f32 %v4919, 0.0
        %v5024 = vmax.f32 %v4924, 0.0
        %v5025 = vmax.f32 %v4927, 0.0
        %v5026 = vmax.f32 %v4936, %v4937
        %v5027 = vmax.f32 %v4939, %v4940
        %v5028 = vmax.f32 %v4942, %v4943
        %v5029 = vmax.f32 %v4945, %v4946
        %v5030 = vmax.f32 %v4948, %v4949
        %v5031 = vmax.f32 %v4951, %v4952
        %v5032 = vmax.f32 %v4954, %v4955
        %v5033 = vmax.f32 %v4957, %v4958
        %v5034 = vmax.f32 %v4960, %v4961
        %v5035 = vmax.f32 %v4963, %v4964
        %v5036 = vmax.f32 %v4966, %v4967
        %v5037 = vmax.f32 %v4969, %v4970
        %v5038 = vmax.f32 %v4972, %v4973
        %v5039 = vmax.f32 %v4975, %v4976
        %v5040 = vmax.f32 %v4978, %v4979
        %v5041 = vmax.f32 %v4981, %v4982
        %v5042 = vmax.f32 %v4984, %v4985
        %v5043 = vmax.f32 %v4987, %v4988
        %v5044 = vmax.f32 %v4990, %v4991
        %v5045 = vmax.f32 %v4993, %v4994
        %v5046 = vmax.f32 %v4996, %v4997
        %v5047 = vmax.f32 %v4999, %v5000
        %v5048 = vmax.f32 %v5002, %v5003
        %v5049 = vmax.f32 %v5005, %v5006
        %v5050 = vmax.f32 %v5008, %v5009
        %v5051 = vmax.f32 %v5011, %v5012
        %v5052 = vmax.f32 %v5014, %v5015
        %v5053 = vmax.f32 %v5017, %v5018
        %v5054 = vmax.f32 %v5020, %v5021
        %v5055 = vmax.f32 %v5023, %v5024
        %v5056 = vmax.f32 %v5026, %v4938
        %v5057 = vmax.f32 %v5027, %v4941
        %v5058 = vmax.f32 %v5028, %v4944
        %v5059 = vmax.f32 %v5029, %v4947
        %v5060 = vmax.f32 %v5030, %v4950
        %v5061 = vmax.f32 %v5031, %v4953
        %v5062 = vmax.f32 %v5032, %v4956
        %v5063 = vmax.f32 %v5033, %v4959
        %v5064 = vmax.f32 %v5034, %v4962
        %v5065 = vmax.f32 %v5035, %v4965
        %v5066 = vmax.f32 %v5036, %v4968
        %v5067 = vmax.f32 %v5037, %v4971
        %v5068 = vmax.f32 %v5038, %v4974
        %v5069 = vmax.f32 %v5039, %v4977
        %v5070 = vmax.f32 %v5040, %v4980
        %v5071 = vmax.f32 %v5041, %v4983
        %v5072 = vmax.f32 %v5042, %v4986
        %v5073 = vmax.f32 %v5043, %v4989
        %v5074 = vmax.f32 %v5044, %v4992
        %v5075 = vmax.f32 %v5045, %v4995
        %v5076 = vmax.f32 %v5046, %v4998
        %v5077 = vmax.f32 %v5047, %v5001
        %v5078 = vmax.f32 %v5048, %v5004
        %v5079 = vmax.f32 %v5049, %v5007
        %v5080 = vmax.f32 %v5050, %v5010
        %v5081 = vmax.f32 %v5051, %v5013
        %v5082 = vmax.f32 %v5052, %v5016
        %v5083 = vmax.f32 %v5053, %v5019
        %v5084 = vmax.f32 %v5054, %v5022
        %v5085 = vmax.f32 %v5055, %v5025
        %5107 = vrot.lane.b32.xlu0 %v5057, 32
        %v5108 = vpop.permute.xlu0 %5107
        %5109 = vrot.lane.b32.xlu0 %v5058, 32
        %v5110 = vpop.permute.xlu0 %5109
        %5111 = vrot.lane.b32.xlu0 %v5059, 32
        %v5112 = vpop.permute.xlu0 %5111
        %5113 = vrot.lane.b32.xlu0 %v5060, 32
        %v5114 = vpop.permute.xlu0 %5113
        %5115 = vrot.lane.b32.xlu0 %v5061, 32
        %v5116 = vpop.permute.xlu0 %5115
        %5117 = vrot.lane.b32.xlu0 %v5062, 32
        %v5118 = vpop.permute.xlu0 %5117
        %5119 = vrot.lane.b32.xlu0 %v5063, 32
        %v5120 = vpop.permute.xlu0 %5119
        %5121 = vrot.lane.b32.xlu0 %v5064, 32
        %v5122 = vpop.permute.xlu0 %5121
        %5123 = vrot.lane.b32.xlu0 %v5065, 32
        %v5124 = vpop.permute.xlu0 %5123
        %5125 = vrot.lane.b32.xlu0 %v5066, 32
        %v5126 = vpop.permute.xlu0 %5125
        %5127 = vrot.lane.b32.xlu0 %v5067, 32
        %v5128 = vpop.permute.xlu0 %5127
        %5129 = vrot.lane.b32.xlu0 %v5068, 32
        %v5130 = vpop.permute.xlu0 %5129
        %5131 = vrot.lane.b32.xlu0 %v5069, 32
        %v5132 = vpop.permute.xlu0 %5131
        %5133 = vrot.lane.b32.xlu0 %v5070, 32
        %v5134 = vpop.permute.xlu0 %5133
        %5135 = vrot.lane.b32.xlu0 %v5071, 32
        %v5136 = vpop.permute.xlu0 %5135
        %5137 = vrot.lane.b32.xlu0 %v5072, 32
        %v5138 = vpop.permute.xlu0 %5137
        %5139 = vrot.lane.b32.xlu0 %v5073, 32
        %v5140 = vpop.permute.xlu0 %5139
        %5141 = vrot.lane.b32.xlu0 %v5074, 32
        %v5142 = vpop.permute.xlu0 %5141
        %5143 = vrot.lane.b32.xlu0 %v5075, 32
        %v5144 = vpop.permute.xlu0 %5143
        %5145 = vrot.lane.b32.xlu0 %v5076, 32
        %v5146 = vpop.permute.xlu0 %5145
        %5147 = vrot.lane.b32.xlu0 %v5077, 32
        %v5148 = vpop.permute.xlu0 %5147
        %5171 = vrot.lane.b32.xlu0 %v5058, 64
        %v5172 = vpop.permute.xlu0 %5171
        %5173 = vrot.lane.b32.xlu0 %v5059, 64
        %v5174 = vpop.permute.xlu0 %5173
        %5175 = vrot.lane.b32.xlu0 %v5060, 64
        %v5176 = vpop.permute.xlu0 %5175
        %5177 = vrot.lane.b32.xlu0 %v5061, 64
        %v5178 = vpop.permute.xlu0 %5177
        %5179 = vrot.lane.b32.xlu0 %v5062, 64
        %v5180 = vpop.permute.xlu0 %5179
        %5181 = vrot.lane.b32.xlu0 %v5063, 64
        %v5182 = vpop.permute.xlu0 %5181
        %5183 = vrot.lane.b32.xlu0 %v5064, 64
        %v5184 = vpop.permute.xlu0 %5183
        %5185 = vrot.lane.b32.xlu0 %v5065, 64
        %v5186 = vpop.permute.xlu0 %5185
        %5187 = vrot.lane.b32.xlu0 %v5066, 64
        %v5188 = vpop.permute.xlu0 %5187
        %5189 = vrot.lane.b32.xlu0 %v5067, 64
        %v5190 = vpop.permute.xlu0 %5189
        %5191 = vrot.lane.b32.xlu0 %v5068, 64
        %v5192 = vpop.permute.xlu0 %5191
        %5193 = vrot.lane.b32.xlu0 %v5069, 64
        %v5194 = vpop.permute.xlu0 %5193
        %5195 = vrot.lane.b32.xlu0 %v5070, 64
        %v5196 = vpop.permute.xlu0 %5195
        %5197 = vrot.lane.b32.xlu0 %v5071, 64
        %v5198 = vpop.permute.xlu0 %5197
        %5199 = vrot.lane.b32.xlu0 %v5072, 64
        %v5200 = vpop.permute.xlu0 %5199
        %5201 = vrot.lane.b32.xlu0 %v5073, 64
        %v5202 = vpop.permute.xlu0 %5201
        %5203 = vrot.lane.b32.xlu0 %v5074, 64
        %v5204 = vpop.permute.xlu0 %5203
        %5205 = vrot.lane.b32.xlu0 %v5075, 64
        %v5206 = vpop.permute.xlu0 %5205
        %5207 = vrot.lane.b32.xlu0 %v5076, 64
        %v5208 = vpop.permute.xlu0 %5207
        %5209 = vrot.lane.b32.xlu0 %v5077, 64
        %v5210 = vpop.permute.xlu0 %5209
        %5211 = vrot.lane.b32.xlu0 %v5078, 64
        %v5212 = vpop.permute.xlu0 %5211
        %5235 = vrot.lane.b32.xlu0 %v5059, 96
        %v5236 = vpop.permute.xlu0 %5235
        %5237 = vrot.lane.b32.xlu0 %v5060, 96
        %v5238 = vpop.permute.xlu0 %5237
        %5239 = vrot.lane.b32.xlu0 %v5061, 96
        %v5240 = vpop.permute.xlu0 %5239
        %5241 = vrot.lane.b32.xlu0 %v5062, 96
        %v5242 = vpop.permute.xlu0 %5241
        %5243 = vrot.lane.b32.xlu0 %v5063, 96
        %v5244 = vpop.permute.xlu0 %5243
        %5245 = vrot.lane.b32.xlu0 %v5064, 96
        %v5246 = vpop.permute.xlu0 %5245
        %5247 = vrot.lane.b32.xlu0 %v5065, 96
        %v5248 = vpop.permute.xlu0 %5247
        %5249 = vrot.lane.b32.xlu0 %v5066, 96
        %v5250 = vpop.permute.xlu0 %5249
        %5251 = vrot.lane.b32.xlu0 %v5067, 96
        %v5252 = vpop.permute.xlu0 %5251
        %5253 = vrot.lane.b32.xlu0 %v5068, 96
        %v5254 = vpop.permute.xlu0 %5253
        %5255 = vrot.lane.b32.xlu0 %v5069, 96
        %v5256 = vpop.permute.xlu0 %5255
        %5257 = vrot.lane.b32.xlu0 %v5070, 96
        %v5258 = vpop.permute.xlu0 %5257
        %5259 = vrot.lane.b32.xlu0 %v5071, 96
        %v5260 = vpop.permute.xlu0 %5259
        %5261 = vrot.lane.b32.xlu0 %v5072, 96
        %v5262 = vpop.permute.xlu0 %5261
        %5263 = vrot.lane.b32.xlu0 %v5073, 96
        %v5264 = vpop.permute.xlu0 %5263
        %5265 = vrot.lane.b32.xlu0 %v5074, 96
        %v5266 = vpop.permute.xlu0 %5265
        %5267 = vrot.lane.b32.xlu0 %v5075, 96
        %v5268 = vpop.permute.xlu0 %5267
        %5269 = vrot.lane.b32.xlu0 %v5076, 96
        %v5270 = vpop.permute.xlu0 %5269
        %5271 = vrot.lane.b32.xlu0 %v5077, 96
        %v5272 = vpop.permute.xlu0 %5271
        %5273 = vrot.lane.b32.xlu0 %v5078, 96
        %v5274 = vpop.permute.xlu0 %5273
        %5275 = vrot.lane.b32.xlu0 %v5079, 96
        %v5276 = vpop.permute.xlu0 %5275
        %5300 = vrot.lane.b32.xlu0 %v5078, 32
        %v5301 = vpop.permute.xlu0 %5300
        %5302 = vrot.lane.b32.xlu0 %v5079, 32
        %v5303 = vpop.permute.xlu0 %5302
        %5304 = vrot.lane.b32.xlu0 %v5080, 32
        %v5305 = vpop.permute.xlu0 %5304
        %5306 = vrot.lane.b32.xlu0 %v5081, 32
        %v5307 = vpop.permute.xlu0 %5306
        %5313 = vrot.lane.b32.xlu0 %v5079, 64
        %v5314 = vpop.permute.xlu0 %5313
        %5315 = vrot.lane.b32.xlu0 %v5080, 64
        %v5316 = vpop.permute.xlu0 %5315
        %5317 = vrot.lane.b32.xlu0 %v5081, 64
        %v5318 = vpop.permute.xlu0 %5317
        %5319 = vrot.lane.b32.xlu0 %v5082, 64
        %v5320 = vpop.permute.xlu0 %5319
        %5326 = vrot.lane.b32.xlu0 %v5080, 96
        %v5327 = vpop.permute.xlu0 %5326
        %5328 = vrot.lane.b32.xlu0 %v5081, 96
        %v5329 = vpop.permute.xlu0 %5328
        %5330 = vrot.lane.b32.xlu0 %v5082, 96
        %v5331 = vpop.permute.xlu0 %5330
        %5332 = vrot.lane.b32.xlu0 %v5083, 96
        %v5333 = vpop.permute.xlu0 %5332
        %5340 = vrot.lane.b32.xlu0 %v5082, 32
        %v5341 = vpop.permute.xlu0 %5340
        %5342 = vrot.lane.b32.xlu0 %v5083, 32
        %v5343 = vpop.permute.xlu0 %5342
        %5344 = vrot.lane.b32.xlu0 %v5084, 32
        %v5345 = vpop.permute.xlu0 %5344
        %5346 = vrot.lane.b32.xlu0 %v5085, 32
        %v5347 = vpop.permute.xlu0 %5346
        %v5352 = vsel %vm4144, %v5056, %v5108
        %v5353 = vsel %vm4144, %v5057, %v5110
        %v5354 = vsel %vm4144, %v5058, %v5112
        %v5355 = vsel %vm4144, %v5059, %v5114
        %v5356 = vsel %vm4144, %v5060, %v5116
        %v5357 = vsel %vm4144, %v5061, %v5118
        %v5358 = vsel %vm4144, %v5062, %v5120
        %v5359 = vsel %vm4144, %v5063, %v5122
        %v5360 = vsel %vm4144, %v5064, %v5124
        %v5361 = vsel %vm4144, %v5065, %v5126
        %v5362 = vsel %vm4144, %v5066, %v5128
        %v5363 = vsel %vm4144, %v5067, %v5130
        %v5364 = vsel %vm4144, %v5068, %v5132
        %v5365 = vsel %vm4144, %v5069, %v5134
        %v5366 = vsel %vm4144, %v5070, %v5136
        %v5367 = vsel %vm4144, %v5071, %v5138
        %v5368 = vsel %vm4144, %v5072, %v5140
        %v5369 = vsel %vm4144, %v5073, %v5142
        %v5370 = vsel %vm4144, %v5074, %v5144
        %v5371 = vsel %vm4144, %v5075, %v5146
        %v5372 = vsel %vm4144, %v5076, %v5148
        %vm5373 = vcmask 523264
        %v5374 = vsel %vm5373, %v5352, %v5172
        %v5375 = vsel %vm5373, %v5353, %v5174
        %v5376 = vsel %vm5373, %v5354, %v5176
        %v5377 = vsel %vm5373, %v5355, %v5178
        %v5378 = vsel %vm5373, %v5356, %v5180
        %v5379 = vsel %vm5373, %v5357, %v5182
        %v5380 = vsel %vm5373, %v5358, %v5184
        %v5381 = vsel %vm5373, %v5359, %v5186
        %v5382 = vsel %vm5373, %v5360, %v5188
        %v5383 = vsel %vm5373, %v5361, %v5190
        %v5384 = vsel %vm5373, %v5362, %v5192
        %v5385 = vsel %vm5373, %v5363, %v5194
        %v5386 = vsel %vm5373, %v5364, %v5196
        %v5387 = vsel %vm5373, %v5365, %v5198
        %v5388 = vsel %vm5373, %v5366, %v5200
        %v5389 = vsel %vm5373, %v5367, %v5202
        %v5390 = vsel %vm5373, %v5368, %v5204
        %v5391 = vsel %vm5373, %v5369, %v5206
        %v5392 = vsel %vm5373, %v5370, %v5208
        %v5393 = vsel %vm5373, %v5371, %v5210
        %v5394 = vsel %vm5373, %v5372, %v5212
        %vm5395 = vcmask 785408
        %v5396 = vsel %vm5395, %v5374, %v5236
        %v5397 = vsel %vm5395, %v5375, %v5238
        %v5398 = vsel %vm5395, %v5376, %v5240
        %v5399 = vsel %vm5395, %v5377, %v5242
        %v5400 = vsel %vm5395, %v5378, %v5244
        %v5401 = vsel %vm5395, %v5379, %v5246
        %v5402 = vsel %vm5395, %v5380, %v5248
        %v5403 = vsel %vm5395, %v5381, %v5250
        %v5404 = vsel %vm5395, %v5382, %v5252
        %v5405 = vsel %vm5395, %v5383, %v5254
        %v5406 = vsel %vm5395, %v5384, %v5256
        %v5407 = vsel %vm5395, %v5385, %v5258
        %v5408 = vsel %vm5395, %v5386, %v5260
        %v5409 = vsel %vm5395, %v5387, %v5262
        %v5410 = vsel %vm5395, %v5388, %v5264
        %v5411 = vsel %vm5395, %v5389, %v5266
        %v5412 = vsel %vm5395, %v5390, %v5268
        %v5413 = vsel %vm5395, %v5391, %v5270
        %v5414 = vsel %vm5395, %v5392, %v5272
        %v5415 = vsel %vm5395, %v5393, %v5274
        %v5416 = vsel %vm5395, %v5394, %v5276
        %v5417 = vsel %vm4144, %v5077, %v5301
        %v5418 = vsel %vm4144, %v5078, %v5303
        %v5419 = vsel %vm4144, %v5079, %v5305
        %v5420 = vsel %vm4144, %v5080, %v5307
        %v5421 = vsel %vm5373, %v5417, %v5314
        %v5422 = vsel %vm5373, %v5418, %v5316
        %v5423 = vsel %vm5373, %v5419, %v5318
        %v5424 = vsel %vm5373, %v5420, %v5320
        %v5425 = vsel %vm5395, %v5421, %v5327
        %v5426 = vsel %vm5395, %v5422, %v5329
        %v5427 = vsel %vm5395, %v5423, %v5331
        %v5428 = vsel %vm5395, %v5424, %v5333
        %v5429 = vsel %vm4144, %v5081, %v5341
        %v5430 = vsel %vm4144, %v5082, %v5343
        %v5431 = vsel %vm4144, %v5083, %v5345
        %v5432 = vsel %vm4144, %v5084, %v5347
        %v5433 = vpack.c.bf16 %v5397, %v5396
        %v5434 = vpack.c.bf16 %v5401, %v5400
        %v5435 = vpack.c.bf16 %v5361, %v5360
        %v5436 = vpack.c.bf16 %v5399, %v5398
        %v5437 = vpack.c.bf16 %v5403, %v5402
        %v5438 = vpack.c.bf16 %v5363, %v5362
        %v5439 = vpack.c.bf16 %v5405, %v5404
        %v5440 = vpack.c.bf16 %v5365, %v5364
        %v5441 = vpack.c.bf16 %v5407, %v5406
        %v5442 = vpack.c.bf16 %v5367, %v5366
        %v5443 = vpack.c.bf16 %v5409, %v5408
        %v5444 = vpack.c.bf16 %v5369, %v5368
        %v5445 = vpack.c.bf16 %v5411, %v5410
        %v5446 = vpack.c.bf16 %v5371, %v5370
        %v5447 = vpack.c.bf16 %v5413, %v5412
        %v5448 = vpack.c.bf16 %v5417, %v5372
        %v5449 = vpack.c.bf16 %v5415, %v5414
        %v5450 = vpack.c.bf16 %v5419, %v5418
        %v5451 = vpack.c.bf16 %v5425, %v5416
        %v5452 = vpack.c.bf16 %v5429, %v5420
        %v5453 = vpack.c.bf16 %v5427, %v5426
        %v5454 = vpack.c.bf16 %v5431, %v5430
        %v5455 = vpack.c.bf16 %v5416, %v5416
        %v5456 = vpack.c.bf16 %v5428, %v5428
        %v5457 = vpack.c.bf16 %v5432, %v5432
        %v5458 = vld [vmem:[%s2] sm:$0xf]
        %v5459 = vld [vmem:[%s2 + $0x4] sm:$0xf]
        %v5460 = vld [vmem:[%s2 + $0x8] sm:$0xf]
        %v5461 = vld [vmem:[%s2 + $0xc] sm:$0xf]
        %v5462 = vld [vmem:[%s2 + $0x10] sm:$0xf]
        %v5463 = vld [vmem:[%s2 + $0x14] sm:$0xf]
        %v5464 = vld [vmem:[%s2 + $0x18] sm:$0xf]
        %v5465 = vld [vmem:[%s2 + $0x1c] sm:$0xf]
        %v5466 = vld [vmem:[%s2 + $0x20] sm:$0xf]
        %v5467 = vld [vmem:[%s2 + $0x24] sm:$0xf]
        %v5468 = vld [vmem:[%s2 + $0x28] sm:$0xf]
        %v5469 = vld [vmem:[%s2 + $0x2c] sm:$0xf]
        %v5470 = vld [vmem:[%s2 + $0x30] sm:$0xf]
        %v5471 = vld [vmem:[%s2 + $0x34] sm:$0xf]
        %v5472 = vld [vmem:[%s2 + $0x38] sm:$0xf]
        %v5473 = vld [vmem:[%s2 + $0x3c] sm:$0xf]
        %v5474 = vld [vmem:[%s2 + $0x40] sm:$0xf]
        %v5475 = vld [vmem:[%s2 + $0x44] sm:$0xf]
        %v5476 = vld [vmem:[%s2 + $0x48] sm:$0xf]
        %v5477 = vld [vmem:[%s2 + $0x4c] sm:$0xf]
        %v5478 = vld [vmem:[%s2 + $0x50] sm:$0xf]
        %v5479 = vld [vmem:[%s2 + $0x54] sm:$0xf]
        %v5480 = vld [vmem:[%s2 + $0x58] sm:$0xf]
        %v5481 = vld [vmem:[%s2 + $0x5c] sm:$0xf]
        %v5482 = vld [vmem:[%s2 + $0x60] sm:$0xf]
        %v5483 = vld [vmem:[%s2 + $0x64] sm:$0xf]
        %v5484 = vld [vmem:[%s2 + $0x68] sm:$0xf]
        %v5485 = vld [vmem:[%s2 + $0x6c] sm:$0xf]
        %v5486 = vld [vmem:[%s2 + $0x70] sm:$0xf]
        %v5487 = vld [vmem:[%s2 + $0x74] sm:$0xf]
        %v5488 = vld [vmem:[%s2 + $0x78] sm:$0xf]
        %v5489 = vld [vmem:[%s2 + $0x7c] sm:$0xf]
        %v5490 = vld [vmem:[%s2 + $0x80] sm:$0xf]
        %v5491 = vld [vmem:[%s2 + $0x84] sm:$0xf]
        %v5492 = vld [vmem:[%s2 + $0x88] sm:$0xf]
        %v5493 = vld [vmem:[%s2 + $0x8c] sm:$0xf]
        %v5494 = vld [vmem:[%s2 + $0x90] sm:$0xf]
        %v5495 = vld [vmem:[%s2 + $0x94] sm:$0xf]
        %v5496 = vld [vmem:[%s2 + $0x98] sm:$0xf]
        %v5497 = vld [vmem:[%s2 + $0x9c] sm:$0xf]
        %v5538 = vunpack.c.l.b16 %v5458
        %v5539 = vunpack.c.l.b16 %v5459
        %v5540 = vunpack.c.l.b16 %v5460
        %v5541 = vunpack.c.l.b16 %v5461
        %v5542 = vunpack.c.l.b16 %v5462
        %v5543 = vunpack.c.l.b16 %v5463
        %v5544 = vunpack.c.l.b16 %v5464
        %v5545 = vunpack.c.l.b16 %v5465
        %v5546 = vunpack.c.l.b16 %v5466
        %v5547 = vunpack.c.l.b16 %v5467
        %v5548 = vunpack.c.l.b16 %v5468
        %v5549 = vunpack.c.l.b16 %v5469
        %v5550 = vunpack.c.l.b16 %v5470
        %v5551 = vunpack.c.l.b16 %v5471
        %v5552 = vunpack.c.l.b16 %v5472
        %v5553 = vunpack.c.l.b16 %v5473
        %v5554 = vunpack.c.l.b16 %v5474
        %v5555 = vunpack.c.l.b16 %v5475
        %v5556 = vunpack.c.l.b16 %v5476
        %v5557 = vunpack.c.l.b16 %v5477
        %v5558 = vunpack.c.l.b16 %v5478
        %v5559 = vunpack.c.l.b16 %v5479
        %v5560 = vunpack.c.l.b16 %v5480
        %v5561 = vunpack.c.l.b16 %v5481
        %v5562 = vunpack.c.l.b16 %v5482
        %v5563 = vunpack.c.l.b16 %v5483
        %v5564 = vunpack.c.l.b16 %v5484
        %v5565 = vunpack.c.l.b16 %v5485
        %v5566 = vunpack.c.l.b16 %v5486
        %v5567 = vunpack.c.l.b16 %v5487
        %v5568 = vunpack.c.l.b16 %v5488
        %v5569 = vunpack.c.l.b16 %v5489
        %v5570 = vunpack.c.l.b16 %v5490
        %v5571 = vunpack.c.l.b16 %v5491
        %v5572 = vunpack.c.l.b16 %v5492
        %v5573 = vunpack.c.l.b16 %v5493
        %v5574 = vunpack.c.l.b16 %v5494
        %v5575 = vunpack.c.l.b16 %v5495
        %v5576 = vunpack.c.l.b16 %v5496
        %v5577 = vunpack.c.l.b16 %v5497
        %v5578 = vpack.c.b16 %v5539, %v5538
        %v5579 = vpack.c.b16 %v5541, %v5540
        %v5580 = vpack.c.b16 %v5543, %v5542
        %v5581 = vpack.c.b16 %v5545, %v5544
        %v5582 = vpack.c.b16 %v5547, %v5546
        %v5583 = vpack.c.b16 %v5549, %v5548
        %v5584 = vpack.c.b16 %v5551, %v5550
        %v5585 = vpack.c.b16 %v5553, %v5552
        %v5586 = vpack.c.b16 %v5555, %v5554
        %v5587 = vpack.c.b16 %v5557, %v5556
        %v5588 = vpack.c.b16 %v5559, %v5558
        %v5589 = vpack.c.b16 %v5561, %v5560
        %v5590 = vpack.c.b16 %v5563, %v5562
        %v5591 = vpack.c.b16 %v5565, %v5564
        %v5592 = vpack.c.b16 %v5567, %v5566
        %v5593 = vpack.c.b16 %v5569, %v5568
        %v5594 = vpack.c.b16 %v5571, %v5570
        %v5595 = vpack.c.b16 %v5573, %v5572
        %v5596 = vpack.c.b16 %v5575, %v5574
        %v5597 = vpack.c.b16 %v5577, %v5576
        %v5619 = vsel %vm5373, %v5435, 0
        %v5622 = vsel %vm5373, %v5438, 0
        %v5625 = vsel %vm5373, %v5440, 0
        %v5628 = vsel %vm5373, %v5442, 0
        %v5631 = vsel %vm5373, %v5444, 0
        %v5634 = vsel %vm5373, %v5446, 0
        %v5637 = vsel %vm5373, %v5448, 0
        %v5640 = vsel %vm5373, %v5450, 0
        %v5643 = vsel %vm5373, %v5452, 0
        %v5646 = vsel %vm5373, %v5454, 0
        %v5649 = vsel %vm5373, %v5457, 0
        %5651 = vmatprep.subr.bf16.mxu0 0
        %5652 = vmatpush1.bf16.msra.mxu0 %v5585
        %5653 = vmatprep.subr.bf16.mxu0 0
        %5654 = vmatpush1.bf16.msra.mxu0 %v5584
        %5655 = vmatprep.subr.bf16.mxu0 0
        %5656 = vmatpush1.bf16.msra.mxu0 %v5583
        %5657 = vmatprep.subr.bf16.mxu0 0
        %5658 = vmatpush1.bf16.msra.mxu0 %v5582
        %5659 = vmatprep.subr.bf16.mxu0 0
        %5660 = vmatpush1.bf16.msra.mxu0 %v5581
        %5661 = vmatprep.subr.bf16.mxu0 0
        %5662 = vmatpush1.bf16.msra.mxu0 %v5580
        %5663 = vmatprep.subr.bf16.mxu0 0
        %5664 = vmatpush1.bf16.msra.mxu0 %v5579
        %5665 = vmatprep.subr.bf16.mxu0 0
        %5666 = vmatpush1.bf16.msra.mxu0 %v5578
        %5667 = vmatprep.subr.bf16.mxu0 0
        %5668 = vmatpush2.bf16.msra.mxu0 %v5593
        %5669 = vmatprep.subr.bf16.mxu0 0
        %5670 = vmatpush2.bf16.msra.mxu0 %v5592
        %5671 = vmatprep.subr.bf16.mxu0 0
        %5672 = vmatpush2.bf16.msra.mxu0 %v5591
        %5673 = vmatprep.subr.bf16.mxu0 0
        %5674 = vmatpush2.bf16.msra.mxu0 %v5590
        %5675 = vmatprep.subr.bf16.mxu0 0
        %5676 = vmatpush2.bf16.msra.mxu0 %v5589
        %5677 = vmatprep.subr.bf16.mxu0 0
        %5678 = vmatpush2.bf16.msra.mxu0 %v5588
        %5679 = vmatprep.subr.bf16.mxu0 0
        %5680 = vmatpush2.bf16.msra.mxu0 %v5587
        %5681 = vmatprep.subr.bf16.mxu0 0
        %5682 = vmatpush2.bf16.msra.mxu0 %v5586
        %5683 = vmatprep.mubr.bf16.mxu0 %v5434
        %5684 = vmatmul.mubr.bf16.gmra.mxu0 %v5433
        %v5685 = vpop.f32.mrf.mxu0
        %v5686 = vadd.f32 0.0, %v5685
        %v5687 = vpop.f32.mrf.mxu0
        %v5688 = vpop.f32.mrf.mxu0
        %v5689 = vadd.f32 0.0, %v5688
        %v5690 = vpop.f32.mrf.mxu0
        %5691 = vmatprep.mubr.bf16.mxu0 %v5437
        %5692 = vmatmul.mubr.bf16.gmra.mxu0 %v5436
        %v5693 = vpop.f32.mrf.mxu0
        %v5694 = vadd.f32 0.0, %v5693
        %v5695 = vpop.f32.mrf.mxu0
        %v5696 = vpop.f32.mrf.mxu0
        %v5697 = vadd.f32 0.0, %v5696
        %v5698 = vpop.f32.mrf.mxu0
        %5699 = vmatprep.mubr.bf16.mxu0 %v5439
        %5700 = vmatmul.mubr.bf16.gmra.mxu0 %v5434
        %v5701 = vpop.f32.mrf.mxu0
        %v5702 = vadd.f32 0.0, %v5701
        %v5703 = vpop.f32.mrf.mxu0
        %v5704 = vpop.f32.mrf.mxu0
        %v5705 = vadd.f32 0.0, %v5704
        %v5706 = vpop.f32.mrf.mxu0
        %5707 = vmatprep.mubr.bf16.mxu0 %v5441
        %5708 = vmatmul.mubr.bf16.gmra.mxu0 %v5437
        %v5709 = vpop.f32.mrf.mxu0
        %v5710 = vadd.f32 0.0, %v5709
        %v5711 = vpop.f32.mrf.mxu0
        %v5712 = vpop.f32.mrf.mxu0
        %v5713 = vadd.f32 0.0, %v5712
        %v5714 = vpop.f32.mrf.mxu0
        %5715 = vmatprep.mubr.bf16.mxu0 %v5443
        %5716 = vmatmul.mubr.bf16.gmra.mxu0 %v5439
        %v5717 = vpop.f32.mrf.mxu0
        %v5718 = vadd.f32 0.0, %v5717
        %v5719 = vpop.f32.mrf.mxu0
        %v5720 = vpop.f32.mrf.mxu0
        %v5721 = vadd.f32 0.0, %v5720
        %v5722 = vpop.f32.mrf.mxu0
        %5723 = vmatprep.mubr.bf16.mxu0 %v5445
        %5724 = vmatmul.mubr.bf16.gmra.mxu0 %v5441
        %v5725 = vpop.f32.mrf.mxu0
        %v5726 = vadd.f32 0.0, %v5725
        %v5727 = vpop.f32.mrf.mxu0
        %v5728 = vpop.f32.mrf.mxu0
        %v5729 = vadd.f32 0.0, %v5728
        %v5730 = vpop.f32.mrf.mxu0
        %5731 = vmatprep.mubr.bf16.mxu0 %v5447
        %5732 = vmatmul.mubr.bf16.gmra.mxu0 %v5443
        %v5733 = vpop.f32.mrf.mxu0
        %v5734 = vadd.f32 0.0, %v5733
        %v5735 = vpop.f32.mrf.mxu0
        %v5736 = vpop.f32.mrf.mxu0
        %v5737 = vadd.f32 0.0, %v5736
        %v5738 = vpop.f32.mrf.mxu0
        %5739 = vmatprep.mubr.bf16.mxu0 %v5449
        %5740 = vmatmul.mubr.bf16.gmra.mxu0 %v5445
        %v5741 = vpop.f32.mrf.mxu0
        %v5742 = vadd.f32 0.0, %v5741
        %v5743 = vpop.f32.mrf.mxu0
        %v5744 = vpop.f32.mrf.mxu0
        %v5745 = vadd.f32 0.0, %v5744
        %v5746 = vpop.f32.mrf.mxu0
        %5747 = vmatprep.mubr.bf16.mxu0 %v5451
        %5748 = vmatmul.mubr.bf16.gmra.mxu0 %v5447
        %v5749 = vpop.f32.mrf.mxu0
        %v5750 = vadd.f32 0.0, %v5749
        %v5751 = vpop.f32.mrf.mxu0
        %v5752 = vpop.f32.mrf.mxu0
        %v5753 = vadd.f32 0.0, %v5752
        %v5754 = vpop.f32.mrf.mxu0
        %5755 = vmatprep.mubr.bf16.mxu0 %v5453
        %5756 = vmatmul.mubr.bf16.gmra.mxu0 %v5449
        %v5757 = vpop.f32.mrf.mxu0
        %v5758 = vadd.f32 0.0, %v5757
        %v5759 = vpop.f32.mrf.mxu0
        %v5760 = vpop.f32.mrf.mxu0
        %v5761 = vadd.f32 0.0, %v5760
        %v5762 = vpop.f32.mrf.mxu0
        %5763 = vmatprep.mubr.bf16.mxu0 %v5456
        %5764 = vmatmul.mubr.bf16.gmra.mxu0 %v5455
        %v5765 = vpop.f32.mrf.mxu0
        %v5766 = vadd.f32 0.0, %v5765
        %v5767 = vpop.f32.mrf.mxu0
        %v5768 = vpop.f32.mrf.mxu0
        %v5769 = vpop.f32.mrf.mxu0
        %5770 = vdwg.mxu0
        %5771 = vmatprep.subr.bf16.mxu0 0
        %5772 = vmatpush1.bf16.msra.mxu0 0
        %5773 = vmatprep.subr.bf16.mxu0 0
        %5774 = vmatpush1.bf16.msra.mxu0 0
        %5775 = vmatprep.subr.bf16.mxu0 0
        %5776 = vmatpush1.bf16.msra.mxu0 0
        %5777 = vmatprep.subr.bf16.mxu0 0
        %5778 = vmatpush1.bf16.msra.mxu0 0
        %5779 = vmatprep.subr.bf16.mxu0 0
        %5780 = vmatpush1.bf16.msra.mxu0 %v5597
        %5781 = vmatprep.subr.bf16.mxu0 0
        %5782 = vmatpush1.bf16.msra.mxu0 %v5596
        %5783 = vmatprep.subr.bf16.mxu0 0
        %5784 = vmatpush1.bf16.msra.mxu0 %v5595
        %5785 = vmatprep.subr.bf16.mxu0 0
        %5786 = vmatpush1.bf16.msra.mxu0 %v5594
        %5787 = vmatprep.subr.bf16.mxu0 0
        %5788 = vmatpush2.bf16.msra.mxu0 0
        %5789 = vmatprep.subr.bf16.mxu0 0
        %5790 = vmatpush2.bf16.msra.mxu0 0
        %5791 = vmatprep.subr.bf16.mxu0 0
        %5792 = vmatpush2.bf16.msra.mxu0 0
        %5793 = vmatprep.subr.bf16.mxu0 0
        %5794 = vmatpush2.bf16.msra.mxu0 0
        %5795 = vmatprep.subr.bf16.mxu0 0
        %5796 = vmatpush2.bf16.msra.mxu0 0
        %5797 = vmatprep.subr.bf16.mxu0 0
        %5798 = vmatpush2.bf16.msra.mxu0 0
        %5799 = vmatprep.subr.bf16.mxu0 0
        %5800 = vmatpush2.bf16.msra.mxu0 0
        %5801 = vmatprep.subr.bf16.mxu0 0
        %5802 = vmatpush2.bf16.msra.mxu0 0
        %5803 = vmatprep.mubr.bf16.mxu0 0
        %5804 = vmatmul.mubr.bf16.gmra.mxu0 %v5619
        %v5805 = vpop.f32.mrf.mxu0
        %v5806 = vadd.f32 %v5686, %v5805
        %v5807 = vpop.f32.mrf.mxu0
        %v5808 = vpop.f32.mrf.mxu0
        %v5809 = vadd.f32 %v5689, %v5808
        %v5810 = vpop.f32.mrf.mxu0
        %5811 = vmatprep.mubr.bf16.mxu0 0
        %5812 = vmatmul.mubr.bf16.gmra.mxu0 %v5622
        %v5813 = vpop.f32.mrf.mxu0
        %v5814 = vadd.f32 %v5694, %v5813
        %v5815 = vpop.f32.mrf.mxu0
        %v5816 = vpop.f32.mrf.mxu0
        %v5817 = vadd.f32 %v5697, %v5816
        %v5818 = vpop.f32.mrf.mxu0
        %5819 = vmatprep.mubr.bf16.mxu0 0
        %5820 = vmatmul.mubr.bf16.gmra.mxu0 %v5625
        %v5821 = vpop.f32.mrf.mxu0
        %v5822 = vadd.f32 %v5702, %v5821
        %v5823 = vpop.f32.mrf.mxu0
        %v5824 = vpop.f32.mrf.mxu0
        %v5825 = vadd.f32 %v5705, %v5824
        %v5826 = vpop.f32.mrf.mxu0
        %5827 = vmatprep.mubr.bf16.mxu0 0
        %5828 = vmatmul.mubr.bf16.gmra.mxu0 %v5628
        %v5829 = vpop.f32.mrf.mxu0
        %v5830 = vadd.f32 %v5710, %v5829
        %v5831 = vpop.f32.mrf.mxu0
        %v5832 = vpop.f32.mrf.mxu0
        %v5833 = vadd.f32 %v5713, %v5832
        %v5834 = vpop.f32.mrf.mxu0
        %5835 = vmatprep.mubr.bf16.mxu0 0
        %5836 = vmatmul.mubr.bf16.gmra.mxu0 %v5631
        %v5837 = vpop.f32.mrf.mxu0
        %v5838 = vadd.f32 %v5718, %v5837
        %v5839 = vpop.f32.mrf.mxu0
        %v5840 = vpop.f32.mrf.mxu0
        %v5841 = vadd.f32 %v5721, %v5840
        %v5842 = vpop.f32.mrf.mxu0
        %5843 = vmatprep.mubr.bf16.mxu0 0
        %5844 = vmatmul.mubr.bf16.gmra.mxu0 %v5634
        %v5845 = vpop.f32.mrf.mxu0
        %v5846 = vadd.f32 %v5726, %v5845
        %v5847 = vpop.f32.mrf.mxu0
        %v5848 = vpop.f32.mrf.mxu0
        %v5849 = vadd.f32 %v5729, %v5848
        %v5850 = vpop.f32.mrf.mxu0
        %5851 = vmatprep.mubr.bf16.mxu0 0
        %5852 = vmatmul.mubr.bf16.gmra.mxu0 %v5637
        %v5853 = vpop.f32.mrf.mxu0
        %v5854 = vadd.f32 %v5734, %v5853
        %v5855 = vpop.f32.mrf.mxu0
        %v5856 = vpop.f32.mrf.mxu0
        %v5857 = vadd.f32 %v5737, %v5856
        %v5858 = vpop.f32.mrf.mxu0
        %5859 = vmatprep.mubr.bf16.mxu0 0
        %5860 = vmatmul.mubr.bf16.gmra.mxu0 %v5640
        %v5861 = vpop.f32.mrf.mxu0
        %v5862 = vadd.f32 %v5742, %v5861
        %v5863 = vpop.f32.mrf.mxu0
        %v5864 = vpop.f32.mrf.mxu0
        %v5865 = vadd.f32 %v5745, %v5864
        %v5866 = vpop.f32.mrf.mxu0
        %5867 = vmatprep.mubr.bf16.mxu0 0
        %5868 = vmatmul.mubr.bf16.gmra.mxu0 %v5643
        %v5869 = vpop.f32.mrf.mxu0
        %v5870 = vadd.f32 %v5750, %v5869
        %v5871 = vpop.f32.mrf.mxu0
        %v5872 = vpop.f32.mrf.mxu0
        %v5873 = vadd.f32 %v5753, %v5872
        %v5874 = vpop.f32.mrf.mxu0
        %5875 = vmatprep.mubr.bf16.mxu0 0
        %5876 = vmatmul.mubr.bf16.gmra.mxu0 %v5646
        %v5877 = vpop.f32.mrf.mxu0
        %v5878 = vadd.f32 %v5758, %v5877
        %v5879 = vpop.f32.mrf.mxu0
        %v5880 = vpop.f32.mrf.mxu0
        %v5881 = vadd.f32 %v5761, %v5880
        %v5882 = vpop.f32.mrf.mxu0
        %5883 = vmatprep.mubr.bf16.mxu0 0
        %5884 = vmatmul.mubr.bf16.gmra.mxu0 %v5649
        %v5885 = vpop.f32.mrf.mxu0
        %v5886 = vadd.f32 %v5766, %v5885
        %v5887 = vpop.f32.mrf.mxu0
        %v5888 = vpop.f32.mrf.mxu0
        %v5889 = vpop.f32.mrf.mxu0
        %5890 = vdwg.mxu0
        %v5891 = vmax.f32 %v5806, 0.0
        %v5892 = vmax.f32 %v5809, 0.0
        %v5893 = vmax.f32 %v5814, 0.0
        %v5894 = vmax.f32 %v5817, 0.0
        %v5895 = vmax.f32 %v5822, 0.0
        %v5896 = vmax.f32 %v5825, 0.0
        %v5897 = vmax.f32 %v5830, 0.0
        %v5898 = vmax.f32 %v5833, 0.0
        %v5899 = vmax.f32 %v5838, 0.0
        %v5900 = vmax.f32 %v5841, 0.0
        %v5901 = vmax.f32 %v5846, 0.0
        %v5902 = vmax.f32 %v5849, 0.0
        %v5903 = vmax.f32 %v5854, 0.0
        %v5904 = vmax.f32 %v5857, 0.0
        %v5905 = vmax.f32 %v5862, 0.0
        %v5906 = vmax.f32 %v5865, 0.0
        %v5907 = vmax.f32 %v5870, 0.0
        %v5908 = vmax.f32 %v5873, 0.0
        %v5909 = vmax.f32 %v5878, 0.0
        %v5910 = vmax.f32 %v5881, 0.0
        %v5911 = vmax.f32 %v5886, 0.0
        %v5912 = vmax.f32 %v5891, %v5892
        %v5913 = vmax.f32 %v5894, %v5895
        %v5914 = vmax.f32 %v5897, %v5898
        %v5915 = vmax.f32 %v5900, %v5901
        %v5916 = vmax.f32 %v5903, %v5904
        %v5917 = vmax.f32 %v5906, %v5907
        %v5918 = vmax.f32 %v5909, %v5910
        %v5919 = vmax.f32 %v5912, %v5893
        %v5920 = vmax.f32 %v5913, %v5896
        %v5921 = vmax.f32 %v5914, %v5899
        %v5922 = vmax.f32 %v5915, %v5902
        %v5923 = vmax.f32 %v5916, %v5905
        %v5924 = vmax.f32 %v5917, %v5908
        %v5925 = vmax.f32 %v5918, %v5911
        %v5926 = vpack.c.bf16 %v5920, %v5919
        %v5927 = vpack.c.bf16 %v5922, %v5921
        %v5928 = vpack.c.bf16 %v5924, %v5923
        %v5929 = vpack.c.bf16 %v5925, %v5925
        %v5930 = vld [vmem:[%s3] sm:$0xff]
        %v5931 = vld [vmem:[%s3 + $0x8] sm:$0xff]
        %v5932 = vld [vmem:[%s3 + $0x10] sm:$0xff]
        %v5933 = vld [vmem:[%s3 + $0x18] sm:$0xff]
        %v5934 = vld [vmem:[%s4] sm:$0x3]
        %v5936 = vlaneseq
        %v5937 = vshrl.u32 %v5936, 7
        %v5938 = vsub.s32 0, %v5937
        %v5939 = vrot.slane %v5934, %v5938
        %v5940 = vlaneseq
        %v5941 = vshrl.u32 %v5940, 7
        %v5942 = vsub.s32 1, %v5941
        %v5943 = vrot.slane %v5934, %v5942
        %v5950 = vunpack.c.l.b16 %v5930
        %v5951 = vunpack.c.h.b16 %v5930
        %v5952 = vunpack.c.l.b16 %v5931
        %v5953 = vunpack.c.h.b16 %v5931
        %v5954 = vunpack.c.l.b16 %v5932
        %v5955 = vunpack.c.h.b16 %v5932
        %v5956 = vunpack.c.l.b16 %v5933
        %v5957 = vunpack.c.h.b16 %v5933
        %v5958 = vpack.c.b16 %v5952, %v5950
        %v5959 = vpack.c.b16 %v5953, %v5951
        %v5960 = vpack.c.b16 %v5956, %v5954
        %v5961 = vpack.c.b16 %v5957, %v5955
        %v5967 = vsel %vm4144, %v5926, 0
        %v5970 = vsel %vm4144, %v5927, 0
        %v5973 = vsel %vm4144, %v5928, 0
        %v5976 = vsel %vm4144, %v5929, 0
        %5978 = vmatprep.subr.bf16.mxu0 0
        %5979 = vmatpush1.bf16.msra.mxu0 0
        %5980 = vmatprep.subr.bf16.mxu0 0
        %5981 = vmatpush1.bf16.msra.mxu0 0
        %5982 = vmatprep.subr.bf16.mxu0 0
        %5983 = vmatpush1.bf16.msra.mxu0 0
        %5984 = vmatprep.subr.bf16.mxu0 0
        %5985 = vmatpush1.bf16.msra.mxu0 0
        %5986 = vmatprep.subr.bf16.mxu0 0
        %5987 = vmatpush1.bf16.msra.mxu0 0
        %5988 = vmatprep.subr.bf16.mxu0 0
        %5989 = vmatpush1.bf16.msra.mxu0 0
        %5990 = vmatprep.subr.bf16.mxu0 %v5961
        %5991 = vmatpush1.bf16.msra.mxu0 %v5960
        %5992 = vmatprep.subr.bf16.mxu0 %v5959
        %5993 = vmatpush1.bf16.msra.mxu0 %v5958
        %5994 = vmatprep.subr.bf16.mxu0 0
        %5995 = vmatpush2.bf16.msra.mxu0 0
        %5996 = vmatprep.subr.bf16.mxu0 0
        %5997 = vmatpush2.bf16.msra.mxu0 0
        %5998 = vmatprep.subr.bf16.mxu0 0
        %5999 = vmatpush2.bf16.msra.mxu0 0
        %6000 = vmatprep.subr.bf16.mxu0 0
        %6001 = vmatpush2.bf16.msra.mxu0 0
        %6002 = vmatprep.subr.bf16.mxu0 0
        %6003 = vmatpush2.bf16.msra.mxu0 0
        %6004 = vmatprep.subr.bf16.mxu0 0
        %6005 = vmatpush2.bf16.msra.mxu0 0
        %6006 = vmatprep.subr.bf16.mxu0 0
        %6007 = vmatpush2.bf16.msra.mxu0 0
        %6008 = vmatprep.subr.bf16.mxu0 0
        %6009 = vmatpush2.bf16.msra.mxu0 0
        %6010 = vmatprep.mubr.bf16.mxu0 0
        %6011 = vmatmul.mubr.bf16.gmra.mxu0 %v5967
        %v6012 = vpop.f32.mrf.mxu0
        %v6013 = vadd.f32 %v5939, %v6012
        %v6014 = vpop.f32.mrf.mxu0
        %v6015 = vadd.f32 %v5943, %v6014
        %v6016 = vpop.f32.mrf.mxu0
        %v6017 = vadd.f32 %v5939, %v6016
        %v6018 = vpop.f32.mrf.mxu0
        %v6019 = vadd.f32 %v5943, %v6018
        %6020 = vmatprep.mubr.bf16.mxu0 0
        %6021 = vmatmul.mubr.bf16.gmra.mxu0 %v5970
        %v6022 = vpop.f32.mrf.mxu0
        %v6023 = vadd.f32 %v5939, %v6022
        %v6024 = vpop.f32.mrf.mxu0
        %v6025 = vadd.f32 %v5943, %v6024
        %v6026 = vpop.f32.mrf.mxu0
        %v6027 = vadd.f32 %v5939, %v6026
        %v6028 = vpop.f32.mrf.mxu0
        %v6029 = vadd.f32 %v5943, %v6028
        %6030 = vmatprep.mubr.bf16.mxu0 0
        %6031 = vmatmul.mubr.bf16.gmra.mxu0 %v5973
        %v6032 = vpop.f32.mrf.mxu0
        %v6033 = vadd.f32 %v5939, %v6032
        %v6034 = vpop.f32.mrf.mxu0
        %v6035 = vadd.f32 %v5943, %v6034
        %v6036 = vpop.f32.mrf.mxu0
        %v6037 = vadd.f32 %v5939, %v6036
        %v6038 = vpop.f32.mrf.mxu0
        %v6039 = vadd.f32 %v5943, %v6038
        %6040 = vmatprep.mubr.bf16.mxu0 0
        %6041 = vmatmul.mubr.bf16.gmra.mxu0 %v5976
        %v6042 = vpop.f32.mrf.mxu0
        %v6043 = vadd.f32 %v5939, %v6042
        %v6044 = vpop.f32.mrf.mxu0
        %v6045 = vadd.f32 %v5943, %v6044
        %v6046 = vpop.f32.mrf.mxu0
        %v6047 = vpop.f32.mrf.mxu0
        %6048 = vdwg.mxu0
        %6049 = vst [vmem:[#allocation2] sm:$0xff] %v6013
        %6050 = vst.msk [vmem:[#allocation2 + $0x8] sm:$0xff] %vm5373, %v6015
        %6051 = vst [vmem:[#allocation2 + $0x10] sm:$0xff] %v6017
        %6052 = vst.msk [vmem:[#allocation2 + $0x18] sm:$0xff] %vm5373, %v6019
        %6053 = vst [vmem:[#allocation2 + $0x20] sm:$0xff] %v6023
        %6054 = vst.msk [vmem:[#allocation2 + $0x28] sm:$0xff] %vm5373, %v6025
        %6055 = vst [vmem:[#allocation2 + $0x30] sm:$0xff] %v6027
        %6056 = vst.msk [vmem:[#allocation2 + $0x38] sm:$0xff] %vm5373, %v6029
        %6057 = vst [vmem:[#allocation2 + $0x40] sm:$0xff] %v6033
        %6058 = vst.msk [vmem:[#allocation2 + $0x48] sm:$0xff] %vm5373, %v6035
        %6059 = vst [vmem:[#allocation2 + $0x50] sm:$0xff] %v6037
        %6060 = vst.msk [vmem:[#allocation2 + $0x58] sm:$0xff] %vm5373, %v6039
        %6061 = vst [vmem:[#allocation2 + $0x60] sm:$0xff] %v6043
        %6062 = vst.msk [vmem:[#allocation2 + $0x68] sm:$0xff] %vm5373, %v6045
        %v6063 = vld [vmem:[%s5] sm:$0xff]
        %v6064 = vld [vmem:[%s5 + $0x8] sm:$0xff]
        %v6065 = vld [vmem:[%s5 + $0x10] sm:$0xff]
        %v6066 = vld [vmem:[%s5 + $0x18] sm:$0xff]
        %v6067 = vld [vmem:[%s5 + $0x20] sm:$0xff]
        %v6068 = vld [vmem:[%s5 + $0x28] sm:$0xff]
        %v6069 = vld [vmem:[%s5 + $0x30] sm:$0xff]
        %v6070 = vld [vmem:[%s5 + $0x38] sm:$0xff]
        %v6071 = vld [vmem:[%s6] sm:$0x3]
        %v6072 = vld [vmem:[#allocation2] sm:$0xff]
        %s6073 = scalar_lea.vmem [#allocation2], 96
        %v6074 = vld [vmem:[%s6073] sm:$0xff]
        %v6075 = vld [vmem:[%s6073 + $0x8] sm:$0xff]
        %v6077 = vlaneseq
        %v6078 = vshrl.u32 %v6077, 7
        %v6079 = vsub.s32 0, %v6078
        %v6080 = vrot.slane %v6071, %v6079
        %v6081 = vlaneseq
        %v6082 = vshrl.u32 %v6081, 7
        %v6083 = vsub.s32 1, %v6082
        %v6084 = vrot.slane %v6071, %v6083
        %v6095 = vunpack.c.l.b16 %v6063
        %v6096 = vunpack.c.h.b16 %v6063
        %v6097 = vunpack.c.l.b16 %v6064
        %v6098 = vunpack.c.h.b16 %v6064
        %v6099 = vunpack.c.l.b16 %v6065
        %v6100 = vunpack.c.h.b16 %v6065
        %v6101 = vunpack.c.l.b16 %v6066
        %v6102 = vunpack.c.h.b16 %v6066
        %v6103 = vunpack.c.l.b16 %v6067
        %v6104 = vunpack.c.h.b16 %v6067
        %v6105 = vunpack.c.l.b16 %v6068
        %v6106 = vunpack.c.h.b16 %v6068
        %v6107 = vunpack.c.l.b16 %v6069
        %v6108 = vunpack.c.h.b16 %v6069
        %v6109 = vunpack.c.l.b16 %v6070
        %v6110 = vunpack.c.h.b16 %v6070
        %v6111 = vpack.c.b16 %v6097, %v6095
        %v6112 = vpack.c.b16 %v6098, %v6096
        %v6113 = vpack.c.b16 %v6101, %v6099
        %v6114 = vpack.c.b16 %v6102, %v6100
        %v6115 = vpack.c.b16 %v6105, %v6103
        %v6116 = vpack.c.b16 %v6106, %v6104
        %v6117 = vpack.c.b16 %v6109, %v6107
        %v6118 = vpack.c.b16 %v6110, %v6108
        %v6128 = vsel %vm5373, 0, 0
        %6130 = vmatprep.subr.bf16.mxu0 0
        %6131 = vmatpush1.bf16.msra.mxu0 0
        %6132 = vmatprep.subr.bf16.mxu0 0
        %6133 = vmatpush1.bf16.msra.mxu0 0
        %6134 = vmatprep.subr.bf16.mxu0 0
        %6135 = vmatpush1.bf16.msra.mxu0 0
        %6136 = vmatprep.subr.bf16.mxu0 0
        %6137 = vmatpush1.bf16.msra.mxu0 0
        %6138 = vmatprep.subr.bf16.mxu0 %v6118
        %6139 = vmatpush1.bf16.msra.mxu0 %v6117
        %6140 = vmatprep.subr.bf16.mxu0 %v6116
        %6141 = vmatpush1.bf16.msra.mxu0 %v6115
        %6142 = vmatprep.subr.bf16.mxu0 %v6114
        %6143 = vmatpush1.bf16.msra.mxu0 %v6113
        %6144 = vmatprep.subr.bf16.mxu0 %v6112
        %6145 = vmatpush1.bf16.msra.mxu0 %v6111
        %6146 = vmatprep.subr.bf16.mxu0 0
        %6147 = vmatpush2.bf16.msra.mxu0 0
        %6148 = vmatprep.subr.bf16.mxu0 0
        %6149 = vmatpush2.bf16.msra.mxu0 0
        %6150 = vmatprep.subr.bf16.mxu0 0
        %6151 = vmatpush2.bf16.msra.mxu0 0
        %6152 = vmatprep.subr.bf16.mxu0 0
        %6153 = vmatpush2.bf16.msra.mxu0 0
        %6154 = vmatprep.subr.bf16.mxu0 0
        %6155 = vmatpush2.bf16.msra.mxu0 0
        %6156 = vmatprep.subr.bf16.mxu0 0
        %6157 = vmatpush2.bf16.msra.mxu0 0
        %6158 = vmatprep.subr.bf16.mxu0 0
        %6159 = vmatpush2.bf16.msra.mxu0 0
        %6160 = vmatprep.subr.bf16.mxu0 0
        %6161 = vmatpush2.bf16.msra.mxu0 0
        %6162 = vmatprep.mubr.bf16.mxu0 0
        %6163 = vmatmul.mubr.bf16.gmra.mxu0 %v6128
        %v6164 = vpop.f32.mrf.mxu0
        %v6165 = vadd.f32 %v6080, %v6164
        %v6166 = vpop.f32.mrf.mxu0
        %v6167 = vadd.f32 %v6084, %v6166
        %v6168 = vpop.f32.mrf.mxu0
        %v6169 = vpop.f32.mrf.mxu0
        %6170 = vdwg.mxu0
        %v6171 = vadd.f32 %v6072, %v6165
        %v6172 = vxor.u32 %v6171, 2147483648
        %v6173 = vmul.f32 %v6172, 1.442695
        %v6174 = vpow.pop %v6173
        %v6175 = vadd.f32 %v6174, 1.0
        %v6176 = vrcp.pop %v6175
        %v6177 = vmul.f32 1.0, %v6176
        %6179 = vrot.lane.b32.xlu0 %v6165, 64
        %v6180 = vpop.permute.xlu0 %6179
        %v6182 = vmul.f32 %v6177, %v6180
        %6184 = vrot.lane.b32.xlu0 %v6182, 64
        %v6185 = vpop.permute.xlu0 %6184
        %v6187 = vadd.f32 %v6072, %v6185
        %v6188 = vtanh.pop %v6187
        %v6189 = vsub.f32 1.0, %v6177
        %6191 = vrot.lane.b32.xlu0 %v6188, 96
        %v6192 = vpop.permute.xlu0 %6191
        %v6194 = vmul.f32 %v6189, %v6192
        %v6195 = vmul.f32 %v6177, 0.0
        %v6196 = vadd.f32 %v6194, %v6195
        %v6197 = vadd.f32 %v6074, %v6165
        %v6198 = vxor.u32 %v6197, 2147483648
        %v6199 = vmul.f32 %v6198, 1.442695
        %v6200 = vpow.pop %v6199
        %v6201 = vadd.f32 %v6200, 1.0
        %v6202 = vrcp.pop %v6201
        %v6203 = vmul.f32 1.0, %v6202
        %v6204 = vadd.f32 %v6075, %v6167
        %v6205 = vxor.u32 %v6204, 2147483648
        %v6206 = vmul.f32 %v6205, 1.442695
        %v6207 = vpow.pop %v6206
        %v6208 = vadd.f32 %v6207, 1.0
        %v6209 = vrcp.pop %v6208
        %v6210 = vmul.f32 1.0, %v6209
        %6212 = vrot.lane.b32.xlu0 %v6167, 64
        %v6213 = vpop.permute.xlu0 %6212
        %v6215 = vmul.f32 %v6203, %v6213
        %6217 = vrot.lane.b32.xlu0 %v6215, 64
        %v6218 = vpop.permute.xlu0 %6217
        %v6220 = vadd.f32 %v6075, %v6218
        %v6221 = vtanh.pop %v6220
        %v6222 = vsub.f32 1.0, %v6210
        %6224 = vrot.lane.b32.xlu0 %v6221, 96
        %v6225 = vpop.permute.xlu0 %6224
        %v6227 = vmul.f32 %v6222, %v6225
        %v6228 = vmul.f32 %v6210, 0.0
        %v6229 = vadd.f32 %v6227, %v6228
        %6231 = vrot.lane.b32.xlu0 %v6196, 96
        %v6232 = vpop.permute.xlu0 %6231
        %6234 = vst.msk [vmem:[#allocation3] sm:$0xff] %vm4144, %v6232
        %s6235 = scalar_lea.vmem [#allocation4], 48
        %6236 = vst.msk [vmem:[%s6235] sm:$0xff] %vm4144, %v6229
        %6238 = vrot.lane.b32.xlu0 %v6229, 32
        %v6239 = vpop.permute.xlu0 %6238
        %v6241 = vsel %vm4144, %v6232, %v6239
        %s6242 = scalar_lea.vmem [#allocation2], 16
        %v6243 = vld [vmem:[%s6242] sm:$0xff]
        %s6244 = scalar_lea.vmem [#allocation2], 80
        %v6245 = vld [vmem:[%s6244] sm:$0xff]
        %v6246 = vld [vmem:[%s6244 + $0x8] sm:$0xff]
        %v6247 = vpack.c.bf16 %v6241, %v6241
        %v6249 = vsel %vm5373, %v6247, 0
        %6251 = vmatprep.subr.bf16.mxu0 0
        %6252 = vmatpush1.bf16.msra.mxu0 0
        %6253 = vmatprep.subr.bf16.mxu0 0
        %6254 = vmatpush1.bf16.msra.mxu0 0
        %6255 = vmatprep.subr.bf16.mxu0 0
        %6256 = vmatpush1.bf16.msra.mxu0 0
        %6257 = vmatprep.subr.bf16.mxu0 0
        %6258 = vmatpush1.bf16.msra.mxu0 0
        %6259 = vmatprep.subr.bf16.mxu0 %v6118
        %6260 = vmatpush1.bf16.msra.mxu0 %v6117
        %6261 = vmatprep.subr.bf16.mxu0 %v6116
        %6262 = vmatpush1.bf16.msra.mxu0 %v6115
        %6263 = vmatprep.subr.bf16.mxu0 %v6114
        %6264 = vmatpush1.bf16.msra.mxu0 %v6113
        %6265 = vmatprep.subr.bf16.mxu0 %v6112
        %6266 = vmatpush1.bf16.msra.mxu0 %v6111
        %6267 = vmatprep.subr.bf16.mxu0 0
        %6268 = vmatpush2.bf16.msra.mxu0 0
        %6269 = vmatprep.subr.bf16.mxu0 0
        %6270 = vmatpush2.bf16.msra.mxu0 0
        %6271 = vmatprep.subr.bf16.mxu0 0
        %6272 = vmatpush2.bf16.msra.mxu0 0
        %6273 = vmatprep.subr.bf16.mxu0 0
        %6274 = vmatpush2.bf16.msra.mxu0 0
        %6275 = vmatprep.subr.bf16.mxu0 0
        %6276 = vmatpush2.bf16.msra.mxu0 0
        %6277 = vmatprep.subr.bf16.mxu0 0
        %6278 = vmatpush2.bf16.msra.mxu0 0
        %6279 = vmatprep.subr.bf16.mxu0 0
        %6280 = vmatpush2.bf16.msra.mxu0 0
        %6281 = vmatprep.subr.bf16.mxu0 0
        %6282 = vmatpush2.bf16.msra.mxu0 0
        %6283 = vmatprep.mubr.bf16.mxu0 0
        %6284 = vmatmul.mubr.bf16.gmra.mxu0 %v6249
        %v6285 = vpop.f32.mrf.mxu0
        %v6286 = vadd.f32 %v6080, %v6285
        %v6287 = vpop.f32.mrf.mxu0
        %v6288 = vadd.f32 %v6084, %v6287
        %v6289 = vpop.f32.mrf.mxu0
        %v6290 = vpop.f32.mrf.mxu0
        %6291 = vdwg.mxu0
        %v6292 = vadd.f32 %v6243, %v6286
        %v6293 = vxor.u32 %v6292, 2147483648
        %v6294 = vmul.f32 %v6293, 1.442695
        %v6295 = vpow.pop %v6294
        %v6296 = vadd.f32 %v6295, 1.0
        %v6297 = vrcp.pop %v6296
        %v6298 = vmul.f32 1.0, %v6297
        %6300 = vrot.lane.b32.xlu0 %v6286, 64
        %v6301 = vpop.permute.xlu0 %6300
        %v6303 = vmul.f32 %v6298, %v6301
        %6305 = vrot.lane.b32.xlu0 %v6303, 64
        %v6306 = vpop.permute.xlu0 %6305
        %v6308 = vadd.f32 %v6243, %v6306
        %v6309 = vtanh.pop %v6308
        %v6310 = vsub.f32 1.0, %v6298
        %6312 = vrot.lane.b32.xlu0 %v6309, 96
        %v6313 = vpop.permute.xlu0 %6312
        %v6315 = vmul.f32 %v6310, %v6313
        %6317 = vrot.lane.b32.xlu0 %v6241, 32
        %v6318 = vpop.permute.xlu0 %6317
        %v6320 = vmul.f32 %v6298, %v6318
        %v6321 = vadd.f32 %v6315, %v6320
        %v6322 = vadd.f32 %v6245, %v6286
        %v6323 = vxor.u32 %v6322, 2147483648
        %v6324 = vmul.f32 %v6323, 1.442695
        %v6325 = vpow.pop %v6324
        %v6326 = vadd.f32 %v6325, 1.0
        %v6327 = vrcp.pop %v6326
        %v6328 = vmul.f32 1.0, %v6327
        %v6329 = vadd.f32 %v6246, %v6288
        %v6330 = vxor.u32 %v6329, 2147483648
        %v6331 = vmul.f32 %v6330, 1.442695
        %v6332 = vpow.pop %v6331
        %v6333 = vadd.f32 %v6332, 1.0
        %v6334 = vrcp.pop %v6333
        %v6335 = vmul.f32 1.0, %v6334
        %6337 = vrot.lane.b32.xlu0 %v6288, 64
        %v6338 = vpop.permute.xlu0 %6337
        %v6340 = vmul.f32 %v6328, %v6338
        %6342 = vrot.lane.b32.xlu0 %v6340, 64
        %v6343 = vpop.permute.xlu0 %6342
        %v6345 = vadd.f32 %v6246, %v6343
        %v6346 = vtanh.pop %v6345
        %v6347 = vsub.f32 1.0, %v6335
        %6349 = vrot.lane.b32.xlu0 %v6346, 96
        %v6350 = vpop.permute.xlu0 %6349
        %v6352 = vmul.f32 %v6347, %v6350
        %6353 = vrot.lane.b32.xlu0 %v6241, 96
        %v6354 = vpop.permute.xlu0 %6353
        %v6356 = vmul.f32 %v6335, %v6354
        %v6357 = vadd.f32 %v6352, %v6356
        %6359 = vrot.lane.b32.xlu0 %v6321, 96
        %v6360 = vpop.permute.xlu0 %6359
        %s6362 = scalar_lea.vmem [#allocation3], 8
        %6363 = vst.msk [vmem:[%s6362] sm:$0xff] %vm4144, %v6360
        %s6364 = scalar_lea.vmem [#allocation4], 40
        %6365 = vst.msk [vmem:[%s6364] sm:$0xff] %vm4144, %v6357
        %6367 = vrot.lane.b32.xlu0 %v6357, 32
        %v6368 = vpop.permute.xlu0 %6367
        %v6370 = vsel %vm4144, %v6360, %v6368
        %s6371 = scalar_lea.vmem [#allocation2], 32
        %v6372 = vld [vmem:[%s6371] sm:$0xff]
        %s6373 = scalar_lea.vmem [#allocation2], 64
        %v6374 = vld [vmem:[%s6373] sm:$0xff]
        %v6375 = vld [vmem:[%s6373 + $0x8] sm:$0xff]
        %v6376 = vpack.c.bf16 %v6370, %v6370
        %v6378 = vsel %vm5373, %v6376, 0
        %6380 = vmatprep.subr.bf16.mxu0 0
        %6381 = vmatpush1.bf16.msra.mxu0 0
        %6382 = vmatprep.subr.bf16.mxu0 0
        %6383 = vmatpush1.bf16.msra.mxu0 0
        %6384 = vmatprep.subr.bf16.mxu0 0
        %6385 = vmatpush1.bf16.msra.mxu0 0
        %6386 = vmatprep.subr.bf16.mxu0 0
        %6387 = vmatpush1.bf16.msra.mxu0 0
        %6388 = vmatprep.subr.bf16.mxu0 %v6118
        %6389 = vmatpush1.bf16.msra.mxu0 %v6117
        %6390 = vmatprep.subr.bf16.mxu0 %v6116
        %6391 = vmatpush1.bf16.msra.mxu0 %v6115
        %6392 = vmatprep.subr.bf16.mxu0 %v6114
        %6393 = vmatpush1.bf16.msra.mxu0 %v6113
        %6394 = vmatprep.subr.bf16.mxu0 %v6112
        %6395 = vmatpush1.bf16.msra.mxu0 %v6111
        %6396 = vmatprep.subr.bf16.mxu0 0
        %6397 = vmatpush2.bf16.msra.mxu0 0
        %6398 = vmatprep.subr.bf16.mxu0 0
        %6399 = vmatpush2.bf16.msra.mxu0 0
        %6400 = vmatprep.subr.bf16.mxu0 0
        %6401 = vmatpush2.bf16.msra.mxu0 0
        %6402 = vmatprep.subr.bf16.mxu0 0
        %6403 = vmatpush2.bf16.msra.mxu0 0
        %6404 = vmatprep.subr.bf16.mxu0 0
        %6405 = vmatpush2.bf16.msra.mxu0 0
        %6406 = vmatprep.subr.bf16.mxu0 0
        %6407 = vmatpush2.bf16.msra.mxu0 0
        %6408 = vmatprep.subr.bf16.mxu0 0
        %6409 = vmatpush2.bf16.msra.mxu0 0
        %6410 = vmatprep.subr.bf16.mxu0 0
        %6411 = vmatpush2.bf16.msra.mxu0 0
        %6412 = vmatprep.mubr.bf16.mxu0 0
        %6413 = vmatmul.mubr.bf16.gmra.mxu0 %v6378
        %v6414 = vpop.f32.mrf.mxu0
        %v6415 = vadd.f32 %v6080, %v6414
        %v6416 = vpop.f32.mrf.mxu0
        %v6417 = vadd.f32 %v6084, %v6416
        %v6418 = vpop.f32.mrf.mxu0
        %v6419 = vpop.f32.mrf.mxu0
        %6420 = vdwg.mxu0
        %v6421 = vadd.f32 %v6372, %v6415
        %v6422 = vxor.u32 %v6421, 2147483648
        %v6423 = vmul.f32 %v6422, 1.442695
        %v6424 = vpow.pop %v6423
        %v6425 = vadd.f32 %v6424, 1.0
        %v6426 = vrcp.pop %v6425
        %v6427 = vmul.f32 1.0, %v6426
        %6429 = vrot.lane.b32.xlu0 %v6415, 64
        %v6430 = vpop.permute.xlu0 %6429
        %v6432 = vmul.f32 %v6427, %v6430
        %6434 = vrot.lane.b32.xlu0 %v6432, 64
        %v6435 = vpop.permute.xlu0 %6434
        %v6437 = vadd.f32 %v6372, %v6435
        %v6438 = vtanh.pop %v6437
        %v6439 = vsub.f32 1.0, %v6427
        %6441 = vrot.lane.b32.xlu0 %v6438, 96
        %v6442 = vpop.permute.xlu0 %6441
        %v6444 = vmul.f32 %v6439, %v6442
        %6446 = vrot.lane.b32.xlu0 %v6370, 32
        %v6447 = vpop.permute.xlu0 %6446
        %v6449 = vmul.f32 %v6427, %v6447
        %v6450 = vadd.f32 %v6444, %v6449
        %v6451 = vadd.f32 %v6374, %v6415
        %v6452 = vxor.u32 %v6451, 2147483648
        %v6453 = vmul.f32 %v6452, 1.442695
        %v6454 = vpow.pop %v6453
        %v6455 = vadd.f32 %v6454, 1.0
        %v6456 = vrcp.pop %v6455
        %v6457 = vmul.f32 1.0, %v6456
        %v6458 = vadd.f32 %v6375, %v6417
        %v6459 = vxor.u32 %v6458, 2147483648
        %v6460 = vmul.f32 %v6459, 1.442695
        %v6461 = vpow.pop %v6460
        %v6462 = vadd.f32 %v6461, 1.0
        %v6463 = vrcp.pop %v6462
        %v6464 = vmul.f32 1.0, %v6463
        %6466 = vrot.lane.b32.xlu0 %v6417, 64
        %v6467 = vpop.permute.xlu0 %6466
        %v6469 = vmul.f32 %v6457, %v6467
        %6471 = vrot.lane.b32.xlu0 %v6469, 64
        %v6472 = vpop.permute.xlu0 %6471
        %v6474 = vadd.f32 %v6375, %v6472
        %v6475 = vtanh.pop %v6474
        %v6476 = vsub.f32 1.0, %v6464
        %6478 = vrot.lane.b32.xlu0 %v6475, 96
        %v6479 = vpop.permute.xlu0 %6478
        %v6481 = vmul.f32 %v6476, %v6479
        %6482 = vrot.lane.b32.xlu0 %v6370, 96
        %v6483 = vpop.permute.xlu0 %6482
        %v6485 = vmul.f32 %v6464, %v6483
        %v6486 = vadd.f32 %v6481, %v6485
        %6488 = vrot.lane.b32.xlu0 %v6450, 96
        %v6489 = vpop.permute.xlu0 %6488
        %s6491 = scalar_lea.vmem [#allocation3], 16
        %6492 = vst.msk [vmem:[%s6491] sm:$0xff] %vm4144, %v6489
        %s6493 = scalar_lea.vmem [#allocation4], 32
        %6494 = vst.msk [vmem:[%s6493] sm:$0xff] %vm4144, %v6486
        %6496 = vrot.lane.b32.xlu0 %v6486, 32
        %v6497 = vpop.permute.xlu0 %6496
        %v6499 = vsel %vm4144, %v6489, %v6497
        %s6500 = scalar_lea.vmem [#allocation2], 48
        %v6501 = vld [vmem:[%s6500] sm:$0xff]
        %v6502 = vld [vmem:[%s6500 + $0x8] sm:$0xff]
        %v6503 = vpack.c.bf16 %v6499, %v6499
        %v6505 = vsel %vm5373, %v6503, 0
        %6507 = vmatprep.subr.bf16.mxu0 0
        %6508 = vmatpush1.bf16.msra.mxu0 0
        %6509 = vmatprep.subr.bf16.mxu0 0
        %6510 = vmatpush1.bf16.msra.mxu0 0
        %6511 = vmatprep.subr.bf16.mxu0 0
        %6512 = vmatpush1.bf16.msra.mxu0 0
        %6513 = vmatprep.subr.bf16.mxu0 0
        %6514 = vmatpush1.bf16.msra.mxu0 0
        %6515 = vmatprep.subr.bf16.mxu0 %v6118
        %6516 = vmatpush1.bf16.msra.mxu0 %v6117
        %6517 = vmatprep.subr.bf16.mxu0 %v6116
        %6518 = vmatpush1.bf16.msra.mxu0 %v6115
        %6519 = vmatprep.subr.bf16.mxu0 %v6114
        %6520 = vmatpush1.bf16.msra.mxu0 %v6113
        %6521 = vmatprep.subr.bf16.mxu0 %v6112
        %6522 = vmatpush1.bf16.msra.mxu0 %v6111
        %6523 = vmatprep.subr.bf16.mxu0 0
        %6524 = vmatpush2.bf16.msra.mxu0 0
        %6525 = vmatprep.subr.bf16.mxu0 0
        %6526 = vmatpush2.bf16.msra.mxu0 0
        %6527 = vmatprep.subr.bf16.mxu0 0
        %6528 = vmatpush2.bf16.msra.mxu0 0
        %6529 = vmatprep.subr.bf16.mxu0 0
        %6530 = vmatpush2.bf16.msra.mxu0 0
        %6531 = vmatprep.subr.bf16.mxu0 0
        %6532 = vmatpush2.bf16.msra.mxu0 0
        %6533 = vmatprep.subr.bf16.mxu0 0
        %6534 = vmatpush2.bf16.msra.mxu0 0
        %6535 = vmatprep.subr.bf16.mxu0 0
        %6536 = vmatpush2.bf16.msra.mxu0 0
        %6537 = vmatprep.subr.bf16.mxu0 0
        %6538 = vmatpush2.bf16.msra.mxu0 0
        %6539 = vmatprep.mubr.bf16.mxu0 0
        %6540 = vmatmul.mubr.bf16.gmra.mxu0 %v6505
        %v6541 = vpop.f32.mrf.mxu0
        %v6542 = vadd.f32 %v6080, %v6541
        %v6543 = vpop.f32.mrf.mxu0
        %v6544 = vadd.f32 %v6084, %v6543
        %v6545 = vpop.f32.mrf.mxu0
        %v6546 = vpop.f32.mrf.mxu0
        %6547 = vdwg.mxu0
        %v6548 = vadd.f32 %v6501, %v6542
        %v6549 = vxor.u32 %v6548, 2147483648
        %v6550 = vmul.f32 %v6549, 1.442695
        %v6551 = vpow.pop %v6550
        %v6552 = vadd.f32 %v6551, 1.0
        %v6553 = vrcp.pop %v6552
        %v6554 = vmul.f32 1.0, %v6553
        %6556 = vrot.lane.b32.xlu0 %v6542, 64
        %v6557 = vpop.permute.xlu0 %6556
        %v6559 = vmul.f32 %v6554, %v6557
        %6561 = vrot.lane.b32.xlu0 %v6559, 64
        %v6562 = vpop.permute.xlu0 %6561
        %v6564 = vadd.f32 %v6501, %v6562
        %v6565 = vtanh.pop %v6564
        %v6566 = vsub.f32 1.0, %v6554
        %6568 = vrot.lane.b32.xlu0 %v6565, 96
        %v6569 = vpop.permute.xlu0 %6568
        %v6571 = vmul.f32 %v6566, %v6569
        %6573 = vrot.lane.b32.xlu0 %v6499, 32
        %v6574 = vpop.permute.xlu0 %6573
        %v6576 = vmul.f32 %v6554, %v6574
        %v6577 = vadd.f32 %v6571, %v6576
        %v6578 = vadd.f32 %v6502, %v6544
        %v6579 = vxor.u32 %v6578, 2147483648
        %v6580 = vmul.f32 %v6579, 1.442695
        %v6581 = vpow.pop %v6580
        %v6582 = vadd.f32 %v6581, 1.0
        %v6583 = vrcp.pop %v6582
        %v6584 = vmul.f32 1.0, %v6583
        %6586 = vrot.lane.b32.xlu0 %v6544, 64
        %v6587 = vpop.permute.xlu0 %6586
        %v6589 = vmul.f32 %v6554, %v6587
        %6591 = vrot.lane.b32.xlu0 %v6589, 64
        %v6592 = vpop.permute.xlu0 %6591
        %v6594 = vadd.f32 %v6502, %v6592
        %v6595 = vtanh.pop %v6594
        %v6596 = vsub.f32 1.0, %v6584
        %6598 = vrot.lane.b32.xlu0 %v6595, 96
        %v6599 = vpop.permute.xlu0 %6598
        %v6601 = vmul.f32 %v6596, %v6599
        %6602 = vrot.lane.b32.xlu0 %v6499, 96
        %v6603 = vpop.permute.xlu0 %6602
        %v6605 = vmul.f32 %v6584, %v6603
        %v6606 = vadd.f32 %v6601, %v6605
        %6608 = vrot.lane.b32.xlu0 %v6577, 96
        %v6609 = vpop.permute.xlu0 %6608
        %s6611 = scalar_lea.vmem [#allocation3], 24
        %6612 = vst.msk [vmem:[%s6611] sm:$0xff] %vm4144, %v6609
        %s6613 = scalar_lea.vmem [#allocation4], 24
        %6614 = vst.msk [vmem:[%s6613] sm:$0xff] %vm4144, %v6606
        %6616 = vrot.lane.b32.xlu0 %v6606, 32
        %v6617 = vpop.permute.xlu0 %6616
        %v6619 = vsel %vm4144, %v6609, %v6617
        %v6620 = vld [vmem:[%s6373] sm:$0xff]
        %v6621 = vld [vmem:[%s6371] sm:$0xff]
        %v6622 = vld [vmem:[%s6371 + $0x8] sm:$0xff]
        %v6623 = vpack.c.bf16 %v6619, %v6619
        %v6625 = vsel %vm5373, %v6623, 0
        %6627 = vmatprep.subr.bf16.mxu0 0
        %6628 = vmatpush1.bf16.msra.mxu0 0
        %6629 = vmatprep.subr.bf16.mxu0 0
        %6630 = vmatpush1.bf16.msra.mxu0 0
        %6631 = vmatprep.subr.bf16.mxu0 0
        %6632 = vmatpush1.bf16.msra.mxu0 0
        %6633 = vmatprep.subr.bf16.mxu0 0
        %6634 = vmatpush1.bf16.msra.mxu0 0
        %6635 = vmatprep.subr.bf16.mxu0 %v6118
        %6636 = vmatpush1.bf16.msra.mxu0 %v6117
        %6637 = vmatprep.subr.bf16.mxu0 %v6116
        %6638 = vmatpush1.bf16.msra.mxu0 %v6115
        %6639 = vmatprep.subr.bf16.mxu0 %v6114
        %6640 = vmatpush1.bf16.msra.mxu0 %v6113
        %6641 = vmatprep.subr.bf16.mxu0 %v6112
        %6642 = vmatpush1.bf16.msra.mxu0 %v6111
        %6643 = vmatprep.subr.bf16.mxu0 0
        %6644 = vmatpush2.bf16.msra.mxu0 0
        %6645 = vmatprep.subr.bf16.mxu0 0
        %6646 = vmatpush2.bf16.msra.mxu0 0
        %6647 = vmatprep.subr.bf16.mxu0 0
        %6648 = vmatpush2.bf16.msra.mxu0 0
        %6649 = vmatprep.subr.bf16.mxu0 0
        %6650 = vmatpush2.bf16.msra.mxu0 0
        %6651 = vmatprep.subr.bf16.mxu0 0
        %6652 = vmatpush2.bf16.msra.mxu0 0
        %6653 = vmatprep.subr.bf16.mxu0 0
        %6654 = vmatpush2.bf16.msra.mxu0 0
        %6655 = vmatprep.subr.bf16.mxu0 0
        %6656 = vmatpush2.bf16.msra.mxu0 0
        %6657 = vmatprep.subr.bf16.mxu0 0
        %6658 = vmatpush2.bf16.msra.mxu0 0
        %6659 = vmatprep.mubr.bf16.mxu0 0
        %6660 = vmatmul.mubr.bf16.gmra.mxu0 %v6625
        %v6661 = vpop.f32.mrf.mxu0
        %v6662 = vadd.f32 %v6080, %v6661
        %v6663 = vpop.f32.mrf.mxu0
        %v6664 = vadd.f32 %v6084, %v6663
        %v6665 = vpop.f32.mrf.mxu0
        %v6666 = vpop.f32.mrf.mxu0
        %6667 = vdwg.mxu0
        %v6668 = vadd.f32 %v6620, %v6662
        %v6669 = vxor.u32 %v6668, 2147483648
        %v6670 = vmul.f32 %v6669, 1.442695
        %v6671 = vpow.pop %v6670
        %v6672 = vadd.f32 %v6671, 1.0
        %v6673 = vrcp.pop %v6672
        %v6674 = vmul.f32 1.0, %v6673
        %6676 = vrot.lane.b32.xlu0 %v6662, 64
        %v6677 = vpop.permute.xlu0 %6676
        %v6679 = vmul.f32 %v6674, %v6677
        %6681 = vrot.lane.b32.xlu0 %v6679, 64
        %v6682 = vpop.permute.xlu0 %6681
        %v6684 = vadd.f32 %v6620, %v6682
        %v6685 = vtanh.pop %v6684
        %v6686 = vsub.f32 1.0, %v6674
        %6688 = vrot.lane.b32.xlu0 %v6685, 96
        %v6689 = vpop.permute.xlu0 %6688
        %v6691 = vmul.f32 %v6686, %v6689
        %6693 = vrot.lane.b32.xlu0 %v6619, 32
        %v6694 = vpop.permute.xlu0 %6693
        %v6696 = vmul.f32 %v6674, %v6694
        %v6697 = vadd.f32 %v6691, %v6696
        %v6698 = vadd.f32 %v6621, %v6662
        %v6699 = vxor.u32 %v6698, 2147483648
        %v6700 = vmul.f32 %v6699, 1.442695
        %v6701 = vpow.pop %v6700
        %v6702 = vadd.f32 %v6701, 1.0
        %v6703 = vrcp.pop %v6702
        %v6704 = vmul.f32 1.0, %v6703
        %v6705 = vadd.f32 %v6622, %v6664
        %v6706 = vxor.u32 %v6705, 2147483648
        %v6707 = vmul.f32 %v6706, 1.442695
        %v6708 = vpow.pop %v6707
        %v6709 = vadd.f32 %v6708, 1.0
        %v6710 = vrcp.pop %v6709
        %v6711 = vmul.f32 1.0, %v6710
        %6713 = vrot.lane.b32.xlu0 %v6664, 64
        %v6714 = vpop.permute.xlu0 %6713
        %v6716 = vmul.f32 %v6704, %v6714
        %6718 = vrot.lane.b32.xlu0 %v6716, 64
        %v6719 = vpop.permute.xlu0 %6718
        %v6721 = vadd.f32 %v6622, %v6719
        %v6722 = vtanh.pop %v6721
        %v6723 = vsub.f32 1.0, %v6711
        %6725 = vrot.lane.b32.xlu0 %v6722, 96
        %v6726 = vpop.permute.xlu0 %6725
        %v6728 = vmul.f32 %v6723, %v6726
        %6729 = vrot.lane.b32.xlu0 %v6619, 96
        %v6730 = vpop.permute.xlu0 %6729
        %v6732 = vmul.f32 %v6711, %v6730
        %v6733 = vadd.f32 %v6728, %v6732
        %6735 = vrot.lane.b32.xlu0 %v6697, 96
        %v6736 = vpop.permute.xlu0 %6735
        %s6738 = scalar_lea.vmem [#allocation3], 32
        %6739 = vst.msk [vmem:[%s6738] sm:$0xff] %vm4144, %v6736
        %s6740 = scalar_lea.vmem [#allocation4], 16
        %6741 = vst.msk [vmem:[%s6740] sm:$0xff] %vm4144, %v6733
        %6743 = vrot.lane.b32.xlu0 %v6733, 32
        %v6744 = vpop.permute.xlu0 %6743
        %v6746 = vsel %vm4144, %v6736, %v6744
        %v6747 = vld [vmem:[%s6244] sm:$0xff]
        %v6748 = vld [vmem:[%s6242] sm:$0xff]
        %v6749 = vld [vmem:[%s6242 + $0x8] sm:$0xff]
        %v6750 = vpack.c.bf16 %v6746, %v6746
        %v6752 = vsel %vm5373, %v6750, 0
        %6754 = vmatprep.subr.bf16.mxu0 0
        %6755 = vmatpush1.bf16.msra.mxu0 0
        %6756 = vmatprep.subr.bf16.mxu0 0
        %6757 = vmatpush1.bf16.msra.mxu0 0
        %6758 = vmatprep.subr.bf16.mxu0 0
        %6759 = vmatpush1.bf16.msra.mxu0 0
        %6760 = vmatprep.subr.bf16.mxu0 0
        %6761 = vmatpush1.bf16.msra.mxu0 0
        %6762 = vmatprep.subr.bf16.mxu0 %v6118
        %6763 = vmatpush1.bf16.msra.mxu0 %v6117
        %6764 = vmatprep.subr.bf16.mxu0 %v6116
        %6765 = vmatpush1.bf16.msra.mxu0 %v6115
        %6766 = vmatprep.subr.bf16.mxu0 %v6114
        %6767 = vmatpush1.bf16.msra.mxu0 %v6113
        %6768 = vmatprep.subr.bf16.mxu0 %v6112
        %6769 = vmatpush1.bf16.msra.mxu0 %v6111
        %6770 = vmatprep.subr.bf16.mxu0 0
        %6771 = vmatpush2.bf16.msra.mxu0 0
        %6772 = vmatprep.subr.bf16.mxu0 0
        %6773 = vmatpush2.bf16.msra.mxu0 0
        %6774 = vmatprep.subr.bf16.mxu0 0
        %6775 = vmatpush2.bf16.msra.mxu0 0
        %6776 = vmatprep.subr.bf16.mxu0 0
        %6777 = vmatpush2.bf16.msra.mxu0 0
        %6778 = vmatprep.subr.bf16.mxu0 0
        %6779 = vmatpush2.bf16.msra.mxu0 0
        %6780 = vmatprep.subr.bf16.mxu0 0
        %6781 = vmatpush2.bf16.msra.mxu0 0
        %6782 = vmatprep.subr.bf16.mxu0 0
        %6783 = vmatpush2.bf16.msra.mxu0 0
        %6784 = vmatprep.subr.bf16.mxu0 0
        %6785 = vmatpush2.bf16.msra.mxu0 0
        %6786 = vmatprep.mubr.bf16.mxu0 0
        %6787 = vmatmul.mubr.bf16.gmra.mxu0 %v6752
        %v6788 = vpop.f32.mrf.mxu0
        %v6789 = vadd.f32 %v6080, %v6788
        %v6790 = vpop.f32.mrf.mxu0
        %v6791 = vadd.f32 %v6084, %v6790
        %v6792 = vpop.f32.mrf.mxu0
        %v6793 = vpop.f32.mrf.mxu0
        %6794 = vdwg.mxu0
        %v6795 = vadd.f32 %v6747, %v6789
        %v6796 = vxor.u32 %v6795, 2147483648
        %v6797 = vmul.f32 %v6796, 1.442695
        %v6798 = vpow.pop %v6797
        %v6799 = vadd.f32 %v6798, 1.0
        %v6800 = vrcp.pop %v6799
        %v6801 = vmul.f32 1.0, %v6800
        %6803 = vrot.lane.b32.xlu0 %v6789, 64
        %v6804 = vpop.permute.xlu0 %6803
        %v6806 = vmul.f32 %v6801, %v6804
        %6808 = vrot.lane.b32.xlu0 %v6806, 64
        %v6809 = vpop.permute.xlu0 %6808
        %v6811 = vadd.f32 %v6747, %v6809
        %v6812 = vtanh.pop %v6811
        %v6813 = vsub.f32 1.0, %v6801
        %6815 = vrot.lane.b32.xlu0 %v6812, 96
        %v6816 = vpop.permute.xlu0 %6815
        %v6818 = vmul.f32 %v6813, %v6816
        %6820 = vrot.lane.b32.xlu0 %v6746, 32
        %v6821 = vpop.permute.xlu0 %6820
        %v6823 = vmul.f32 %v6801, %v6821
        %v6824 = vadd.f32 %v6818, %v6823
        %v6825 = vadd.f32 %v6748, %v6789
        %v6826 = vxor.u32 %v6825, 2147483648
        %v6827 = vmul.f32 %v6826, 1.442695
        %v6828 = vpow.pop %v6827
        %v6829 = vadd.f32 %v6828, 1.0
        %v6830 = vrcp.pop %v6829
        %v6831 = vmul.f32 1.0, %v6830
        %v6832 = vadd.f32 %v6749, %v6791
        %v6833 = vxor.u32 %v6832, 2147483648
        %v6834 = vmul.f32 %v6833, 1.442695
        %v6835 = vpow.pop %v6834
        %v6836 = vadd.f32 %v6835, 1.0
        %v6837 = vrcp.pop %v6836
        %v6838 = vmul.f32 1.0, %v6837
        %6840 = vrot.lane.b32.xlu0 %v6791, 64
        %v6841 = vpop.permute.xlu0 %6840
        %v6843 = vmul.f32 %v6831, %v6841
        %6845 = vrot.lane.b32.xlu0 %v6843, 64
        %v6846 = vpop.permute.xlu0 %6845
        %v6848 = vadd.f32 %v6749, %v6846
        %v6849 = vtanh.pop %v6848
        %v6850 = vsub.f32 1.0, %v6838
        %6852 = vrot.lane.b32.xlu0 %v6849, 96
        %v6853 = vpop.permute.xlu0 %6852
        %v6855 = vmul.f32 %v6850, %v6853
        %6856 = vrot.lane.b32.xlu0 %v6746, 96
        %v6857 = vpop.permute.xlu0 %6856
        %v6859 = vmul.f32 %v6838, %v6857
        %v6860 = vadd.f32 %v6855, %v6859
        %6862 = vrot.lane.b32.xlu0 %v6824, 96
        %v6863 = vpop.permute.xlu0 %6862
        %s6865 = scalar_lea.vmem [#allocation3], 40
        %6866 = vst.msk [vmem:[%s6865] sm:$0xff] %vm4144, %v6863
        %s6867 = scalar_lea.vmem [#allocation4], 8
        %6868 = vst.msk [vmem:[%s6867] sm:$0xff] %vm4144, %v6860
        %6870 = vrot.lane.b32.xlu0 %v6860, 32
        %v6871 = vpop.permute.xlu0 %6870
        %v6873 = vsel %vm4144, %v6863, %v6871
        %v6874 = vld [vmem:[%s6073] sm:$0xff]
        %v6875 = vld [vmem:[#allocation2] sm:$0xff]
        %v6876 = vld [vmem:[#allocation2 + $0x8] sm:$0xff]
        %v6877 = vpack.c.bf16 %v6873, %v6873
        %v6879 = vsel %vm5373, %v6877, 0
        %6881 = vmatprep.subr.bf16.mxu0 0
        %6882 = vmatpush1.bf16.msra.mxu0 0
        %6883 = vmatprep.subr.bf16.mxu0 0
        %6884 = vmatpush1.bf16.msra.mxu0 0
        %6885 = vmatprep.subr.bf16.mxu0 0
        %6886 = vmatpush1.bf16.msra.mxu0 0
        %6887 = vmatprep.subr.bf16.mxu0 0
        %6888 = vmatpush1.bf16.msra.mxu0 0
        %6889 = vmatprep.subr.bf16.mxu0 %v6118
        %6890 = vmatpush1.bf16.msra.mxu0 %v6117
        %6891 = vmatprep.subr.bf16.mxu0 %v6116
        %6892 = vmatpush1.bf16.msra.mxu0 %v6115
        %6893 = vmatprep.subr.bf16.mxu0 %v6114
        %6894 = vmatpush1.bf16.msra.mxu0 %v6113
        %6895 = vmatprep.subr.bf16.mxu0 %v6112
        %6896 = vmatpush1.bf16.msra.mxu0 %v6111
        %6897 = vmatprep.subr.bf16.mxu0 0
        %6898 = vmatpush2.bf16.msra.mxu0 0
        %6899 = vmatprep.subr.bf16.mxu0 0
        %6900 = vmatpush2.bf16.msra.mxu0 0
        %6901 = vmatprep.subr.bf16.mxu0 0
        %6902 = vmatpush2.bf16.msra.mxu0 0
        %6903 = vmatprep.subr.bf16.mxu0 0
        %6904 = vmatpush2.bf16.msra.mxu0 0
        %6905 = vmatprep.subr.bf16.mxu0 0
        %6906 = vmatpush2.bf16.msra.mxu0 0
        %6907 = vmatprep.subr.bf16.mxu0 0
        %6908 = vmatpush2.bf16.msra.mxu0 0
        %6909 = vmatprep.subr.bf16.mxu0 0
        %6910 = vmatpush2.bf16.msra.mxu0 0
        %6911 = vmatprep.subr.bf16.mxu0 0
        %6912 = vmatpush2.bf16.msra.mxu0 0
        %6913 = vmatprep.mubr.bf16.mxu0 0
        %6914 = vmatmul.mubr.bf16.gmra.mxu0 %v6879
        %v6915 = vpop.f32.mrf.mxu0
        %v6916 = vadd.f32 %v6080, %v6915
        %v6917 = vpop.f32.mrf.mxu0
        %v6918 = vadd.f32 %v6084, %v6917
        %v6919 = vpop.f32.mrf.mxu0
        %v6920 = vpop.f32.mrf.mxu0
        %6921 = vdwg.mxu0
        %v6922 = vadd.f32 %v6874, %v6916
        %v6923 = vxor.u32 %v6922, 2147483648
        %v6924 = vmul.f32 %v6923, 1.442695
        %v6925 = vpow.pop %v6924
        %v6926 = vadd.f32 %v6925, 1.0
        %v6927 = vrcp.pop %v6926
        %v6928 = vmul.f32 1.0, %v6927
        %6930 = vrot.lane.b32.xlu0 %v6916, 64
        %v6931 = vpop.permute.xlu0 %6930
        %v6933 = vmul.f32 %v6928, %v6931
        %6935 = vrot.lane.b32.xlu0 %v6933, 64
        %v6936 = vpop.permute.xlu0 %6935
        %v6938 = vadd.f32 %v6874, %v6936
        %v6939 = vtanh.pop %v6938
        %v6940 = vsub.f32 1.0, %v6928
        %6942 = vrot.lane.b32.xlu0 %v6939, 96
        %v6943 = vpop.permute.xlu0 %6942
        %v6945 = vmul.f32 %v6940, %v6943
        %6947 = vrot.lane.b32.xlu0 %v6873, 32
        %v6948 = vpop.permute.xlu0 %6947
        %v6950 = vmul.f32 %v6928, %v6948
        %v6951 = vadd.f32 %v6945, %v6950
        %v6952 = vadd.f32 %v6875, %v6916
        %v6953 = vxor.u32 %v6952, 2147483648
        %v6954 = vmul.f32 %v6953, 1.442695
        %v6955 = vpow.pop %v6954
        %v6956 = vadd.f32 %v6955, 1.0
        %v6957 = vrcp.pop %v6956
        %v6958 = vmul.f32 1.0, %v6957
        %v6959 = vadd.f32 %v6876, %v6918
        %v6960 = vxor.u32 %v6959, 2147483648
        %v6961 = vmul.f32 %v6960, 1.442695
        %v6962 = vpow.pop %v6961
        %v6963 = vadd.f32 %v6962, 1.0
        %v6964 = vrcp.pop %v6963
        %v6965 = vmul.f32 1.0, %v6964
        %6967 = vrot.lane.b32.xlu0 %v6918, 64
        %v6968 = vpop.permute.xlu0 %6967
        %v6970 = vmul.f32 %v6958, %v6968
        %6972 = vrot.lane.b32.xlu0 %v6970, 64
        %v6973 = vpop.permute.xlu0 %6972
        %v6975 = vadd.f32 %v6876, %v6973
        %v6976 = vtanh.pop %v6975
        %v6977 = vsub.f32 1.0, %v6965
        %6979 = vrot.lane.b32.xlu0 %v6976, 96
        %v6980 = vpop.permute.xlu0 %6979
        %v6982 = vmul.f32 %v6977, %v6980
        %6983 = vrot.lane.b32.xlu0 %v6873, 96
        %v6984 = vpop.permute.xlu0 %6983
        %v6986 = vmul.f32 %v6965, %v6984
        %v6987 = vadd.f32 %v6982, %v6986
        %6989 = vrot.lane.b32.xlu0 %v6951, 96
        %v6990 = vpop.permute.xlu0 %6989
        %s6992 = scalar_lea.vmem [#allocation3], 48
        %6993 = vst.msk [vmem:[%s6992] sm:$0xff] %vm4144, %v6990
        %6994 = vst.msk [vmem:[#allocation4] sm:$0xff] %vm4144, %v6987
        %v6995 = vld [vmem:[#allocation3] sm:$0xff]
        %v6996 = vld [vmem:[#allocation3 + $0x8] sm:$0xff]
        %v6997 = vld [vmem:[#allocation3 + $0x10] sm:$0xff]
        %v6998 = vld [vmem:[#allocation3 + $0x18] sm:$0xff]
        %v6999 = vld [vmem:[#allocation3 + $0x20] sm:$0xff]
        %v7000 = vld [vmem:[#allocation3 + $0x28] sm:$0xff]
        %v7001 = vld [vmem:[#allocation3 + $0x30] sm:$0xff]
        %v7002 = vld [vmem:[#allocation4] sm:$0xff]
        %v7003 = vld [vmem:[#allocation4 + $0x8] sm:$0xff]
        %v7004 = vld [vmem:[#allocation4 + $0x10] sm:$0xff]
        %v7005 = vld [vmem:[#allocation4 + $0x18] sm:$0xff]
        %v7006 = vld [vmem:[#allocation4 + $0x20] sm:$0xff]
        %v7007 = vld [vmem:[#allocation4 + $0x28] sm:$0xff]
        %v7008 = vld [vmem:[#allocation4 + $0x30] sm:$0xff]
        %7016 = vrot.lane.b32.xlu0 %v7002, 32
        %v7017 = vpop.permute.xlu0 %7016
        %7018 = vrot.lane.b32.xlu0 %v7003, 32
        %v7019 = vpop.permute.xlu0 %7018
        %7020 = vrot.lane.b32.xlu0 %v7004, 32
        %v7021 = vpop.permute.xlu0 %7020
        %7022 = vrot.lane.b32.xlu0 %v7005, 32
        %v7023 = vpop.permute.xlu0 %7022
        %7024 = vrot.lane.b32.xlu0 %v7006, 32
        %v7025 = vpop.permute.xlu0 %7024
        %7026 = vrot.lane.b32.xlu0 %v7007, 32
        %v7027 = vpop.permute.xlu0 %7026
        %7028 = vrot.lane.b32.xlu0 %v7008, 32
        %v7029 = vpop.permute.xlu0 %7028
        %v7037 = vsel %vm4144, %v6995, %v7017
        %v7038 = vsel %vm4144, %v6996, %v7019
        %v7039 = vsel %vm4144, %v6997, %v7021
        %v7040 = vsel %vm4144, %v6998, %v7023
        %v7041 = vsel %vm4144, %v6999, %v7025
        %v7042 = vsel %vm4144, %v7000, %v7027
        %v7043 = vsel %vm4144, %v7001, %v7029
        %v7044 = vmax.f32 %v7037, 0.0
        %v7045 = vmax.f32 %v7038, 0.0
        %v7046 = vmax.f32 %v7039, 0.0
        %v7047 = vmax.f32 %v7040, 0.0
        %v7048 = vmax.f32 %v7041, 0.0
        %v7049 = vmax.f32 %v7042, 0.0
        %v7050 = vmax.f32 %v7043, 0.0
        %v7051 = vpack.c.bf16 %v7045, %v7044
        %v7052 = vpack.c.bf16 %v7047, %v7046
        %v7053 = vpack.c.bf16 %v7049, %v7048
        %v7054 = vpack.c.bf16 %v7050, %v7050
        %v7055 = vld [vmem:[%s7] sm:$0xf]
        %v7056 = vld [vmem:[%s7 + $0x4] sm:$0xf]
        %v7057 = vld [vmem:[%s7 + $0x8] sm:$0xf]
        %v7058 = vld [vmem:[%s7 + $0xc] sm:$0xf]
        %v7059 = vld [vmem:[%s7 + $0x10] sm:$0xf]
        %v7060 = vld [vmem:[%s7 + $0x14] sm:$0xf]
        %v7061 = vld [vmem:[%s7 + $0x18] sm:$0xf]
        %v7062 = vld [vmem:[%s7 + $0x1c] sm:$0xf]
        %v7063 = vld [vmem:[%s8] sm:$0x1]
        %v7065 = vlaneseq
        %v7066 = vshrl.u32 %v7065, 7
        %v7067 = vsub.s32 0, %v7066
        %v7068 = vrot.slane %v7063, %v7067
        %v7078 = vunpack.c.l.b16 %v7055
        %v7079 = vunpack.c.l.b16 %v7056
        %v7080 = vunpack.c.l.b16 %v7057
        %v7081 = vunpack.c.l.b16 %v7058
        %v7082 = vunpack.c.l.b16 %v7059
        %v7083 = vunpack.c.l.b16 %v7060
        %v7084 = vunpack.c.l.b16 %v7061
        %v7085 = vunpack.c.l.b16 %v7062
        %v7086 = vpack.c.b16 %v7079, %v7078
        %v7087 = vpack.c.b16 %v7081, %v7080
        %v7088 = vpack.c.b16 %v7083, %v7082
        %v7089 = vpack.c.b16 %v7085, %v7084
        %v7095 = vsel %vm5373, %v7051, 0
        %v7098 = vsel %vm5373, %v7052, 0
        %v7101 = vsel %vm5373, %v7053, 0
        %v7104 = vsel %vm5373, %v7054, 0
        %7106 = vmatprep.subr.bf16.mxu0 0
        %7107 = vmatpush1.bf16.msra.mxu0 0
        %7108 = vmatprep.subr.bf16.mxu0 0
        %7109 = vmatpush1.bf16.msra.mxu0 0
        %7110 = vmatprep.subr.bf16.mxu0 0
        %7111 = vmatpush1.bf16.msra.mxu0 0
        %7112 = vmatprep.subr.bf16.mxu0 0
        %7113 = vmatpush1.bf16.msra.mxu0 0
        %7114 = vmatprep.subr.bf16.mxu0 0
        %7115 = vmatpush1.bf16.msra.mxu0 %v7089
        %7116 = vmatprep.subr.bf16.mxu0 0
        %7117 = vmatpush1.bf16.msra.mxu0 %v7088
        %7118 = vmatprep.subr.bf16.mxu0 0
        %7119 = vmatpush1.bf16.msra.mxu0 %v7087
        %7120 = vmatprep.subr.bf16.mxu0 0
        %7121 = vmatpush1.bf16.msra.mxu0 %v7086
        %7122 = vmatprep.subr.bf16.mxu0 0
        %7123 = vmatpush2.bf16.msra.mxu0 0
        %7124 = vmatprep.subr.bf16.mxu0 0
        %7125 = vmatpush2.bf16.msra.mxu0 0
        %7126 = vmatprep.subr.bf16.mxu0 0
        %7127 = vmatpush2.bf16.msra.mxu0 0
        %7128 = vmatprep.subr.bf16.mxu0 0
        %7129 = vmatpush2.bf16.msra.mxu0 0
        %7130 = vmatprep.subr.bf16.mxu0 0
        %7131 = vmatpush2.bf16.msra.mxu0 0
        %7132 = vmatprep.subr.bf16.mxu0 0
        %7133 = vmatpush2.bf16.msra.mxu0 0
        %7134 = vmatprep.subr.bf16.mxu0 0
        %7135 = vmatpush2.bf16.msra.mxu0 0
        %7136 = vmatprep.subr.bf16.mxu0 0
        %7137 = vmatpush2.bf16.msra.mxu0 0
        %7138 = vmatprep.mubr.bf16.mxu0 0
        %7139 = vmatmul.mubr.bf16.gmra.mxu0 %v7095
        %v7140 = vpop.f32.mrf.mxu0
        %v7141 = vadd.f32 %v7068, %v7140
        %v7142 = vpop.f32.mrf.mxu0
        %v7143 = vpop.f32.mrf.mxu0
        %v7144 = vadd.f32 %v7068, %v7143
        %v7145 = vpop.f32.mrf.mxu0
        %7146 = vmatprep.mubr.bf16.mxu0 0
        %7147 = vmatmul.mubr.bf16.gmra.mxu0 %v7098
        %v7148 = vpop.f32.mrf.mxu0
        %v7149 = vadd.f32 %v7068, %v7148
        %v7150 = vpop.f32.mrf.mxu0
        %v7151 = vpop.f32.mrf.mxu0
        %v7152 = vadd.f32 %v7068, %v7151
        %v7153 = vpop.f32.mrf.mxu0
        %7154 = vmatprep.mubr.bf16.mxu0 0
        %7155 = vmatmul.mubr.bf16.gmra.mxu0 %v7101
        %v7156 = vpop.f32.mrf.mxu0
        %v7157 = vadd.f32 %v7068, %v7156
        %v7158 = vpop.f32.mrf.mxu0
        %v7159 = vpop.f32.mrf.mxu0
        %v7160 = vadd.f32 %v7068, %v7159
        %v7161 = vpop.f32.mrf.mxu0
        %7162 = vmatprep.mubr.bf16.mxu0 0
        %7163 = vmatmul.mubr.bf16.gmra.mxu0 %v7104
        %v7164 = vpop.f32.mrf.mxu0
        %v7165 = vadd.f32 %v7068, %v7164
        %v7166 = vpop.f32.mrf.mxu0
        %v7167 = vpop.f32.mrf.mxu0
        %v7168 = vpop.f32.mrf.mxu0
        %7169 = vdwg.mxu0
        %v7170 = vtanh.pop %v7141
        %v7171 = vtanh.pop %v7144
        %v7172 = vtanh.pop %v7149
        %v7173 = vtanh.pop %v7152
        %v7174 = vtanh.pop %v7157
        %v7175 = vtanh.pop %v7160
        %v7176 = vtanh.pop %v7165
        %v7177 = vld [vmem:[%s9] sm:$0x1]
        %v7179 = vlaneseq
        %v7180 = vshrl.u32 %v7179, 7
        %v7181 = vsub.s32 0, %v7180
        %v7182 = vrot.slane %v7177, %v7181
        %v7184 = vmul.f32 %v7170, %v7182
        %v7185 = vmul.f32 %v7171, %v7182
        %v7186 = vmul.f32 %v7172, %v7182
        %v7187 = vmul.f32 %v7173, %v7182
        %v7188 = vmul.f32 %v7174, %v7182
        %v7189 = vmul.f32 %v7175, %v7182
        %v7190 = vmul.f32 %v7176, %v7182
        %vm7191 = vcmask 408576
        %v7192 = vsel %vm7191, %v7184, 0.0
        %7193 = vadd.xlane.f32.xlu0 %v7192
        %v7194 = vpop.xlane.xlu0 %7193
        %v7195 = vsel %vm7191, %v7185, 0.0
        %7196 = vadd.xlane.f32.xlu0 %v7195
        %v7197 = vpop.xlane.xlu0 %7196
        %v7198 = vsel %vm7191, %v7186, 0.0
        %7199 = vadd.xlane.f32.xlu0 %v7198
        %v7200 = vpop.xlane.xlu0 %7199
        %v7201 = vsel %vm7191, %v7187, 0.0
        %7202 = vadd.xlane.f32.xlu0 %v7201
        %v7203 = vpop.xlane.xlu0 %7202
        %v7204 = vsel %vm7191, %v7188, 0.0
        %7205 = vadd.xlane.f32.xlu0 %v7204
        %v7206 = vpop.xlane.xlu0 %7205
        %v7207 = vsel %vm7191, %v7189, 0.0
        %7208 = vadd.xlane.f32.xlu0 %v7207
        %v7209 = vpop.xlane.xlu0 %7208
        %v7210 = vsel %vm7191, %v7190, 0.0
        %7211 = vadd.xlane.f32.xlu0 %v7210
        %v7212 = vpop.xlane.xlu0 %7211
        %v7213 = vmax.f32 %v7194, %v7206
        %v7214 = vmax.f32 %v7197, %v7209
        %v7215 = vmax.f32 %v7200, %v7212
        %v7216 = vmax.f32 %v7213, %v7214
        %v7217 = vmax.f32 %v7215, %v7203
        %v7218 = vmax.f32 %v7216, %v7217
        %v7219 = vsub.f32 %v7194, %v7218
        %v7220 = vsub.f32 %v7197, %v7218
        %v7221 = vsub.f32 %v7200, %v7218
        %v7222 = vsub.f32 %v7203, %v7218
        %v7223 = vsub.f32 %v7206, %v7218
        %v7224 = vsub.f32 %v7209, %v7218
        %v7225 = vsub.f32 %v7212, %v7218
        %v7226 = vmul.f32 %v7219, 1.442695
        %v7227 = vpow.pop %v7226
        %v7228 = vmul.f32 %v7220, 1.442695
        %v7229 = vpow.pop %v7228
        %v7230 = vmul.f32 %v7221, 1.442695
        %v7231 = vpow.pop %v7230
        %v7232 = vmul.f32 %v7222, 1.442695
        %v7233 = vpow.pop %v7232
        %v7234 = vmul.f32 %v7223, 1.442695
        %v7235 = vpow.pop %v7234
        %v7236 = vmul.f32 %v7224, 1.442695
        %v7237 = vpow.pop %v7236
        %v7238 = vmul.f32 %v7225, 1.442695
        %v7239 = vpow.pop %v7238
        %v7240 = vadd.f32 %v7227, %v7229
        %v7241 = vadd.f32 %v7240, %v7231
        %v7242 = vadd.f32 %v7241, %v7233
        %v7243 = vadd.f32 %v7242, %v7235
        %v7244 = vadd.f32 %v7243, %v7237
        %v7245 = vadd.f32 %v7244, %v7239
        %v7246 = vrcp.pop %v7245
        %v7247 = vmul.f32 %v7227, %v7246
        %v7248 = vmul.f32 %v7229, %v7246
        %v7249 = vmul.f32 %v7231, %v7246
        %v7250 = vmul.f32 %v7233, %v7246
        %v7251 = vmul.f32 %v7235, %v7246
        %v7252 = vmul.f32 %v7237, %v7246
        %v7253 = vmul.f32 %v7239, %v7246
        %v7254 = vmul.f32 %v7044, %v7247
        %v7255 = vmul.f32 %v7045, %v7248
        %v7256 = vmul.f32 %v7046, %v7249
        %v7257 = vmul.f32 %v7047, %v7250
        %v7258 = vmul.f32 %v7048, %v7251
        %v7259 = vmul.f32 %v7049, %v7252
        %v7260 = vmul.f32 %v7050, %v7253
        %v7261 = vsel %vm5373, %v7254, 0.0
        %v7262 = vsel %vm5373, %v7255, 0.0
        %v7263 = vadd.f32 %v7261, %v7262
        %v7264 = vsel %vm5373, %v7256, 0.0
        %v7265 = vadd.f32 %v7263, %v7264
        %v7266 = vsel %vm5373, %v7257, 0.0
        %v7267 = vadd.f32 %v7265, %v7266
        %v7268 = vsel %vm5373, %v7258, 0.0
        %v7269 = vadd.f32 %v7267, %v7268
        %v7270 = vsel %vm5373, %v7259, 0.0
        %v7271 = vadd.f32 %v7269, %v7270
        %v7272 = vsel %vm5373, %v7260, 0.0
        %v7273 = vadd.f32 %v7271, %v7272
        %v7274 = vmax.f32 %v7273, 0.0
        %v7275 = vpack.c.bf16 %v7274, %v7274
        %v7276 = vld [vmem:[%s10] sm:$0xf]
        %v7277 = vld [vmem:[%s10 + $0x4] sm:$0xf]
        %v7278 = vld [vmem:[%s10 + $0x8] sm:$0xf]
        %v7279 = vld [vmem:[%s10 + $0xc] sm:$0xf]
        %v7280 = vld [vmem:[%s10 + $0x10] sm:$0xf]
        %v7281 = vld [vmem:[%s10 + $0x14] sm:$0xf]
        %v7282 = vld [vmem:[%s10 + $0x18] sm:$0xf]
        %v7283 = vld [vmem:[%s10 + $0x1c] sm:$0xf]
        %v7284 = vld [vmem:[%s11] sm:$0x1]
        %v7286 = vlaneseq
        %v7287 = vshrl.u32 %v7286, 7
        %v7288 = vsub.s32 0, %v7287
        %v7289 = vrot.slane %v7284, %v7288
        %v7299 = vunpack.c.l.b16 %v7276
        %v7300 = vunpack.c.l.b16 %v7277
        %v7301 = vunpack.c.l.b16 %v7278
        %v7302 = vunpack.c.l.b16 %v7279
        %v7303 = vunpack.c.l.b16 %v7280
        %v7304 = vunpack.c.l.b16 %v7281
        %v7305 = vunpack.c.l.b16 %v7282
        %v7306 = vunpack.c.l.b16 %v7283
        %v7307 = vpack.c.b16 %v7300, %v7299
        %v7308 = vpack.c.b16 %v7302, %v7301
        %v7309 = vpack.c.b16 %v7304, %v7303
        %v7310 = vpack.c.b16 %v7306, %v7305
        %v7316 = vsel %vm5373, %v7275, 0
        %7318 = vmatprep.subr.bf16.mxu0 0
        %7319 = vmatpush1.bf16.msra.mxu0 0
        %7320 = vmatprep.subr.bf16.mxu0 0
        %7321 = vmatpush1.bf16.msra.mxu0 0
        %7322 = vmatprep.subr.bf16.mxu0 0
        %7323 = vmatpush1.bf16.msra.mxu0 0
        %7324 = vmatprep.subr.bf16.mxu0 0
        %7325 = vmatpush1.bf16.msra.mxu0 0
        %7326 = vmatprep.subr.bf16.mxu0 0
        %7327 = vmatpush1.bf16.msra.mxu0 %v7310
        %7328 = vmatprep.subr.bf16.mxu0 0
        %7329 = vmatpush1.bf16.msra.mxu0 %v7309
        %7330 = vmatprep.subr.bf16.mxu0 0
        %7331 = vmatpush1.bf16.msra.mxu0 %v7308
        %7332 = vmatprep.subr.bf16.mxu0 0
        %7333 = vmatpush1.bf16.msra.mxu0 %v7307
        %7334 = vmatprep.subr.bf16.mxu0 0
        %7335 = vmatpush2.bf16.msra.mxu0 0
        %7336 = vmatprep.subr.bf16.mxu0 0
        %7337 = vmatpush2.bf16.msra.mxu0 0
        %7338 = vmatprep.subr.bf16.mxu0 0
        %7339 = vmatpush2.bf16.msra.mxu0 0
        %7340 = vmatprep.subr.bf16.mxu0 0
        %7341 = vmatpush2.bf16.msra.mxu0 0
        %7342 = vmatprep.subr.bf16.mxu0 0
        %7343 = vmatpush2.bf16.msra.mxu0 0
        %7344 = vmatprep.subr.bf16.mxu0 0
        %7345 = vmatpush2.bf16.msra.mxu0 0
        %7346 = vmatprep.subr.bf16.mxu0 0
        %7347 = vmatpush2.bf16.msra.mxu0 0
        %7348 = vmatprep.subr.bf16.mxu0 0
        %7349 = vmatpush2.bf16.msra.mxu0 0
        %7350 = vmatprep.mubr.bf16.mxu0 0
        %7351 = vmatmul.mubr.bf16.gmra.mxu0 %v7316
        %v7352 = vpop.f32.mrf.mxu0
        %v7353 = vadd.f32 %v7289, %v7352
        %v7354 = vpop.f32.mrf.mxu0
        %v7355 = vpop.f32.mrf.mxu0
        %v7356 = vpop.f32.mrf.mxu0
        %7357 = vdwg.mxu0
        %7358 = vmax.xlane.f32.xlu0 %v7353
        %v7359 = vpop.xlane.xlu0 %7358
        %v7360 = vsub.f32 %v7353, %v7359
        %v7361 = vmul.f32 %v7360, 1.442695
        %v7362 = vpow.pop %v7361
        %7363 = vadd.xlane.f32.xlu0 %v7362
        %v7364 = vpop.xlane.xlu0 %7363
        %v7365 = vrcp.pop %v7364
        %v7366 = vmul.f32 %v7362, %v7365
        %7367 = vst [vmem:[%s842] sm:$0xff] %v7366
        %p7368 = scmp.lt.s32.totalorder %s23, 1
        %s7369 = scalar_select %p7368, %s23, 1
        %s7370 = smul.addr %s7369, 8
        %s7371 = scalar_lea.vmem %s12, %s7370
        // Predicated region
        $region107: #{rnatracker_forward.1} parent=101 // pred_check
          %p7372 = pneg %p298
        $region108: #{rnatracker_forward.1} parent=101 // pred_check_branch
          %7374 = sbr.rel (%p7372) target = $region110
        $region109: #{rnatracker_forward.1} parent=101 // pred_region
          _
        $region110: #{rnatracker_forward.1} parent=101 // pred_fallthru
          _
      $region102: #{rnatracker_forward.1} parent=5 // pred_fallthru
        _
      %p7375 = scmp.le.s32.totalorder 2, %s18
      // Predicated region
      $region111: #{rnatracker_forward.1} parent=5 // pred_check
        %p7376 = pneg %p7375
      $region112: #{rnatracker_forward.1} parent=5 // pred_check_branch
        %7378 = sbr.rel (%p7376) target = $region114
      $region113: #{rnatracker_forward.1} parent=5 // pred_region
        %s7379 = ssub.s32 %s18, 2
        // Predicated region
        $region115: #{rnatracker_forward.1} parent=113 // pred_check
          %p7380 = pneg %p304
        $region116: #{rnatracker_forward.1} parent=113 // pred_check_branch
          %7382 = sbr.rel (%p7380) target = $region118
        $region117: #{rnatracker_forward.1} parent=113 // pred_region
          %p7383 = scmp.lt.s32.totalorder %s24, 1
          %s7384 = scalar_select %p7383, %s24, 1
          %s7385 = smul.addr %s7384, 8
          %s7386 = scalar_lea.vmem %s12, %s7385
        $region118: #{rnatracker_forward.1} parent=113 // pred_fallthru
          _
      $region114: #{rnatracker_forward.1} parent=5 // pred_fallthru
        _
    $region6: #{rnatracker_forward.1} parent=1 // loop_footer
      %s22 = sadd.s32 1, %s18
    $region7: #{rnatracker_forward.1} parent=1 // loop_footer_branch
      %17 = sbr.rel target = $region3
    $region8: #{rnatracker_forward.1} parent=1 // loop_exit
      _

</llo_original>
